<compile_context>
chip_gen: v7x
topology: tpu7x:2x2x1
jax: 0.10.0
libtpu: 0.0.40
codegen_flags: <defaults>
</compile_context>

<pallas_src>
import math
from functools import partial

import jax
import jax.numpy as jnp
from jax.experimental import pallas as pl
from jax.experimental.pallas import tpu as pltpu


# ----------------------------- Pallas kernel --------------------------------


def _layer_norm(x, w, b, eps=1e-5):
    mu = jnp.mean(x, axis=-1, keepdims=True)
    var = jnp.mean((x - mu) ** 2, axis=-1, keepdims=True)
    return (x - mu) * jax.lax.rsqrt(var + eps) * w + b


def _set_transformer_kernel(
    x_ref,      # (TB, S, Din)  compute dtype
    mask_ref,   # (TB, S)       f32 (1.0 = keep)
    w_in_ref,   # (Din, H)      compute dtype
    b_in_ref,   # (1, H)        f32
    wqkv_ref,   # (L, H, 3H)    compute dtype (Q block pre-scaled by 1/sqrt(hd))
    bqkv_ref,   # (L, 1, 3H)    f32
    wo_ref,     # (L, H, H)     compute dtype
    bo_ref,     # (L, 1, H)     f32
    lnw_ref,    # (L, 1, H)     f32
    lnb_ref,    # (L, 1, H)     f32
    onw_ref,    # (1, H)        f32
    onb_ref,    # (1, H)        f32
    out_ref,    # (TB, H)       f32
    *,
    num_layers: int,
    num_heads: int,
    hidden_dim: int,
    seq_len: int,
    block_batch: int,
    compute_dtype,
):
    H = hidden_dim
    hd = H // num_heads
    TB, S = block_batch, seq_len

    # input projection over all TB*S rows at once (lane-/sublane-dense MXU op)
    x = x_ref[...].reshape(TB * S, -1)
    h = jnp.dot(x, w_in_ref[...], preferred_element_type=jnp.float32) + b_in_ref[...]

    def layer_body(l, h):
        hc = h.astype(compute_dtype)
        # fused QKV projection: (TB*S, H) @ (H, 3H)
        qkv = jnp.dot(hc, wqkv_ref[l], preferred_element_type=jnp.float32) + bqkv_ref[l]
        qkv = qkv.reshape(TB, S, 3 * H)        # split leading dim only (cheap)

        head_outs = []
        for hh in range(num_heads):
            q = qkv[:, :, 0 * H + hh * hd:0 * H + (hh + 1) * hd].astype(compute_dtype)
            k = qkv[:, :, 1 * H + hh * hd:1 * H + (hh + 1) * hd].astype(compute_dtype)
            v = qkv[:, :, 2 * H + hh * hd:2 * H + (hh + 1) * hd].astype(compute_dtype)
            # scores batched over the TB samples; 1/sqrt(hd) already folded into Q
            s = jnp.einsum("bqd,bkd->bqk", q, k, preferred_element_type=jnp.float32)
            s = s - jnp.max(s, axis=-1, keepdims=True)
            p = jnp.exp(s)
            denom = jnp.sum(p, axis=-1, keepdims=True)          # (TB, S, 1)
            o = jnp.einsum("bqk,bkd->bqd", p.astype(compute_dtype), v,
                           preferred_element_type=jnp.float32)  # (TB, S, hd)
            # deferred softmax normalization: EUP reciprocal * small output
            head_outs.append(o * pl.reciprocal(denom, approx=True))
        attn = jnp.concatenate(head_outs, axis=-1).reshape(TB * S, H)

        # attention output projection: (TB*S, H) @ (H, H)
        attn = (jnp.dot(attn.astype(compute_dtype), wo_ref[l],
                        preferred_element_type=jnp.float32) + bo_ref[l])

        # residual + LayerNorm (dropout is identity in eval mode)
        return _layer_norm(h + attn, lnw_ref[l], lnb_ref[l])

    if num_layers <= 4:
        for l in range(num_layers):            # static unroll (LLO visibility)
            h = layer_body(l, h)
    else:
        # bounds live ranges for deep stacks; weights support dynamic indexing
        h = jax.lax.fori_loop(0, num_layers, layer_body, h)

    # final LayerNorm
    h = _layer_norm(h, onw_ref[...], onb_ref[...]).reshape(TB, S, H)

    # masked mean over the sequence axis on the VPU (sublane reduce) with a
    # divide-by-zero guard; mask is all-ones when the caller passed mask=None.
    m = mask_ref[...]                                            # (TB, S)
    msum = jnp.maximum(jnp.sum(m, axis=-1, keepdims=True), 1.0)  # (TB, 1)
    pooled = jnp.sum(h * m[:, :, None], axis=1)                  # (TB, H)
    out_ref[...] = pooled * pl.reciprocal(msum, approx=True)


# ------------------------------ Wrapper --------------------------------------


def _choose_block_batch(batch, seq, target_rows=256):
    """TB (multiple of 8) so TB*seq ~ target MXU rows, without over-padding."""
    tb = -(-target_rows // seq)
    tb = max(8, -(-tb // 8) * 8)
    batch8 = max(8, -(-batch // 8) * 8)
    return min(tb, batch8)


def _vmem_limit_bytes(TB, S, Din, H, L, compute_dtype):
    c = jnp.dtype(compute_dtype).itemsize
    f32 = 4
    blocks = (
        TB * S * Din * c + TB * S * f32            # x, mask blocks
        + Din * H * c + H * f32                    # input projection
        + L * (H * 3 * H * c + 3 * H * f32)        # fused QKV
        + L * (H * H * c + H * f32)                # attn out projection
        + L * 2 * H * f32 + 2 * H * f32            # layer norms + output norm
        + TB * H * f32                             # output block
    )
    intermediates = TB * S * (8 * H + 4 * S) * f32  # h, qkv, scores, temps
    est = 2 * blocks + intermediates                # 2x: double-buffered blocks
    # TODO(synk): on v7x (64 MiB VMEM) with large H/L, stream one layer of
    # weights per step (extra "arbitrary" layer grid axis) instead of keeping
    # all layers resident, and drop double-buffering on grid-invariant weights.
    return int(min(max(est, 32 * 1024 * 1024), 100 * 1024 * 1024))


def set_transformer_forward(x, params, mask=None, *, num_heads, num_layers,
                            block_batch=None, compute_dtype=jnp.bfloat16):
    """x: (B, S, Din) float32; mask: optional (B, S) bool. Returns (B, H) f32."""
    B, S, Din = x.shape
    H = params["w_in"].shape[1]
    assert H % num_heads == 0
    hd = H // num_heads

    TB = block_batch if block_batch is not None else _choose_block_batch(B, S)
    B_pad = -(-B // TB) * TB
    grid_len = B_pad // TB

    if mask is None:
        mask_f = jnp.ones((B_pad, S), jnp.float32)
    else:
        mask_f = jnp.zeros((B_pad, S), jnp.float32).at[:B].set(
            mask.astype(jnp.float32))
    if B_pad != B:
        x = jnp.pad(x, ((0, B_pad - B), (0, 0), (0, 0)))

    # fold 1/sqrt(head_dim) into the Q block of the fused QKV projection (free)
    qscale = jnp.concatenate(
        [jnp.full((H,), 1.0 / math.sqrt(hd), jnp.float32),
         jnp.ones((2 * H,), jnp.float32)])
    wqkv = (params["wqkv"] * qscale).astype(compute_dtype)
    bqkv = (params["bqkv"] * qscale).astype(jnp.float32)

    # matmul operands in bf16 (f32 accumulation inside the kernel)
    x_c = x.astype(compute_dtype)
    w_in = params["w_in"].astype(compute_dtype)
    wo = params["wo"].astype(compute_dtype)

    kernel = partial(
        _set_transformer_kernel,
        num_layers=num_layers, num_heads=num_heads, hidden_dim=H,
        seq_len=S, block_batch=TB, compute_dtype=compute_dtype)

    def full(shape):
        n = len(shape)
        return pl.BlockSpec(shape, lambda b: (0,) * n)

    out = pl.pallas_call(
        kernel,
        out_shape=jax.ShapeDtypeStruct((B_pad, H), jnp.float32),
        grid=(grid_len,),
        in_specs=[
            pl.BlockSpec((TB, S, Din), lambda b: (b, 0, 0)),   # x
            pl.BlockSpec((TB, S), lambda b: (b, 0)),           # mask
            full((Din, H)),                                    # w_in
            full((1, H)),                                      # b_in
            full((num_layers, H, 3 * H)),                      # wqkv
            full((num_layers, 1, 3 * H)),                      # bqkv
            full((num_layers, H, H)),                          # wo
            full((num_layers, 1, H)),                          # bo
            full((num_layers, 1, H)),                          # ln_w
            full((num_layers, 1, H)),                          # ln_b
            full((1, H)),                                      # out_norm w
            full((1, H)),                                      # out_norm b
        ],
        out_specs=pl.BlockSpec((TB, H), lambda b: (b, 0)),
        compiler_params=pltpu.CompilerParams(
            dimension_semantics=("parallel",),
            vmem_limit_bytes=_vmem_limit_bytes(
                TB, S, Din, H, num_layers, compute_dtype)),
    )(
        x_c, mask_f,
        w_in, params["b_in"],
        wqkv, bqkv,
        wo, params["bo"],
        params["lnw"], params["lnb"],
        params["onw"], params["onb"],
    )
    return out[:B]


# --------------------- Deterministic parameter init --------------------------


def init_params(key, input_dim, hidden_dim, num_layers):
    ks = jax.random.split(key, 8)
    sc = 0.1
    H = hidden_dim
    # NOTE: PyTorch Linear stores weight as (out, in); we store the transpose
    # (in, out) so the kernel computes x @ W + b.
    return {
        "w_in": sc * jax.random.normal(ks[0], (input_dim, H), jnp.float32),
        "b_in": sc * jax.random.normal(ks[1], (1, H), jnp.float32),
        "wqkv": sc * jax.random.normal(ks[2], (num_layers, H, 3 * H), jnp.float32),
        "bqkv": sc * jax.random.normal(ks[3], (num_layers, 1, 3 * H), jnp.float32),
        "wo":   sc * jax.random.normal(ks[4], (num_layers, H, H), jnp.float32),
        "bo":   sc * jax.random.normal(ks[5], (num_layers, 1, H), jnp.float32),
        "lnw":  jnp.ones((num_layers, 1, H), jnp.float32),
        "lnb":  jnp.zeros((num_layers, 1, H), jnp.float32),
        "onw":  jnp.ones((1, H), jnp.float32),
        "onb":  jnp.zeros((1, H), jnp.float32),
    }


# ------------------------- Pure-JAX reference (f32) ---------------------------


def reference_forward(x, params, mask=None, *, num_heads, num_layers):
    H = params["w_in"].shape[1]
    hd = H // num_heads

    def ln(z, w, b, eps=1e-5):
        mu = z.mean(-1, keepdims=True)
        var = ((z - mu) ** 2).mean(-1, keepdims=True)
        return (z - mu) / jnp.sqrt(var + eps) * w + b

    h = x @ params["w_in"] + params["b_in"]                  # (B,S,H)
    for l in range(num_layers):
        qkv = h @ params["wqkv"][l] + params["bqkv"][l]
        q, k, v = jnp.split(qkv, 3, axis=-1)
        B, S, _ = q.shape
        qh = q.reshape(B, S, num_heads, hd).transpose(0, 2, 1, 3)
        kh = k.reshape(B, S, num_heads, hd).transpose(0, 2, 1, 3)
        vh = v.reshape(B, S, num_heads, hd).transpose(0, 2, 1, 3)
        s = jnp.einsum("bhqd,bhkd->bhqk", qh, kh) / math.sqrt(hd)
        p = jax.nn.softmax(s, axis=-1)
        o = jnp.einsum("bhqk,bhkd->bhqd", p, vh)
        o = o.transpose(0, 2, 1, 3).reshape(B, S, H)
        o = o @ params["wo"][l] + params["bo"][l]
        h = ln(h + o, params["lnw"][l], params["lnb"][l])
    h = ln(h, params["onw"], params["onb"])
    if mask is None:
        return h.mean(axis=1)
    m = mask.astype(jnp.float32)
    return (h * m[..., None]).sum(1) / m.sum(1, keepdims=True)


# --------------------------------- Main ---------------------------------------


if __name__ == "__main__":
    B, S = 2, 8
    input_dim, hidden_dim = 16, 32
    num_heads, num_layers = 4, 2

    key = jax.random.PRNGKey(0)
    kx, kp, km = jax.random.split(key, 3)
    x = jax.random.normal(kx, (B, S, input_dim), jnp.float32)
    params = init_params(kp, input_dim, hidden_dim, num_layers)

    # tolerance reflects bf16 matmul operands (f32 accumulation) vs f32 reference
    atol = rtol = 5e-2

    # mask=None path (plain mean over sequence)
    out = set_transformer_forward(
        x, params, mask=None, num_heads=num_heads, num_layers=num_layers)
    out = jax.block_until_ready(out)
    ref = reference_forward(
        x, params, mask=None, num_heads=num_heads, num_layers=num_layers)
    assert out.shape == (B, hidden_dim)
    assert jnp.allclose(out, ref, atol=atol, rtol=rtol), (out, ref)

    # masked-mean path (at least one valid token per row)
    mask = jax.random.bernoulli(km, 0.7, (B, S)).at[:, 0].set(True)
    out_m = jax.block_until_ready(set_transformer_forward(
        x, params, mask=mask, num_heads=num_heads, num_layers=num_layers))
    ref_m = reference_forward(
        x, params, mask=mask, num_heads=num_heads, num_layers=num_layers)
    assert jnp.allclose(out_m, ref_m, atol=atol, rtol=rtol), (out_m, ref_m)

    print("KERNEL_OK")
</pallas_src>

<mosaic_0001>
module attributes {stable_mosaic.version = 11 : i64} {
  func.func @_set_transformer_kernel(%arg0: i32, %arg1: memref<8x8x16xbf16, #tpu.memory_space<vmem>>, %arg2: memref<8x8xf32, #tpu.memory_space<vmem>>, %arg3: memref<16x32xbf16, #tpu.memory_space<vmem>>, %arg4: memref<1x32xf32, #tpu.memory_space<vmem>>, %arg5: memref<2x32x96xbf16, #tpu.memory_space<vmem>>, %arg6: memref<2x1x96xf32, #tpu.memory_space<vmem>>, %arg7: memref<2x32x32xbf16, #tpu.memory_space<vmem>>, %arg8: memref<2x1x32xf32, #tpu.memory_space<vmem>>, %arg9: memref<2x1x32xf32, #tpu.memory_space<vmem>>, %arg10: memref<2x1x32xf32, #tpu.memory_space<vmem>>, %arg11: memref<1x32xf32, #tpu.memory_space<vmem>>, %arg12: memref<1x32xf32, #tpu.memory_space<vmem>>, %arg13: memref<8x32xf32, #tpu.memory_space<vmem>>) attributes {dimension_semantics = [#tpu.dimension_semantics<parallel>], iteration_bounds = array<i64: 1>, scalar_prefetch = 0 : i64, scratch_operands = 0 : i64, tpu.core_type = #tpu.core_type<tc>, window_params = [{transform_indices = @transform_0, window_bounds = array<i64: 8, 8, 16>}, {transform_indices = @transform_1, window_bounds = array<i64: 8, 8>}, {pipeline_mode = #tpu.pipeline_mode<synchronous>, transform_indices = @transform_2, window_bounds = array<i64: 16, 32>}, {pipeline_mode = #tpu.pipeline_mode<synchronous>, transform_indices = @transform_3, window_bounds = array<i64: 1, 32>}, {pipeline_mode = #tpu.pipeline_mode<synchronous>, transform_indices = @transform_4, window_bounds = array<i64: 2, 32, 96>}, {pipeline_mode = #tpu.pipeline_mode<synchronous>, transform_indices = @transform_5, window_bounds = array<i64: 2, 1, 96>}, {pipeline_mode = #tpu.pipeline_mode<synchronous>, transform_indices = @transform_6, window_bounds = array<i64: 2, 32, 32>}, {pipeline_mode = #tpu.pipeline_mode<synchronous>, transform_indices = @transform_7, window_bounds = array<i64: 2, 1, 32>}, {pipeline_mode = #tpu.pipeline_mode<synchronous>, transform_indices = @transform_8, window_bounds = array<i64: 2, 1, 32>}, {pipeline_mode = #tpu.pipeline_mode<synchronous>, transform_indices = @transform_9, window_bounds = array<i64: 2, 1, 32>}, {pipeline_mode = #tpu.pipeline_mode<synchronous>, transform_indices = @transform_10, window_bounds = array<i64: 1, 32>}, {pipeline_mode = #tpu.pipeline_mode<synchronous>, transform_indices = @transform_11, window_bounds = array<i64: 1, 32>}, {transform_indices = @transform_12, window_bounds = array<i64: 8, 32>}]} {
    %c0 = arith.constant 0 : index
    %c0_0 = arith.constant 0 : index
    %c0_1 = arith.constant 0 : index
    %0 = vector.load %arg1[%c0, %c0_0, %c0_1] : memref<8x8x16xbf16, #tpu.memory_space<vmem>>, vector<8x8x16xbf16>
    %1 = vector.shape_cast %0 : vector<8x8x16xbf16> to vector<64x16xbf16>
    %c0_2 = arith.constant 0 : index
    %c0_3 = arith.constant 0 : index
    %2 = vector.load %arg3[%c0_2, %c0_3] : memref<16x32xbf16, #tpu.memory_space<vmem>>, vector<16x32xbf16>
    %cst = arith.constant dense<0.000000e+00> : vector<64x32xf32>
    %3 = tpu.matmul %1, %2, %cst {dimension_numbers = #tpu.dot_dimension_numbers<[1], [0], [0], [1], [0, 0, 1, 1], [], []>} : vector<64x16xbf16>, vector<16x32xbf16>, vector<64x32xf32> -> vector<64x32xf32>
    %c0_4 = arith.constant 0 : index
    %c0_5 = arith.constant 0 : index
    %4 = vector.load %arg4[%c0_4, %c0_5] : memref<1x32xf32, #tpu.memory_space<vmem>>, vector<1x32xf32>
    %5 = vector.broadcast %4 : vector<1x32xf32> to vector<64x32xf32>
    %6 = arith.addf %3, %5 : vector<64x32xf32>
    %7 = arith.truncf %6 : vector<64x32xf32> to vector<64x32xbf16>
    %c0_6 = arith.constant 0 : index
    %c0_7 = arith.constant 0 : index
    %c0_8 = arith.constant 0 : index
    %8 = vector.load %arg5[%c0_6, %c0_7, %c0_8] : memref<2x32x96xbf16, #tpu.memory_space<vmem>>, vector<1x32x96xbf16>
    %9 = vector.shape_cast %8 : vector<1x32x96xbf16> to vector<32x96xbf16>
    %cst_9 = arith.constant dense<0.000000e+00> : vector<64x96xf32>
    %10 = tpu.matmul %7, %9, %cst_9 {dimension_numbers = #tpu.dot_dimension_numbers<[1], [0], [0], [1], [0, 0, 1, 1], [], []>} : vector<64x32xbf16>, vector<32x96xbf16>, vector<64x96xf32> -> vector<64x96xf32>
    %c0_10 = arith.constant 0 : index
    %c0_11 = arith.constant 0 : index
    %c0_12 = arith.constant 0 : index
    %11 = vector.load %arg6[%c0_10, %c0_11, %c0_12] : memref<2x1x96xf32, #tpu.memory_space<vmem>>, vector<1x1x96xf32>
    %12 = vector.shape_cast %11 : vector<1x1x96xf32> to vector<1x96xf32>
    %13 = vector.broadcast %12 : vector<1x96xf32> to vector<64x96xf32>
    %14 = arith.addf %10, %13 : vector<64x96xf32>
    %15 = vector.shape_cast %14 : vector<64x96xf32> to vector<8x8x96xf32>
    %16 = vector.extract_strided_slice %15 {offsets = [0, 0, 0], sizes = [8, 8, 8], strides = [1, 1, 1]} : vector<8x8x96xf32> to vector<8x8x8xf32>
    %17 = arith.truncf %16 : vector<8x8x8xf32> to vector<8x8x8xbf16>
    %18 = vector.extract_strided_slice %15 {offsets = [0, 0, 32], sizes = [8, 8, 8], strides = [1, 1, 1]} : vector<8x8x96xf32> to vector<8x8x8xf32>
    %19 = arith.truncf %18 : vector<8x8x8xf32> to vector<8x8x8xbf16>
    %20 = vector.extract_strided_slice %15 {offsets = [0, 0, 64], sizes = [8, 8, 8], strides = [1, 1, 1]} : vector<8x8x96xf32> to vector<8x8x8xf32>
    %21 = arith.truncf %20 : vector<8x8x8xf32> to vector<8x8x8xbf16>
    "tpu.trace_start"() <{level = 10 : i32, message = "bqd,bkd->bqk"}> : () -> ()
    %cst_13 = arith.constant dense<0.000000e+00> : vector<8x8x8xf32>
    %22 = tpu.matmul %17, %19, %cst_13 {dimension_numbers = #tpu.dot_dimension_numbers<[2], [2], [1], [1], [0, 0, 0, 1, 1, 1], [0], [0]>} : vector<8x8x8xbf16>, vector<8x8x8xbf16>, vector<8x8x8xf32> -> vector<8x8x8xf32>
    "tpu.trace_stop"() : () -> ()
    %cst_14 = arith.constant dense<0xFF800000> : vector<8x8xf32>
    %23 = vector.multi_reduction <maximumf>, %22, %cst_14 [2] : vector<8x8x8xf32> to vector<8x8xf32>
    %24 = vector.shape_cast %23 : vector<8x8xf32> to vector<8x8x1xf32>
    %25 = vector.broadcast %24 : vector<8x8x1xf32> to vector<8x8x8xf32>
    %26 = arith.subf %22, %25 : vector<8x8x8xf32>
    %27 = math.exp %26 : vector<8x8x8xf32>
    %cst_15 = arith.constant dense<0.000000e+00> : vector<8x8xf32>
    %28 = vector.multi_reduction <add>, %27, %cst_15 [2] : vector<8x8x8xf32> to vector<8x8xf32>
    %29 = vector.shape_cast %28 : vector<8x8xf32> to vector<8x8x1xf32>
    %30 = arith.truncf %27 : vector<8x8x8xf32> to vector<8x8x8xbf16>
    "tpu.trace_start"() <{level = 10 : i32, message = "bqk,bkd->bqd"}> : () -> ()
    %cst_16 = arith.constant dense<0.000000e+00> : vector<8x8x8xf32>
    %31 = tpu.matmul %30, %21, %cst_16 {dimension_numbers = #tpu.dot_dimension_numbers<[2], [1], [1], [2], [0, 0, 0, 1, 1, 2], [0], [0]>} : vector<8x8x8xbf16>, vector<8x8x8xbf16>, vector<8x8x8xf32> -> vector<8x8x8xf32>
    "tpu.trace_stop"() : () -> ()
    %32 = tpu.reciprocal %29 {approx = true} : vector<8x8x1xf32> -> vector<8x8x1xf32>
    %33 = vector.broadcast %32 : vector<8x8x1xf32> to vector<8x8x8xf32>
    %34 = arith.mulf %31, %33 : vector<8x8x8xf32>
    %35 = vector.extract_strided_slice %15 {offsets = [0, 0, 8], sizes = [8, 8, 8], strides = [1, 1, 1]} : vector<8x8x96xf32> to vector<8x8x8xf32>
    %36 = arith.truncf %35 : vector<8x8x8xf32> to vector<8x8x8xbf16>
    %37 = vector.extract_strided_slice %15 {offsets = [0, 0, 40], sizes = [8, 8, 8], strides = [1, 1, 1]} : vector<8x8x96xf32> to vector<8x8x8xf32>
    %38 = arith.truncf %37 : vector<8x8x8xf32> to vector<8x8x8xbf16>
    %39 = vector.extract_strided_slice %15 {offsets = [0, 0, 72], sizes = [8, 8, 8], strides = [1, 1, 1]} : vector<8x8x96xf32> to vector<8x8x8xf32>
    %40 = arith.truncf %39 : vector<8x8x8xf32> to vector<8x8x8xbf16>
    "tpu.trace_start"() <{level = 10 : i32, message = "bqd,bkd->bqk"}> : () -> ()
    %cst_17 = arith.constant dense<0.000000e+00> : vector<8x8x8xf32>
    %41 = tpu.matmul %36, %38, %cst_17 {dimension_numbers = #tpu.dot_dimension_numbers<[2], [2], [1], [1], [0, 0, 0, 1, 1, 1], [0], [0]>} : vector<8x8x8xbf16>, vector<8x8x8xbf16>, vector<8x8x8xf32> -> vector<8x8x8xf32>
    "tpu.trace_stop"() : () -> ()
    %cst_18 = arith.constant dense<0xFF800000> : vector<8x8xf32>
    %42 = vector.multi_reduction <maximumf>, %41, %cst_18 [2] : vector<8x8x8xf32> to vector<8x8xf32>
    %43 = vector.shape_cast %42 : vector<8x8xf32> to vector<8x8x1xf32>
    %44 = vector.broadcast %43 : vector<8x8x1xf32> to vector<8x8x8xf32>
    %45 = arith.subf %41, %44 : vector<8x8x8xf32>
    %46 = math.exp %45 : vector<8x8x8xf32>
    %cst_19 = arith.constant dense<0.000000e+00> : vector<8x8xf32>
    %47 = vector.multi_reduction <add>, %46, %cst_19 [2] : vector<8x8x8xf32> to vector<8x8xf32>
    %48 = vector.shape_cast %47 : vector<8x8xf32> to vector<8x8x1xf32>
    %49 = arith.truncf %46 : vector<8x8x8xf32> to vector<8x8x8xbf16>
    "tpu.trace_start"() <{level = 10 : i32, message = "bqk,bkd->bqd"}> : () -> ()
    %cst_20 = arith.constant dense<0.000000e+00> : vector<8x8x8xf32>
    %50 = tpu.matmul %49, %40, %cst_20 {dimension_numbers = #tpu.dot_dimension_numbers<[2], [1], [1], [2], [0, 0, 0, 1, 1, 2], [0], [0]>} : vector<8x8x8xbf16>, vector<8x8x8xbf16>, vector<8x8x8xf32> -> vector<8x8x8xf32>
    "tpu.trace_stop"() : () -> ()
    %51 = tpu.reciprocal %48 {approx = true} : vector<8x8x1xf32> -> vector<8x8x1xf32>
    %52 = vector.broadcast %51 : vector<8x8x1xf32> to vector<8x8x8xf32>
    %53 = arith.mulf %50, %52 : vector<8x8x8xf32>
    %54 = vector.extract_strided_slice %15 {offsets = [0, 0, 16], sizes = [8, 8, 8], strides = [1, 1, 1]} : vector<8x8x96xf32> to vector<8x8x8xf32>
    %55 = arith.truncf %54 : vector<8x8x8xf32> to vector<8x8x8xbf16>
    %56 = vector.extract_strided_slice %15 {offsets = [0, 0, 48], sizes = [8, 8, 8], strides = [1, 1, 1]} : vector<8x8x96xf32> to vector<8x8x8xf32>
    %57 = arith.truncf %56 : vector<8x8x8xf32> to vector<8x8x8xbf16>
    %58 = vector.extract_strided_slice %15 {offsets = [0, 0, 80], sizes = [8, 8, 8], strides = [1, 1, 1]} : vector<8x8x96xf32> to vector<8x8x8xf32>
    %59 = arith.truncf %58 : vector<8x8x8xf32> to vector<8x8x8xbf16>
    "tpu.trace_start"() <{level = 10 : i32, message = "bqd,bkd->bqk"}> : () -> ()
    %cst_21 = arith.constant dense<0.000000e+00> : vector<8x8x8xf32>
    %60 = tpu.matmul %55, %57, %cst_21 {dimension_numbers = #tpu.dot_dimension_numbers<[2], [2], [1], [1], [0, 0, 0, 1, 1, 1], [0], [0]>} : vector<8x8x8xbf16>, vector<8x8x8xbf16>, vector<8x8x8xf32> -> vector<8x8x8xf32>
    "tpu.trace_stop"() : () -> ()
    %cst_22 = arith.constant dense<0xFF800000> : vector<8x8xf32>
    %61 = vector.multi_reduction <maximumf>, %60, %cst_22 [2] : vector<8x8x8xf32> to vector<8x8xf32>
    %62 = vector.shape_cast %61 : vector<8x8xf32> to vector<8x8x1xf32>
    %63 = vector.broadcast %62 : vector<8x8x1xf32> to vector<8x8x8xf32>
    %64 = arith.subf %60, %63 : vector<8x8x8xf32>
    %65 = math.exp %64 : vector<8x8x8xf32>
    %cst_23 = arith.constant dense<0.000000e+00> : vector<8x8xf32>
    %66 = vector.multi_reduction <add>, %65, %cst_23 [2] : vector<8x8x8xf32> to vector<8x8xf32>
    %67 = vector.shape_cast %66 : vector<8x8xf32> to vector<8x8x1xf32>
    %68 = arith.truncf %65 : vector<8x8x8xf32> to vector<8x8x8xbf16>
    "tpu.trace_start"() <{level = 10 : i32, message = "bqk,bkd->bqd"}> : () -> ()
    %cst_24 = arith.constant dense<0.000000e+00> : vector<8x8x8xf32>
    %69 = tpu.matmul %68, %59, %cst_24 {dimension_numbers = #tpu.dot_dimension_numbers<[2], [1], [1], [2], [0, 0, 0, 1, 1, 2], [0], [0]>} : vector<8x8x8xbf16>, vector<8x8x8xbf16>, vector<8x8x8xf32> -> vector<8x8x8xf32>
    "tpu.trace_stop"() : () -> ()
    %70 = tpu.reciprocal %67 {approx = true} : vector<8x8x1xf32> -> vector<8x8x1xf32>
    %71 = vector.broadcast %70 : vector<8x8x1xf32> to vector<8x8x8xf32>
    %72 = arith.mulf %69, %71 : vector<8x8x8xf32>
    %73 = vector.extract_strided_slice %15 {offsets = [0, 0, 24], sizes = [8, 8, 8], strides = [1, 1, 1]} : vector<8x8x96xf32> to vector<8x8x8xf32>
    %74 = arith.truncf %73 : vector<8x8x8xf32> to vector<8x8x8xbf16>
    %75 = vector.extract_strided_slice %15 {offsets = [0, 0, 56], sizes = [8, 8, 8], strides = [1, 1, 1]} : vector<8x8x96xf32> to vector<8x8x8xf32>
    %76 = arith.truncf %75 : vector<8x8x8xf32> to vector<8x8x8xbf16>
    %77 = vector.extract_strided_slice %15 {offsets = [0, 0, 88], sizes = [8, 8, 8], strides = [1, 1, 1]} : vector<8x8x96xf32> to vector<8x8x8xf32>
    %78 = arith.truncf %77 : vector<8x8x8xf32> to vector<8x8x8xbf16>
    "tpu.trace_start"() <{level = 10 : i32, message = "bqd,bkd->bqk"}> : () -> ()
    %cst_25 = arith.constant dense<0.000000e+00> : vector<8x8x8xf32>
    %79 = tpu.matmul %74, %76, %cst_25 {dimension_numbers = #tpu.dot_dimension_numbers<[2], [2], [1], [1], [0, 0, 0, 1, 1, 1], [0], [0]>} : vector<8x8x8xbf16>, vector<8x8x8xbf16>, vector<8x8x8xf32> -> vector<8x8x8xf32>
    "tpu.trace_stop"() : () -> ()
    %cst_26 = arith.constant dense<0xFF800000> : vector<8x8xf32>
    %80 = vector.multi_reduction <maximumf>, %79, %cst_26 [2] : vector<8x8x8xf32> to vector<8x8xf32>
    %81 = vector.shape_cast %80 : vector<8x8xf32> to vector<8x8x1xf32>
    %82 = vector.broadcast %81 : vector<8x8x1xf32> to vector<8x8x8xf32>
    %83 = arith.subf %79, %82 : vector<8x8x8xf32>
    %84 = math.exp %83 : vector<8x8x8xf32>
    %cst_27 = arith.constant dense<0.000000e+00> : vector<8x8xf32>
    %85 = vector.multi_reduction <add>, %84, %cst_27 [2] : vector<8x8x8xf32> to vector<8x8xf32>
    %86 = vector.shape_cast %85 : vector<8x8xf32> to vector<8x8x1xf32>
    %87 = arith.truncf %84 : vector<8x8x8xf32> to vector<8x8x8xbf16>
    "tpu.trace_start"() <{level = 10 : i32, message = "bqk,bkd->bqd"}> : () -> ()
    %cst_28 = arith.constant dense<0.000000e+00> : vector<8x8x8xf32>
    %88 = tpu.matmul %87, %78, %cst_28 {dimension_numbers = #tpu.dot_dimension_numbers<[2], [1], [1], [2], [0, 0, 0, 1, 1, 2], [0], [0]>} : vector<8x8x8xbf16>, vector<8x8x8xbf16>, vector<8x8x8xf32> -> vector<8x8x8xf32>
    "tpu.trace_stop"() : () -> ()
    %89 = tpu.reciprocal %86 {approx = true} : vector<8x8x1xf32> -> vector<8x8x1xf32>
    %90 = vector.broadcast %89 : vector<8x8x1xf32> to vector<8x8x8xf32>
    %91 = arith.mulf %88, %90 : vector<8x8x8xf32>
    %92 = tpu.concatenate %34, %53, %72, %91 in 2 : vector<8x8x8xf32>, vector<8x8x8xf32>, vector<8x8x8xf32>, vector<8x8x8xf32> -> vector<8x8x32xf32>
    %93 = vector.shape_cast %92 : vector<8x8x32xf32> to vector<64x32xf32>
    %94 = arith.truncf %93 : vector<64x32xf32> to vector<64x32xbf16>
    %c0_29 = arith.constant 0 : index
    %c0_30 = arith.constant 0 : index
    %c0_31 = arith.constant 0 : index
    %95 = vector.load %arg7[%c0_29, %c0_30, %c0_31] : memref<2x32x32xbf16, #tpu.memory_space<vmem>>, vector<1x32x32xbf16>
    %96 = vector.shape_cast %95 : vector<1x32x32xbf16> to vector<32x32xbf16>
    %cst_32 = arith.constant dense<0.000000e+00> : vector<64x32xf32>
    %97 = tpu.matmul %94, %96, %cst_32 {dimension_numbers = #tpu.dot_dimension_numbers<[1], [0], [0], [1], [0, 0, 1, 1], [], []>} : vector<64x32xbf16>, vector<32x32xbf16>, vector<64x32xf32> -> vector<64x32xf32>
    %c0_33 = arith.constant 0 : index
    %c0_34 = arith.constant 0 : index
    %c0_35 = arith.constant 0 : index
    %98 = vector.load %arg8[%c0_33, %c0_34, %c0_35] : memref<2x1x32xf32, #tpu.memory_space<vmem>>, vector<1x1x32xf32>
    %99 = vector.shape_cast %98 : vector<1x1x32xf32> to vector<1x32xf32>
    %100 = vector.broadcast %99 : vector<1x32xf32> to vector<64x32xf32>
    %101 = arith.addf %97, %100 : vector<64x32xf32>
    %102 = arith.addf %6, %101 : vector<64x32xf32>
    %c0_36 = arith.constant 0 : index
    %c0_37 = arith.constant 0 : index
    %c0_38 = arith.constant 0 : index
    %103 = vector.load %arg9[%c0_36, %c0_37, %c0_38] : memref<2x1x32xf32, #tpu.memory_space<vmem>>, vector<1x1x32xf32>
    %104 = vector.shape_cast %103 : vector<1x1x32xf32> to vector<1x32xf32>
    %c0_39 = arith.constant 0 : index
    %c0_40 = arith.constant 0 : index
    %c0_41 = arith.constant 0 : index
    %105 = vector.load %arg10[%c0_39, %c0_40, %c0_41] : memref<2x1x32xf32, #tpu.memory_space<vmem>>, vector<1x1x32xf32>
    %106 = vector.shape_cast %105 : vector<1x1x32xf32> to vector<1x32xf32>
    %cst_42 = arith.constant dense<0.000000e+00> : vector<64xf32>
    %107 = vector.multi_reduction <add>, %102, %cst_42 [1] : vector<64x32xf32> to vector<64xf32>
    %108 = vector.shape_cast %107 : vector<64xf32> to vector<64x1xf32>
    %cst_43 = arith.constant 3.200000e+01 : f32
    %109 = vector.broadcast %cst_43 : f32 to vector<64x1xf32>
    %110 = arith.divf %108, %109 : vector<64x1xf32>
    %111 = vector.broadcast %110 : vector<64x1xf32> to vector<64x32xf32>
    %112 = arith.subf %102, %111 : vector<64x32xf32>
    %113 = arith.mulf %112, %112 : vector<64x32xf32>
    %cst_44 = arith.constant dense<0.000000e+00> : vector<64xf32>
    %114 = vector.multi_reduction <add>, %113, %cst_44 [1] : vector<64x32xf32> to vector<64xf32>
    %115 = vector.shape_cast %114 : vector<64xf32> to vector<64x1xf32>
    %cst_45 = arith.constant 3.200000e+01 : f32
    %116 = vector.broadcast %cst_45 : f32 to vector<64x1xf32>
    %117 = arith.divf %115, %116 : vector<64x1xf32>
    %118 = vector.broadcast %110 : vector<64x1xf32> to vector<64x32xf32>
    %119 = arith.subf %102, %118 : vector<64x32xf32>
    %cst_46 = arith.constant 9.99999974E-6 : f32
    %120 = vector.broadcast %cst_46 : f32 to vector<64x1xf32>
    %121 = arith.addf %117, %120 : vector<64x1xf32>
    %122 = math.rsqrt %121 : vector<64x1xf32>
    %123 = vector.broadcast %122 : vector<64x1xf32> to vector<64x32xf32>
    %124 = arith.mulf %119, %123 : vector<64x32xf32>
    %125 = vector.broadcast %104 : vector<1x32xf32> to vector<64x32xf32>
    %126 = arith.mulf %124, %125 : vector<64x32xf32>
    %127 = vector.broadcast %106 : vector<1x32xf32> to vector<64x32xf32>
    %128 = arith.addf %126, %127 : vector<64x32xf32>
    %129 = arith.truncf %128 : vector<64x32xf32> to vector<64x32xbf16>
    %c1 = arith.constant 1 : index
    %c0_47 = arith.constant 0 : index
    %c0_48 = arith.constant 0 : index
    %130 = vector.load %arg5[%c1, %c0_47, %c0_48] : memref<2x32x96xbf16, #tpu.memory_space<vmem>>, vector<1x32x96xbf16>
    %131 = vector.shape_cast %130 : vector<1x32x96xbf16> to vector<32x96xbf16>
    %cst_49 = arith.constant dense<0.000000e+00> : vector<64x96xf32>
    %132 = tpu.matmul %129, %131, %cst_49 {dimension_numbers = #tpu.dot_dimension_numbers<[1], [0], [0], [1], [0, 0, 1, 1], [], []>} : vector<64x32xbf16>, vector<32x96xbf16>, vector<64x96xf32> -> vector<64x96xf32>
    %c1_50 = arith.constant 1 : index
    %c0_51 = arith.constant 0 : index
    %c0_52 = arith.constant 0 : index
    %133 = vector.load %arg6[%c1_50, %c0_51, %c0_52] : memref<2x1x96xf32, #tpu.memory_space<vmem>>, vector<1x1x96xf32>
    %134 = vector.shape_cast %133 : vector<1x1x96xf32> to vector<1x96xf32>
    %135 = vector.broadcast %134 : vector<1x96xf32> to vector<64x96xf32>
    %136 = arith.addf %132, %135 : vector<64x96xf32>
    %137 = vector.shape_cast %136 : vector<64x96xf32> to vector<8x8x96xf32>
    %138 = vector.extract_strided_slice %137 {offsets = [0, 0, 0], sizes = [8, 8, 8], strides = [1, 1, 1]} : vector<8x8x96xf32> to vector<8x8x8xf32>
    %139 = arith.truncf %138 : vector<8x8x8xf32> to vector<8x8x8xbf16>
    %140 = vector.extract_strided_slice %137 {offsets = [0, 0, 32], sizes = [8, 8, 8], strides = [1, 1, 1]} : vector<8x8x96xf32> to vector<8x8x8xf32>
    %141 = arith.truncf %140 : vector<8x8x8xf32> to vector<8x8x8xbf16>
    %142 = vector.extract_strided_slice %137 {offsets = [0, 0, 64], sizes = [8, 8, 8], strides = [1, 1, 1]} : vector<8x8x96xf32> to vector<8x8x8xf32>
    %143 = arith.truncf %142 : vector<8x8x8xf32> to vector<8x8x8xbf16>
    "tpu.trace_start"() <{level = 10 : i32, message = "bqd,bkd->bqk"}> : () -> ()
    %cst_53 = arith.constant dense<0.000000e+00> : vector<8x8x8xf32>
    %144 = tpu.matmul %139, %141, %cst_53 {dimension_numbers = #tpu.dot_dimension_numbers<[2], [2], [1], [1], [0, 0, 0, 1, 1, 1], [0], [0]>} : vector<8x8x8xbf16>, vector<8x8x8xbf16>, vector<8x8x8xf32> -> vector<8x8x8xf32>
    "tpu.trace_stop"() : () -> ()
    %cst_54 = arith.constant dense<0xFF800000> : vector<8x8xf32>
    %145 = vector.multi_reduction <maximumf>, %144, %cst_54 [2] : vector<8x8x8xf32> to vector<8x8xf32>
    %146 = vector.shape_cast %145 : vector<8x8xf32> to vector<8x8x1xf32>
    %147 = vector.broadcast %146 : vector<8x8x1xf32> to vector<8x8x8xf32>
    %148 = arith.subf %144, %147 : vector<8x8x8xf32>
    %149 = math.exp %148 : vector<8x8x8xf32>
    %cst_55 = arith.constant dense<0.000000e+00> : vector<8x8xf32>
    %150 = vector.multi_reduction <add>, %149, %cst_55 [2] : vector<8x8x8xf32> to vector<8x8xf32>
    %151 = vector.shape_cast %150 : vector<8x8xf32> to vector<8x8x1xf32>
    %152 = arith.truncf %149 : vector<8x8x8xf32> to vector<8x8x8xbf16>
    "tpu.trace_start"() <{level = 10 : i32, message = "bqk,bkd->bqd"}> : () -> ()
    %cst_56 = arith.constant dense<0.000000e+00> : vector<8x8x8xf32>
    %153 = tpu.matmul %152, %143, %cst_56 {dimension_numbers = #tpu.dot_dimension_numbers<[2], [1], [1], [2], [0, 0, 0, 1, 1, 2], [0], [0]>} : vector<8x8x8xbf16>, vector<8x8x8xbf16>, vector<8x8x8xf32> -> vector<8x8x8xf32>
    "tpu.trace_stop"() : () -> ()
    %154 = tpu.reciprocal %151 {approx = true} : vector<8x8x1xf32> -> vector<8x8x1xf32>
    %155 = vector.broadcast %154 : vector<8x8x1xf32> to vector<8x8x8xf32>
    %156 = arith.mulf %153, %155 : vector<8x8x8xf32>
    %157 = vector.extract_strided_slice %137 {offsets = [0, 0, 8], sizes = [8, 8, 8], strides = [1, 1, 1]} : vector<8x8x96xf32> to vector<8x8x8xf32>
    %158 = arith.truncf %157 : vector<8x8x8xf32> to vector<8x8x8xbf16>
    %159 = vector.extract_strided_slice %137 {offsets = [0, 0, 40], sizes = [8, 8, 8], strides = [1, 1, 1]} : vector<8x8x96xf32> to vector<8x8x8xf32>
    %160 = arith.truncf %159 : vector<8x8x8xf32> to vector<8x8x8xbf16>
    %161 = vector.extract_strided_slice %137 {offsets = [0, 0, 72], sizes = [8, 8, 8], strides = [1, 1, 1]} : vector<8x8x96xf32> to vector<8x8x8xf32>
    %162 = arith.truncf %161 : vector<8x8x8xf32> to vector<8x8x8xbf16>
    "tpu.trace_start"() <{level = 10 : i32, message = "bqd,bkd->bqk"}> : () -> ()
    %cst_57 = arith.constant dense<0.000000e+00> : vector<8x8x8xf32>
    %163 = tpu.matmul %158, %160, %cst_57 {dimension_numbers = #tpu.dot_dimension_numbers<[2], [2], [1], [1], [0, 0, 0, 1, 1, 1], [0], [0]>} : vector<8x8x8xbf16>, vector<8x8x8xbf16>, vector<8x8x8xf32> -> vector<8x8x8xf32>
    "tpu.trace_stop"() : () -> ()
    %cst_58 = arith.constant dense<0xFF800000> : vector<8x8xf32>
    %164 = vector.multi_reduction <maximumf>, %163, %cst_58 [2] : vector<8x8x8xf32> to vector<8x8xf32>
    %165 = vector.shape_cast %164 : vector<8x8xf32> to vector<8x8x1xf32>
    %166 = vector.broadcast %165 : vector<8x8x1xf32> to vector<8x8x8xf32>
    %167 = arith.subf %163, %166 : vector<8x8x8xf32>
    %168 = math.exp %167 : vector<8x8x8xf32>
    %cst_59 = arith.constant dense<0.000000e+00> : vector<8x8xf32>
    %169 = vector.multi_reduction <add>, %168, %cst_59 [2] : vector<8x8x8xf32> to vector<8x8xf32>
    %170 = vector.shape_cast %169 : vector<8x8xf32> to vector<8x8x1xf32>
    %171 = arith.truncf %168 : vector<8x8x8xf32> to vector<8x8x8xbf16>
    "tpu.trace_start"() <{level = 10 : i32, message = "bqk,bkd->bqd"}> : () -> ()
    %cst_60 = arith.constant dense<0.000000e+00> : vector<8x8x8xf32>
    %172 = tpu.matmul %171, %162, %cst_60 {dimension_numbers = #tpu.dot_dimension_numbers<[2], [1], [1], [2], [0, 0, 0, 1, 1, 2], [0], [0]>} : vector<8x8x8xbf16>, vector<8x8x8xbf16>, vector<8x8x8xf32> -> vector<8x8x8xf32>
    "tpu.trace_stop"() : () -> ()
    %173 = tpu.reciprocal %170 {approx = true} : vector<8x8x1xf32> -> vector<8x8x1xf32>
    %174 = vector.broadcast %173 : vector<8x8x1xf32> to vector<8x8x8xf32>
    %175 = arith.mulf %172, %174 : vector<8x8x8xf32>
    %176 = vector.extract_strided_slice %137 {offsets = [0, 0, 16], sizes = [8, 8, 8], strides = [1, 1, 1]} : vector<8x8x96xf32> to vector<8x8x8xf32>
    %177 = arith.truncf %176 : vector<8x8x8xf32> to vector<8x8x8xbf16>
    %178 = vector.extract_strided_slice %137 {offsets = [0, 0, 48], sizes = [8, 8, 8], strides = [1, 1, 1]} : vector<8x8x96xf32> to vector<8x8x8xf32>
    %179 = arith.truncf %178 : vector<8x8x8xf32> to vector<8x8x8xbf16>
    %180 = vector.extract_strided_slice %137 {offsets = [0, 0, 80], sizes = [8, 8, 8], strides = [1, 1, 1]} : vector<8x8x96xf32> to vector<8x8x8xf32>
    %181 = arith.truncf %180 : vector<8x8x8xf32> to vector<8x8x8xbf16>
    "tpu.trace_start"() <{level = 10 : i32, message = "bqd,bkd->bqk"}> : () -> ()
    %cst_61 = arith.constant dense<0.000000e+00> : vector<8x8x8xf32>
    %182 = tpu.matmul %177, %179, %cst_61 {dimension_numbers = #tpu.dot_dimension_numbers<[2], [2], [1], [1], [0, 0, 0, 1, 1, 1], [0], [0]>} : vector<8x8x8xbf16>, vector<8x8x8xbf16>, vector<8x8x8xf32> -> vector<8x8x8xf32>
    "tpu.trace_stop"() : () -> ()
    %cst_62 = arith.constant dense<0xFF800000> : vector<8x8xf32>
    %183 = vector.multi_reduction <maximumf>, %182, %cst_62 [2] : vector<8x8x8xf32> to vector<8x8xf32>
    %184 = vector.shape_cast %183 : vector<8x8xf32> to vector<8x8x1xf32>
    %185 = vector.broadcast %184 : vector<8x8x1xf32> to vector<8x8x8xf32>
    %186 = arith.subf %182, %185 : vector<8x8x8xf32>
    %187 = math.exp %186 : vector<8x8x8xf32>
    %cst_63 = arith.constant dense<0.000000e+00> : vector<8x8xf32>
    %188 = vector.multi_reduction <add>, %187, %cst_63 [2] : vector<8x8x8xf32> to vector<8x8xf32>
    %189 = vector.shape_cast %188 : vector<8x8xf32> to vector<8x8x1xf32>
    %190 = arith.truncf %187 : vector<8x8x8xf32> to vector<8x8x8xbf16>
    "tpu.trace_start"() <{level = 10 : i32, message = "bqk,bkd->bqd"}> : () -> ()
    %cst_64 = arith.constant dense<0.000000e+00> : vector<8x8x8xf32>
    %191 = tpu.matmul %190, %181, %cst_64 {dimension_numbers = #tpu.dot_dimension_numbers<[2], [1], [1], [2], [0, 0, 0, 1, 1, 2], [0], [0]>} : vector<8x8x8xbf16>, vector<8x8x8xbf16>, vector<8x8x8xf32> -> vector<8x8x8xf32>
    "tpu.trace_stop"() : () -> ()
    %192 = tpu.reciprocal %189 {approx = true} : vector<8x8x1xf32> -> vector<8x8x1xf32>
    %193 = vector.broadcast %192 : vector<8x8x1xf32> to vector<8x8x8xf32>
    %194 = arith.mulf %191, %193 : vector<8x8x8xf32>
    %195 = vector.extract_strided_slice %137 {offsets = [0, 0, 24], sizes = [8, 8, 8], strides = [1, 1, 1]} : vector<8x8x96xf32> to vector<8x8x8xf32>
    %196 = arith.truncf %195 : vector<8x8x8xf32> to vector<8x8x8xbf16>
    %197 = vector.extract_strided_slice %137 {offsets = [0, 0, 56], sizes = [8, 8, 8], strides = [1, 1, 1]} : vector<8x8x96xf32> to vector<8x8x8xf32>
    %198 = arith.truncf %197 : vector<8x8x8xf32> to vector<8x8x8xbf16>
    %199 = vector.extract_strided_slice %137 {offsets = [0, 0, 88], sizes = [8, 8, 8], strides = [1, 1, 1]} : vector<8x8x96xf32> to vector<8x8x8xf32>
    %200 = arith.truncf %199 : vector<8x8x8xf32> to vector<8x8x8xbf16>
    "tpu.trace_start"() <{level = 10 : i32, message = "bqd,bkd->bqk"}> : () -> ()
    %cst_65 = arith.constant dense<0.000000e+00> : vector<8x8x8xf32>
    %201 = tpu.matmul %196, %198, %cst_65 {dimension_numbers = #tpu.dot_dimension_numbers<[2], [2], [1], [1], [0, 0, 0, 1, 1, 1], [0], [0]>} : vector<8x8x8xbf16>, vector<8x8x8xbf16>, vector<8x8x8xf32> -> vector<8x8x8xf32>
    "tpu.trace_stop"() : () -> ()
    %cst_66 = arith.constant dense<0xFF800000> : vector<8x8xf32>
    %202 = vector.multi_reduction <maximumf>, %201, %cst_66 [2] : vector<8x8x8xf32> to vector<8x8xf32>
    %203 = vector.shape_cast %202 : vector<8x8xf32> to vector<8x8x1xf32>
    %204 = vector.broadcast %203 : vector<8x8x1xf32> to vector<8x8x8xf32>
    %205 = arith.subf %201, %204 : vector<8x8x8xf32>
    %206 = math.exp %205 : vector<8x8x8xf32>
    %cst_67 = arith.constant dense<0.000000e+00> : vector<8x8xf32>
    %207 = vector.multi_reduction <add>, %206, %cst_67 [2] : vector<8x8x8xf32> to vector<8x8xf32>
    %208 = vector.shape_cast %207 : vector<8x8xf32> to vector<8x8x1xf32>
    %209 = arith.truncf %206 : vector<8x8x8xf32> to vector<8x8x8xbf16>
    "tpu.trace_start"() <{level = 10 : i32, message = "bqk,bkd->bqd"}> : () -> ()
    %cst_68 = arith.constant dense<0.000000e+00> : vector<8x8x8xf32>
    %210 = tpu.matmul %209, %200, %cst_68 {dimension_numbers = #tpu.dot_dimension_numbers<[2], [1], [1], [2], [0, 0, 0, 1, 1, 2], [0], [0]>} : vector<8x8x8xbf16>, vector<8x8x8xbf16>, vector<8x8x8xf32> -> vector<8x8x8xf32>
    "tpu.trace_stop"() : () -> ()
    %211 = tpu.reciprocal %208 {approx = true} : vector<8x8x1xf32> -> vector<8x8x1xf32>
    %212 = vector.broadcast %211 : vector<8x8x1xf32> to vector<8x8x8xf32>
    %213 = arith.mulf %210, %212 : vector<8x8x8xf32>
    %214 = tpu.concatenate %156, %175, %194, %213 in 2 : vector<8x8x8xf32>, vector<8x8x8xf32>, vector<8x8x8xf32>, vector<8x8x8xf32> -> vector<8x8x32xf32>
    %215 = vector.shape_cast %214 : vector<8x8x32xf32> to vector<64x32xf32>
    %216 = arith.truncf %215 : vector<64x32xf32> to vector<64x32xbf16>
    %c1_69 = arith.constant 1 : index
    %c0_70 = arith.constant 0 : index
    %c0_71 = arith.constant 0 : index
    %217 = vector.load %arg7[%c1_69, %c0_70, %c0_71] : memref<2x32x32xbf16, #tpu.memory_space<vmem>>, vector<1x32x32xbf16>
    %218 = vector.shape_cast %217 : vector<1x32x32xbf16> to vector<32x32xbf16>
    %cst_72 = arith.constant dense<0.000000e+00> : vector<64x32xf32>
    %219 = tpu.matmul %216, %218, %cst_72 {dimension_numbers = #tpu.dot_dimension_numbers<[1], [0], [0], [1], [0, 0, 1, 1], [], []>} : vector<64x32xbf16>, vector<32x32xbf16>, vector<64x32xf32> -> vector<64x32xf32>
    %c1_73 = arith.constant 1 : index
    %c0_74 = arith.constant 0 : index
    %c0_75 = arith.constant 0 : index
    %220 = vector.load %arg8[%c1_73, %c0_74, %c0_75] : memref<2x1x32xf32, #tpu.memory_space<vmem>>, vector<1x1x32xf32>
    %221 = vector.shape_cast %220 : vector<1x1x32xf32> to vector<1x32xf32>
    %222 = vector.broadcast %221 : vector<1x32xf32> to vector<64x32xf32>
    %223 = arith.addf %219, %222 : vector<64x32xf32>
    %224 = arith.addf %128, %223 : vector<64x32xf32>
    %c1_76 = arith.constant 1 : index
    %c0_77 = arith.constant 0 : index
    %c0_78 = arith.constant 0 : index
    %225 = vector.load %arg9[%c1_76, %c0_77, %c0_78] : memref<2x1x32xf32, #tpu.memory_space<vmem>>, vector<1x1x32xf32>
    %226 = vector.shape_cast %225 : vector<1x1x32xf32> to vector<1x32xf32>
    %c1_79 = arith.constant 1 : index
    %c0_80 = arith.constant 0 : index
    %c0_81 = arith.constant 0 : index
    %227 = vector.load %arg10[%c1_79, %c0_80, %c0_81] : memref<2x1x32xf32, #tpu.memory_space<vmem>>, vector<1x1x32xf32>
    %228 = vector.shape_cast %227 : vector<1x1x32xf32> to vector<1x32xf32>
    %cst_82 = arith.constant dense<0.000000e+00> : vector<64xf32>
    %229 = vector.multi_reduction <add>, %224, %cst_82 [1] : vector<64x32xf32> to vector<64xf32>
    %230 = vector.shape_cast %229 : vector<64xf32> to vector<64x1xf32>
    %cst_83 = arith.constant 3.200000e+01 : f32
    %231 = vector.broadcast %cst_83 : f32 to vector<64x1xf32>
    %232 = arith.divf %230, %231 : vector<64x1xf32>
    %233 = vector.broadcast %232 : vector<64x1xf32> to vector<64x32xf32>
    %234 = arith.subf %224, %233 : vector<64x32xf32>
    %235 = arith.mulf %234, %234 : vector<64x32xf32>
    %cst_84 = arith.constant dense<0.000000e+00> : vector<64xf32>
    %236 = vector.multi_reduction <add>, %235, %cst_84 [1] : vector<64x32xf32> to vector<64xf32>
    %237 = vector.shape_cast %236 : vector<64xf32> to vector<64x1xf32>
    %cst_85 = arith.constant 3.200000e+01 : f32
    %238 = vector.broadcast %cst_85 : f32 to vector<64x1xf32>
    %239 = arith.divf %237, %238 : vector<64x1xf32>
    %240 = vector.broadcast %232 : vector<64x1xf32> to vector<64x32xf32>
    %241 = arith.subf %224, %240 : vector<64x32xf32>
    %cst_86 = arith.constant 9.99999974E-6 : f32
    %242 = vector.broadcast %cst_86 : f32 to vector<64x1xf32>
    %243 = arith.addf %239, %242 : vector<64x1xf32>
    %244 = math.rsqrt %243 : vector<64x1xf32>
    %245 = vector.broadcast %244 : vector<64x1xf32> to vector<64x32xf32>
    %246 = arith.mulf %241, %245 : vector<64x32xf32>
    %247 = vector.broadcast %226 : vector<1x32xf32> to vector<64x32xf32>
    %248 = arith.mulf %246, %247 : vector<64x32xf32>
    %249 = vector.broadcast %228 : vector<1x32xf32> to vector<64x32xf32>
    %250 = arith.addf %248, %249 : vector<64x32xf32>
    %c0_87 = arith.constant 0 : index
    %c0_88 = arith.constant 0 : index
    %251 = vector.load %arg11[%c0_87, %c0_88] : memref<1x32xf32, #tpu.memory_space<vmem>>, vector<1x32xf32>
    %c0_89 = arith.constant 0 : index
    %c0_90 = arith.constant 0 : index
    %252 = vector.load %arg12[%c0_89, %c0_90] : memref<1x32xf32, #tpu.memory_space<vmem>>, vector<1x32xf32>
    %cst_91 = arith.constant dense<0.000000e+00> : vector<64xf32>
    %253 = vector.multi_reduction <add>, %250, %cst_91 [1] : vector<64x32xf32> to vector<64xf32>
    %254 = vector.shape_cast %253 : vector<64xf32> to vector<64x1xf32>
    %cst_92 = arith.constant 3.200000e+01 : f32
    %255 = vector.broadcast %cst_92 : f32 to vector<64x1xf32>
    %256 = arith.divf %254, %255 : vector<64x1xf32>
    %257 = vector.broadcast %256 : vector<64x1xf32> to vector<64x32xf32>
    %258 = arith.subf %250, %257 : vector<64x32xf32>
    %259 = arith.mulf %258, %258 : vector<64x32xf32>
    %cst_93 = arith.constant dense<0.000000e+00> : vector<64xf32>
    %260 = vector.multi_reduction <add>, %259, %cst_93 [1] : vector<64x32xf32> to vector<64xf32>
    %261 = vector.shape_cast %260 : vector<64xf32> to vector<64x1xf32>
    %cst_94 = arith.constant 3.200000e+01 : f32
    %262 = vector.broadcast %cst_94 : f32 to vector<64x1xf32>
    %263 = arith.divf %261, %262 : vector<64x1xf32>
    %264 = vector.broadcast %256 : vector<64x1xf32> to vector<64x32xf32>
    %265 = arith.subf %250, %264 : vector<64x32xf32>
    %cst_95 = arith.constant 9.99999974E-6 : f32
    %266 = vector.broadcast %cst_95 : f32 to vector<64x1xf32>
    %267 = arith.addf %263, %266 : vector<64x1xf32>
    %268 = math.rsqrt %267 : vector<64x1xf32>
    %269 = vector.broadcast %268 : vector<64x1xf32> to vector<64x32xf32>
    %270 = arith.mulf %265, %269 : vector<64x32xf32>
    %271 = vector.broadcast %251 : vector<1x32xf32> to vector<64x32xf32>
    %272 = arith.mulf %270, %271 : vector<64x32xf32>
    %273 = vector.broadcast %252 : vector<1x32xf32> to vector<64x32xf32>
    %274 = arith.addf %272, %273 : vector<64x32xf32>
    %275 = vector.shape_cast %274 : vector<64x32xf32> to vector<8x8x32xf32>
    %c0_96 = arith.constant 0 : index
    %c0_97 = arith.constant 0 : index
    %276 = vector.load %arg2[%c0_96, %c0_97] : memref<8x8xf32, #tpu.memory_space<vmem>>, vector<8x8xf32>
    %cst_98 = arith.constant dense<0.000000e+00> : vector<8xf32>
    %277 = vector.multi_reduction <add>, %276, %cst_98 [1] : vector<8x8xf32> to vector<8xf32>
    %278 = vector.shape_cast %277 : vector<8xf32> to vector<8x1xf32>
    %cst_99 = arith.constant 1.000000e+00 : f32
    %279 = vector.broadcast %cst_99 : f32 to vector<8x1xf32>
    %280 = arith.maximumf %278, %279 : vector<8x1xf32>
    %281 = vector.shape_cast %276 : vector<8x8xf32> to vector<8x8x1xf32>
    %282 = vector.broadcast %281 : vector<8x8x1xf32> to vector<8x8x32xf32>
    %283 = arith.mulf %275, %282 : vector<8x8x32xf32>
    %cst_100 = arith.constant dense<0.000000e+00> : vector<8x32xf32>
    %284 = vector.multi_reduction <add>, %283, %cst_100 [1] : vector<8x8x32xf32> to vector<8x32xf32>
    %285 = tpu.reciprocal %280 {approx = true} : vector<8x1xf32> -> vector<8x1xf32>
    %286 = vector.broadcast %285 : vector<8x1xf32> to vector<8x32xf32>
    %287 = arith.mulf %284, %286 : vector<8x32xf32>
    %c0_101 = arith.constant 0 : index
    %c0_102 = arith.constant 0 : index
    %288 = vector.load %arg13[%c0_101, %c0_102] : memref<8x32xf32, #tpu.memory_space<vmem>>, vector<8x32xf32>
    tpu.vector_store %arg13[%c0_101, %c0_102], %287 {strides = array<i32>} : memref<8x32xf32, #tpu.memory_space<vmem>>, vector<8x32xf32>,
    return
  }
  func.func @transform_0(%arg0: i32) -> (i32, i32, i32) {
    %c0_i32 = arith.constant 0 : i32
    %c0_i32_0 = arith.constant 0 : i32
    %c0_i32_1 = arith.constant 0 : i32
    return %arg0, %c0_i32, %c0_i32_0 : i32, i32, i32
  }
  func.func @transform_1(%arg0: i32) -> (i32, i32) {
    %c0_i32 = arith.constant 0 : i32
    %c0_i32_0 = arith.constant 0 : i32
    return %arg0, %c0_i32 : i32, i32
  }
  func.func @transform_2(%arg0: i32) -> (i32, i32) {
    %c0_i32 = arith.constant 0 : i32
    %c0_i32_0 = arith.constant 0 : i32
    %c0_i32_1 = arith.constant 0 : i32
    return %c0_i32, %c0_i32_0 : i32, i32
  }
  func.func @transform_3(%arg0: i32) -> (i32, i32) {
    %c0_i32 = arith.constant 0 : i32
    %c0_i32_0 = arith.constant 0 : i32
    %c0_i32_1 = arith.constant 0 : i32
    return %c0_i32, %c0_i32_0 : i32, i32
  }
  func.func @transform_4(%arg0: i32) -> (i32, i32, i32) {
    %c0_i32 = arith.constant 0 : i32
    %c0_i32_0 = arith.constant 0 : i32
    %c0_i32_1 = arith.constant 0 : i32
    %c0_i32_2 = arith.constant 0 : i32
    return %c0_i32, %c0_i32_0, %c0_i32_1 : i32, i32, i32
  }
  func.func @transform_5(%arg0: i32) -> (i32, i32, i32) {
    %c0_i32 = arith.constant 0 : i32
    %c0_i32_0 = arith.constant 0 : i32
    %c0_i32_1 = arith.constant 0 : i32
    %c0_i32_2 = arith.constant 0 : i32
    return %c0_i32, %c0_i32_0, %c0_i32_1 : i32, i32, i32
  }
  func.func @transform_6(%arg0: i32) -> (i32, i32, i32) {
    %c0_i32 = arith.constant 0 : i32
    %c0_i32_0 = arith.constant 0 : i32
    %c0_i32_1 = arith.constant 0 : i32
    %c0_i32_2 = arith.constant 0 : i32
    return %c0_i32, %c0_i32_0, %c0_i32_1 : i32, i32, i32
  }
  func.func @transform_7(%arg0: i32) -> (i32, i32, i32) {
    %c0_i32 = arith.constant 0 : i32
    %c0_i32_0 = arith.constant 0 : i32
    %c0_i32_1 = arith.constant 0 : i32
    %c0_i32_2 = arith.constant 0 : i32
    return %c0_i32, %c0_i32_0, %c0_i32_1 : i32, i32, i32
  }
  func.func @transform_8(%arg0: i32) -> (i32, i32, i32) {
    %c0_i32 = arith.constant 0 : i32
    %c0_i32_0 = arith.constant 0 : i32
    %c0_i32_1 = arith.constant 0 : i32
    %c0_i32_2 = arith.constant 0 : i32
    return %c0_i32, %c0_i32_0, %c0_i32_1 : i32, i32, i32
  }
  func.func @transform_9(%arg0: i32) -> (i32, i32, i32) {
    %c0_i32 = arith.constant 0 : i32
    %c0_i32_0 = arith.constant 0 : i32
    %c0_i32_1 = arith.constant 0 : i32
    %c0_i32_2 = arith.constant 0 : i32
    return %c0_i32, %c0_i32_0, %c0_i32_1 : i32, i32, i32
  }
  func.func @transform_10(%arg0: i32) -> (i32, i32) {
    %c0_i32 = arith.constant 0 : i32
    %c0_i32_0 = arith.constant 0 : i32
    %c0_i32_1 = arith.constant 0 : i32
    return %c0_i32, %c0_i32_0 : i32, i32
  }
  func.func @transform_11(%arg0: i32) -> (i32, i32) {
    %c0_i32 = arith.constant 0 : i32
    %c0_i32_0 = arith.constant 0 : i32
    %c0_i32_1 = arith.constant 0 : i32
    return %c0_i32, %c0_i32_0 : i32, i32
  }
  func.func @transform_12(%arg0: i32) -> (i32, i32) {
    %c0_i32 = arith.constant 0 : i32
    %c0_i32_0 = arith.constant 0 : i32
    return %arg0, %c0_i32 : i32, i32
  }
}

</mosaic_0001>

<llo_original>
// kernel: tpu_custom_call.1
$region0: #{tpu_custom_call.1}
  #allocation0 [shape = 'u32[]', space=smem, size = 0x4, offset = 0x4, fixed_abs, tag = 'smem constant byte address 0x4 - core index']
  #allocation1 [shape = 'u32[144,128]{1,0:T(1,128)}', space=vmem, size = 0x12000, scoped, tag = 'internal scratch']
  %s0 = inlined_call_operand.hbm [shape: bf16[8,8,16], index: 0, kind: input, shape index: {}]
  %s1 = inlined_call_operand.hbm [shape: f32[8,8], index: 1, kind: input, shape index: {}]
  %s2 = inlined_call_operand.hbm [shape: bf16[16,32], index: 2, kind: input, shape index: {}]
  %s3 = inlined_call_operand.vmem [shape: f32[1,32], index: 3, kind: input, shape index: {}]
  %s4 = inlined_call_operand.hbm [shape: bf16[2,32,96], index: 4, kind: input, shape index: {}]
  %s5 = inlined_call_operand.vmem [shape: f32[2,1,96], index: 5, kind: input, shape index: {}]
  %s6 = inlined_call_operand.hbm [shape: bf16[2,32,32], index: 6, kind: input, shape index: {}]
  %s7 = inlined_call_operand.vmem [shape: f32[2,1,32], index: 7, kind: input, shape index: {}]
  %s8 = inlined_call_operand.vmem [shape: f32[2,1,32], index: 8, kind: input, shape index: {}]
  %s9 = inlined_call_operand.vmem [shape: f32[2,1,32], index: 9, kind: input, shape index: {}]
  %s10 = inlined_call_operand.vmem [shape: f32[1,32], index: 10, kind: input, shape index: {}]
  %s11 = inlined_call_operand.vmem [shape: f32[1,32], index: 11, kind: input, shape index: {}]
  %s12 = inlined_call_operand.hbm [shape: f32[8,32], index: 12, kind: output, shape index: {}]
  %s13 = sld [smem:[#allocation0]]
  $region78: #{tpu_custom_call.1} parent=0
    _
  %s15 = ssub.s32 1, %s13
  %s16 = scalar_select 0, %s15, %s13
  $region1: #{tpu_custom_call.1} parent=0
    #allocation2 [shape = 'u8[16384]{0}', space=vmem, size = 0x4000, scoped, tag = 'input window, operand 0, single buffered']
    #allocation3 [shape = 's32[1]{0}', space=sflag, size = 0x4, scoped, tag = 'scoped memory for tpu_custom_call.1']
    #allocation4 [shape = 's32[1]{0}', space=sflag, size = 0x4, scoped, tag = 'scoped memory for tpu_custom_call.1']
    #allocation5 [shape = 'u8[4096]{0}', space=vmem, size = 0x1000, scoped, tag = 'input window, operand 1, single buffered']
    #allocation6 [shape = 's32[1]{0}', space=sflag, size = 0x4, scoped, tag = 'scoped memory for tpu_custom_call.1']
    #allocation7 [shape = 'u8[4096]{0}', space=vmem, size = 0x1000, scoped, tag = 'input window, operand 2, single buffered']
    #allocation8 [shape = 'u8[16384]{0}', space=vmem, size = 0x4000, scoped, tag = 'input window, operand 4, single buffered']
    #allocation9 [shape = 's32[1]{0}', space=sflag, size = 0x4, scoped, tag = 'scoped memory for tpu_custom_call.1']
    #allocation10 [shape = 'u8[16384]{0}', space=vmem, size = 0x4000, scoped, tag = 'input window, operand 6, single buffered']
    #allocation11 [shape = 'u8[4096]{0}', space=vmem, size = 0x1000, scoped, tag = 'output window, operand 0, single buffered']
    %17 = vsyncpa [#allocation3], 0
    %18 = vsyncpa [#allocation6], 0
    %19 = vsyncpa [#allocation9], 0
    %20 = vsyncpa [#allocation4], 0
    // Predicated region
    $region2: #{tpu_custom_call.1} parent=1 // pred_check
      _
    $region3: #{tpu_custom_call.1} parent=1 // pred_check_branch
      %22 = sbr.rel (0) target = $region5
    $region4: #{tpu_custom_call.1} parent=1 // pred_region
      %s24 = ssub.s32 512, 512
      %25 = vsyncadd [#allocation3], %s24
      %s26 = sshll.u32 [#allocation2], 4
      %s27 = int_to_ptr.vmem [resolvable:$true] %s26
      %32 = dma.hbm_to_vmem [thread:$0]  %s0, 512, %s27, [#allocation3], 64, 64, 4
    $region5: #{tpu_custom_call.1} parent=1 // pred_fallthru
      _
    // Predicated region
    $region6: #{tpu_custom_call.1} parent=1 // pred_check
      _
    $region7: #{tpu_custom_call.1} parent=1 // pred_check_branch
      %34 = sbr.rel (0) target = $region9
    $region8: #{tpu_custom_call.1} parent=1 // pred_region
      %s36 = ssub.s32 128, 128
      %37 = vsyncadd [#allocation6], %s36
      %s39 = sshll.u32 [#allocation5], 4
      %s40 = int_to_ptr.vmem [resolvable:$true] %s39
      %42 = dma.hbm_to_vmem [thread:$0]  %s1, 128, %s40, [#allocation6]
    $region9: #{tpu_custom_call.1} parent=1 // pred_fallthru
      _
    // Predicated region
    $region10: #{tpu_custom_call.1} parent=1 // pred_check
      _
    $region11: #{tpu_custom_call.1} parent=1 // pred_check_branch
      %44 = sbr.rel (0) target = $region13
    $region12: #{tpu_custom_call.1} parent=1 // pred_region
      %s46 = ssub.s32 128, 128
      %47 = vsyncadd [#allocation6], %s46
      %s48 = sshll.u32 [#allocation7], 4
      %s49 = int_to_ptr.vmem [resolvable:$true] %s48
      %54 = dma.hbm_to_vmem [thread:$0]  %s2, 128, %s49, [#allocation6], 64, 64, 4
    $region13: #{tpu_custom_call.1} parent=1 // pred_fallthru
      _
    // Predicated region
    $region14: #{tpu_custom_call.1} parent=1 // pred_check
      _
    $region15: #{tpu_custom_call.1} parent=1 // pred_check_branch
      %56 = sbr.rel (0) target = $region17
    $region16: #{tpu_custom_call.1} parent=1 // pred_region
      _
    $region17: #{tpu_custom_call.1} parent=1 // pred_fallthru
      _
    // Predicated region
    $region18: #{tpu_custom_call.1} parent=1 // pred_check
      _
    $region19: #{tpu_custom_call.1} parent=1 // pred_check_branch
      %58 = sbr.rel (0) target = $region21
    $region20: #{tpu_custom_call.1} parent=1 // pred_region
      %s60 = ssub.s32 512, 512
      %61 = vsyncadd [#allocation9], %s60
      %s62 = sshll.u32 [#allocation8], 4
      %s63 = int_to_ptr.vmem [resolvable:$true] %s62
      %68 = dma.hbm_to_vmem [thread:$0]  %s4, 512, %s63, [#allocation9], 64, 64, 4
    $region21: #{tpu_custom_call.1} parent=1 // pred_fallthru
      _
    // Predicated region
    $region22: #{tpu_custom_call.1} parent=1 // pred_check
      _
    $region23: #{tpu_custom_call.1} parent=1 // pred_check_branch
      %70 = sbr.rel (0) target = $region25
    $region24: #{tpu_custom_call.1} parent=1 // pred_region
      _
    $region25: #{tpu_custom_call.1} parent=1 // pred_fallthru
      _
    // Predicated region
    $region26: #{tpu_custom_call.1} parent=1 // pred_check
      _
    $region27: #{tpu_custom_call.1} parent=1 // pred_check_branch
      %72 = sbr.rel (0) target = $region29
    $region28: #{tpu_custom_call.1} parent=1 // pred_region
      %s74 = ssub.s32 512, 512
      %75 = vsyncadd [#allocation9], %s74
      %s76 = sshll.u32 [#allocation10], 4
      %s77 = int_to_ptr.vmem [resolvable:$true] %s76
      %82 = dma.hbm_to_vmem [thread:$0]  %s6, 512, %s77, [#allocation9], 64, 64, 4
    $region29: #{tpu_custom_call.1} parent=1 // pred_fallthru
      _
    // Predicated region
    $region30: #{tpu_custom_call.1} parent=1 // pred_check
      _
    $region31: #{tpu_custom_call.1} parent=1 // pred_check_branch
      %84 = sbr.rel (0) target = $region33
    $region32: #{tpu_custom_call.1} parent=1 // pred_region
      _
    $region33: #{tpu_custom_call.1} parent=1 // pred_fallthru
      _
    // Predicated region
    $region34: #{tpu_custom_call.1} parent=1 // pred_check
      _
    $region35: #{tpu_custom_call.1} parent=1 // pred_check_branch
      %86 = sbr.rel (0) target = $region37
    $region36: #{tpu_custom_call.1} parent=1 // pred_region
      _
    $region37: #{tpu_custom_call.1} parent=1 // pred_fallthru
      _
    // Predicated region
    $region38: #{tpu_custom_call.1} parent=1 // pred_check
      _
    $region39: #{tpu_custom_call.1} parent=1 // pred_check_branch
      %88 = sbr.rel (0) target = $region41
    $region40: #{tpu_custom_call.1} parent=1 // pred_region
      _
    $region41: #{tpu_custom_call.1} parent=1 // pred_fallthru
      _
    // Predicated region
    $region42: #{tpu_custom_call.1} parent=1 // pred_check
      _
    $region43: #{tpu_custom_call.1} parent=1 // pred_check_branch
      %90 = sbr.rel (0) target = $region45
    $region44: #{tpu_custom_call.1} parent=1 // pred_region
      _
    $region45: #{tpu_custom_call.1} parent=1 // pred_fallthru
      _
    // Predicated region
    $region46: #{tpu_custom_call.1} parent=1 // pred_check
      _
    $region47: #{tpu_custom_call.1} parent=1 // pred_check_branch
      %92 = sbr.rel (0) target = $region49
    $region48: #{tpu_custom_call.1} parent=1 // pred_region
      _
    $region49: #{tpu_custom_call.1} parent=1 // pred_fallthru
      _
    // Predicated region
    $region50: #{tpu_custom_call.1} parent=1 // pred_check
      _
    $region51: #{tpu_custom_call.1} parent=1 // pred_check_branch
      %94 = sbr.rel (0) target = $region53
    $region52: #{tpu_custom_call.1} parent=1 // pred_region
      %95 = dma.done [#allocation3], 512
    $region53: #{tpu_custom_call.1} parent=1 // pred_fallthru
      _
    // Predicated region
    $region54: #{tpu_custom_call.1} parent=1 // pred_check
      _
    $region55: #{tpu_custom_call.1} parent=1 // pred_check_branch
      %97 = sbr.rel (0) target = $region57
    $region56: #{tpu_custom_call.1} parent=1 // pred_region
      %98 = dma.done [#allocation6], 128
    $region57: #{tpu_custom_call.1} parent=1 // pred_fallthru
      _
    // Predicated region
    $region58: #{tpu_custom_call.1} parent=1 // pred_check
      _
    $region59: #{tpu_custom_call.1} parent=1 // pred_check_branch
      %100 = sbr.rel (0) target = $region61
    $region60: #{tpu_custom_call.1} parent=1 // pred_region
      %101 = dma.done [#allocation6], 128
    $region61: #{tpu_custom_call.1} parent=1 // pred_fallthru
      _
    // Predicated region
    $region62: #{tpu_custom_call.1} parent=1 // pred_check
      _
    $region63: #{tpu_custom_call.1} parent=1 // pred_check_branch
      %103 = sbr.rel (0) target = $region65
    $region64: #{tpu_custom_call.1} parent=1 // pred_region
      %104 = dma.done [#allocation9], 512
    $region65: #{tpu_custom_call.1} parent=1 // pred_fallthru
      _
    // Predicated region
    $region66: #{tpu_custom_call.1} parent=1 // pred_check
      _
    $region67: #{tpu_custom_call.1} parent=1 // pred_check_branch
      %106 = sbr.rel (0) target = $region69
    $region68: #{tpu_custom_call.1} parent=1 // pred_region
      %107 = dma.done [#allocation9], 512
    $region69: #{tpu_custom_call.1} parent=1 // pred_fallthru
      _
    %v109 = vld [vmem:[#allocation2] sm:$0xf]
    %v110 = vld [vmem:[#allocation2 + $0x4] sm:$0xf]
    %v111 = vld [vmem:[#allocation2 + $0x8] sm:$0xf]
    %v112 = vld [vmem:[#allocation2 + $0xc] sm:$0xf]
    %v113 = vld [vmem:[#allocation2 + $0x10] sm:$0xf]
    %v114 = vld [vmem:[#allocation2 + $0x14] sm:$0xf]
    %v115 = vld [vmem:[#allocation2 + $0x18] sm:$0xf]
    %v116 = vld [vmem:[#allocation2 + $0x1c] sm:$0xf]
    %v117 = vld [vmem:[#allocation7] sm:$0xf]
    %v118 = vld [vmem:[#allocation7 + $0x4] sm:$0xf]
    %v119 = vld [vmem:[%s3] sm:$0x1]
    %v121 = vlaneseq
    %v122 = vshrl.u32 %v121, 7
    %v123 = vsub.s32 0, %v122
    %v124 = vrot.slane %v119, %v123
    %v134 = vunpack.c.l.b16 %v109
    %v135 = vunpack.c.l.b16 %v110
    %v136 = vunpack.c.l.b16 %v111
    %v137 = vunpack.c.l.b16 %v112
    %v138 = vunpack.c.l.b16 %v113
    %v139 = vunpack.c.l.b16 %v114
    %v140 = vunpack.c.l.b16 %v115
    %v141 = vunpack.c.l.b16 %v116
    %v142 = vpack.c.b16 %v135, %v134
    %v143 = vpack.c.b16 %v137, %v136
    %v144 = vpack.c.b16 %v139, %v138
    %v145 = vpack.c.b16 %v141, %v140
    %v148 = vunpack.c.l.b16 %v117
    %v149 = vunpack.c.l.b16 %v118
    %v150 = vpack.c.b16 %v149, %v148
    %vm152 = vcmask 130048
    %v154 = vsel %vm152, %v142, 0
    %v157 = vsel %vm152, %v143, 0
    %v160 = vsel %vm152, %v144, 0
    %v163 = vsel %vm152, %v145, 0
    %165 = vmatprep.subr.bf16.mxu0 0
    %166 = vmatpush1.bf16.msra.mxu0 %v150
    %167 = vmatprep.subr.bf16.mxu0 0
    %168 = vmatpush1.bf16.msra.mxu0 0
    %169 = vmatprep.subr.bf16.mxu0 0
    %170 = vmatpush1.bf16.msra.mxu0 0
    %171 = vmatprep.subr.bf16.mxu0 0
    %172 = vmatpush1.bf16.msra.mxu0 0
    %173 = vmatprep.subr.bf16.mxu0 0
    %174 = vmatpush1.bf16.msra.mxu0 0
    %175 = vmatprep.subr.bf16.mxu0 0
    %176 = vmatpush1.bf16.msra.mxu0 0
    %177 = vmatprep.subr.bf16.mxu0 0
    %178 = vmatpush1.bf16.msra.mxu0 0
    %179 = vmatprep.subr.bf16.mxu0 0
    %180 = vmatpush1.bf16.msra.mxu0 0
    %181 = vmatprep.subr.bf16.mxu0 0
    %182 = vmatpush1.bf16.msra.mxu0 0
    %183 = vmatprep.subr.bf16.mxu0 0
    %184 = vmatpush1.bf16.msra.mxu0 0
    %185 = vmatprep.subr.bf16.mxu0 0
    %186 = vmatpush1.bf16.msra.mxu0 0
    %187 = vmatprep.subr.bf16.mxu0 0
    %188 = vmatpush1.bf16.msra.mxu0 0
    %189 = vmatprep.subr.bf16.mxu0 0
    %190 = vmatpush1.bf16.msra.mxu0 0
    %191 = vmatprep.subr.bf16.mxu0 0
    %192 = vmatpush1.bf16.msra.mxu0 0
    %193 = vmatprep.subr.bf16.mxu0 0
    %194 = vmatpush1.bf16.msra.mxu0 0
    %195 = vmatprep.subr.bf16.mxu0 0
    %196 = vmatpush1.bf16.msra.mxu0 0
    %197 = vmatprep.mubr.bf16.mxu0 0
    %198 = vmatmul.mubr.bf16.gmra.mrb[0].mxu0 %v154
    %v199 = vpop.f32.mrb[0].mxu0
    %v200 = vadd.f32 %v124, %v199
    %v201 = vpop.f32.mrb[0].mxu0
    %v202 = vpop.f32.mrb[0].mxu0
    %v203 = vadd.f32 %v124, %v202
    %v204 = vpop.f32.mrb[0].mxu0
    %205 = vmatprep.mubr.bf16.mxu0 0
    %206 = vmatmul.mubr.bf16.gmra.mrb[0].mxu0 %v157
    %v207 = vpop.f32.mrb[0].mxu0
    %v208 = vadd.f32 %v124, %v207
    %v209 = vpop.f32.mrb[0].mxu0
    %v210 = vpop.f32.mrb[0].mxu0
    %v211 = vadd.f32 %v124, %v210
    %v212 = vpop.f32.mrb[0].mxu0
    %213 = vmatprep.mubr.bf16.mxu0 0
    %214 = vmatmul.mubr.bf16.gmra.mrb[0].mxu0 %v160
    %v215 = vpop.f32.mrb[0].mxu0
    %v216 = vadd.f32 %v124, %v215
    %v217 = vpop.f32.mrb[0].mxu0
    %v218 = vpop.f32.mrb[0].mxu0
    %v219 = vadd.f32 %v124, %v218
    %v220 = vpop.f32.mrb[0].mxu0
    %221 = vmatprep.mubr.bf16.mxu0 0
    %222 = vmatmul.mubr.bf16.gmra.mrb[0].mxu0 %v163
    %v223 = vpop.f32.mrb[0].mxu0
    %v224 = vadd.f32 %v124, %v223
    %v225 = vpop.f32.mrb[0].mxu0
    %v226 = vpop.f32.mrb[0].mxu0
    %v227 = vadd.f32 %v124, %v226
    %v228 = vpop.f32.mrb[0].mxu0
    %229 = vdwg.mxu0
    %v230 = vpack.c.bf16 %v203, %v200
    %v231 = vpack.c.bf16 %v211, %v208
    %v232 = vpack.c.bf16 %v219, %v216
    %v233 = vpack.c.bf16 %v227, %v224
    %v234 = vld [vmem:[#allocation8] sm:$0xf]
    %v235 = vld [vmem:[#allocation8 + $0x4] sm:$0xf]
    %v236 = vld [vmem:[#allocation8 + $0x8] sm:$0xf]
    %v237 = vld [vmem:[#allocation8 + $0xc] sm:$0xf]
    %v238 = vld [vmem:[%s5] sm:$0x1]
    %v240 = vlaneseq
    %v241 = vshrl.u32 %v240, 7
    %v242 = vsub.s32 0, %v241
    %v243 = vrot.slane %v238, %v242
    %v249 = vunpack.c.l.b16 %v234
    %v250 = vunpack.c.l.b16 %v235
    %v251 = vunpack.c.l.b16 %v236
    %v252 = vunpack.c.l.b16 %v237
    %v253 = vpack.c.b16 %v250, %v249
    %v254 = vpack.c.b16 %v252, %v251
    %vm257 = vcmask 261120
    %v259 = vsel %vm257, %v230, 0
    %v262 = vsel %vm257, %v231, 0
    %v265 = vsel %vm257, %v232, 0
    %v268 = vsel %vm257, %v233, 0
    %270 = vmatprep.subr.bf16.mxu0 0
    %271 = vmatpush1.bf16.msra.mxu0 %v253
    %272 = vmatprep.subr.bf16.mxu0 0
    %273 = vmatpush1.bf16.msra.mxu0 %v254
    %274 = vmatprep.subr.bf16.mxu0 0
    %275 = vmatpush1.bf16.msra.mxu0 0
    %276 = vmatprep.subr.bf16.mxu0 0
    %277 = vmatpush1.bf16.msra.mxu0 0
    %278 = vmatprep.subr.bf16.mxu0 0
    %279 = vmatpush1.bf16.msra.mxu0 0
    %280 = vmatprep.subr.bf16.mxu0 0
    %281 = vmatpush1.bf16.msra.mxu0 0
    %282 = vmatprep.subr.bf16.mxu0 0
    %283 = vmatpush1.bf16.msra.mxu0 0
    %284 = vmatprep.subr.bf16.mxu0 0
    %285 = vmatpush1.bf16.msra.mxu0 0
    %286 = vmatprep.subr.bf16.mxu0 0
    %287 = vmatpush1.bf16.msra.mxu0 0
    %288 = vmatprep.subr.bf16.mxu0 0
    %289 = vmatpush1.bf16.msra.mxu0 0
    %290 = vmatprep.subr.bf16.mxu0 0
    %291 = vmatpush1.bf16.msra.mxu0 0
    %292 = vmatprep.subr.bf16.mxu0 0
    %293 = vmatpush1.bf16.msra.mxu0 0
    %294 = vmatprep.subr.bf16.mxu0 0
    %295 = vmatpush1.bf16.msra.mxu0 0
    %296 = vmatprep.subr.bf16.mxu0 0
    %297 = vmatpush1.bf16.msra.mxu0 0
    %298 = vmatprep.subr.bf16.mxu0 0
    %299 = vmatpush1.bf16.msra.mxu0 0
    %300 = vmatprep.subr.bf16.mxu0 0
    %301 = vmatpush1.bf16.msra.mxu0 0
    %302 = vmatprep.mubr.bf16.mxu0 0
    %303 = vmatmul.mubr.bf16.gmra.mrb[0].mxu0 %v259
    %v304 = vpop.f32.mrb[0].mxu0
    %v305 = vadd.f32 %v243, %v304
    %v306 = vpop.f32.mrb[0].mxu0
    %v307 = vpop.f32.mrb[0].mxu0
    %v308 = vadd.f32 %v243, %v307
    %v309 = vpop.f32.mrb[0].mxu0
    %310 = vmatprep.mubr.bf16.mxu0 0
    %311 = vmatmul.mubr.bf16.gmra.mrb[0].mxu0 %v262
    %v312 = vpop.f32.mrb[0].mxu0
    %v313 = vadd.f32 %v243, %v312
    %v314 = vpop.f32.mrb[0].mxu0
    %v315 = vpop.f32.mrb[0].mxu0
    %v316 = vadd.f32 %v243, %v315
    %v317 = vpop.f32.mrb[0].mxu0
    %318 = vmatprep.mubr.bf16.mxu0 0
    %319 = vmatmul.mubr.bf16.gmra.mrb[0].mxu0 %v265
    %v320 = vpop.f32.mrb[0].mxu0
    %v321 = vadd.f32 %v243, %v320
    %v322 = vpop.f32.mrb[0].mxu0
    %v323 = vpop.f32.mrb[0].mxu0
    %v324 = vadd.f32 %v243, %v323
    %v325 = vpop.f32.mrb[0].mxu0
    %326 = vmatprep.mubr.bf16.mxu0 0
    %327 = vmatmul.mubr.bf16.gmra.mrb[0].mxu0 %v268
    %v328 = vpop.f32.mrb[0].mxu0
    %v329 = vadd.f32 %v243, %v328
    %v330 = vpop.f32.mrb[0].mxu0
    %v331 = vpop.f32.mrb[0].mxu0
    %v332 = vadd.f32 %v243, %v331
    %v333 = vpop.f32.mrb[0].mxu0
    %334 = vdwg.mxu0
    %v335 = vpack.c.bf16 %v305, %v305
    %v336 = vpack.c.bf16 %v308, %v308
    %v337 = vpack.c.bf16 %v313, %v313
    %v338 = vpack.c.bf16 %v316, %v316
    %v339 = vpack.c.bf16 %v321, %v321
    %v340 = vpack.c.bf16 %v324, %v324
    %v341 = vpack.c.bf16 %v329, %v329
    %v342 = vpack.c.bf16 %v332, %v332
    %344 = vrot.lane.b32.xlu0 %v335, 96
    %v345 = vpop.permute.xlu0 %344
    %vm346 = vcmask 64512
    %v348 = vsel %vm346, %v335, 0
    %v351 = vsel %vm346, %v345, 0
    %353 = vmatprep.subr.bf16.mxu0 0
    %354 = vmatpush1.bf16.xpose.msra.mxu0 %v351
    %355 = vmatprep.subr.bf16.mxu0 0
    %356 = vmatpush1.bf16.xpose.msra.mxu0 0
    %357 = vmatprep.subr.bf16.mxu0 0
    %358 = vmatpush1.bf16.xpose.msra.mxu0 0
    %359 = vmatprep.subr.bf16.mxu0 0
    %360 = vmatpush1.bf16.xpose.msra.mxu0 0
    %361 = vmatprep.subr.bf16.mxu0 0
    %362 = vmatpush1.bf16.xpose.msra.mxu0 0
    %363 = vmatprep.subr.bf16.mxu0 0
    %364 = vmatpush1.bf16.xpose.msra.mxu0 0
    %365 = vmatprep.subr.bf16.mxu0 0
    %366 = vmatpush1.bf16.xpose.msra.mxu0 0
    %367 = vmatprep.subr.bf16.mxu0 0
    %368 = vmatpush1.bf16.xpose.msra.mxu0 0
    %369 = vmatprep.subr.bf16.mxu0 0
    %370 = vmatpush1.bf16.xpose.msra.mxu0 0
    %371 = vmatprep.subr.bf16.mxu0 0
    %372 = vmatpush1.bf16.xpose.msra.mxu0 0
    %373 = vmatprep.subr.bf16.mxu0 0
    %374 = vmatpush1.bf16.xpose.msra.mxu0 0
    %375 = vmatprep.subr.bf16.mxu0 0
    %376 = vmatpush1.bf16.xpose.msra.mxu0 0
    %377 = vmatprep.subr.bf16.mxu0 0
    %378 = vmatpush1.bf16.xpose.msra.mxu0 0
    %379 = vmatprep.subr.bf16.mxu0 0
    %380 = vmatpush1.bf16.xpose.msra.mxu0 0
    %381 = vmatprep.subr.bf16.mxu0 0
    %382 = vmatpush1.bf16.xpose.msra.mxu0 0
    %383 = vmatprep.subr.bf16.mxu0 0
    %384 = vmatpush1.bf16.xpose.msra.mxu0 0
    %385 = vmatprep.mubr.bf16.mxu0 0
    %386 = vmatmul.mubr.bf16.gmra.mrb[0].mxu0 %v348
    %v387 = vpop.f32.mrb[0].mxu0
    %v388 = vadd.f32 0.0, %v387
    %v389 = vpop.f32.mrb[0].mxu0
    %v390 = vpop.f32.mrb[0].mxu0
    %v391 = vpop.f32.mrb[0].mxu0
    %392 = vdwg.mxu0
    %394 = vrot.lane.b32.xlu0 %v336, 96
    %v395 = vpop.permute.xlu0 %394
    %v397 = vsel %vm346, %v336, 0
    %v400 = vsel %vm346, %v395, 0
    %402 = vmatprep.subr.bf16.mxu0 0
    %403 = vmatpush1.bf16.xpose.msra.mxu0 %v400
    %404 = vmatprep.subr.bf16.mxu0 0
    %405 = vmatpush1.bf16.xpose.msra.mxu0 0
    %406 = vmatprep.subr.bf16.mxu0 0
    %407 = vmatpush1.bf16.xpose.msra.mxu0 0
    %408 = vmatprep.subr.bf16.mxu0 0
    %409 = vmatpush1.bf16.xpose.msra.mxu0 0
    %410 = vmatprep.subr.bf16.mxu0 0
    %411 = vmatpush1.bf16.xpose.msra.mxu0 0
    %412 = vmatprep.subr.bf16.mxu0 0
    %413 = vmatpush1.bf16.xpose.msra.mxu0 0
    %414 = vmatprep.subr.bf16.mxu0 0
    %415 = vmatpush1.bf16.xpose.msra.mxu0 0
    %416 = vmatprep.subr.bf16.mxu0 0
    %417 = vmatpush1.bf16.xpose.msra.mxu0 0
    %418 = vmatprep.subr.bf16.mxu0 0
    %419 = vmatpush1.bf16.xpose.msra.mxu0 0
    %420 = vmatprep.subr.bf16.mxu0 0
    %421 = vmatpush1.bf16.xpose.msra.mxu0 0
    %422 = vmatprep.subr.bf16.mxu0 0
    %423 = vmatpush1.bf16.xpose.msra.mxu0 0
    %424 = vmatprep.subr.bf16.mxu0 0
    %425 = vmatpush1.bf16.xpose.msra.mxu0 0
    %426 = vmatprep.subr.bf16.mxu0 0
    %427 = vmatpush1.bf16.xpose.msra.mxu0 0
    %428 = vmatprep.subr.bf16.mxu0 0
    %429 = vmatpush1.bf16.xpose.msra.mxu0 0
    %430 = vmatprep.subr.bf16.mxu0 0
    %431 = vmatpush1.bf16.xpose.msra.mxu0 0
    %432 = vmatprep.subr.bf16.mxu0 0
    %433 = vmatpush1.bf16.xpose.msra.mxu0 0
    %434 = vmatprep.mubr.bf16.mxu0 0
    %435 = vmatmul.mubr.bf16.gmra.mrb[0].mxu0 %v397
    %v436 = vpop.f32.mrb[0].mxu0
    %v437 = vadd.f32 0.0, %v436
    %v438 = vpop.f32.mrb[0].mxu0
    %v439 = vpop.f32.mrb[0].mxu0
    %v440 = vpop.f32.mrb[0].mxu0
    %441 = vdwg.mxu0
    %443 = vrot.lane.b32.xlu0 %v337, 96
    %v444 = vpop.permute.xlu0 %443
    %v446 = vsel %vm346, %v337, 0
    %v449 = vsel %vm346, %v444, 0
    %451 = vmatprep.subr.bf16.mxu0 0
    %452 = vmatpush1.bf16.xpose.msra.mxu0 %v449
    %453 = vmatprep.subr.bf16.mxu0 0
    %454 = vmatpush1.bf16.xpose.msra.mxu0 0
    %455 = vmatprep.subr.bf16.mxu0 0
    %456 = vmatpush1.bf16.xpose.msra.mxu0 0
    %457 = vmatprep.subr.bf16.mxu0 0
    %458 = vmatpush1.bf16.xpose.msra.mxu0 0
    %459 = vmatprep.subr.bf16.mxu0 0
    %460 = vmatpush1.bf16.xpose.msra.mxu0 0
    %461 = vmatprep.subr.bf16.mxu0 0
    %462 = vmatpush1.bf16.xpose.msra.mxu0 0
    %463 = vmatprep.subr.bf16.mxu0 0
    %464 = vmatpush1.bf16.xpose.msra.mxu0 0
    %465 = vmatprep.subr.bf16.mxu0 0
    %466 = vmatpush1.bf16.xpose.msra.mxu0 0
    %467 = vmatprep.subr.bf16.mxu0 0
    %468 = vmatpush1.bf16.xpose.msra.mxu0 0
    %469 = vmatprep.subr.bf16.mxu0 0
    %470 = vmatpush1.bf16.xpose.msra.mxu0 0
    %471 = vmatprep.subr.bf16.mxu0 0
    %472 = vmatpush1.bf16.xpose.msra.mxu0 0
    %473 = vmatprep.subr.bf16.mxu0 0
    %474 = vmatpush1.bf16.xpose.msra.mxu0 0
    %475 = vmatprep.subr.bf16.mxu0 0
    %476 = vmatpush1.bf16.xpose.msra.mxu0 0
    %477 = vmatprep.subr.bf16.mxu0 0
    %478 = vmatpush1.bf16.xpose.msra.mxu0 0
    %479 = vmatprep.subr.bf16.mxu0 0
    %480 = vmatpush1.bf16.xpose.msra.mxu0 0
    %481 = vmatprep.subr.bf16.mxu0 0
    %482 = vmatpush1.bf16.xpose.msra.mxu0 0
    %483 = vmatprep.mubr.bf16.mxu0 0
    %484 = vmatmul.mubr.bf16.gmra.mrb[0].mxu0 %v446
    %v485 = vpop.f32.mrb[0].mxu0
    %v486 = vadd.f32 0.0, %v485
    %v487 = vpop.f32.mrb[0].mxu0
    %v488 = vpop.f32.mrb[0].mxu0
    %v489 = vpop.f32.mrb[0].mxu0
    %490 = vdwg.mxu0
    %492 = vrot.lane.b32.xlu0 %v338, 96
    %v493 = vpop.permute.xlu0 %492
    %v495 = vsel %vm346, %v338, 0
    %v498 = vsel %vm346, %v493, 0
    %500 = vmatprep.subr.bf16.mxu0 0
    %501 = vmatpush1.bf16.xpose.msra.mxu0 %v498
    %502 = vmatprep.subr.bf16.mxu0 0
    %503 = vmatpush1.bf16.xpose.msra.mxu0 0
    %504 = vmatprep.subr.bf16.mxu0 0
    %505 = vmatpush1.bf16.xpose.msra.mxu0 0
    %506 = vmatprep.subr.bf16.mxu0 0
    %507 = vmatpush1.bf16.xpose.msra.mxu0 0
    %508 = vmatprep.subr.bf16.mxu0 0
    %509 = vmatpush1.bf16.xpose.msra.mxu0 0
    %510 = vmatprep.subr.bf16.mxu0 0
    %511 = vmatpush1.bf16.xpose.msra.mxu0 0
    %512 = vmatprep.subr.bf16.mxu0 0
    %513 = vmatpush1.bf16.xpose.msra.mxu0 0
    %514 = vmatprep.subr.bf16.mxu0 0
    %515 = vmatpush1.bf16.xpose.msra.mxu0 0
    %516 = vmatprep.subr.bf16.mxu0 0
    %517 = vmatpush1.bf16.xpose.msra.mxu0 0
    %518 = vmatprep.subr.bf16.mxu0 0
    %519 = vmatpush1.bf16.xpose.msra.mxu0 0
    %520 = vmatprep.subr.bf16.mxu0 0
    %521 = vmatpush1.bf16.xpose.msra.mxu0 0
    %522 = vmatprep.subr.bf16.mxu0 0
    %523 = vmatpush1.bf16.xpose.msra.mxu0 0
    %524 = vmatprep.subr.bf16.mxu0 0
    %525 = vmatpush1.bf16.xpose.msra.mxu0 0
    %526 = vmatprep.subr.bf16.mxu0 0
    %527 = vmatpush1.bf16.xpose.msra.mxu0 0
    %528 = vmatprep.subr.bf16.mxu0 0
    %529 = vmatpush1.bf16.xpose.msra.mxu0 0
    %530 = vmatprep.subr.bf16.mxu0 0
    %531 = vmatpush1.bf16.xpose.msra.mxu0 0
    %532 = vmatprep.mubr.bf16.mxu0 0
    %533 = vmatmul.mubr.bf16.gmra.mrb[0].mxu0 %v495
    %v534 = vpop.f32.mrb[0].mxu0
    %v535 = vadd.f32 0.0, %v534
    %v536 = vpop.f32.mrb[0].mxu0
    %v537 = vpop.f32.mrb[0].mxu0
    %v538 = vpop.f32.mrb[0].mxu0
    %539 = vdwg.mxu0
    %541 = vrot.lane.b32.xlu0 %v339, 96
    %v542 = vpop.permute.xlu0 %541
    %v544 = vsel %vm346, %v339, 0
    %v547 = vsel %vm346, %v542, 0
    %549 = vmatprep.subr.bf16.mxu0 0
    %550 = vmatpush1.bf16.xpose.msra.mxu0 %v547
    %551 = vmatprep.subr.bf16.mxu0 0
    %552 = vmatpush1.bf16.xpose.msra.mxu0 0
    %553 = vmatprep.subr.bf16.mxu0 0
    %554 = vmatpush1.bf16.xpose.msra.mxu0 0
    %555 = vmatprep.subr.bf16.mxu0 0
    %556 = vmatpush1.bf16.xpose.msra.mxu0 0
    %557 = vmatprep.subr.bf16.mxu0 0
    %558 = vmatpush1.bf16.xpose.msra.mxu0 0
    %559 = vmatprep.subr.bf16.mxu0 0
    %560 = vmatpush1.bf16.xpose.msra.mxu0 0
    %561 = vmatprep.subr.bf16.mxu0 0
    %562 = vmatpush1.bf16.xpose.msra.mxu0 0
    %563 = vmatprep.subr.bf16.mxu0 0
    %564 = vmatpush1.bf16.xpose.msra.mxu0 0
    %565 = vmatprep.subr.bf16.mxu0 0
    %566 = vmatpush1.bf16.xpose.msra.mxu0 0
    %567 = vmatprep.subr.bf16.mxu0 0
    %568 = vmatpush1.bf16.xpose.msra.mxu0 0
    %569 = vmatprep.subr.bf16.mxu0 0
    %570 = vmatpush1.bf16.xpose.msra.mxu0 0
    %571 = vmatprep.subr.bf16.mxu0 0
    %572 = vmatpush1.bf16.xpose.msra.mxu0 0
    %573 = vmatprep.subr.bf16.mxu0 0
    %574 = vmatpush1.bf16.xpose.msra.mxu0 0
    %575 = vmatprep.subr.bf16.mxu0 0
    %576 = vmatpush1.bf16.xpose.msra.mxu0 0
    %577 = vmatprep.subr.bf16.mxu0 0
    %578 = vmatpush1.bf16.xpose.msra.mxu0 0
    %579 = vmatprep.subr.bf16.mxu0 0
    %580 = vmatpush1.bf16.xpose.msra.mxu0 0
    %581 = vmatprep.mubr.bf16.mxu0 0
    %582 = vmatmul.mubr.bf16.gmra.mrb[0].mxu0 %v544
    %v583 = vpop.f32.mrb[0].mxu0
    %v584 = vadd.f32 0.0, %v583
    %v585 = vpop.f32.mrb[0].mxu0
    %v586 = vpop.f32.mrb[0].mxu0
    %v587 = vpop.f32.mrb[0].mxu0
    %588 = vdwg.mxu0
    %590 = vrot.lane.b32.xlu0 %v340, 96
    %v591 = vpop.permute.xlu0 %590
    %v593 = vsel %vm346, %v340, 0
    %v596 = vsel %vm346, %v591, 0
    %598 = vmatprep.subr.bf16.mxu0 0
    %599 = vmatpush1.bf16.xpose.msra.mxu0 %v596
    %600 = vmatprep.subr.bf16.mxu0 0
    %601 = vmatpush1.bf16.xpose.msra.mxu0 0
    %602 = vmatprep.subr.bf16.mxu0 0
    %603 = vmatpush1.bf16.xpose.msra.mxu0 0
    %604 = vmatprep.subr.bf16.mxu0 0
    %605 = vmatpush1.bf16.xpose.msra.mxu0 0
    %606 = vmatprep.subr.bf16.mxu0 0
    %607 = vmatpush1.bf16.xpose.msra.mxu0 0
    %608 = vmatprep.subr.bf16.mxu0 0
    %609 = vmatpush1.bf16.xpose.msra.mxu0 0
    %610 = vmatprep.subr.bf16.mxu0 0
    %611 = vmatpush1.bf16.xpose.msra.mxu0 0
    %612 = vmatprep.subr.bf16.mxu0 0
    %613 = vmatpush1.bf16.xpose.msra.mxu0 0
    %614 = vmatprep.subr.bf16.mxu0 0
    %615 = vmatpush1.bf16.xpose.msra.mxu0 0
    %616 = vmatprep.subr.bf16.mxu0 0
    %617 = vmatpush1.bf16.xpose.msra.mxu0 0
    %618 = vmatprep.subr.bf16.mxu0 0
    %619 = vmatpush1.bf16.xpose.msra.mxu0 0
    %620 = vmatprep.subr.bf16.mxu0 0
    %621 = vmatpush1.bf16.xpose.msra.mxu0 0
    %622 = vmatprep.subr.bf16.mxu0 0
    %623 = vmatpush1.bf16.xpose.msra.mxu0 0
    %624 = vmatprep.subr.bf16.mxu0 0
    %625 = vmatpush1.bf16.xpose.msra.mxu0 0
    %626 = vmatprep.subr.bf16.mxu0 0
    %627 = vmatpush1.bf16.xpose.msra.mxu0 0
    %628 = vmatprep.subr.bf16.mxu0 0
    %629 = vmatpush1.bf16.xpose.msra.mxu0 0
    %630 = vmatprep.mubr.bf16.mxu0 0
    %631 = vmatmul.mubr.bf16.gmra.mrb[0].mxu0 %v593
    %v632 = vpop.f32.mrb[0].mxu0
    %v633 = vadd.f32 0.0, %v632
    %v634 = vpop.f32.mrb[0].mxu0
    %v635 = vpop.f32.mrb[0].mxu0
    %v636 = vpop.f32.mrb[0].mxu0
    %637 = vdwg.mxu0
    %639 = vrot.lane.b32.xlu0 %v341, 96
    %v640 = vpop.permute.xlu0 %639
    %v642 = vsel %vm346, %v341, 0
    %v645 = vsel %vm346, %v640, 0
    %647 = vmatprep.subr.bf16.mxu0 0
    %648 = vmatpush1.bf16.xpose.msra.mxu0 %v645
    %649 = vmatprep.subr.bf16.mxu0 0
    %650 = vmatpush1.bf16.xpose.msra.mxu0 0
    %651 = vmatprep.subr.bf16.mxu0 0
    %652 = vmatpush1.bf16.xpose.msra.mxu0 0
    %653 = vmatprep.subr.bf16.mxu0 0
    %654 = vmatpush1.bf16.xpose.msra.mxu0 0
    %655 = vmatprep.subr.bf16.mxu0 0
    %656 = vmatpush1.bf16.xpose.msra.mxu0 0
    %657 = vmatprep.subr.bf16.mxu0 0
    %658 = vmatpush1.bf16.xpose.msra.mxu0 0
    %659 = vmatprep.subr.bf16.mxu0 0
    %660 = vmatpush1.bf16.xpose.msra.mxu0 0
    %661 = vmatprep.subr.bf16.mxu0 0
    %662 = vmatpush1.bf16.xpose.msra.mxu0 0
    %663 = vmatprep.subr.bf16.mxu0 0
    %664 = vmatpush1.bf16.xpose.msra.mxu0 0
    %665 = vmatprep.subr.bf16.mxu0 0
    %666 = vmatpush1.bf16.xpose.msra.mxu0 0
    %667 = vmatprep.subr.bf16.mxu0 0
    %668 = vmatpush1.bf16.xpose.msra.mxu0 0
    %669 = vmatprep.subr.bf16.mxu0 0
    %670 = vmatpush1.bf16.xpose.msra.mxu0 0
    %671 = vmatprep.subr.bf16.mxu0 0
    %672 = vmatpush1.bf16.xpose.msra.mxu0 0
    %673 = vmatprep.subr.bf16.mxu0 0
    %674 = vmatpush1.bf16.xpose.msra.mxu0 0
    %675 = vmatprep.subr.bf16.mxu0 0
    %676 = vmatpush1.bf16.xpose.msra.mxu0 0
    %677 = vmatprep.subr.bf16.mxu0 0
    %678 = vmatpush1.bf16.xpose.msra.mxu0 0
    %679 = vmatprep.mubr.bf16.mxu0 0
    %680 = vmatmul.mubr.bf16.gmra.mrb[0].mxu0 %v642
    %v681 = vpop.f32.mrb[0].mxu0
    %v682 = vadd.f32 0.0, %v681
    %v683 = vpop.f32.mrb[0].mxu0
    %v684 = vpop.f32.mrb[0].mxu0
    %v685 = vpop.f32.mrb[0].mxu0
    %686 = vdwg.mxu0
    %688 = vrot.lane.b32.xlu0 %v342, 96
    %v689 = vpop.permute.xlu0 %688
    %v691 = vsel %vm346, %v342, 0
    %v694 = vsel %vm346, %v689, 0
    %696 = vmatprep.subr.bf16.mxu0 0
    %697 = vmatpush1.bf16.xpose.msra.mxu0 %v694
    %698 = vmatprep.subr.bf16.mxu0 0
    %699 = vmatpush1.bf16.xpose.msra.mxu0 0
    %700 = vmatprep.subr.bf16.mxu0 0
    %701 = vmatpush1.bf16.xpose.msra.mxu0 0
    %702 = vmatprep.subr.bf16.mxu0 0
    %703 = vmatpush1.bf16.xpose.msra.mxu0 0
    %704 = vmatprep.subr.bf16.mxu0 0
    %705 = vmatpush1.bf16.xpose.msra.mxu0 0
    %706 = vmatprep.subr.bf16.mxu0 0
    %707 = vmatpush1.bf16.xpose.msra.mxu0 0
    %708 = vmatprep.subr.bf16.mxu0 0
    %709 = vmatpush1.bf16.xpose.msra.mxu0 0
    %710 = vmatprep.subr.bf16.mxu0 0
    %711 = vmatpush1.bf16.xpose.msra.mxu0 0
    %712 = vmatprep.subr.bf16.mxu0 0
    %713 = vmatpush1.bf16.xpose.msra.mxu0 0
    %714 = vmatprep.subr.bf16.mxu0 0
    %715 = vmatpush1.bf16.xpose.msra.mxu0 0
    %716 = vmatprep.subr.bf16.mxu0 0
    %717 = vmatpush1.bf16.xpose.msra.mxu0 0
    %718 = vmatprep.subr.bf16.mxu0 0
    %719 = vmatpush1.bf16.xpose.msra.mxu0 0
    %720 = vmatprep.subr.bf16.mxu0 0
    %721 = vmatpush1.bf16.xpose.msra.mxu0 0
    %722 = vmatprep.subr.bf16.mxu0 0
    %723 = vmatpush1.bf16.xpose.msra.mxu0 0
    %724 = vmatprep.subr.bf16.mxu0 0
    %725 = vmatpush1.bf16.xpose.msra.mxu0 0
    %726 = vmatprep.subr.bf16.mxu0 0
    %727 = vmatpush1.bf16.xpose.msra.mxu0 0
    %728 = vmatprep.mubr.bf16.mxu0 0
    %729 = vmatmul.mubr.bf16.gmra.mrb[0].mxu0 %v691
    %v730 = vpop.f32.mrb[0].mxu0
    %v731 = vadd.f32 0.0, %v730
    %v732 = vpop.f32.mrb[0].mxu0
    %v733 = vpop.f32.mrb[0].mxu0
    %v734 = vpop.f32.mrb[0].mxu0
    %735 = vdwg.mxu0
    %v736 = vsel %vm346, %v388, -inf
    %737 = vmax.xlane.f32.xlu0 %v736
    %v738 = vpop.xlane.xlu0 %737
    %v739 = vsel %vm346, %v437, -inf
    %740 = vmax.xlane.f32.xlu0 %v739
    %v741 = vpop.xlane.xlu0 %740
    %v742 = vsel %vm346, %v486, -inf
    %743 = vmax.xlane.f32.xlu0 %v742
    %v744 = vpop.xlane.xlu0 %743
    %v745 = vsel %vm346, %v535, -inf
    %746 = vmax.xlane.f32.xlu0 %v745
    %v747 = vpop.xlane.xlu0 %746
    %v748 = vsel %vm346, %v584, -inf
    %749 = vmax.xlane.f32.xlu0 %v748
    %v750 = vpop.xlane.xlu0 %749
    %v751 = vsel %vm346, %v633, -inf
    %752 = vmax.xlane.f32.xlu0 %v751
    %v753 = vpop.xlane.xlu0 %752
    %v754 = vsel %vm346, %v682, -inf
    %755 = vmax.xlane.f32.xlu0 %v754
    %v756 = vpop.xlane.xlu0 %755
    %v757 = vsel %vm346, %v731, -inf
    %758 = vmax.xlane.f32.xlu0 %v757
    %v759 = vpop.xlane.xlu0 %758
    %v760 = vsub.f32 %v388, %v738
    %v761 = vsub.f32 %v437, %v741
    %v762 = vsub.f32 %v486, %v744
    %v763 = vsub.f32 %v535, %v747
    %v764 = vsub.f32 %v584, %v750
    %v765 = vsub.f32 %v633, %v753
    %v766 = vsub.f32 %v682, %v756
    %v767 = vsub.f32 %v731, %v759
    %v768 = vmul.f32 %v760, 1.442695
    %v769 = vpow.pop %v768
    %v770 = vmul.f32 %v761, 1.442695
    %v771 = vpow.pop %v770
    %v772 = vmul.f32 %v762, 1.442695
    %v773 = vpow.pop %v772
    %v774 = vmul.f32 %v763, 1.442695
    %v775 = vpow.pop %v774
    %v776 = vmul.f32 %v764, 1.442695
    %v777 = vpow.pop %v776
    %v778 = vmul.f32 %v765, 1.442695
    %v779 = vpow.pop %v778
    %v780 = vmul.f32 %v766, 1.442695
    %v781 = vpow.pop %v780
    %v782 = vmul.f32 %v767, 1.442695
    %v783 = vpow.pop %v782
    %v784 = vsel %vm346, %v769, 0.0
    %785 = vadd.xlane.f32.xlu0 %v784
    %v786 = vpop.xlane.xlu0 %785
    %v787 = vsel %vm346, %v771, 0.0
    %788 = vadd.xlane.f32.xlu0 %v787
    %v789 = vpop.xlane.xlu0 %788
    %v790 = vsel %vm346, %v773, 0.0
    %791 = vadd.xlane.f32.xlu0 %v790
    %v792 = vpop.xlane.xlu0 %791
    %v793 = vsel %vm346, %v775, 0.0
    %794 = vadd.xlane.f32.xlu0 %v793
    %v795 = vpop.xlane.xlu0 %794
    %v796 = vsel %vm346, %v777, 0.0
    %797 = vadd.xlane.f32.xlu0 %v796
    %v798 = vpop.xlane.xlu0 %797
    %v799 = vsel %vm346, %v779, 0.0
    %800 = vadd.xlane.f32.xlu0 %v799
    %v801 = vpop.xlane.xlu0 %800
    %v802 = vsel %vm346, %v781, 0.0
    %803 = vadd.xlane.f32.xlu0 %v802
    %v804 = vpop.xlane.xlu0 %803
    %v805 = vsel %vm346, %v783, 0.0
    %806 = vadd.xlane.f32.xlu0 %v805
    %v807 = vpop.xlane.xlu0 %806
    %v808 = vpack.c.bf16 %v769, %v769
    %v809 = vpack.c.bf16 %v771, %v771
    %v810 = vpack.c.bf16 %v773, %v773
    %v811 = vpack.c.bf16 %v775, %v775
    %v812 = vpack.c.bf16 %v777, %v777
    %v813 = vpack.c.bf16 %v779, %v779
    %v814 = vpack.c.bf16 %v781, %v781
    %v815 = vpack.c.bf16 %v783, %v783
    %816 = vrot.lane.b32.xlu0 %v335, 64
    %v817 = vpop.permute.xlu0 %816
    %v819 = vsel %vm346, %v808, 0
    %vm821 = vcmask 1043456
    %v823 = vsel %vm821, %v817, 0
    %825 = vmatprep.subr.bf16.mxu0 0
    %826 = vmatpush1.bf16.msra.mxu0 %v823
    %827 = vmatprep.subr.bf16.mxu0 0
    %828 = vmatpush1.bf16.msra.mxu0 0
    %829 = vmatprep.subr.bf16.mxu0 0
    %830 = vmatpush1.bf16.msra.mxu0 0
    %831 = vmatprep.subr.bf16.mxu0 0
    %832 = vmatpush1.bf16.msra.mxu0 0
    %833 = vmatprep.subr.bf16.mxu0 0
    %834 = vmatpush1.bf16.msra.mxu0 0
    %835 = vmatprep.subr.bf16.mxu0 0
    %836 = vmatpush1.bf16.msra.mxu0 0
    %837 = vmatprep.subr.bf16.mxu0 0
    %838 = vmatpush1.bf16.msra.mxu0 0
    %839 = vmatprep.subr.bf16.mxu0 0
    %840 = vmatpush1.bf16.msra.mxu0 0
    %841 = vmatprep.subr.bf16.mxu0 0
    %842 = vmatpush1.bf16.msra.mxu0 0
    %843 = vmatprep.subr.bf16.mxu0 0
    %844 = vmatpush1.bf16.msra.mxu0 0
    %845 = vmatprep.subr.bf16.mxu0 0
    %846 = vmatpush1.bf16.msra.mxu0 0
    %847 = vmatprep.subr.bf16.mxu0 0
    %848 = vmatpush1.bf16.msra.mxu0 0
    %849 = vmatprep.subr.bf16.mxu0 0
    %850 = vmatpush1.bf16.msra.mxu0 0
    %851 = vmatprep.subr.bf16.mxu0 0
    %852 = vmatpush1.bf16.msra.mxu0 0
    %853 = vmatprep.subr.bf16.mxu0 0
    %854 = vmatpush1.bf16.msra.mxu0 0
    %855 = vmatprep.subr.bf16.mxu0 0
    %856 = vmatpush1.bf16.msra.mxu0 0
    %857 = vmatprep.mubr.bf16.mxu0 0
    %858 = vmatmul.mubr.bf16.gmra.mrb[0].mxu0 %v819
    %v859 = vpop.f32.mrb[0].mxu0
    %v860 = vadd.f32 0.0, %v859
    %v861 = vpop.f32.mrb[0].mxu0
    %v862 = vpop.f32.mrb[0].mxu0
    %v863 = vpop.f32.mrb[0].mxu0
    %864 = vdwg.mxu0
    %865 = vrot.lane.b32.xlu0 %v336, 64
    %v866 = vpop.permute.xlu0 %865
    %v868 = vsel %vm346, %v809, 0
    %v871 = vsel %vm821, %v866, 0
    %873 = vmatprep.subr.bf16.mxu0 0
    %874 = vmatpush1.bf16.msra.mxu0 %v871
    %875 = vmatprep.subr.bf16.mxu0 0
    %876 = vmatpush1.bf16.msra.mxu0 0
    %877 = vmatprep.subr.bf16.mxu0 0
    %878 = vmatpush1.bf16.msra.mxu0 0
    %879 = vmatprep.subr.bf16.mxu0 0
    %880 = vmatpush1.bf16.msra.mxu0 0
    %881 = vmatprep.subr.bf16.mxu0 0
    %882 = vmatpush1.bf16.msra.mxu0 0
    %883 = vmatprep.subr.bf16.mxu0 0
    %884 = vmatpush1.bf16.msra.mxu0 0
    %885 = vmatprep.subr.bf16.mxu0 0
    %886 = vmatpush1.bf16.msra.mxu0 0
    %887 = vmatprep.subr.bf16.mxu0 0
    %888 = vmatpush1.bf16.msra.mxu0 0
    %889 = vmatprep.subr.bf16.mxu0 0
    %890 = vmatpush1.bf16.msra.mxu0 0
    %891 = vmatprep.subr.bf16.mxu0 0
    %892 = vmatpush1.bf16.msra.mxu0 0
    %893 = vmatprep.subr.bf16.mxu0 0
    %894 = vmatpush1.bf16.msra.mxu0 0
    %895 = vmatprep.subr.bf16.mxu0 0
    %896 = vmatpush1.bf16.msra.mxu0 0
    %897 = vmatprep.subr.bf16.mxu0 0
    %898 = vmatpush1.bf16.msra.mxu0 0
    %899 = vmatprep.subr.bf16.mxu0 0
    %900 = vmatpush1.bf16.msra.mxu0 0
    %901 = vmatprep.subr.bf16.mxu0 0
    %902 = vmatpush1.bf16.msra.mxu0 0
    %903 = vmatprep.subr.bf16.mxu0 0
    %904 = vmatpush1.bf16.msra.mxu0 0
    %905 = vmatprep.mubr.bf16.mxu0 0
    %906 = vmatmul.mubr.bf16.gmra.mrb[0].mxu0 %v868
    %v907 = vpop.f32.mrb[0].mxu0
    %v908 = vadd.f32 0.0, %v907
    %v909 = vpop.f32.mrb[0].mxu0
    %v910 = vpop.f32.mrb[0].mxu0
    %v911 = vpop.f32.mrb[0].mxu0
    %912 = vdwg.mxu0
    %913 = vrot.lane.b32.xlu0 %v337, 64
    %v914 = vpop.permute.xlu0 %913
    %v916 = vsel %vm346, %v810, 0
    %v919 = vsel %vm821, %v914, 0
    %921 = vmatprep.subr.bf16.mxu0 0
    %922 = vmatpush1.bf16.msra.mxu0 %v919
    %923 = vmatprep.subr.bf16.mxu0 0
    %924 = vmatpush1.bf16.msra.mxu0 0
    %925 = vmatprep.subr.bf16.mxu0 0
    %926 = vmatpush1.bf16.msra.mxu0 0
    %927 = vmatprep.subr.bf16.mxu0 0
    %928 = vmatpush1.bf16.msra.mxu0 0
    %929 = vmatprep.subr.bf16.mxu0 0
    %930 = vmatpush1.bf16.msra.mxu0 0
    %931 = vmatprep.subr.bf16.mxu0 0
    %932 = vmatpush1.bf16.msra.mxu0 0
    %933 = vmatprep.subr.bf16.mxu0 0
    %934 = vmatpush1.bf16.msra.mxu0 0
    %935 = vmatprep.subr.bf16.mxu0 0
    %936 = vmatpush1.bf16.msra.mxu0 0
    %937 = vmatprep.subr.bf16.mxu0 0
    %938 = vmatpush1.bf16.msra.mxu0 0
    %939 = vmatprep.subr.bf16.mxu0 0
    %940 = vmatpush1.bf16.msra.mxu0 0
    %941 = vmatprep.subr.bf16.mxu0 0
    %942 = vmatpush1.bf16.msra.mxu0 0
    %943 = vmatprep.subr.bf16.mxu0 0
    %944 = vmatpush1.bf16.msra.mxu0 0
    %945 = vmatprep.subr.bf16.mxu0 0
    %946 = vmatpush1.bf16.msra.mxu0 0
    %947 = vmatprep.subr.bf16.mxu0 0
    %948 = vmatpush1.bf16.msra.mxu0 0
    %949 = vmatprep.subr.bf16.mxu0 0
    %950 = vmatpush1.bf16.msra.mxu0 0
    %951 = vmatprep.subr.bf16.mxu0 0
    %952 = vmatpush1.bf16.msra.mxu0 0
    %953 = vmatprep.mubr.bf16.mxu0 0
    %954 = vmatmul.mubr.bf16.gmra.mrb[0].mxu0 %v916
    %v955 = vpop.f32.mrb[0].mxu0
    %v956 = vadd.f32 0.0, %v955
    %v957 = vpop.f32.mrb[0].mxu0
    %v958 = vpop.f32.mrb[0].mxu0
    %v959 = vpop.f32.mrb[0].mxu0
    %960 = vdwg.mxu0
    %961 = vrot.lane.b32.xlu0 %v338, 64
    %v962 = vpop.permute.xlu0 %961
    %v964 = vsel %vm346, %v811, 0
    %v967 = vsel %vm821, %v962, 0
    %969 = vmatprep.subr.bf16.mxu0 0
    %970 = vmatpush1.bf16.msra.mxu0 %v967
    %971 = vmatprep.subr.bf16.mxu0 0
    %972 = vmatpush1.bf16.msra.mxu0 0
    %973 = vmatprep.subr.bf16.mxu0 0
    %974 = vmatpush1.bf16.msra.mxu0 0
    %975 = vmatprep.subr.bf16.mxu0 0
    %976 = vmatpush1.bf16.msra.mxu0 0
    %977 = vmatprep.subr.bf16.mxu0 0
    %978 = vmatpush1.bf16.msra.mxu0 0
    %979 = vmatprep.subr.bf16.mxu0 0
    %980 = vmatpush1.bf16.msra.mxu0 0
    %981 = vmatprep.subr.bf16.mxu0 0
    %982 = vmatpush1.bf16.msra.mxu0 0
    %983 = vmatprep.subr.bf16.mxu0 0
    %984 = vmatpush1.bf16.msra.mxu0 0
    %985 = vmatprep.subr.bf16.mxu0 0
    %986 = vmatpush1.bf16.msra.mxu0 0
    %987 = vmatprep.subr.bf16.mxu0 0
    %988 = vmatpush1.bf16.msra.mxu0 0
    %989 = vmatprep.subr.bf16.mxu0 0
    %990 = vmatpush1.bf16.msra.mxu0 0
    %991 = vmatprep.subr.bf16.mxu0 0
    %992 = vmatpush1.bf16.msra.mxu0 0
    %993 = vmatprep.subr.bf16.mxu0 0
    %994 = vmatpush1.bf16.msra.mxu0 0
    %995 = vmatprep.subr.bf16.mxu0 0
    %996 = vmatpush1.bf16.msra.mxu0 0
    %997 = vmatprep.subr.bf16.mxu0 0
    %998 = vmatpush1.bf16.msra.mxu0 0
    %999 = vmatprep.subr.bf16.mxu0 0
    %1000 = vmatpush1.bf16.msra.mxu0 0
    %1001 = vmatprep.mubr.bf16.mxu0 0
    %1002 = vmatmul.mubr.bf16.gmra.mrb[0].mxu0 %v964
    %v1003 = vpop.f32.mrb[0].mxu0
    %v1004 = vadd.f32 0.0, %v1003
    %v1005 = vpop.f32.mrb[0].mxu0
    %v1006 = vpop.f32.mrb[0].mxu0
    %v1007 = vpop.f32.mrb[0].mxu0
    %1008 = vdwg.mxu0
    %1009 = vrot.lane.b32.xlu0 %v339, 64
    %v1010 = vpop.permute.xlu0 %1009
    %v1012 = vsel %vm346, %v812, 0
    %v1015 = vsel %vm821, %v1010, 0
    %1017 = vmatprep.subr.bf16.mxu0 0
    %1018 = vmatpush1.bf16.msra.mxu0 %v1015
    %1019 = vmatprep.subr.bf16.mxu0 0
    %1020 = vmatpush1.bf16.msra.mxu0 0
    %1021 = vmatprep.subr.bf16.mxu0 0
    %1022 = vmatpush1.bf16.msra.mxu0 0
    %1023 = vmatprep.subr.bf16.mxu0 0
    %1024 = vmatpush1.bf16.msra.mxu0 0
    %1025 = vmatprep.subr.bf16.mxu0 0
    %1026 = vmatpush1.bf16.msra.mxu0 0
    %1027 = vmatprep.subr.bf16.mxu0 0
    %1028 = vmatpush1.bf16.msra.mxu0 0
    %1029 = vmatprep.subr.bf16.mxu0 0
    %1030 = vmatpush1.bf16.msra.mxu0 0
    %1031 = vmatprep.subr.bf16.mxu0 0
    %1032 = vmatpush1.bf16.msra.mxu0 0
    %1033 = vmatprep.subr.bf16.mxu0 0
    %1034 = vmatpush1.bf16.msra.mxu0 0
    %1035 = vmatprep.subr.bf16.mxu0 0
    %1036 = vmatpush1.bf16.msra.mxu0 0
    %1037 = vmatprep.subr.bf16.mxu0 0
    %1038 = vmatpush1.bf16.msra.mxu0 0
    %1039 = vmatprep.subr.bf16.mxu0 0
    %1040 = vmatpush1.bf16.msra.mxu0 0
    %1041 = vmatprep.subr.bf16.mxu0 0
    %1042 = vmatpush1.bf16.msra.mxu0 0
    %1043 = vmatprep.subr.bf16.mxu0 0
    %1044 = vmatpush1.bf16.msra.mxu0 0
    %1045 = vmatprep.subr.bf16.mxu0 0
    %1046 = vmatpush1.bf16.msra.mxu0 0
    %1047 = vmatprep.subr.bf16.mxu0 0
    %1048 = vmatpush1.bf16.msra.mxu0 0
    %1049 = vmatprep.mubr.bf16.mxu0 0
    %1050 = vmatmul.mubr.bf16.gmra.mrb[0].mxu0 %v1012
    %v1051 = vpop.f32.mrb[0].mxu0
    %v1052 = vadd.f32 0.0, %v1051
    %v1053 = vpop.f32.mrb[0].mxu0
    %v1054 = vpop.f32.mrb[0].mxu0
    %v1055 = vpop.f32.mrb[0].mxu0
    %1056 = vdwg.mxu0
    %1057 = vrot.lane.b32.xlu0 %v340, 64
    %v1058 = vpop.permute.xlu0 %1057
    %v1060 = vsel %vm346, %v813, 0
    %v1063 = vsel %vm821, %v1058, 0
    %1065 = vmatprep.subr.bf16.mxu0 0
    %1066 = vmatpush1.bf16.msra.mxu0 %v1063
    %1067 = vmatprep.subr.bf16.mxu0 0
    %1068 = vmatpush1.bf16.msra.mxu0 0
    %1069 = vmatprep.subr.bf16.mxu0 0
    %1070 = vmatpush1.bf16.msra.mxu0 0
    %1071 = vmatprep.subr.bf16.mxu0 0
    %1072 = vmatpush1.bf16.msra.mxu0 0
    %1073 = vmatprep.subr.bf16.mxu0 0
    %1074 = vmatpush1.bf16.msra.mxu0 0
    %1075 = vmatprep.subr.bf16.mxu0 0
    %1076 = vmatpush1.bf16.msra.mxu0 0
    %1077 = vmatprep.subr.bf16.mxu0 0
    %1078 = vmatpush1.bf16.msra.mxu0 0
    %1079 = vmatprep.subr.bf16.mxu0 0
    %1080 = vmatpush1.bf16.msra.mxu0 0
    %1081 = vmatprep.subr.bf16.mxu0 0
    %1082 = vmatpush1.bf16.msra.mxu0 0
    %1083 = vmatprep.subr.bf16.mxu0 0
    %1084 = vmatpush1.bf16.msra.mxu0 0
    %1085 = vmatprep.subr.bf16.mxu0 0
    %1086 = vmatpush1.bf16.msra.mxu0 0
    %1087 = vmatprep.subr.bf16.mxu0 0
    %1088 = vmatpush1.bf16.msra.mxu0 0
    %1089 = vmatprep.subr.bf16.mxu0 0
    %1090 = vmatpush1.bf16.msra.mxu0 0
    %1091 = vmatprep.subr.bf16.mxu0 0
    %1092 = vmatpush1.bf16.msra.mxu0 0
    %1093 = vmatprep.subr.bf16.mxu0 0
    %1094 = vmatpush1.bf16.msra.mxu0 0
    %1095 = vmatprep.subr.bf16.mxu0 0
    %1096 = vmatpush1.bf16.msra.mxu0 0
    %1097 = vmatprep.mubr.bf16.mxu0 0
    %1098 = vmatmul.mubr.bf16.gmra.mrb[0].mxu0 %v1060
    %v1099 = vpop.f32.mrb[0].mxu0
    %v1100 = vadd.f32 0.0, %v1099
    %v1101 = vpop.f32.mrb[0].mxu0
    %v1102 = vpop.f32.mrb[0].mxu0
    %v1103 = vpop.f32.mrb[0].mxu0
    %1104 = vdwg.mxu0
    %1105 = vrot.lane.b32.xlu0 %v341, 64
    %v1106 = vpop.permute.xlu0 %1105
    %v1108 = vsel %vm346, %v814, 0
    %v1111 = vsel %vm821, %v1106, 0
    %1113 = vmatprep.subr.bf16.mxu0 0
    %1114 = vmatpush1.bf16.msra.mxu0 %v1111
    %1115 = vmatprep.subr.bf16.mxu0 0
    %1116 = vmatpush1.bf16.msra.mxu0 0
    %1117 = vmatprep.subr.bf16.mxu0 0
    %1118 = vmatpush1.bf16.msra.mxu0 0
    %1119 = vmatprep.subr.bf16.mxu0 0
    %1120 = vmatpush1.bf16.msra.mxu0 0
    %1121 = vmatprep.subr.bf16.mxu0 0
    %1122 = vmatpush1.bf16.msra.mxu0 0
    %1123 = vmatprep.subr.bf16.mxu0 0
    %1124 = vmatpush1.bf16.msra.mxu0 0
    %1125 = vmatprep.subr.bf16.mxu0 0
    %1126 = vmatpush1.bf16.msra.mxu0 0
    %1127 = vmatprep.subr.bf16.mxu0 0
    %1128 = vmatpush1.bf16.msra.mxu0 0
    %1129 = vmatprep.subr.bf16.mxu0 0
    %1130 = vmatpush1.bf16.msra.mxu0 0
    %1131 = vmatprep.subr.bf16.mxu0 0
    %1132 = vmatpush1.bf16.msra.mxu0 0
    %1133 = vmatprep.subr.bf16.mxu0 0
    %1134 = vmatpush1.bf16.msra.mxu0 0
    %1135 = vmatprep.subr.bf16.mxu0 0
    %1136 = vmatpush1.bf16.msra.mxu0 0
    %1137 = vmatprep.subr.bf16.mxu0 0
    %1138 = vmatpush1.bf16.msra.mxu0 0
    %1139 = vmatprep.subr.bf16.mxu0 0
    %1140 = vmatpush1.bf16.msra.mxu0 0
    %1141 = vmatprep.subr.bf16.mxu0 0
    %1142 = vmatpush1.bf16.msra.mxu0 0
    %1143 = vmatprep.subr.bf16.mxu0 0
    %1144 = vmatpush1.bf16.msra.mxu0 0
    %1145 = vmatprep.mubr.bf16.mxu0 0
    %1146 = vmatmul.mubr.bf16.gmra.mrb[0].mxu0 %v1108
    %v1147 = vpop.f32.mrb[0].mxu0
    %v1148 = vadd.f32 0.0, %v1147
    %v1149 = vpop.f32.mrb[0].mxu0
    %v1150 = vpop.f32.mrb[0].mxu0
    %v1151 = vpop.f32.mrb[0].mxu0
    %1152 = vdwg.mxu0
    %1153 = vrot.lane.b32.xlu0 %v342, 64
    %v1154 = vpop.permute.xlu0 %1153
    %v1156 = vsel %vm346, %v815, 0
    %v1159 = vsel %vm821, %v1154, 0
    %1161 = vmatprep.subr.bf16.mxu0 0
    %1162 = vmatpush1.bf16.msra.mxu0 %v1159
    %1163 = vmatprep.subr.bf16.mxu0 0
    %1164 = vmatpush1.bf16.msra.mxu0 0
    %1165 = vmatprep.subr.bf16.mxu0 0
    %1166 = vmatpush1.bf16.msra.mxu0 0
    %1167 = vmatprep.subr.bf16.mxu0 0
    %1168 = vmatpush1.bf16.msra.mxu0 0
    %1169 = vmatprep.subr.bf16.mxu0 0
    %1170 = vmatpush1.bf16.msra.mxu0 0
    %1171 = vmatprep.subr.bf16.mxu0 0
    %1172 = vmatpush1.bf16.msra.mxu0 0
    %1173 = vmatprep.subr.bf16.mxu0 0
    %1174 = vmatpush1.bf16.msra.mxu0 0
    %1175 = vmatprep.subr.bf16.mxu0 0
    %1176 = vmatpush1.bf16.msra.mxu0 0
    %1177 = vmatprep.subr.bf16.mxu0 0
    %1178 = vmatpush1.bf16.msra.mxu0 0
    %1179 = vmatprep.subr.bf16.mxu0 0
    %1180 = vmatpush1.bf16.msra.mxu0 0
    %1181 = vmatprep.subr.bf16.mxu0 0
    %1182 = vmatpush1.bf16.msra.mxu0 0
    %1183 = vmatprep.subr.bf16.mxu0 0
    %1184 = vmatpush1.bf16.msra.mxu0 0
    %1185 = vmatprep.subr.bf16.mxu0 0
    %1186 = vmatpush1.bf16.msra.mxu0 0
    %1187 = vmatprep.subr.bf16.mxu0 0
    %1188 = vmatpush1.bf16.msra.mxu0 0
    %1189 = vmatprep.subr.bf16.mxu0 0
    %1190 = vmatpush1.bf16.msra.mxu0 0
    %1191 = vmatprep.subr.bf16.mxu0 0
    %1192 = vmatpush1.bf16.msra.mxu0 0
    %1193 = vmatprep.mubr.bf16.mxu0 0
    %1194 = vmatmul.mubr.bf16.gmra.mrb[0].mxu0 %v1156
    %v1195 = vpop.f32.mrb[0].mxu0
    %v1196 = vadd.f32 0.0, %v1195
    %v1197 = vpop.f32.mrb[0].mxu0
    %v1198 = vpop.f32.mrb[0].mxu0
    %v1199 = vpop.f32.mrb[0].mxu0
    %1200 = vdwg.mxu0
    %v1201 = vrcp.pop %v786
    %v1202 = vrcp.pop %v789
    %v1203 = vrcp.pop %v792
    %v1204 = vrcp.pop %v795
    %v1205 = vrcp.pop %v798
    %v1206 = vrcp.pop %v801
    %v1207 = vrcp.pop %v804
    %v1208 = vrcp.pop %v807
    %v1209 = vmul.f32 %v860, %v1201
    %v1210 = vmul.f32 %v908, %v1202
    %v1211 = vmul.f32 %v956, %v1203
    %v1212 = vmul.f32 %v1004, %v1204
    %v1213 = vmul.f32 %v1052, %v1205
    %v1214 = vmul.f32 %v1100, %v1206
    %v1215 = vmul.f32 %v1148, %v1207
    %v1216 = vmul.f32 %v1196, %v1208
    %1217 = vrot.lane.b32.xlu0 %v335, 120
    %v1218 = vpop.permute.xlu0 %1217
    %1219 = vrot.lane.b32.xlu0 %v335, 88
    %v1220 = vpop.permute.xlu0 %1219
    %v1222 = vsel %vm346, %v1218, 0
    %v1225 = vsel %vm346, %v1220, 0
    %1227 = vmatprep.subr.bf16.mxu0 0
    %1228 = vmatpush1.bf16.xpose.msra.mxu0 %v1225
    %1229 = vmatprep.subr.bf16.mxu0 0
    %1230 = vmatpush1.bf16.xpose.msra.mxu0 0
    %1231 = vmatprep.subr.bf16.mxu0 0
    %1232 = vmatpush1.bf16.xpose.msra.mxu0 0
    %1233 = vmatprep.subr.bf16.mxu0 0
    %1234 = vmatpush1.bf16.xpose.msra.mxu0 0
    %1235 = vmatprep.subr.bf16.mxu0 0
    %1236 = vmatpush1.bf16.xpose.msra.mxu0 0
    %1237 = vmatprep.subr.bf16.mxu0 0
    %1238 = vmatpush1.bf16.xpose.msra.mxu0 0
    %1239 = vmatprep.subr.bf16.mxu0 0
    %1240 = vmatpush1.bf16.xpose.msra.mxu0 0
    %1241 = vmatprep.subr.bf16.mxu0 0
    %1242 = vmatpush1.bf16.xpose.msra.mxu0 0
    %1243 = vmatprep.subr.bf16.mxu0 0
    %1244 = vmatpush1.bf16.xpose.msra.mxu0 0
    %1245 = vmatprep.subr.bf16.mxu0 0
    %1246 = vmatpush1.bf16.xpose.msra.mxu0 0
    %1247 = vmatprep.subr.bf16.mxu0 0
    %1248 = vmatpush1.bf16.xpose.msra.mxu0 0
    %1249 = vmatprep.subr.bf16.mxu0 0
    %1250 = vmatpush1.bf16.xpose.msra.mxu0 0
    %1251 = vmatprep.subr.bf16.mxu0 0
    %1252 = vmatpush1.bf16.xpose.msra.mxu0 0
    %1253 = vmatprep.subr.bf16.mxu0 0
    %1254 = vmatpush1.bf16.xpose.msra.mxu0 0
    %1255 = vmatprep.subr.bf16.mxu0 0
    %1256 = vmatpush1.bf16.xpose.msra.mxu0 0
    %1257 = vmatprep.subr.bf16.mxu0 0
    %1258 = vmatpush1.bf16.xpose.msra.mxu0 0
    %1259 = vmatprep.mubr.bf16.mxu0 0
    %1260 = vmatmul.mubr.bf16.gmra.mrb[0].mxu0 %v1222
    %v1261 = vpop.f32.mrb[0].mxu0
    %v1262 = vadd.f32 0.0, %v1261
    %v1263 = vpop.f32.mrb[0].mxu0
    %v1264 = vpop.f32.mrb[0].mxu0
    %v1265 = vpop.f32.mrb[0].mxu0
    %1266 = vdwg.mxu0
    %1267 = vrot.lane.b32.xlu0 %v336, 120
    %v1268 = vpop.permute.xlu0 %1267
    %1269 = vrot.lane.b32.xlu0 %v336, 88
    %v1270 = vpop.permute.xlu0 %1269
    %v1272 = vsel %vm346, %v1268, 0
    %v1275 = vsel %vm346, %v1270, 0
    %1277 = vmatprep.subr.bf16.mxu0 0
    %1278 = vmatpush1.bf16.xpose.msra.mxu0 %v1275
    %1279 = vmatprep.subr.bf16.mxu0 0
    %1280 = vmatpush1.bf16.xpose.msra.mxu0 0
    %1281 = vmatprep.subr.bf16.mxu0 0
    %1282 = vmatpush1.bf16.xpose.msra.mxu0 0
    %1283 = vmatprep.subr.bf16.mxu0 0
    %1284 = vmatpush1.bf16.xpose.msra.mxu0 0
    %1285 = vmatprep.subr.bf16.mxu0 0
    %1286 = vmatpush1.bf16.xpose.msra.mxu0 0
    %1287 = vmatprep.subr.bf16.mxu0 0
    %1288 = vmatpush1.bf16.xpose.msra.mxu0 0
    %1289 = vmatprep.subr.bf16.mxu0 0
    %1290 = vmatpush1.bf16.xpose.msra.mxu0 0
    %1291 = vmatprep.subr.bf16.mxu0 0
    %1292 = vmatpush1.bf16.xpose.msra.mxu0 0
    %1293 = vmatprep.subr.bf16.mxu0 0
    %1294 = vmatpush1.bf16.xpose.msra.mxu0 0
    %1295 = vmatprep.subr.bf16.mxu0 0
    %1296 = vmatpush1.bf16.xpose.msra.mxu0 0
    %1297 = vmatprep.subr.bf16.mxu0 0
    %1298 = vmatpush1.bf16.xpose.msra.mxu0 0
    %1299 = vmatprep.subr.bf16.mxu0 0
    %1300 = vmatpush1.bf16.xpose.msra.mxu0 0
    %1301 = vmatprep.subr.bf16.mxu0 0
    %1302 = vmatpush1.bf16.xpose.msra.mxu0 0
    %1303 = vmatprep.subr.bf16.mxu0 0
    %1304 = vmatpush1.bf16.xpose.msra.mxu0 0
    %1305 = vmatprep.subr.bf16.mxu0 0
    %1306 = vmatpush1.bf16.xpose.msra.mxu0 0
    %1307 = vmatprep.subr.bf16.mxu0 0
    %1308 = vmatpush1.bf16.xpose.msra.mxu0 0
    %1309 = vmatprep.mubr.bf16.mxu0 0
    %1310 = vmatmul.mubr.bf16.gmra.mrb[0].mxu0 %v1272
    %v1311 = vpop.f32.mrb[0].mxu0
    %v1312 = vadd.f32 0.0, %v1311
    %v1313 = vpop.f32.mrb[0].mxu0
    %v1314 = vpop.f32.mrb[0].mxu0
    %v1315 = vpop.f32.mrb[0].mxu0
    %1316 = vdwg.mxu0
    %1317 = vrot.lane.b32.xlu0 %v337, 120
    %v1318 = vpop.permute.xlu0 %1317
    %1319 = vrot.lane.b32.xlu0 %v337, 88
    %v1320 = vpop.permute.xlu0 %1319
    %v1322 = vsel %vm346, %v1318, 0
    %v1325 = vsel %vm346, %v1320, 0
    %1327 = vmatprep.subr.bf16.mxu0 0
    %1328 = vmatpush1.bf16.xpose.msra.mxu0 %v1325
    %1329 = vmatprep.subr.bf16.mxu0 0
    %1330 = vmatpush1.bf16.xpose.msra.mxu0 0
    %1331 = vmatprep.subr.bf16.mxu0 0
    %1332 = vmatpush1.bf16.xpose.msra.mxu0 0
    %1333 = vmatprep.subr.bf16.mxu0 0
    %1334 = vmatpush1.bf16.xpose.msra.mxu0 0
    %1335 = vmatprep.subr.bf16.mxu0 0
    %1336 = vmatpush1.bf16.xpose.msra.mxu0 0
    %1337 = vmatprep.subr.bf16.mxu0 0
    %1338 = vmatpush1.bf16.xpose.msra.mxu0 0
    %1339 = vmatprep.subr.bf16.mxu0 0
    %1340 = vmatpush1.bf16.xpose.msra.mxu0 0
    %1341 = vmatprep.subr.bf16.mxu0 0
    %1342 = vmatpush1.bf16.xpose.msra.mxu0 0
    %1343 = vmatprep.subr.bf16.mxu0 0
    %1344 = vmatpush1.bf16.xpose.msra.mxu0 0
    %1345 = vmatprep.subr.bf16.mxu0 0
    %1346 = vmatpush1.bf16.xpose.msra.mxu0 0
    %1347 = vmatprep.subr.bf16.mxu0 0
    %1348 = vmatpush1.bf16.xpose.msra.mxu0 0
    %1349 = vmatprep.subr.bf16.mxu0 0
    %1350 = vmatpush1.bf16.xpose.msra.mxu0 0
    %1351 = vmatprep.subr.bf16.mxu0 0
    %1352 = vmatpush1.bf16.xpose.msra.mxu0 0
    %1353 = vmatprep.subr.bf16.mxu0 0
    %1354 = vmatpush1.bf16.xpose.msra.mxu0 0
    %1355 = vmatprep.subr.bf16.mxu0 0
    %1356 = vmatpush1.bf16.xpose.msra.mxu0 0
    %1357 = vmatprep.subr.bf16.mxu0 0
    %1358 = vmatpush1.bf16.xpose.msra.mxu0 0
    %1359 = vmatprep.mubr.bf16.mxu0 0
    %1360 = vmatmul.mubr.bf16.gmra.mrb[0].mxu0 %v1322
    %v1361 = vpop.f32.mrb[0].mxu0
    %v1362 = vadd.f32 0.0, %v1361
    %v1363 = vpop.f32.mrb[0].mxu0
    %v1364 = vpop.f32.mrb[0].mxu0
    %v1365 = vpop.f32.mrb[0].mxu0
    %1366 = vdwg.mxu0
    %1367 = vrot.lane.b32.xlu0 %v338, 120
    %v1368 = vpop.permute.xlu0 %1367
    %1369 = vrot.lane.b32.xlu0 %v338, 88
    %v1370 = vpop.permute.xlu0 %1369
    %v1372 = vsel %vm346, %v1368, 0
    %v1375 = vsel %vm346, %v1370, 0
    %1377 = vmatprep.subr.bf16.mxu0 0
    %1378 = vmatpush1.bf16.xpose.msra.mxu0 %v1375
    %1379 = vmatprep.subr.bf16.mxu0 0
    %1380 = vmatpush1.bf16.xpose.msra.mxu0 0
    %1381 = vmatprep.subr.bf16.mxu0 0
    %1382 = vmatpush1.bf16.xpose.msra.mxu0 0
    %1383 = vmatprep.subr.bf16.mxu0 0
    %1384 = vmatpush1.bf16.xpose.msra.mxu0 0
    %1385 = vmatprep.subr.bf16.mxu0 0
    %1386 = vmatpush1.bf16.xpose.msra.mxu0 0
    %1387 = vmatprep.subr.bf16.mxu0 0
    %1388 = vmatpush1.bf16.xpose.msra.mxu0 0
    %1389 = vmatprep.subr.bf16.mxu0 0
    %1390 = vmatpush1.bf16.xpose.msra.mxu0 0
    %1391 = vmatprep.subr.bf16.mxu0 0
    %1392 = vmatpush1.bf16.xpose.msra.mxu0 0
    %1393 = vmatprep.subr.bf16.mxu0 0
    %1394 = vmatpush1.bf16.xpose.msra.mxu0 0
    %1395 = vmatprep.subr.bf16.mxu0 0
    %1396 = vmatpush1.bf16.xpose.msra.mxu0 0
    %1397 = vmatprep.subr.bf16.mxu0 0
    %1398 = vmatpush1.bf16.xpose.msra.mxu0 0
    %1399 = vmatprep.subr.bf16.mxu0 0
    %1400 = vmatpush1.bf16.xpose.msra.mxu0 0
    %1401 = vmatprep.subr.bf16.mxu0 0
    %1402 = vmatpush1.bf16.xpose.msra.mxu0 0
    %1403 = vmatprep.subr.bf16.mxu0 0
    %1404 = vmatpush1.bf16.xpose.msra.mxu0 0
    %1405 = vmatprep.subr.bf16.mxu0 0
    %1406 = vmatpush1.bf16.xpose.msra.mxu0 0
    %1407 = vmatprep.subr.bf16.mxu0 0
    %1408 = vmatpush1.bf16.xpose.msra.mxu0 0
    %1409 = vmatprep.mubr.bf16.mxu0 0
    %1410 = vmatmul.mubr.bf16.gmra.mrb[0].mxu0 %v1372
    %v1411 = vpop.f32.mrb[0].mxu0
    %v1412 = vadd.f32 0.0, %v1411
    %v1413 = vpop.f32.mrb[0].mxu0
    %v1414 = vpop.f32.mrb[0].mxu0
    %v1415 = vpop.f32.mrb[0].mxu0
    %1416 = vdwg.mxu0
    %1417 = vrot.lane.b32.xlu0 %v339, 120
    %v1418 = vpop.permute.xlu0 %1417
    %1419 = vrot.lane.b32.xlu0 %v339, 88
    %v1420 = vpop.permute.xlu0 %1419
    %v1422 = vsel %vm346, %v1418, 0
    %v1425 = vsel %vm346, %v1420, 0
    %1427 = vmatprep.subr.bf16.mxu0 0
    %1428 = vmatpush1.bf16.xpose.msra.mxu0 %v1425
    %1429 = vmatprep.subr.bf16.mxu0 0
    %1430 = vmatpush1.bf16.xpose.msra.mxu0 0
    %1431 = vmatprep.subr.bf16.mxu0 0
    %1432 = vmatpush1.bf16.xpose.msra.mxu0 0
    %1433 = vmatprep.subr.bf16.mxu0 0
    %1434 = vmatpush1.bf16.xpose.msra.mxu0 0
    %1435 = vmatprep.subr.bf16.mxu0 0
    %1436 = vmatpush1.bf16.xpose.msra.mxu0 0
    %1437 = vmatprep.subr.bf16.mxu0 0
    %1438 = vmatpush1.bf16.xpose.msra.mxu0 0
    %1439 = vmatprep.subr.bf16.mxu0 0
    %1440 = vmatpush1.bf16.xpose.msra.mxu0 0
    %1441 = vmatprep.subr.bf16.mxu0 0
    %1442 = vmatpush1.bf16.xpose.msra.mxu0 0
    %1443 = vmatprep.subr.bf16.mxu0 0
    %1444 = vmatpush1.bf16.xpose.msra.mxu0 0
    %1445 = vmatprep.subr.bf16.mxu0 0
    %1446 = vmatpush1.bf16.xpose.msra.mxu0 0
    %1447 = vmatprep.subr.bf16.mxu0 0
    %1448 = vmatpush1.bf16.xpose.msra.mxu0 0
    %1449 = vmatprep.subr.bf16.mxu0 0
    %1450 = vmatpush1.bf16.xpose.msra.mxu0 0
    %1451 = vmatprep.subr.bf16.mxu0 0
    %1452 = vmatpush1.bf16.xpose.msra.mxu0 0
    %1453 = vmatprep.subr.bf16.mxu0 0
    %1454 = vmatpush1.bf16.xpose.msra.mxu0 0
    %1455 = vmatprep.subr.bf16.mxu0 0
    %1456 = vmatpush1.bf16.xpose.msra.mxu0 0
    %1457 = vmatprep.subr.bf16.mxu0 0
    %1458 = vmatpush1.bf16.xpose.msra.mxu0 0
    %1459 = vmatprep.mubr.bf16.mxu0 0
    %1460 = vmatmul.mubr.bf16.gmra.mrb[0].mxu0 %v1422
    %v1461 = vpop.f32.mrb[0].mxu0
    %v1462 = vadd.f32 0.0, %v1461
    %v1463 = vpop.f32.mrb[0].mxu0
    %v1464 = vpop.f32.mrb[0].mxu0
    %v1465 = vpop.f32.mrb[0].mxu0
    %1466 = vdwg.mxu0
    %1467 = vrot.lane.b32.xlu0 %v340, 120
    %v1468 = vpop.permute.xlu0 %1467
    %1469 = vrot.lane.b32.xlu0 %v340, 88
    %v1470 = vpop.permute.xlu0 %1469
    %v1472 = vsel %vm346, %v1468, 0
    %v1475 = vsel %vm346, %v1470, 0
    %1477 = vmatprep.subr.bf16.mxu0 0
    %1478 = vmatpush1.bf16.xpose.msra.mxu0 %v1475
    %1479 = vmatprep.subr.bf16.mxu0 0
    %1480 = vmatpush1.bf16.xpose.msra.mxu0 0
    %1481 = vmatprep.subr.bf16.mxu0 0
    %1482 = vmatpush1.bf16.xpose.msra.mxu0 0
    %1483 = vmatprep.subr.bf16.mxu0 0
    %1484 = vmatpush1.bf16.xpose.msra.mxu0 0
    %1485 = vmatprep.subr.bf16.mxu0 0
    %1486 = vmatpush1.bf16.xpose.msra.mxu0 0
    %1487 = vmatprep.subr.bf16.mxu0 0
    %1488 = vmatpush1.bf16.xpose.msra.mxu0 0
    %1489 = vmatprep.subr.bf16.mxu0 0
    %1490 = vmatpush1.bf16.xpose.msra.mxu0 0
    %1491 = vmatprep.subr.bf16.mxu0 0
    %1492 = vmatpush1.bf16.xpose.msra.mxu0 0
    %1493 = vmatprep.subr.bf16.mxu0 0
    %1494 = vmatpush1.bf16.xpose.msra.mxu0 0
    %1495 = vmatprep.subr.bf16.mxu0 0
    %1496 = vmatpush1.bf16.xpose.msra.mxu0 0
    %1497 = vmatprep.subr.bf16.mxu0 0
    %1498 = vmatpush1.bf16.xpose.msra.mxu0 0
    %1499 = vmatprep.subr.bf16.mxu0 0
    %1500 = vmatpush1.bf16.xpose.msra.mxu0 0
    %1501 = vmatprep.subr.bf16.mxu0 0
    %1502 = vmatpush1.bf16.xpose.msra.mxu0 0
    %1503 = vmatprep.subr.bf16.mxu0 0
    %1504 = vmatpush1.bf16.xpose.msra.mxu0 0
    %1505 = vmatprep.subr.bf16.mxu0 0
    %1506 = vmatpush1.bf16.xpose.msra.mxu0 0
    %1507 = vmatprep.subr.bf16.mxu0 0
    %1508 = vmatpush1.bf16.xpose.msra.mxu0 0
    %1509 = vmatprep.mubr.bf16.mxu0 0
    %1510 = vmatmul.mubr.bf16.gmra.mrb[0].mxu0 %v1472
    %v1511 = vpop.f32.mrb[0].mxu0
    %v1512 = vadd.f32 0.0, %v1511
    %v1513 = vpop.f32.mrb[0].mxu0
    %v1514 = vpop.f32.mrb[0].mxu0
    %v1515 = vpop.f32.mrb[0].mxu0
    %1516 = vdwg.mxu0
    %1517 = vrot.lane.b32.xlu0 %v341, 120
    %v1518 = vpop.permute.xlu0 %1517
    %1519 = vrot.lane.b32.xlu0 %v341, 88
    %v1520 = vpop.permute.xlu0 %1519
    %v1522 = vsel %vm346, %v1518, 0
    %v1525 = vsel %vm346, %v1520, 0
    %1527 = vmatprep.subr.bf16.mxu0 0
    %1528 = vmatpush1.bf16.xpose.msra.mxu0 %v1525
    %1529 = vmatprep.subr.bf16.mxu0 0
    %1530 = vmatpush1.bf16.xpose.msra.mxu0 0
    %1531 = vmatprep.subr.bf16.mxu0 0
    %1532 = vmatpush1.bf16.xpose.msra.mxu0 0
    %1533 = vmatprep.subr.bf16.mxu0 0
    %1534 = vmatpush1.bf16.xpose.msra.mxu0 0
    %1535 = vmatprep.subr.bf16.mxu0 0
    %1536 = vmatpush1.bf16.xpose.msra.mxu0 0
    %1537 = vmatprep.subr.bf16.mxu0 0
    %1538 = vmatpush1.bf16.xpose.msra.mxu0 0
    %1539 = vmatprep.subr.bf16.mxu0 0
    %1540 = vmatpush1.bf16.xpose.msra.mxu0 0
    %1541 = vmatprep.subr.bf16.mxu0 0
    %1542 = vmatpush1.bf16.xpose.msra.mxu0 0
    %1543 = vmatprep.subr.bf16.mxu0 0
    %1544 = vmatpush1.bf16.xpose.msra.mxu0 0
    %1545 = vmatprep.subr.bf16.mxu0 0
    %1546 = vmatpush1.bf16.xpose.msra.mxu0 0
    %1547 = vmatprep.subr.bf16.mxu0 0
    %1548 = vmatpush1.bf16.xpose.msra.mxu0 0
    %1549 = vmatprep.subr.bf16.mxu0 0
    %1550 = vmatpush1.bf16.xpose.msra.mxu0 0
    %1551 = vmatprep.subr.bf16.mxu0 0
    %1552 = vmatpush1.bf16.xpose.msra.mxu0 0
    %1553 = vmatprep.subr.bf16.mxu0 0
    %1554 = vmatpush1.bf16.xpose.msra.mxu0 0
    %1555 = vmatprep.subr.bf16.mxu0 0
    %1556 = vmatpush1.bf16.xpose.msra.mxu0 0
    %1557 = vmatprep.subr.bf16.mxu0 0
    %1558 = vmatpush1.bf16.xpose.msra.mxu0 0
    %1559 = vmatprep.mubr.bf16.mxu0 0
    %1560 = vmatmul.mubr.bf16.gmra.mrb[0].mxu0 %v1522
    %v1561 = vpop.f32.mrb[0].mxu0
    %v1562 = vadd.f32 0.0, %v1561
    %v1563 = vpop.f32.mrb[0].mxu0
    %v1564 = vpop.f32.mrb[0].mxu0
    %v1565 = vpop.f32.mrb[0].mxu0
    %1566 = vdwg.mxu0
    %1567 = vrot.lane.b32.xlu0 %v342, 120
    %v1568 = vpop.permute.xlu0 %1567
    %1569 = vrot.lane.b32.xlu0 %v342, 88
    %v1570 = vpop.permute.xlu0 %1569
    %v1572 = vsel %vm346, %v1568, 0
    %v1575 = vsel %vm346, %v1570, 0
    %1577 = vmatprep.subr.bf16.mxu0 0
    %1578 = vmatpush1.bf16.xpose.msra.mxu0 %v1575
    %1579 = vmatprep.subr.bf16.mxu0 0
    %1580 = vmatpush1.bf16.xpose.msra.mxu0 0
    %1581 = vmatprep.subr.bf16.mxu0 0
    %1582 = vmatpush1.bf16.xpose.msra.mxu0 0
    %1583 = vmatprep.subr.bf16.mxu0 0
    %1584 = vmatpush1.bf16.xpose.msra.mxu0 0
    %1585 = vmatprep.subr.bf16.mxu0 0
    %1586 = vmatpush1.bf16.xpose.msra.mxu0 0
    %1587 = vmatprep.subr.bf16.mxu0 0
    %1588 = vmatpush1.bf16.xpose.msra.mxu0 0
    %1589 = vmatprep.subr.bf16.mxu0 0
    %1590 = vmatpush1.bf16.xpose.msra.mxu0 0
    %1591 = vmatprep.subr.bf16.mxu0 0
    %1592 = vmatpush1.bf16.xpose.msra.mxu0 0
    %1593 = vmatprep.subr.bf16.mxu0 0
    %1594 = vmatpush1.bf16.xpose.msra.mxu0 0
    %1595 = vmatprep.subr.bf16.mxu0 0
    %1596 = vmatpush1.bf16.xpose.msra.mxu0 0
    %1597 = vmatprep.subr.bf16.mxu0 0
    %1598 = vmatpush1.bf16.xpose.msra.mxu0 0
    %1599 = vmatprep.subr.bf16.mxu0 0
    %1600 = vmatpush1.bf16.xpose.msra.mxu0 0
    %1601 = vmatprep.subr.bf16.mxu0 0
    %1602 = vmatpush1.bf16.xpose.msra.mxu0 0
    %1603 = vmatprep.subr.bf16.mxu0 0
    %1604 = vmatpush1.bf16.xpose.msra.mxu0 0
    %1605 = vmatprep.subr.bf16.mxu0 0
    %1606 = vmatpush1.bf16.xpose.msra.mxu0 0
    %1607 = vmatprep.subr.bf16.mxu0 0
    %1608 = vmatpush1.bf16.xpose.msra.mxu0 0
    %1609 = vmatprep.mubr.bf16.mxu0 0
    %1610 = vmatmul.mubr.bf16.gmra.mrb[0].mxu0 %v1572
    %v1611 = vpop.f32.mrb[0].mxu0
    %v1612 = vadd.f32 0.0, %v1611
    %v1613 = vpop.f32.mrb[0].mxu0
    %v1614 = vpop.f32.mrb[0].mxu0
    %v1615 = vpop.f32.mrb[0].mxu0
    %1616 = vdwg.mxu0
    %v1617 = vsel %vm346, %v1262, -inf
    %1618 = vmax.xlane.f32.xlu0 %v1617
    %v1619 = vpop.xlane.xlu0 %1618
    %v1620 = vsel %vm346, %v1312, -inf
    %1621 = vmax.xlane.f32.xlu0 %v1620
    %v1622 = vpop.xlane.xlu0 %1621
    %v1623 = vsel %vm346, %v1362, -inf
    %1624 = vmax.xlane.f32.xlu0 %v1623
    %v1625 = vpop.xlane.xlu0 %1624
    %v1626 = vsel %vm346, %v1412, -inf
    %1627 = vmax.xlane.f32.xlu0 %v1626
    %v1628 = vpop.xlane.xlu0 %1627
    %v1629 = vsel %vm346, %v1462, -inf
    %1630 = vmax.xlane.f32.xlu0 %v1629
    %v1631 = vpop.xlane.xlu0 %1630
    %v1632 = vsel %vm346, %v1512, -inf
    %1633 = vmax.xlane.f32.xlu0 %v1632
    %v1634 = vpop.xlane.xlu0 %1633
    %v1635 = vsel %vm346, %v1562, -inf
    %1636 = vmax.xlane.f32.xlu0 %v1635
    %v1637 = vpop.xlane.xlu0 %1636
    %v1638 = vsel %vm346, %v1612, -inf
    %1639 = vmax.xlane.f32.xlu0 %v1638
    %v1640 = vpop.xlane.xlu0 %1639
    %v1641 = vsub.f32 %v1262, %v1619
    %v1642 = vsub.f32 %v1312, %v1622
    %v1643 = vsub.f32 %v1362, %v1625
    %v1644 = vsub.f32 %v1412, %v1628
    %v1645 = vsub.f32 %v1462, %v1631
    %v1646 = vsub.f32 %v1512, %v1634
    %v1647 = vsub.f32 %v1562, %v1637
    %v1648 = vsub.f32 %v1612, %v1640
    %v1649 = vmul.f32 %v1641, 1.442695
    %v1650 = vpow.pop %v1649
    %v1651 = vmul.f32 %v1642, 1.442695
    %v1652 = vpow.pop %v1651
    %v1653 = vmul.f32 %v1643, 1.442695
    %v1654 = vpow.pop %v1653
    %v1655 = vmul.f32 %v1644, 1.442695
    %v1656 = vpow.pop %v1655
    %v1657 = vmul.f32 %v1645, 1.442695
    %v1658 = vpow.pop %v1657
    %v1659 = vmul.f32 %v1646, 1.442695
    %v1660 = vpow.pop %v1659
    %v1661 = vmul.f32 %v1647, 1.442695
    %v1662 = vpow.pop %v1661
    %v1663 = vmul.f32 %v1648, 1.442695
    %v1664 = vpow.pop %v1663
    %v1665 = vsel %vm346, %v1650, 0.0
    %1666 = vadd.xlane.f32.xlu0 %v1665
    %v1667 = vpop.xlane.xlu0 %1666
    %v1668 = vsel %vm346, %v1652, 0.0
    %1669 = vadd.xlane.f32.xlu0 %v1668
    %v1670 = vpop.xlane.xlu0 %1669
    %v1671 = vsel %vm346, %v1654, 0.0
    %1672 = vadd.xlane.f32.xlu0 %v1671
    %v1673 = vpop.xlane.xlu0 %1672
    %v1674 = vsel %vm346, %v1656, 0.0
    %1675 = vadd.xlane.f32.xlu0 %v1674
    %v1676 = vpop.xlane.xlu0 %1675
    %v1677 = vsel %vm346, %v1658, 0.0
    %1678 = vadd.xlane.f32.xlu0 %v1677
    %v1679 = vpop.xlane.xlu0 %1678
    %v1680 = vsel %vm346, %v1660, 0.0
    %1681 = vadd.xlane.f32.xlu0 %v1680
    %v1682 = vpop.xlane.xlu0 %1681
    %v1683 = vsel %vm346, %v1662, 0.0
    %1684 = vadd.xlane.f32.xlu0 %v1683
    %v1685 = vpop.xlane.xlu0 %1684
    %v1686 = vsel %vm346, %v1664, 0.0
    %1687 = vadd.xlane.f32.xlu0 %v1686
    %v1688 = vpop.xlane.xlu0 %1687
    %v1689 = vpack.c.bf16 %v1650, %v1650
    %v1690 = vpack.c.bf16 %v1652, %v1652
    %v1691 = vpack.c.bf16 %v1654, %v1654
    %v1692 = vpack.c.bf16 %v1656, %v1656
    %v1693 = vpack.c.bf16 %v1658, %v1658
    %v1694 = vpack.c.bf16 %v1660, %v1660
    %v1695 = vpack.c.bf16 %v1662, %v1662
    %v1696 = vpack.c.bf16 %v1664, %v1664
    %1697 = vrot.lane.b32.xlu0 %v335, 56
    %v1698 = vpop.permute.xlu0 %1697
    %v1700 = vsel %vm346, %v1689, 0
    %v1703 = vsel %vm821, %v1698, 0
    %1705 = vmatprep.subr.bf16.mxu0 0
    %1706 = vmatpush1.bf16.msra.mxu0 %v1703
    %1707 = vmatprep.subr.bf16.mxu0 0
    %1708 = vmatpush1.bf16.msra.mxu0 0
    %1709 = vmatprep.subr.bf16.mxu0 0
    %1710 = vmatpush1.bf16.msra.mxu0 0
    %1711 = vmatprep.subr.bf16.mxu0 0
    %1712 = vmatpush1.bf16.msra.mxu0 0
    %1713 = vmatprep.subr.bf16.mxu0 0
    %1714 = vmatpush1.bf16.msra.mxu0 0
    %1715 = vmatprep.subr.bf16.mxu0 0
    %1716 = vmatpush1.bf16.msra.mxu0 0
    %1717 = vmatprep.subr.bf16.mxu0 0
    %1718 = vmatpush1.bf16.msra.mxu0 0
    %1719 = vmatprep.subr.bf16.mxu0 0
    %1720 = vmatpush1.bf16.msra.mxu0 0
    %1721 = vmatprep.subr.bf16.mxu0 0
    %1722 = vmatpush1.bf16.msra.mxu0 0
    %1723 = vmatprep.subr.bf16.mxu0 0
    %1724 = vmatpush1.bf16.msra.mxu0 0
    %1725 = vmatprep.subr.bf16.mxu0 0
    %1726 = vmatpush1.bf16.msra.mxu0 0
    %1727 = vmatprep.subr.bf16.mxu0 0
    %1728 = vmatpush1.bf16.msra.mxu0 0
    %1729 = vmatprep.subr.bf16.mxu0 0
    %1730 = vmatpush1.bf16.msra.mxu0 0
    %1731 = vmatprep.subr.bf16.mxu0 0
    %1732 = vmatpush1.bf16.msra.mxu0 0
    %1733 = vmatprep.subr.bf16.mxu0 0
    %1734 = vmatpush1.bf16.msra.mxu0 0
    %1735 = vmatprep.subr.bf16.mxu0 0
    %1736 = vmatpush1.bf16.msra.mxu0 0
    %1737 = vmatprep.mubr.bf16.mxu0 0
    %1738 = vmatmul.mubr.bf16.gmra.mrb[0].mxu0 %v1700
    %v1739 = vpop.f32.mrb[0].mxu0
    %v1740 = vadd.f32 0.0, %v1739
    %v1741 = vpop.f32.mrb[0].mxu0
    %v1742 = vpop.f32.mrb[0].mxu0
    %v1743 = vpop.f32.mrb[0].mxu0
    %1744 = vdwg.mxu0
    %1745 = vrot.lane.b32.xlu0 %v336, 56
    %v1746 = vpop.permute.xlu0 %1745
    %v1748 = vsel %vm346, %v1690, 0
    %v1751 = vsel %vm821, %v1746, 0
    %1753 = vmatprep.subr.bf16.mxu0 0
    %1754 = vmatpush1.bf16.msra.mxu0 %v1751
    %1755 = vmatprep.subr.bf16.mxu0 0
    %1756 = vmatpush1.bf16.msra.mxu0 0
    %1757 = vmatprep.subr.bf16.mxu0 0
    %1758 = vmatpush1.bf16.msra.mxu0 0
    %1759 = vmatprep.subr.bf16.mxu0 0
    %1760 = vmatpush1.bf16.msra.mxu0 0
    %1761 = vmatprep.subr.bf16.mxu0 0
    %1762 = vmatpush1.bf16.msra.mxu0 0
    %1763 = vmatprep.subr.bf16.mxu0 0
    %1764 = vmatpush1.bf16.msra.mxu0 0
    %1765 = vmatprep.subr.bf16.mxu0 0
    %1766 = vmatpush1.bf16.msra.mxu0 0
    %1767 = vmatprep.subr.bf16.mxu0 0
    %1768 = vmatpush1.bf16.msra.mxu0 0
    %1769 = vmatprep.subr.bf16.mxu0 0
    %1770 = vmatpush1.bf16.msra.mxu0 0
    %1771 = vmatprep.subr.bf16.mxu0 0
    %1772 = vmatpush1.bf16.msra.mxu0 0
    %1773 = vmatprep.subr.bf16.mxu0 0
    %1774 = vmatpush1.bf16.msra.mxu0 0
    %1775 = vmatprep.subr.bf16.mxu0 0
    %1776 = vmatpush1.bf16.msra.mxu0 0
    %1777 = vmatprep.subr.bf16.mxu0 0
    %1778 = vmatpush1.bf16.msra.mxu0 0
    %1779 = vmatprep.subr.bf16.mxu0 0
    %1780 = vmatpush1.bf16.msra.mxu0 0
    %1781 = vmatprep.subr.bf16.mxu0 0
    %1782 = vmatpush1.bf16.msra.mxu0 0
    %1783 = vmatprep.subr.bf16.mxu0 0
    %1784 = vmatpush1.bf16.msra.mxu0 0
    %1785 = vmatprep.mubr.bf16.mxu0 0
    %1786 = vmatmul.mubr.bf16.gmra.mrb[0].mxu0 %v1748
    %v1787 = vpop.f32.mrb[0].mxu0
    %v1788 = vadd.f32 0.0, %v1787
    %v1789 = vpop.f32.mrb[0].mxu0
    %v1790 = vpop.f32.mrb[0].mxu0
    %v1791 = vpop.f32.mrb[0].mxu0
    %1792 = vdwg.mxu0
    %1793 = vrot.lane.b32.xlu0 %v337, 56
    %v1794 = vpop.permute.xlu0 %1793
    %v1796 = vsel %vm346, %v1691, 0
    %v1799 = vsel %vm821, %v1794, 0
    %1801 = vmatprep.subr.bf16.mxu0 0
    %1802 = vmatpush1.bf16.msra.mxu0 %v1799
    %1803 = vmatprep.subr.bf16.mxu0 0
    %1804 = vmatpush1.bf16.msra.mxu0 0
    %1805 = vmatprep.subr.bf16.mxu0 0
    %1806 = vmatpush1.bf16.msra.mxu0 0
    %1807 = vmatprep.subr.bf16.mxu0 0
    %1808 = vmatpush1.bf16.msra.mxu0 0
    %1809 = vmatprep.subr.bf16.mxu0 0
    %1810 = vmatpush1.bf16.msra.mxu0 0
    %1811 = vmatprep.subr.bf16.mxu0 0
    %1812 = vmatpush1.bf16.msra.mxu0 0
    %1813 = vmatprep.subr.bf16.mxu0 0
    %1814 = vmatpush1.bf16.msra.mxu0 0
    %1815 = vmatprep.subr.bf16.mxu0 0
    %1816 = vmatpush1.bf16.msra.mxu0 0
    %1817 = vmatprep.subr.bf16.mxu0 0
    %1818 = vmatpush1.bf16.msra.mxu0 0
    %1819 = vmatprep.subr.bf16.mxu0 0
    %1820 = vmatpush1.bf16.msra.mxu0 0
    %1821 = vmatprep.subr.bf16.mxu0 0
    %1822 = vmatpush1.bf16.msra.mxu0 0
    %1823 = vmatprep.subr.bf16.mxu0 0
    %1824 = vmatpush1.bf16.msra.mxu0 0
    %1825 = vmatprep.subr.bf16.mxu0 0
    %1826 = vmatpush1.bf16.msra.mxu0 0
    %1827 = vmatprep.subr.bf16.mxu0 0
    %1828 = vmatpush1.bf16.msra.mxu0 0
    %1829 = vmatprep.subr.bf16.mxu0 0
    %1830 = vmatpush1.bf16.msra.mxu0 0
    %1831 = vmatprep.subr.bf16.mxu0 0
    %1832 = vmatpush1.bf16.msra.mxu0 0
    %1833 = vmatprep.mubr.bf16.mxu0 0
    %1834 = vmatmul.mubr.bf16.gmra.mrb[0].mxu0 %v1796
    %v1835 = vpop.f32.mrb[0].mxu0
    %v1836 = vadd.f32 0.0, %v1835
    %v1837 = vpop.f32.mrb[0].mxu0
    %v1838 = vpop.f32.mrb[0].mxu0
    %v1839 = vpop.f32.mrb[0].mxu0
    %1840 = vdwg.mxu0
    %1841 = vrot.lane.b32.xlu0 %v338, 56
    %v1842 = vpop.permute.xlu0 %1841
    %v1844 = vsel %vm346, %v1692, 0
    %v1847 = vsel %vm821, %v1842, 0
    %1849 = vmatprep.subr.bf16.mxu0 0
    %1850 = vmatpush1.bf16.msra.mxu0 %v1847
    %1851 = vmatprep.subr.bf16.mxu0 0
    %1852 = vmatpush1.bf16.msra.mxu0 0
    %1853 = vmatprep.subr.bf16.mxu0 0
    %1854 = vmatpush1.bf16.msra.mxu0 0
    %1855 = vmatprep.subr.bf16.mxu0 0
    %1856 = vmatpush1.bf16.msra.mxu0 0
    %1857 = vmatprep.subr.bf16.mxu0 0
    %1858 = vmatpush1.bf16.msra.mxu0 0
    %1859 = vmatprep.subr.bf16.mxu0 0
    %1860 = vmatpush1.bf16.msra.mxu0 0
    %1861 = vmatprep.subr.bf16.mxu0 0
    %1862 = vmatpush1.bf16.msra.mxu0 0
    %1863 = vmatprep.subr.bf16.mxu0 0
    %1864 = vmatpush1.bf16.msra.mxu0 0
    %1865 = vmatprep.subr.bf16.mxu0 0
    %1866 = vmatpush1.bf16.msra.mxu0 0
    %1867 = vmatprep.subr.bf16.mxu0 0
    %1868 = vmatpush1.bf16.msra.mxu0 0
    %1869 = vmatprep.subr.bf16.mxu0 0
    %1870 = vmatpush1.bf16.msra.mxu0 0
    %1871 = vmatprep.subr.bf16.mxu0 0
    %1872 = vmatpush1.bf16.msra.mxu0 0
    %1873 = vmatprep.subr.bf16.mxu0 0
    %1874 = vmatpush1.bf16.msra.mxu0 0
    %1875 = vmatprep.subr.bf16.mxu0 0
    %1876 = vmatpush1.bf16.msra.mxu0 0
    %1877 = vmatprep.subr.bf16.mxu0 0
    %1878 = vmatpush1.bf16.msra.mxu0 0
    %1879 = vmatprep.subr.bf16.mxu0 0
    %1880 = vmatpush1.bf16.msra.mxu0 0
    %1881 = vmatprep.mubr.bf16.mxu0 0
    %1882 = vmatmul.mubr.bf16.gmra.mrb[0].mxu0 %v1844
    %v1883 = vpop.f32.mrb[0].mxu0
    %v1884 = vadd.f32 0.0, %v1883
    %v1885 = vpop.f32.mrb[0].mxu0
    %v1886 = vpop.f32.mrb[0].mxu0
    %v1887 = vpop.f32.mrb[0].mxu0
    %1888 = vdwg.mxu0
    %1889 = vrot.lane.b32.xlu0 %v339, 56
    %v1890 = vpop.permute.xlu0 %1889
    %v1892 = vsel %vm346, %v1693, 0
    %v1895 = vsel %vm821, %v1890, 0
    %1897 = vmatprep.subr.bf16.mxu0 0
    %1898 = vmatpush1.bf16.msra.mxu0 %v1895
    %1899 = vmatprep.subr.bf16.mxu0 0
    %1900 = vmatpush1.bf16.msra.mxu0 0
    %1901 = vmatprep.subr.bf16.mxu0 0
    %1902 = vmatpush1.bf16.msra.mxu0 0
    %1903 = vmatprep.subr.bf16.mxu0 0
    %1904 = vmatpush1.bf16.msra.mxu0 0
    %1905 = vmatprep.subr.bf16.mxu0 0
    %1906 = vmatpush1.bf16.msra.mxu0 0
    %1907 = vmatprep.subr.bf16.mxu0 0
    %1908 = vmatpush1.bf16.msra.mxu0 0
    %1909 = vmatprep.subr.bf16.mxu0 0
    %1910 = vmatpush1.bf16.msra.mxu0 0
    %1911 = vmatprep.subr.bf16.mxu0 0
    %1912 = vmatpush1.bf16.msra.mxu0 0
    %1913 = vmatprep.subr.bf16.mxu0 0
    %1914 = vmatpush1.bf16.msra.mxu0 0
    %1915 = vmatprep.subr.bf16.mxu0 0
    %1916 = vmatpush1.bf16.msra.mxu0 0
    %1917 = vmatprep.subr.bf16.mxu0 0
    %1918 = vmatpush1.bf16.msra.mxu0 0
    %1919 = vmatprep.subr.bf16.mxu0 0
    %1920 = vmatpush1.bf16.msra.mxu0 0
    %1921 = vmatprep.subr.bf16.mxu0 0
    %1922 = vmatpush1.bf16.msra.mxu0 0
    %1923 = vmatprep.subr.bf16.mxu0 0
    %1924 = vmatpush1.bf16.msra.mxu0 0
    %1925 = vmatprep.subr.bf16.mxu0 0
    %1926 = vmatpush1.bf16.msra.mxu0 0
    %1927 = vmatprep.subr.bf16.mxu0 0
    %1928 = vmatpush1.bf16.msra.mxu0 0
    %1929 = vmatprep.mubr.bf16.mxu0 0
    %1930 = vmatmul.mubr.bf16.gmra.mrb[0].mxu0 %v1892
    %v1931 = vpop.f32.mrb[0].mxu0
    %v1932 = vadd.f32 0.0, %v1931
    %v1933 = vpop.f32.mrb[0].mxu0
    %v1934 = vpop.f32.mrb[0].mxu0
    %v1935 = vpop.f32.mrb[0].mxu0
    %1936 = vdwg.mxu0
    %1937 = vrot.lane.b32.xlu0 %v340, 56
    %v1938 = vpop.permute.xlu0 %1937
    %v1940 = vsel %vm346, %v1694, 0
    %v1943 = vsel %vm821, %v1938, 0
    %1945 = vmatprep.subr.bf16.mxu0 0
    %1946 = vmatpush1.bf16.msra.mxu0 %v1943
    %1947 = vmatprep.subr.bf16.mxu0 0
    %1948 = vmatpush1.bf16.msra.mxu0 0
    %1949 = vmatprep.subr.bf16.mxu0 0
    %1950 = vmatpush1.bf16.msra.mxu0 0
    %1951 = vmatprep.subr.bf16.mxu0 0
    %1952 = vmatpush1.bf16.msra.mxu0 0
    %1953 = vmatprep.subr.bf16.mxu0 0
    %1954 = vmatpush1.bf16.msra.mxu0 0
    %1955 = vmatprep.subr.bf16.mxu0 0
    %1956 = vmatpush1.bf16.msra.mxu0 0
    %1957 = vmatprep.subr.bf16.mxu0 0
    %1958 = vmatpush1.bf16.msra.mxu0 0
    %1959 = vmatprep.subr.bf16.mxu0 0
    %1960 = vmatpush1.bf16.msra.mxu0 0
    %1961 = vmatprep.subr.bf16.mxu0 0
    %1962 = vmatpush1.bf16.msra.mxu0 0
    %1963 = vmatprep.subr.bf16.mxu0 0
    %1964 = vmatpush1.bf16.msra.mxu0 0
    %1965 = vmatprep.subr.bf16.mxu0 0
    %1966 = vmatpush1.bf16.msra.mxu0 0
    %1967 = vmatprep.subr.bf16.mxu0 0
    %1968 = vmatpush1.bf16.msra.mxu0 0
    %1969 = vmatprep.subr.bf16.mxu0 0
    %1970 = vmatpush1.bf16.msra.mxu0 0
    %1971 = vmatprep.subr.bf16.mxu0 0
    %1972 = vmatpush1.bf16.msra.mxu0 0
    %1973 = vmatprep.subr.bf16.mxu0 0
    %1974 = vmatpush1.bf16.msra.mxu0 0
    %1975 = vmatprep.subr.bf16.mxu0 0
    %1976 = vmatpush1.bf16.msra.mxu0 0
    %1977 = vmatprep.mubr.bf16.mxu0 0
    %1978 = vmatmul.mubr.bf16.gmra.mrb[0].mxu0 %v1940
    %v1979 = vpop.f32.mrb[0].mxu0
    %v1980 = vadd.f32 0.0, %v1979
    %v1981 = vpop.f32.mrb[0].mxu0
    %v1982 = vpop.f32.mrb[0].mxu0
    %v1983 = vpop.f32.mrb[0].mxu0
    %1984 = vdwg.mxu0
    %1985 = vrot.lane.b32.xlu0 %v341, 56
    %v1986 = vpop.permute.xlu0 %1985
    %v1988 = vsel %vm346, %v1695, 0
    %v1991 = vsel %vm821, %v1986, 0
    %1993 = vmatprep.subr.bf16.mxu0 0
    %1994 = vmatpush1.bf16.msra.mxu0 %v1991
    %1995 = vmatprep.subr.bf16.mxu0 0
    %1996 = vmatpush1.bf16.msra.mxu0 0
    %1997 = vmatprep.subr.bf16.mxu0 0
    %1998 = vmatpush1.bf16.msra.mxu0 0
    %1999 = vmatprep.subr.bf16.mxu0 0
    %2000 = vmatpush1.bf16.msra.mxu0 0
    %2001 = vmatprep.subr.bf16.mxu0 0
    %2002 = vmatpush1.bf16.msra.mxu0 0
    %2003 = vmatprep.subr.bf16.mxu0 0
    %2004 = vmatpush1.bf16.msra.mxu0 0
    %2005 = vmatprep.subr.bf16.mxu0 0
    %2006 = vmatpush1.bf16.msra.mxu0 0
    %2007 = vmatprep.subr.bf16.mxu0 0
    %2008 = vmatpush1.bf16.msra.mxu0 0
    %2009 = vmatprep.subr.bf16.mxu0 0
    %2010 = vmatpush1.bf16.msra.mxu0 0
    %2011 = vmatprep.subr.bf16.mxu0 0
    %2012 = vmatpush1.bf16.msra.mxu0 0
    %2013 = vmatprep.subr.bf16.mxu0 0
    %2014 = vmatpush1.bf16.msra.mxu0 0
    %2015 = vmatprep.subr.bf16.mxu0 0
    %2016 = vmatpush1.bf16.msra.mxu0 0
    %2017 = vmatprep.subr.bf16.mxu0 0
    %2018 = vmatpush1.bf16.msra.mxu0 0
    %2019 = vmatprep.subr.bf16.mxu0 0
    %2020 = vmatpush1.bf16.msra.mxu0 0
    %2021 = vmatprep.subr.bf16.mxu0 0
    %2022 = vmatpush1.bf16.msra.mxu0 0
    %2023 = vmatprep.subr.bf16.mxu0 0
    %2024 = vmatpush1.bf16.msra.mxu0 0
    %2025 = vmatprep.mubr.bf16.mxu0 0
    %2026 = vmatmul.mubr.bf16.gmra.mrb[0].mxu0 %v1988
    %v2027 = vpop.f32.mrb[0].mxu0
    %v2028 = vadd.f32 0.0, %v2027
    %v2029 = vpop.f32.mrb[0].mxu0
    %v2030 = vpop.f32.mrb[0].mxu0
    %v2031 = vpop.f32.mrb[0].mxu0
    %2032 = vdwg.mxu0
    %2033 = vrot.lane.b32.xlu0 %v342, 56
    %v2034 = vpop.permute.xlu0 %2033
    %v2036 = vsel %vm346, %v1696, 0
    %v2039 = vsel %vm821, %v2034, 0
    %2041 = vmatprep.subr.bf16.mxu0 0
    %2042 = vmatpush1.bf16.msra.mxu0 %v2039
    %2043 = vmatprep.subr.bf16.mxu0 0
    %2044 = vmatpush1.bf16.msra.mxu0 0
    %2045 = vmatprep.subr.bf16.mxu0 0
    %2046 = vmatpush1.bf16.msra.mxu0 0
    %2047 = vmatprep.subr.bf16.mxu0 0
    %2048 = vmatpush1.bf16.msra.mxu0 0
    %2049 = vmatprep.subr.bf16.mxu0 0
    %2050 = vmatpush1.bf16.msra.mxu0 0
    %2051 = vmatprep.subr.bf16.mxu0 0
    %2052 = vmatpush1.bf16.msra.mxu0 0
    %2053 = vmatprep.subr.bf16.mxu0 0
    %2054 = vmatpush1.bf16.msra.mxu0 0
    %2055 = vmatprep.subr.bf16.mxu0 0
    %2056 = vmatpush1.bf16.msra.mxu0 0
    %2057 = vmatprep.subr.bf16.mxu0 0
    %2058 = vmatpush1.bf16.msra.mxu0 0
    %2059 = vmatprep.subr.bf16.mxu0 0
    %2060 = vmatpush1.bf16.msra.mxu0 0
    %2061 = vmatprep.subr.bf16.mxu0 0
    %2062 = vmatpush1.bf16.msra.mxu0 0
    %2063 = vmatprep.subr.bf16.mxu0 0
    %2064 = vmatpush1.bf16.msra.mxu0 0
    %2065 = vmatprep.subr.bf16.mxu0 0
    %2066 = vmatpush1.bf16.msra.mxu0 0
    %2067 = vmatprep.subr.bf16.mxu0 0
    %2068 = vmatpush1.bf16.msra.mxu0 0
    %2069 = vmatprep.subr.bf16.mxu0 0
    %2070 = vmatpush1.bf16.msra.mxu0 0
    %2071 = vmatprep.subr.bf16.mxu0 0
    %2072 = vmatpush1.bf16.msra.mxu0 0
    %2073 = vmatprep.mubr.bf16.mxu0 0
    %2074 = vmatmul.mubr.bf16.gmra.mrb[0].mxu0 %v2036
    %v2075 = vpop.f32.mrb[0].mxu0
    %v2076 = vadd.f32 0.0, %v2075
    %v2077 = vpop.f32.mrb[0].mxu0
    %v2078 = vpop.f32.mrb[0].mxu0
    %v2079 = vpop.f32.mrb[0].mxu0
    %2080 = vdwg.mxu0
    %v2081 = vrcp.pop %v1667
    %v2082 = vrcp.pop %v1670
    %v2083 = vrcp.pop %v1673
    %v2084 = vrcp.pop %v1676
    %v2085 = vrcp.pop %v1679
    %v2086 = vrcp.pop %v1682
    %v2087 = vrcp.pop %v1685
    %v2088 = vrcp.pop %v1688
    %v2089 = vmul.f32 %v1740, %v2081
    %v2090 = vmul.f32 %v1788, %v2082
    %v2091 = vmul.f32 %v1836, %v2083
    %v2092 = vmul.f32 %v1884, %v2084
    %v2093 = vmul.f32 %v1932, %v2085
    %v2094 = vmul.f32 %v1980, %v2086
    %v2095 = vmul.f32 %v2028, %v2087
    %v2096 = vmul.f32 %v2076, %v2088
    %2097 = vrot.lane.b32.xlu0 %v335, 112
    %v2098 = vpop.permute.xlu0 %2097
    %2099 = vrot.lane.b32.xlu0 %v335, 80
    %v2100 = vpop.permute.xlu0 %2099
    %v2102 = vsel %vm346, %v2098, 0
    %v2105 = vsel %vm346, %v2100, 0
    %2107 = vmatprep.subr.bf16.mxu0 0
    %2108 = vmatpush1.bf16.xpose.msra.mxu0 %v2105
    %2109 = vmatprep.subr.bf16.mxu0 0
    %2110 = vmatpush1.bf16.xpose.msra.mxu0 0
    %2111 = vmatprep.subr.bf16.mxu0 0
    %2112 = vmatpush1.bf16.xpose.msra.mxu0 0
    %2113 = vmatprep.subr.bf16.mxu0 0
    %2114 = vmatpush1.bf16.xpose.msra.mxu0 0
    %2115 = vmatprep.subr.bf16.mxu0 0
    %2116 = vmatpush1.bf16.xpose.msra.mxu0 0
    %2117 = vmatprep.subr.bf16.mxu0 0
    %2118 = vmatpush1.bf16.xpose.msra.mxu0 0
    %2119 = vmatprep.subr.bf16.mxu0 0
    %2120 = vmatpush1.bf16.xpose.msra.mxu0 0
    %2121 = vmatprep.subr.bf16.mxu0 0
    %2122 = vmatpush1.bf16.xpose.msra.mxu0 0
    %2123 = vmatprep.subr.bf16.mxu0 0
    %2124 = vmatpush1.bf16.xpose.msra.mxu0 0
    %2125 = vmatprep.subr.bf16.mxu0 0
    %2126 = vmatpush1.bf16.xpose.msra.mxu0 0
    %2127 = vmatprep.subr.bf16.mxu0 0
    %2128 = vmatpush1.bf16.xpose.msra.mxu0 0
    %2129 = vmatprep.subr.bf16.mxu0 0
    %2130 = vmatpush1.bf16.xpose.msra.mxu0 0
    %2131 = vmatprep.subr.bf16.mxu0 0
    %2132 = vmatpush1.bf16.xpose.msra.mxu0 0
    %2133 = vmatprep.subr.bf16.mxu0 0
    %2134 = vmatpush1.bf16.xpose.msra.mxu0 0
    %2135 = vmatprep.subr.bf16.mxu0 0
    %2136 = vmatpush1.bf16.xpose.msra.mxu0 0
    %2137 = vmatprep.subr.bf16.mxu0 0
    %2138 = vmatpush1.bf16.xpose.msra.mxu0 0
    %2139 = vmatprep.mubr.bf16.mxu0 0
    %2140 = vmatmul.mubr.bf16.gmra.mrb[0].mxu0 %v2102
    %v2141 = vpop.f32.mrb[0].mxu0
    %v2142 = vadd.f32 0.0, %v2141
    %v2143 = vpop.f32.mrb[0].mxu0
    %v2144 = vpop.f32.mrb[0].mxu0
    %v2145 = vpop.f32.mrb[0].mxu0
    %2146 = vdwg.mxu0
    %2147 = vrot.lane.b32.xlu0 %v336, 112
    %v2148 = vpop.permute.xlu0 %2147
    %2149 = vrot.lane.b32.xlu0 %v336, 80
    %v2150 = vpop.permute.xlu0 %2149
    %v2152 = vsel %vm346, %v2148, 0
    %v2155 = vsel %vm346, %v2150, 0
    %2157 = vmatprep.subr.bf16.mxu0 0
    %2158 = vmatpush1.bf16.xpose.msra.mxu0 %v2155
    %2159 = vmatprep.subr.bf16.mxu0 0
    %2160 = vmatpush1.bf16.xpose.msra.mxu0 0
    %2161 = vmatprep.subr.bf16.mxu0 0
    %2162 = vmatpush1.bf16.xpose.msra.mxu0 0
    %2163 = vmatprep.subr.bf16.mxu0 0
    %2164 = vmatpush1.bf16.xpose.msra.mxu0 0
    %2165 = vmatprep.subr.bf16.mxu0 0
    %2166 = vmatpush1.bf16.xpose.msra.mxu0 0
    %2167 = vmatprep.subr.bf16.mxu0 0
    %2168 = vmatpush1.bf16.xpose.msra.mxu0 0
    %2169 = vmatprep.subr.bf16.mxu0 0
    %2170 = vmatpush1.bf16.xpose.msra.mxu0 0
    %2171 = vmatprep.subr.bf16.mxu0 0
    %2172 = vmatpush1.bf16.xpose.msra.mxu0 0
    %2173 = vmatprep.subr.bf16.mxu0 0
    %2174 = vmatpush1.bf16.xpose.msra.mxu0 0
    %2175 = vmatprep.subr.bf16.mxu0 0
    %2176 = vmatpush1.bf16.xpose.msra.mxu0 0
    %2177 = vmatprep.subr.bf16.mxu0 0
    %2178 = vmatpush1.bf16.xpose.msra.mxu0 0
    %2179 = vmatprep.subr.bf16.mxu0 0
    %2180 = vmatpush1.bf16.xpose.msra.mxu0 0
    %2181 = vmatprep.subr.bf16.mxu0 0
    %2182 = vmatpush1.bf16.xpose.msra.mxu0 0
    %2183 = vmatprep.subr.bf16.mxu0 0
    %2184 = vmatpush1.bf16.xpose.msra.mxu0 0
    %2185 = vmatprep.subr.bf16.mxu0 0
    %2186 = vmatpush1.bf16.xpose.msra.mxu0 0
    %2187 = vmatprep.subr.bf16.mxu0 0
    %2188 = vmatpush1.bf16.xpose.msra.mxu0 0
    %2189 = vmatprep.mubr.bf16.mxu0 0
    %2190 = vmatmul.mubr.bf16.gmra.mrb[0].mxu0 %v2152
    %v2191 = vpop.f32.mrb[0].mxu0
    %v2192 = vadd.f32 0.0, %v2191
    %v2193 = vpop.f32.mrb[0].mxu0
    %v2194 = vpop.f32.mrb[0].mxu0
    %v2195 = vpop.f32.mrb[0].mxu0
    %2196 = vdwg.mxu0
    %2197 = vrot.lane.b32.xlu0 %v337, 112
    %v2198 = vpop.permute.xlu0 %2197
    %2199 = vrot.lane.b32.xlu0 %v337, 80
    %v2200 = vpop.permute.xlu0 %2199
    %v2202 = vsel %vm346, %v2198, 0
    %v2205 = vsel %vm346, %v2200, 0
    %2207 = vmatprep.subr.bf16.mxu0 0
    %2208 = vmatpush1.bf16.xpose.msra.mxu0 %v2205
    %2209 = vmatprep.subr.bf16.mxu0 0
    %2210 = vmatpush1.bf16.xpose.msra.mxu0 0
    %2211 = vmatprep.subr.bf16.mxu0 0
    %2212 = vmatpush1.bf16.xpose.msra.mxu0 0
    %2213 = vmatprep.subr.bf16.mxu0 0
    %2214 = vmatpush1.bf16.xpose.msra.mxu0 0
    %2215 = vmatprep.subr.bf16.mxu0 0
    %2216 = vmatpush1.bf16.xpose.msra.mxu0 0
    %2217 = vmatprep.subr.bf16.mxu0 0
    %2218 = vmatpush1.bf16.xpose.msra.mxu0 0
    %2219 = vmatprep.subr.bf16.mxu0 0
    %2220 = vmatpush1.bf16.xpose.msra.mxu0 0
    %2221 = vmatprep.subr.bf16.mxu0 0
    %2222 = vmatpush1.bf16.xpose.msra.mxu0 0
    %2223 = vmatprep.subr.bf16.mxu0 0
    %2224 = vmatpush1.bf16.xpose.msra.mxu0 0
    %2225 = vmatprep.subr.bf16.mxu0 0
    %2226 = vmatpush1.bf16.xpose.msra.mxu0 0
    %2227 = vmatprep.subr.bf16.mxu0 0
    %2228 = vmatpush1.bf16.xpose.msra.mxu0 0
    %2229 = vmatprep.subr.bf16.mxu0 0
    %2230 = vmatpush1.bf16.xpose.msra.mxu0 0
    %2231 = vmatprep.subr.bf16.mxu0 0
    %2232 = vmatpush1.bf16.xpose.msra.mxu0 0
    %2233 = vmatprep.subr.bf16.mxu0 0
    %2234 = vmatpush1.bf16.xpose.msra.mxu0 0
    %2235 = vmatprep.subr.bf16.mxu0 0
    %2236 = vmatpush1.bf16.xpose.msra.mxu0 0
    %2237 = vmatprep.subr.bf16.mxu0 0
    %2238 = vmatpush1.bf16.xpose.msra.mxu0 0
    %2239 = vmatprep.mubr.bf16.mxu0 0
    %2240 = vmatmul.mubr.bf16.gmra.mrb[0].mxu0 %v2202
    %v2241 = vpop.f32.mrb[0].mxu0
    %v2242 = vadd.f32 0.0, %v2241
    %v2243 = vpop.f32.mrb[0].mxu0
    %v2244 = vpop.f32.mrb[0].mxu0
    %v2245 = vpop.f32.mrb[0].mxu0
    %2246 = vdwg.mxu0
    %2247 = vrot.lane.b32.xlu0 %v338, 112
    %v2248 = vpop.permute.xlu0 %2247
    %2249 = vrot.lane.b32.xlu0 %v338, 80
    %v2250 = vpop.permute.xlu0 %2249
    %v2252 = vsel %vm346, %v2248, 0
    %v2255 = vsel %vm346, %v2250, 0
    %2257 = vmatprep.subr.bf16.mxu0 0
    %2258 = vmatpush1.bf16.xpose.msra.mxu0 %v2255
    %2259 = vmatprep.subr.bf16.mxu0 0
    %2260 = vmatpush1.bf16.xpose.msra.mxu0 0
    %2261 = vmatprep.subr.bf16.mxu0 0
    %2262 = vmatpush1.bf16.xpose.msra.mxu0 0
    %2263 = vmatprep.subr.bf16.mxu0 0
    %2264 = vmatpush1.bf16.xpose.msra.mxu0 0
    %2265 = vmatprep.subr.bf16.mxu0 0
    %2266 = vmatpush1.bf16.xpose.msra.mxu0 0
    %2267 = vmatprep.subr.bf16.mxu0 0
    %2268 = vmatpush1.bf16.xpose.msra.mxu0 0
    %2269 = vmatprep.subr.bf16.mxu0 0
    %2270 = vmatpush1.bf16.xpose.msra.mxu0 0
    %2271 = vmatprep.subr.bf16.mxu0 0
    %2272 = vmatpush1.bf16.xpose.msra.mxu0 0
    %2273 = vmatprep.subr.bf16.mxu0 0
    %2274 = vmatpush1.bf16.xpose.msra.mxu0 0
    %2275 = vmatprep.subr.bf16.mxu0 0
    %2276 = vmatpush1.bf16.xpose.msra.mxu0 0
    %2277 = vmatprep.subr.bf16.mxu0 0
    %2278 = vmatpush1.bf16.xpose.msra.mxu0 0
    %2279 = vmatprep.subr.bf16.mxu0 0
    %2280 = vmatpush1.bf16.xpose.msra.mxu0 0
    %2281 = vmatprep.subr.bf16.mxu0 0
    %2282 = vmatpush1.bf16.xpose.msra.mxu0 0
    %2283 = vmatprep.subr.bf16.mxu0 0
    %2284 = vmatpush1.bf16.xpose.msra.mxu0 0
    %2285 = vmatprep.subr.bf16.mxu0 0
    %2286 = vmatpush1.bf16.xpose.msra.mxu0 0
    %2287 = vmatprep.subr.bf16.mxu0 0
    %2288 = vmatpush1.bf16.xpose.msra.mxu0 0
    %2289 = vmatprep.mubr.bf16.mxu0 0
    %2290 = vmatmul.mubr.bf16.gmra.mrb[0].mxu0 %v2252
    %v2291 = vpop.f32.mrb[0].mxu0
    %v2292 = vadd.f32 0.0, %v2291
    %v2293 = vpop.f32.mrb[0].mxu0
    %v2294 = vpop.f32.mrb[0].mxu0
    %v2295 = vpop.f32.mrb[0].mxu0
    %2296 = vdwg.mxu0
    %2297 = vrot.lane.b32.xlu0 %v339, 112
    %v2298 = vpop.permute.xlu0 %2297
    %2299 = vrot.lane.b32.xlu0 %v339, 80
    %v2300 = vpop.permute.xlu0 %2299
    %v2302 = vsel %vm346, %v2298, 0
    %v2305 = vsel %vm346, %v2300, 0
    %2307 = vmatprep.subr.bf16.mxu0 0
    %2308 = vmatpush1.bf16.xpose.msra.mxu0 %v2305
    %2309 = vmatprep.subr.bf16.mxu0 0
    %2310 = vmatpush1.bf16.xpose.msra.mxu0 0
    %2311 = vmatprep.subr.bf16.mxu0 0
    %2312 = vmatpush1.bf16.xpose.msra.mxu0 0
    %2313 = vmatprep.subr.bf16.mxu0 0
    %2314 = vmatpush1.bf16.xpose.msra.mxu0 0
    %2315 = vmatprep.subr.bf16.mxu0 0
    %2316 = vmatpush1.bf16.xpose.msra.mxu0 0
    %2317 = vmatprep.subr.bf16.mxu0 0
    %2318 = vmatpush1.bf16.xpose.msra.mxu0 0
    %2319 = vmatprep.subr.bf16.mxu0 0
    %2320 = vmatpush1.bf16.xpose.msra.mxu0 0
    %2321 = vmatprep.subr.bf16.mxu0 0
    %2322 = vmatpush1.bf16.xpose.msra.mxu0 0
    %2323 = vmatprep.subr.bf16.mxu0 0
    %2324 = vmatpush1.bf16.xpose.msra.mxu0 0
    %2325 = vmatprep.subr.bf16.mxu0 0
    %2326 = vmatpush1.bf16.xpose.msra.mxu0 0
    %2327 = vmatprep.subr.bf16.mxu0 0
    %2328 = vmatpush1.bf16.xpose.msra.mxu0 0
    %2329 = vmatprep.subr.bf16.mxu0 0
    %2330 = vmatpush1.bf16.xpose.msra.mxu0 0
    %2331 = vmatprep.subr.bf16.mxu0 0
    %2332 = vmatpush1.bf16.xpose.msra.mxu0 0
    %2333 = vmatprep.subr.bf16.mxu0 0
    %2334 = vmatpush1.bf16.xpose.msra.mxu0 0
    %2335 = vmatprep.subr.bf16.mxu0 0
    %2336 = vmatpush1.bf16.xpose.msra.mxu0 0
    %2337 = vmatprep.subr.bf16.mxu0 0
    %2338 = vmatpush1.bf16.xpose.msra.mxu0 0
    %2339 = vmatprep.mubr.bf16.mxu0 0
    %2340 = vmatmul.mubr.bf16.gmra.mrb[0].mxu0 %v2302
    %v2341 = vpop.f32.mrb[0].mxu0
    %v2342 = vadd.f32 0.0, %v2341
    %v2343 = vpop.f32.mrb[0].mxu0
    %v2344 = vpop.f32.mrb[0].mxu0
    %v2345 = vpop.f32.mrb[0].mxu0
    %2346 = vdwg.mxu0
    %2347 = vrot.lane.b32.xlu0 %v340, 112
    %v2348 = vpop.permute.xlu0 %2347
    %2349 = vrot.lane.b32.xlu0 %v340, 80
    %v2350 = vpop.permute.xlu0 %2349
    %v2352 = vsel %vm346, %v2348, 0
    %v2355 = vsel %vm346, %v2350, 0
    %2357 = vmatprep.subr.bf16.mxu0 0
    %2358 = vmatpush1.bf16.xpose.msra.mxu0 %v2355
    %2359 = vmatprep.subr.bf16.mxu0 0
    %2360 = vmatpush1.bf16.xpose.msra.mxu0 0
    %2361 = vmatprep.subr.bf16.mxu0 0
    %2362 = vmatpush1.bf16.xpose.msra.mxu0 0
    %2363 = vmatprep.subr.bf16.mxu0 0
    %2364 = vmatpush1.bf16.xpose.msra.mxu0 0
    %2365 = vmatprep.subr.bf16.mxu0 0
    %2366 = vmatpush1.bf16.xpose.msra.mxu0 0
    %2367 = vmatprep.subr.bf16.mxu0 0
    %2368 = vmatpush1.bf16.xpose.msra.mxu0 0
    %2369 = vmatprep.subr.bf16.mxu0 0
    %2370 = vmatpush1.bf16.xpose.msra.mxu0 0
    %2371 = vmatprep.subr.bf16.mxu0 0
    %2372 = vmatpush1.bf16.xpose.msra.mxu0 0
    %2373 = vmatprep.subr.bf16.mxu0 0
    %2374 = vmatpush1.bf16.xpose.msra.mxu0 0
    %2375 = vmatprep.subr.bf16.mxu0 0
    %2376 = vmatpush1.bf16.xpose.msra.mxu0 0
    %2377 = vmatprep.subr.bf16.mxu0 0
    %2378 = vmatpush1.bf16.xpose.msra.mxu0 0
    %2379 = vmatprep.subr.bf16.mxu0 0
    %2380 = vmatpush1.bf16.xpose.msra.mxu0 0
    %2381 = vmatprep.subr.bf16.mxu0 0
    %2382 = vmatpush1.bf16.xpose.msra.mxu0 0
    %2383 = vmatprep.subr.bf16.mxu0 0
    %2384 = vmatpush1.bf16.xpose.msra.mxu0 0
    %2385 = vmatprep.subr.bf16.mxu0 0
    %2386 = vmatpush1.bf16.xpose.msra.mxu0 0
    %2387 = vmatprep.subr.bf16.mxu0 0
    %2388 = vmatpush1.bf16.xpose.msra.mxu0 0
    %2389 = vmatprep.mubr.bf16.mxu0 0
    %2390 = vmatmul.mubr.bf16.gmra.mrb[0].mxu0 %v2352
    %v2391 = vpop.f32.mrb[0].mxu0
    %v2392 = vadd.f32 0.0, %v2391
    %v2393 = vpop.f32.mrb[0].mxu0
    %v2394 = vpop.f32.mrb[0].mxu0
    %v2395 = vpop.f32.mrb[0].mxu0
    %2396 = vdwg.mxu0
    %2397 = vrot.lane.b32.xlu0 %v341, 112
    %v2398 = vpop.permute.xlu0 %2397
    %2399 = vrot.lane.b32.xlu0 %v341, 80
    %v2400 = vpop.permute.xlu0 %2399
    %v2402 = vsel %vm346, %v2398, 0
    %v2405 = vsel %vm346, %v2400, 0
    %2407 = vmatprep.subr.bf16.mxu0 0
    %2408 = vmatpush1.bf16.xpose.msra.mxu0 %v2405
    %2409 = vmatprep.subr.bf16.mxu0 0
    %2410 = vmatpush1.bf16.xpose.msra.mxu0 0
    %2411 = vmatprep.subr.bf16.mxu0 0
    %2412 = vmatpush1.bf16.xpose.msra.mxu0 0
    %2413 = vmatprep.subr.bf16.mxu0 0
    %2414 = vmatpush1.bf16.xpose.msra.mxu0 0
    %2415 = vmatprep.subr.bf16.mxu0 0
    %2416 = vmatpush1.bf16.xpose.msra.mxu0 0
    %2417 = vmatprep.subr.bf16.mxu0 0
    %2418 = vmatpush1.bf16.xpose.msra.mxu0 0
    %2419 = vmatprep.subr.bf16.mxu0 0
    %2420 = vmatpush1.bf16.xpose.msra.mxu0 0
    %2421 = vmatprep.subr.bf16.mxu0 0
    %2422 = vmatpush1.bf16.xpose.msra.mxu0 0
    %2423 = vmatprep.subr.bf16.mxu0 0
    %2424 = vmatpush1.bf16.xpose.msra.mxu0 0
    %2425 = vmatprep.subr.bf16.mxu0 0
    %2426 = vmatpush1.bf16.xpose.msra.mxu0 0
    %2427 = vmatprep.subr.bf16.mxu0 0
    %2428 = vmatpush1.bf16.xpose.msra.mxu0 0
    %2429 = vmatprep.subr.bf16.mxu0 0
    %2430 = vmatpush1.bf16.xpose.msra.mxu0 0
    %2431 = vmatprep.subr.bf16.mxu0 0
    %2432 = vmatpush1.bf16.xpose.msra.mxu0 0
    %2433 = vmatprep.subr.bf16.mxu0 0
    %2434 = vmatpush1.bf16.xpose.msra.mxu0 0
    %2435 = vmatprep.subr.bf16.mxu0 0
    %2436 = vmatpush1.bf16.xpose.msra.mxu0 0
    %2437 = vmatprep.subr.bf16.mxu0 0
    %2438 = vmatpush1.bf16.xpose.msra.mxu0 0
    %2439 = vmatprep.mubr.bf16.mxu0 0
    %2440 = vmatmul.mubr.bf16.gmra.mrb[0].mxu0 %v2402
    %v2441 = vpop.f32.mrb[0].mxu0
    %v2442 = vadd.f32 0.0, %v2441
    %v2443 = vpop.f32.mrb[0].mxu0
    %v2444 = vpop.f32.mrb[0].mxu0
    %v2445 = vpop.f32.mrb[0].mxu0
    %2446 = vdwg.mxu0
    %2447 = vrot.lane.b32.xlu0 %v342, 112
    %v2448 = vpop.permute.xlu0 %2447
    %2449 = vrot.lane.b32.xlu0 %v342, 80
    %v2450 = vpop.permute.xlu0 %2449
    %v2452 = vsel %vm346, %v2448, 0
    %v2455 = vsel %vm346, %v2450, 0
    %2457 = vmatprep.subr.bf16.mxu0 0
    %2458 = vmatpush1.bf16.xpose.msra.mxu0 %v2455
    %2459 = vmatprep.subr.bf16.mxu0 0
    %2460 = vmatpush1.bf16.xpose.msra.mxu0 0
    %2461 = vmatprep.subr.bf16.mxu0 0
    %2462 = vmatpush1.bf16.xpose.msra.mxu0 0
    %2463 = vmatprep.subr.bf16.mxu0 0
    %2464 = vmatpush1.bf16.xpose.msra.mxu0 0
    %2465 = vmatprep.subr.bf16.mxu0 0
    %2466 = vmatpush1.bf16.xpose.msra.mxu0 0
    %2467 = vmatprep.subr.bf16.mxu0 0
    %2468 = vmatpush1.bf16.xpose.msra.mxu0 0
    %2469 = vmatprep.subr.bf16.mxu0 0
    %2470 = vmatpush1.bf16.xpose.msra.mxu0 0
    %2471 = vmatprep.subr.bf16.mxu0 0
    %2472 = vmatpush1.bf16.xpose.msra.mxu0 0
    %2473 = vmatprep.subr.bf16.mxu0 0
    %2474 = vmatpush1.bf16.xpose.msra.mxu0 0
    %2475 = vmatprep.subr.bf16.mxu0 0
    %2476 = vmatpush1.bf16.xpose.msra.mxu0 0
    %2477 = vmatprep.subr.bf16.mxu0 0
    %2478 = vmatpush1.bf16.xpose.msra.mxu0 0
    %2479 = vmatprep.subr.bf16.mxu0 0
    %2480 = vmatpush1.bf16.xpose.msra.mxu0 0
    %2481 = vmatprep.subr.bf16.mxu0 0
    %2482 = vmatpush1.bf16.xpose.msra.mxu0 0
    %2483 = vmatprep.subr.bf16.mxu0 0
    %2484 = vmatpush1.bf16.xpose.msra.mxu0 0
    %2485 = vmatprep.subr.bf16.mxu0 0
    %2486 = vmatpush1.bf16.xpose.msra.mxu0 0
    %2487 = vmatprep.subr.bf16.mxu0 0
    %2488 = vmatpush1.bf16.xpose.msra.mxu0 0
    %2489 = vmatprep.mubr.bf16.mxu0 0
    %2490 = vmatmul.mubr.bf16.gmra.mrb[0].mxu0 %v2452
    %v2491 = vpop.f32.mrb[0].mxu0
    %v2492 = vadd.f32 0.0, %v2491
    %v2493 = vpop.f32.mrb[0].mxu0
    %v2494 = vpop.f32.mrb[0].mxu0
    %v2495 = vpop.f32.mrb[0].mxu0
    %2496 = vdwg.mxu0
    %v2497 = vsel %vm346, %v2142, -inf
    %2498 = vmax.xlane.f32.xlu0 %v2497
    %v2499 = vpop.xlane.xlu0 %2498
    %v2500 = vsel %vm346, %v2192, -inf
    %2501 = vmax.xlane.f32.xlu0 %v2500
    %v2502 = vpop.xlane.xlu0 %2501
    %v2503 = vsel %vm346, %v2242, -inf
    %2504 = vmax.xlane.f32.xlu0 %v2503
    %v2505 = vpop.xlane.xlu0 %2504
    %v2506 = vsel %vm346, %v2292, -inf
    %2507 = vmax.xlane.f32.xlu0 %v2506
    %v2508 = vpop.xlane.xlu0 %2507
    %v2509 = vsel %vm346, %v2342, -inf
    %2510 = vmax.xlane.f32.xlu0 %v2509
    %v2511 = vpop.xlane.xlu0 %2510
    %v2512 = vsel %vm346, %v2392, -inf
    %2513 = vmax.xlane.f32.xlu0 %v2512
    %v2514 = vpop.xlane.xlu0 %2513
    %v2515 = vsel %vm346, %v2442, -inf
    %2516 = vmax.xlane.f32.xlu0 %v2515
    %v2517 = vpop.xlane.xlu0 %2516
    %v2518 = vsel %vm346, %v2492, -inf
    %2519 = vmax.xlane.f32.xlu0 %v2518
    %v2520 = vpop.xlane.xlu0 %2519
    %v2521 = vsub.f32 %v2142, %v2499
    %v2522 = vsub.f32 %v2192, %v2502
    %v2523 = vsub.f32 %v2242, %v2505
    %v2524 = vsub.f32 %v2292, %v2508
    %v2525 = vsub.f32 %v2342, %v2511
    %v2526 = vsub.f32 %v2392, %v2514
    %v2527 = vsub.f32 %v2442, %v2517
    %v2528 = vsub.f32 %v2492, %v2520
    %v2529 = vmul.f32 %v2521, 1.442695
    %v2530 = vpow.pop %v2529
    %v2531 = vmul.f32 %v2522, 1.442695
    %v2532 = vpow.pop %v2531
    %v2533 = vmul.f32 %v2523, 1.442695
    %v2534 = vpow.pop %v2533
    %v2535 = vmul.f32 %v2524, 1.442695
    %v2536 = vpow.pop %v2535
    %v2537 = vmul.f32 %v2525, 1.442695
    %v2538 = vpow.pop %v2537
    %v2539 = vmul.f32 %v2526, 1.442695
    %v2540 = vpow.pop %v2539
    %v2541 = vmul.f32 %v2527, 1.442695
    %v2542 = vpow.pop %v2541
    %v2543 = vmul.f32 %v2528, 1.442695
    %v2544 = vpow.pop %v2543
    %v2545 = vsel %vm346, %v2530, 0.0
    %2546 = vadd.xlane.f32.xlu0 %v2545
    %v2547 = vpop.xlane.xlu0 %2546
    %v2548 = vsel %vm346, %v2532, 0.0
    %2549 = vadd.xlane.f32.xlu0 %v2548
    %v2550 = vpop.xlane.xlu0 %2549
    %v2551 = vsel %vm346, %v2534, 0.0
    %2552 = vadd.xlane.f32.xlu0 %v2551
    %v2553 = vpop.xlane.xlu0 %2552
    %v2554 = vsel %vm346, %v2536, 0.0
    %2555 = vadd.xlane.f32.xlu0 %v2554
    %v2556 = vpop.xlane.xlu0 %2555
    %v2557 = vsel %vm346, %v2538, 0.0
    %2558 = vadd.xlane.f32.xlu0 %v2557
    %v2559 = vpop.xlane.xlu0 %2558
    %v2560 = vsel %vm346, %v2540, 0.0
    %2561 = vadd.xlane.f32.xlu0 %v2560
    %v2562 = vpop.xlane.xlu0 %2561
    %v2563 = vsel %vm346, %v2542, 0.0
    %2564 = vadd.xlane.f32.xlu0 %v2563
    %v2565 = vpop.xlane.xlu0 %2564
    %v2566 = vsel %vm346, %v2544, 0.0
    %2567 = vadd.xlane.f32.xlu0 %v2566
    %v2568 = vpop.xlane.xlu0 %2567
    %v2569 = vpack.c.bf16 %v2530, %v2530
    %v2570 = vpack.c.bf16 %v2532, %v2532
    %v2571 = vpack.c.bf16 %v2534, %v2534
    %v2572 = vpack.c.bf16 %v2536, %v2536
    %v2573 = vpack.c.bf16 %v2538, %v2538
    %v2574 = vpack.c.bf16 %v2540, %v2540
    %v2575 = vpack.c.bf16 %v2542, %v2542
    %v2576 = vpack.c.bf16 %v2544, %v2544
    %2577 = vrot.lane.b32.xlu0 %v335, 48
    %v2578 = vpop.permute.xlu0 %2577
    %v2580 = vsel %vm346, %v2569, 0
    %v2583 = vsel %vm821, %v2578, 0
    %2585 = vmatprep.subr.bf16.mxu0 0
    %2586 = vmatpush1.bf16.msra.mxu0 %v2583
    %2587 = vmatprep.subr.bf16.mxu0 0
    %2588 = vmatpush1.bf16.msra.mxu0 0
    %2589 = vmatprep.subr.bf16.mxu0 0
    %2590 = vmatpush1.bf16.msra.mxu0 0
    %2591 = vmatprep.subr.bf16.mxu0 0
    %2592 = vmatpush1.bf16.msra.mxu0 0
    %2593 = vmatprep.subr.bf16.mxu0 0
    %2594 = vmatpush1.bf16.msra.mxu0 0
    %2595 = vmatprep.subr.bf16.mxu0 0
    %2596 = vmatpush1.bf16.msra.mxu0 0
    %2597 = vmatprep.subr.bf16.mxu0 0
    %2598 = vmatpush1.bf16.msra.mxu0 0
    %2599 = vmatprep.subr.bf16.mxu0 0
    %2600 = vmatpush1.bf16.msra.mxu0 0
    %2601 = vmatprep.subr.bf16.mxu0 0
    %2602 = vmatpush1.bf16.msra.mxu0 0
    %2603 = vmatprep.subr.bf16.mxu0 0
    %2604 = vmatpush1.bf16.msra.mxu0 0
    %2605 = vmatprep.subr.bf16.mxu0 0
    %2606 = vmatpush1.bf16.msra.mxu0 0
    %2607 = vmatprep.subr.bf16.mxu0 0
    %2608 = vmatpush1.bf16.msra.mxu0 0
    %2609 = vmatprep.subr.bf16.mxu0 0
    %2610 = vmatpush1.bf16.msra.mxu0 0
    %2611 = vmatprep.subr.bf16.mxu0 0
    %2612 = vmatpush1.bf16.msra.mxu0 0
    %2613 = vmatprep.subr.bf16.mxu0 0
    %2614 = vmatpush1.bf16.msra.mxu0 0
    %2615 = vmatprep.subr.bf16.mxu0 0
    %2616 = vmatpush1.bf16.msra.mxu0 0
    %2617 = vmatprep.mubr.bf16.mxu0 0
    %2618 = vmatmul.mubr.bf16.gmra.mrb[0].mxu0 %v2580
    %v2619 = vpop.f32.mrb[0].mxu0
    %v2620 = vadd.f32 0.0, %v2619
    %v2621 = vpop.f32.mrb[0].mxu0
    %v2622 = vpop.f32.mrb[0].mxu0
    %v2623 = vpop.f32.mrb[0].mxu0
    %2624 = vdwg.mxu0
    %2625 = vrot.lane.b32.xlu0 %v336, 48
    %v2626 = vpop.permute.xlu0 %2625
    %v2628 = vsel %vm346, %v2570, 0
    %v2631 = vsel %vm821, %v2626, 0
    %2633 = vmatprep.subr.bf16.mxu0 0
    %2634 = vmatpush1.bf16.msra.mxu0 %v2631
    %2635 = vmatprep.subr.bf16.mxu0 0
    %2636 = vmatpush1.bf16.msra.mxu0 0
    %2637 = vmatprep.subr.bf16.mxu0 0
    %2638 = vmatpush1.bf16.msra.mxu0 0
    %2639 = vmatprep.subr.bf16.mxu0 0
    %2640 = vmatpush1.bf16.msra.mxu0 0
    %2641 = vmatprep.subr.bf16.mxu0 0
    %2642 = vmatpush1.bf16.msra.mxu0 0
    %2643 = vmatprep.subr.bf16.mxu0 0
    %2644 = vmatpush1.bf16.msra.mxu0 0
    %2645 = vmatprep.subr.bf16.mxu0 0
    %2646 = vmatpush1.bf16.msra.mxu0 0
    %2647 = vmatprep.subr.bf16.mxu0 0
    %2648 = vmatpush1.bf16.msra.mxu0 0
    %2649 = vmatprep.subr.bf16.mxu0 0
    %2650 = vmatpush1.bf16.msra.mxu0 0
    %2651 = vmatprep.subr.bf16.mxu0 0
    %2652 = vmatpush1.bf16.msra.mxu0 0
    %2653 = vmatprep.subr.bf16.mxu0 0
    %2654 = vmatpush1.bf16.msra.mxu0 0
    %2655 = vmatprep.subr.bf16.mxu0 0
    %2656 = vmatpush1.bf16.msra.mxu0 0
    %2657 = vmatprep.subr.bf16.mxu0 0
    %2658 = vmatpush1.bf16.msra.mxu0 0
    %2659 = vmatprep.subr.bf16.mxu0 0
    %2660 = vmatpush1.bf16.msra.mxu0 0
    %2661 = vmatprep.subr.bf16.mxu0 0
    %2662 = vmatpush1.bf16.msra.mxu0 0
    %2663 = vmatprep.subr.bf16.mxu0 0
    %2664 = vmatpush1.bf16.msra.mxu0 0
    %2665 = vmatprep.mubr.bf16.mxu0 0
    %2666 = vmatmul.mubr.bf16.gmra.mrb[0].mxu0 %v2628
    %v2667 = vpop.f32.mrb[0].mxu0
    %v2668 = vadd.f32 0.0, %v2667
    %v2669 = vpop.f32.mrb[0].mxu0
    %v2670 = vpop.f32.mrb[0].mxu0
    %v2671 = vpop.f32.mrb[0].mxu0
    %2672 = vdwg.mxu0
    %2673 = vrot.lane.b32.xlu0 %v337, 48
    %v2674 = vpop.permute.xlu0 %2673
    %v2676 = vsel %vm346, %v2571, 0
    %v2679 = vsel %vm821, %v2674, 0
    %2681 = vmatprep.subr.bf16.mxu0 0
    %2682 = vmatpush1.bf16.msra.mxu0 %v2679
    %2683 = vmatprep.subr.bf16.mxu0 0
    %2684 = vmatpush1.bf16.msra.mxu0 0
    %2685 = vmatprep.subr.bf16.mxu0 0
    %2686 = vmatpush1.bf16.msra.mxu0 0
    %2687 = vmatprep.subr.bf16.mxu0 0
    %2688 = vmatpush1.bf16.msra.mxu0 0
    %2689 = vmatprep.subr.bf16.mxu0 0
    %2690 = vmatpush1.bf16.msra.mxu0 0
    %2691 = vmatprep.subr.bf16.mxu0 0
    %2692 = vmatpush1.bf16.msra.mxu0 0
    %2693 = vmatprep.subr.bf16.mxu0 0
    %2694 = vmatpush1.bf16.msra.mxu0 0
    %2695 = vmatprep.subr.bf16.mxu0 0
    %2696 = vmatpush1.bf16.msra.mxu0 0
    %2697 = vmatprep.subr.bf16.mxu0 0
    %2698 = vmatpush1.bf16.msra.mxu0 0
    %2699 = vmatprep.subr.bf16.mxu0 0
    %2700 = vmatpush1.bf16.msra.mxu0 0
    %2701 = vmatprep.subr.bf16.mxu0 0
    %2702 = vmatpush1.bf16.msra.mxu0 0
    %2703 = vmatprep.subr.bf16.mxu0 0
    %2704 = vmatpush1.bf16.msra.mxu0 0
    %2705 = vmatprep.subr.bf16.mxu0 0
    %2706 = vmatpush1.bf16.msra.mxu0 0
    %2707 = vmatprep.subr.bf16.mxu0 0
    %2708 = vmatpush1.bf16.msra.mxu0 0
    %2709 = vmatprep.subr.bf16.mxu0 0
    %2710 = vmatpush1.bf16.msra.mxu0 0
    %2711 = vmatprep.subr.bf16.mxu0 0
    %2712 = vmatpush1.bf16.msra.mxu0 0
    %2713 = vmatprep.mubr.bf16.mxu0 0
    %2714 = vmatmul.mubr.bf16.gmra.mrb[0].mxu0 %v2676
    %v2715 = vpop.f32.mrb[0].mxu0
    %v2716 = vadd.f32 0.0, %v2715
    %v2717 = vpop.f32.mrb[0].mxu0
    %v2718 = vpop.f32.mrb[0].mxu0
    %v2719 = vpop.f32.mrb[0].mxu0
    %2720 = vdwg.mxu0
    %2721 = vrot.lane.b32.xlu0 %v338, 48
    %v2722 = vpop.permute.xlu0 %2721
    %v2724 = vsel %vm346, %v2572, 0
    %v2727 = vsel %vm821, %v2722, 0
    %2729 = vmatprep.subr.bf16.mxu0 0
    %2730 = vmatpush1.bf16.msra.mxu0 %v2727
    %2731 = vmatprep.subr.bf16.mxu0 0
    %2732 = vmatpush1.bf16.msra.mxu0 0
    %2733 = vmatprep.subr.bf16.mxu0 0
    %2734 = vmatpush1.bf16.msra.mxu0 0
    %2735 = vmatprep.subr.bf16.mxu0 0
    %2736 = vmatpush1.bf16.msra.mxu0 0
    %2737 = vmatprep.subr.bf16.mxu0 0
    %2738 = vmatpush1.bf16.msra.mxu0 0
    %2739 = vmatprep.subr.bf16.mxu0 0
    %2740 = vmatpush1.bf16.msra.mxu0 0
    %2741 = vmatprep.subr.bf16.mxu0 0
    %2742 = vmatpush1.bf16.msra.mxu0 0
    %2743 = vmatprep.subr.bf16.mxu0 0
    %2744 = vmatpush1.bf16.msra.mxu0 0
    %2745 = vmatprep.subr.bf16.mxu0 0
    %2746 = vmatpush1.bf16.msra.mxu0 0
    %2747 = vmatprep.subr.bf16.mxu0 0
    %2748 = vmatpush1.bf16.msra.mxu0 0
    %2749 = vmatprep.subr.bf16.mxu0 0
    %2750 = vmatpush1.bf16.msra.mxu0 0
    %2751 = vmatprep.subr.bf16.mxu0 0
    %2752 = vmatpush1.bf16.msra.mxu0 0
    %2753 = vmatprep.subr.bf16.mxu0 0
    %2754 = vmatpush1.bf16.msra.mxu0 0
    %2755 = vmatprep.subr.bf16.mxu0 0
    %2756 = vmatpush1.bf16.msra.mxu0 0
    %2757 = vmatprep.subr.bf16.mxu0 0
    %2758 = vmatpush1.bf16.msra.mxu0 0
    %2759 = vmatprep.subr.bf16.mxu0 0
    %2760 = vmatpush1.bf16.msra.mxu0 0
    %2761 = vmatprep.mubr.bf16.mxu0 0
    %2762 = vmatmul.mubr.bf16.gmra.mrb[0].mxu0 %v2724
    %v2763 = vpop.f32.mrb[0].mxu0
    %v2764 = vadd.f32 0.0, %v2763
    %v2765 = vpop.f32.mrb[0].mxu0
    %v2766 = vpop.f32.mrb[0].mxu0
    %v2767 = vpop.f32.mrb[0].mxu0
    %2768 = vdwg.mxu0
    %2769 = vrot.lane.b32.xlu0 %v339, 48
    %v2770 = vpop.permute.xlu0 %2769
    %v2772 = vsel %vm346, %v2573, 0
    %v2775 = vsel %vm821, %v2770, 0
    %2777 = vmatprep.subr.bf16.mxu0 0
    %2778 = vmatpush1.bf16.msra.mxu0 %v2775
    %2779 = vmatprep.subr.bf16.mxu0 0
    %2780 = vmatpush1.bf16.msra.mxu0 0
    %2781 = vmatprep.subr.bf16.mxu0 0
    %2782 = vmatpush1.bf16.msra.mxu0 0
    %2783 = vmatprep.subr.bf16.mxu0 0
    %2784 = vmatpush1.bf16.msra.mxu0 0
    %2785 = vmatprep.subr.bf16.mxu0 0
    %2786 = vmatpush1.bf16.msra.mxu0 0
    %2787 = vmatprep.subr.bf16.mxu0 0
    %2788 = vmatpush1.bf16.msra.mxu0 0
    %2789 = vmatprep.subr.bf16.mxu0 0
    %2790 = vmatpush1.bf16.msra.mxu0 0
    %2791 = vmatprep.subr.bf16.mxu0 0
    %2792 = vmatpush1.bf16.msra.mxu0 0
    %2793 = vmatprep.subr.bf16.mxu0 0
    %2794 = vmatpush1.bf16.msra.mxu0 0
    %2795 = vmatprep.subr.bf16.mxu0 0
    %2796 = vmatpush1.bf16.msra.mxu0 0
    %2797 = vmatprep.subr.bf16.mxu0 0
    %2798 = vmatpush1.bf16.msra.mxu0 0
    %2799 = vmatprep.subr.bf16.mxu0 0
    %2800 = vmatpush1.bf16.msra.mxu0 0
    %2801 = vmatprep.subr.bf16.mxu0 0
    %2802 = vmatpush1.bf16.msra.mxu0 0
    %2803 = vmatprep.subr.bf16.mxu0 0
    %2804 = vmatpush1.bf16.msra.mxu0 0
    %2805 = vmatprep.subr.bf16.mxu0 0
    %2806 = vmatpush1.bf16.msra.mxu0 0
    %2807 = vmatprep.subr.bf16.mxu0 0
    %2808 = vmatpush1.bf16.msra.mxu0 0
    %2809 = vmatprep.mubr.bf16.mxu0 0
    %2810 = vmatmul.mubr.bf16.gmra.mrb[0].mxu0 %v2772
    %v2811 = vpop.f32.mrb[0].mxu0
    %v2812 = vadd.f32 0.0, %v2811
    %v2813 = vpop.f32.mrb[0].mxu0
    %v2814 = vpop.f32.mrb[0].mxu0
    %v2815 = vpop.f32.mrb[0].mxu0
    %2816 = vdwg.mxu0
    %2817 = vrot.lane.b32.xlu0 %v340, 48
    %v2818 = vpop.permute.xlu0 %2817
    %v2820 = vsel %vm346, %v2574, 0
    %v2823 = vsel %vm821, %v2818, 0
    %2825 = vmatprep.subr.bf16.mxu0 0
    %2826 = vmatpush1.bf16.msra.mxu0 %v2823
    %2827 = vmatprep.subr.bf16.mxu0 0
    %2828 = vmatpush1.bf16.msra.mxu0 0
    %2829 = vmatprep.subr.bf16.mxu0 0
    %2830 = vmatpush1.bf16.msra.mxu0 0
    %2831 = vmatprep.subr.bf16.mxu0 0
    %2832 = vmatpush1.bf16.msra.mxu0 0
    %2833 = vmatprep.subr.bf16.mxu0 0
    %2834 = vmatpush1.bf16.msra.mxu0 0
    %2835 = vmatprep.subr.bf16.mxu0 0
    %2836 = vmatpush1.bf16.msra.mxu0 0
    %2837 = vmatprep.subr.bf16.mxu0 0
    %2838 = vmatpush1.bf16.msra.mxu0 0
    %2839 = vmatprep.subr.bf16.mxu0 0
    %2840 = vmatpush1.bf16.msra.mxu0 0
    %2841 = vmatprep.subr.bf16.mxu0 0
    %2842 = vmatpush1.bf16.msra.mxu0 0
    %2843 = vmatprep.subr.bf16.mxu0 0
    %2844 = vmatpush1.bf16.msra.mxu0 0
    %2845 = vmatprep.subr.bf16.mxu0 0
    %2846 = vmatpush1.bf16.msra.mxu0 0
    %2847 = vmatprep.subr.bf16.mxu0 0
    %2848 = vmatpush1.bf16.msra.mxu0 0
    %2849 = vmatprep.subr.bf16.mxu0 0
    %2850 = vmatpush1.bf16.msra.mxu0 0
    %2851 = vmatprep.subr.bf16.mxu0 0
    %2852 = vmatpush1.bf16.msra.mxu0 0
    %2853 = vmatprep.subr.bf16.mxu0 0
    %2854 = vmatpush1.bf16.msra.mxu0 0
    %2855 = vmatprep.subr.bf16.mxu0 0
    %2856 = vmatpush1.bf16.msra.mxu0 0
    %2857 = vmatprep.mubr.bf16.mxu0 0
    %2858 = vmatmul.mubr.bf16.gmra.mrb[0].mxu0 %v2820
    %v2859 = vpop.f32.mrb[0].mxu0
    %v2860 = vadd.f32 0.0, %v2859
    %v2861 = vpop.f32.mrb[0].mxu0
    %v2862 = vpop.f32.mrb[0].mxu0
    %v2863 = vpop.f32.mrb[0].mxu0
    %2864 = vdwg.mxu0
    %2865 = vrot.lane.b32.xlu0 %v341, 48
    %v2866 = vpop.permute.xlu0 %2865
    %v2868 = vsel %vm346, %v2575, 0
    %v2871 = vsel %vm821, %v2866, 0
    %2873 = vmatprep.subr.bf16.mxu0 0
    %2874 = vmatpush1.bf16.msra.mxu0 %v2871
    %2875 = vmatprep.subr.bf16.mxu0 0
    %2876 = vmatpush1.bf16.msra.mxu0 0
    %2877 = vmatprep.subr.bf16.mxu0 0
    %2878 = vmatpush1.bf16.msra.mxu0 0
    %2879 = vmatprep.subr.bf16.mxu0 0
    %2880 = vmatpush1.bf16.msra.mxu0 0
    %2881 = vmatprep.subr.bf16.mxu0 0
    %2882 = vmatpush1.bf16.msra.mxu0 0
    %2883 = vmatprep.subr.bf16.mxu0 0
    %2884 = vmatpush1.bf16.msra.mxu0 0
    %2885 = vmatprep.subr.bf16.mxu0 0
    %2886 = vmatpush1.bf16.msra.mxu0 0
    %2887 = vmatprep.subr.bf16.mxu0 0
    %2888 = vmatpush1.bf16.msra.mxu0 0
    %2889 = vmatprep.subr.bf16.mxu0 0
    %2890 = vmatpush1.bf16.msra.mxu0 0
    %2891 = vmatprep.subr.bf16.mxu0 0
    %2892 = vmatpush1.bf16.msra.mxu0 0
    %2893 = vmatprep.subr.bf16.mxu0 0
    %2894 = vmatpush1.bf16.msra.mxu0 0
    %2895 = vmatprep.subr.bf16.mxu0 0
    %2896 = vmatpush1.bf16.msra.mxu0 0
    %2897 = vmatprep.subr.bf16.mxu0 0
    %2898 = vmatpush1.bf16.msra.mxu0 0
    %2899 = vmatprep.subr.bf16.mxu0 0
    %2900 = vmatpush1.bf16.msra.mxu0 0
    %2901 = vmatprep.subr.bf16.mxu0 0
    %2902 = vmatpush1.bf16.msra.mxu0 0
    %2903 = vmatprep.subr.bf16.mxu0 0
    %2904 = vmatpush1.bf16.msra.mxu0 0
    %2905 = vmatprep.mubr.bf16.mxu0 0
    %2906 = vmatmul.mubr.bf16.gmra.mrb[0].mxu0 %v2868
    %v2907 = vpop.f32.mrb[0].mxu0
    %v2908 = vadd.f32 0.0, %v2907
    %v2909 = vpop.f32.mrb[0].mxu0
    %v2910 = vpop.f32.mrb[0].mxu0
    %v2911 = vpop.f32.mrb[0].mxu0
    %2912 = vdwg.mxu0
    %2913 = vrot.lane.b32.xlu0 %v342, 48
    %v2914 = vpop.permute.xlu0 %2913
    %v2916 = vsel %vm346, %v2576, 0
    %v2919 = vsel %vm821, %v2914, 0
    %2921 = vmatprep.subr.bf16.mxu0 0
    %2922 = vmatpush1.bf16.msra.mxu0 %v2919
    %2923 = vmatprep.subr.bf16.mxu0 0
    %2924 = vmatpush1.bf16.msra.mxu0 0
    %2925 = vmatprep.subr.bf16.mxu0 0
    %2926 = vmatpush1.bf16.msra.mxu0 0
    %2927 = vmatprep.subr.bf16.mxu0 0
    %2928 = vmatpush1.bf16.msra.mxu0 0
    %2929 = vmatprep.subr.bf16.mxu0 0
    %2930 = vmatpush1.bf16.msra.mxu0 0
    %2931 = vmatprep.subr.bf16.mxu0 0
    %2932 = vmatpush1.bf16.msra.mxu0 0
    %2933 = vmatprep.subr.bf16.mxu0 0
    %2934 = vmatpush1.bf16.msra.mxu0 0
    %2935 = vmatprep.subr.bf16.mxu0 0
    %2936 = vmatpush1.bf16.msra.mxu0 0
    %2937 = vmatprep.subr.bf16.mxu0 0
    %2938 = vmatpush1.bf16.msra.mxu0 0
    %2939 = vmatprep.subr.bf16.mxu0 0
    %2940 = vmatpush1.bf16.msra.mxu0 0
    %2941 = vmatprep.subr.bf16.mxu0 0
    %2942 = vmatpush1.bf16.msra.mxu0 0
    %2943 = vmatprep.subr.bf16.mxu0 0
    %2944 = vmatpush1.bf16.msra.mxu0 0
    %2945 = vmatprep.subr.bf16.mxu0 0
    %2946 = vmatpush1.bf16.msra.mxu0 0
    %2947 = vmatprep.subr.bf16.mxu0 0
    %2948 = vmatpush1.bf16.msra.mxu0 0
    %2949 = vmatprep.subr.bf16.mxu0 0
    %2950 = vmatpush1.bf16.msra.mxu0 0
    %2951 = vmatprep.subr.bf16.mxu0 0
    %2952 = vmatpush1.bf16.msra.mxu0 0
    %2953 = vmatprep.mubr.bf16.mxu0 0
    %2954 = vmatmul.mubr.bf16.gmra.mrb[0].mxu0 %v2916
    %v2955 = vpop.f32.mrb[0].mxu0
    %v2956 = vadd.f32 0.0, %v2955
    %v2957 = vpop.f32.mrb[0].mxu0
    %v2958 = vpop.f32.mrb[0].mxu0
    %v2959 = vpop.f32.mrb[0].mxu0
    %2960 = vdwg.mxu0
    %v2961 = vrcp.pop %v2547
    %v2962 = vrcp.pop %v2550
    %v2963 = vrcp.pop %v2553
    %v2964 = vrcp.pop %v2556
    %v2965 = vrcp.pop %v2559
    %v2966 = vrcp.pop %v2562
    %v2967 = vrcp.pop %v2565
    %v2968 = vrcp.pop %v2568
    %v2969 = vmul.f32 %v2620, %v2961
    %v2970 = vmul.f32 %v2668, %v2962
    %v2971 = vmul.f32 %v2716, %v2963
    %v2972 = vmul.f32 %v2764, %v2964
    %v2973 = vmul.f32 %v2812, %v2965
    %v2974 = vmul.f32 %v2860, %v2966
    %v2975 = vmul.f32 %v2908, %v2967
    %v2976 = vmul.f32 %v2956, %v2968
    %2977 = vrot.lane.b32.xlu0 %v335, 104
    %v2978 = vpop.permute.xlu0 %2977
    %2979 = vrot.lane.b32.xlu0 %v335, 72
    %v2980 = vpop.permute.xlu0 %2979
    %v2982 = vsel %vm346, %v2978, 0
    %v2985 = vsel %vm346, %v2980, 0
    %2987 = vmatprep.subr.bf16.mxu0 0
    %2988 = vmatpush1.bf16.xpose.msra.mxu0 %v2985
    %2989 = vmatprep.subr.bf16.mxu0 0
    %2990 = vmatpush1.bf16.xpose.msra.mxu0 0
    %2991 = vmatprep.subr.bf16.mxu0 0
    %2992 = vmatpush1.bf16.xpose.msra.mxu0 0
    %2993 = vmatprep.subr.bf16.mxu0 0
    %2994 = vmatpush1.bf16.xpose.msra.mxu0 0
    %2995 = vmatprep.subr.bf16.mxu0 0
    %2996 = vmatpush1.bf16.xpose.msra.mxu0 0
    %2997 = vmatprep.subr.bf16.mxu0 0
    %2998 = vmatpush1.bf16.xpose.msra.mxu0 0
    %2999 = vmatprep.subr.bf16.mxu0 0
    %3000 = vmatpush1.bf16.xpose.msra.mxu0 0
    %3001 = vmatprep.subr.bf16.mxu0 0
    %3002 = vmatpush1.bf16.xpose.msra.mxu0 0
    %3003 = vmatprep.subr.bf16.mxu0 0
    %3004 = vmatpush1.bf16.xpose.msra.mxu0 0
    %3005 = vmatprep.subr.bf16.mxu0 0
    %3006 = vmatpush1.bf16.xpose.msra.mxu0 0
    %3007 = vmatprep.subr.bf16.mxu0 0
    %3008 = vmatpush1.bf16.xpose.msra.mxu0 0
    %3009 = vmatprep.subr.bf16.mxu0 0
    %3010 = vmatpush1.bf16.xpose.msra.mxu0 0
    %3011 = vmatprep.subr.bf16.mxu0 0
    %3012 = vmatpush1.bf16.xpose.msra.mxu0 0
    %3013 = vmatprep.subr.bf16.mxu0 0
    %3014 = vmatpush1.bf16.xpose.msra.mxu0 0
    %3015 = vmatprep.subr.bf16.mxu0 0
    %3016 = vmatpush1.bf16.xpose.msra.mxu0 0
    %3017 = vmatprep.subr.bf16.mxu0 0
    %3018 = vmatpush1.bf16.xpose.msra.mxu0 0
    %3019 = vmatprep.mubr.bf16.mxu0 0
    %3020 = vmatmul.mubr.bf16.gmra.mrb[0].mxu0 %v2982
    %v3021 = vpop.f32.mrb[0].mxu0
    %v3022 = vadd.f32 0.0, %v3021
    %v3023 = vpop.f32.mrb[0].mxu0
    %v3024 = vpop.f32.mrb[0].mxu0
    %v3025 = vpop.f32.mrb[0].mxu0
    %3026 = vdwg.mxu0
    %3027 = vrot.lane.b32.xlu0 %v336, 104
    %v3028 = vpop.permute.xlu0 %3027
    %3029 = vrot.lane.b32.xlu0 %v336, 72
    %v3030 = vpop.permute.xlu0 %3029
    %v3032 = vsel %vm346, %v3028, 0
    %v3035 = vsel %vm346, %v3030, 0
    %3037 = vmatprep.subr.bf16.mxu0 0
    %3038 = vmatpush1.bf16.xpose.msra.mxu0 %v3035
    %3039 = vmatprep.subr.bf16.mxu0 0
    %3040 = vmatpush1.bf16.xpose.msra.mxu0 0
    %3041 = vmatprep.subr.bf16.mxu0 0
    %3042 = vmatpush1.bf16.xpose.msra.mxu0 0
    %3043 = vmatprep.subr.bf16.mxu0 0
    %3044 = vmatpush1.bf16.xpose.msra.mxu0 0
    %3045 = vmatprep.subr.bf16.mxu0 0
    %3046 = vmatpush1.bf16.xpose.msra.mxu0 0
    %3047 = vmatprep.subr.bf16.mxu0 0
    %3048 = vmatpush1.bf16.xpose.msra.mxu0 0
    %3049 = vmatprep.subr.bf16.mxu0 0
    %3050 = vmatpush1.bf16.xpose.msra.mxu0 0
    %3051 = vmatprep.subr.bf16.mxu0 0
    %3052 = vmatpush1.bf16.xpose.msra.mxu0 0
    %3053 = vmatprep.subr.bf16.mxu0 0
    %3054 = vmatpush1.bf16.xpose.msra.mxu0 0
    %3055 = vmatprep.subr.bf16.mxu0 0
    %3056 = vmatpush1.bf16.xpose.msra.mxu0 0
    %3057 = vmatprep.subr.bf16.mxu0 0
    %3058 = vmatpush1.bf16.xpose.msra.mxu0 0
    %3059 = vmatprep.subr.bf16.mxu0 0
    %3060 = vmatpush1.bf16.xpose.msra.mxu0 0
    %3061 = vmatprep.subr.bf16.mxu0 0
    %3062 = vmatpush1.bf16.xpose.msra.mxu0 0
    %3063 = vmatprep.subr.bf16.mxu0 0
    %3064 = vmatpush1.bf16.xpose.msra.mxu0 0
    %3065 = vmatprep.subr.bf16.mxu0 0
    %3066 = vmatpush1.bf16.xpose.msra.mxu0 0
    %3067 = vmatprep.subr.bf16.mxu0 0
    %3068 = vmatpush1.bf16.xpose.msra.mxu0 0
    %3069 = vmatprep.mubr.bf16.mxu0 0
    %3070 = vmatmul.mubr.bf16.gmra.mrb[0].mxu0 %v3032
    %v3071 = vpop.f32.mrb[0].mxu0
    %v3072 = vadd.f32 0.0, %v3071
    %v3073 = vpop.f32.mrb[0].mxu0
    %v3074 = vpop.f32.mrb[0].mxu0
    %v3075 = vpop.f32.mrb[0].mxu0
    %3076 = vdwg.mxu0
    %3077 = vrot.lane.b32.xlu0 %v337, 104
    %v3078 = vpop.permute.xlu0 %3077
    %3079 = vrot.lane.b32.xlu0 %v337, 72
    %v3080 = vpop.permute.xlu0 %3079
    %v3082 = vsel %vm346, %v3078, 0
    %v3085 = vsel %vm346, %v3080, 0
    %3087 = vmatprep.subr.bf16.mxu0 0
    %3088 = vmatpush1.bf16.xpose.msra.mxu0 %v3085
    %3089 = vmatprep.subr.bf16.mxu0 0
    %3090 = vmatpush1.bf16.xpose.msra.mxu0 0
    %3091 = vmatprep.subr.bf16.mxu0 0
    %3092 = vmatpush1.bf16.xpose.msra.mxu0 0
    %3093 = vmatprep.subr.bf16.mxu0 0
    %3094 = vmatpush1.bf16.xpose.msra.mxu0 0
    %3095 = vmatprep.subr.bf16.mxu0 0
    %3096 = vmatpush1.bf16.xpose.msra.mxu0 0
    %3097 = vmatprep.subr.bf16.mxu0 0
    %3098 = vmatpush1.bf16.xpose.msra.mxu0 0
    %3099 = vmatprep.subr.bf16.mxu0 0
    %3100 = vmatpush1.bf16.xpose.msra.mxu0 0
    %3101 = vmatprep.subr.bf16.mxu0 0
    %3102 = vmatpush1.bf16.xpose.msra.mxu0 0
    %3103 = vmatprep.subr.bf16.mxu0 0
    %3104 = vmatpush1.bf16.xpose.msra.mxu0 0
    %3105 = vmatprep.subr.bf16.mxu0 0
    %3106 = vmatpush1.bf16.xpose.msra.mxu0 0
    %3107 = vmatprep.subr.bf16.mxu0 0
    %3108 = vmatpush1.bf16.xpose.msra.mxu0 0
    %3109 = vmatprep.subr.bf16.mxu0 0
    %3110 = vmatpush1.bf16.xpose.msra.mxu0 0
    %3111 = vmatprep.subr.bf16.mxu0 0
    %3112 = vmatpush1.bf16.xpose.msra.mxu0 0
    %3113 = vmatprep.subr.bf16.mxu0 0
    %3114 = vmatpush1.bf16.xpose.msra.mxu0 0
    %3115 = vmatprep.subr.bf16.mxu0 0
    %3116 = vmatpush1.bf16.xpose.msra.mxu0 0
    %3117 = vmatprep.subr.bf16.mxu0 0
    %3118 = vmatpush1.bf16.xpose.msra.mxu0 0
    %3119 = vmatprep.mubr.bf16.mxu0 0
    %3120 = vmatmul.mubr.bf16.gmra.mrb[0].mxu0 %v3082
    %v3121 = vpop.f32.mrb[0].mxu0
    %v3122 = vadd.f32 0.0, %v3121
    %v3123 = vpop.f32.mrb[0].mxu0
    %v3124 = vpop.f32.mrb[0].mxu0
    %v3125 = vpop.f32.mrb[0].mxu0
    %3126 = vdwg.mxu0
    %3127 = vrot.lane.b32.xlu0 %v338, 104
    %v3128 = vpop.permute.xlu0 %3127
    %3129 = vrot.lane.b32.xlu0 %v338, 72
    %v3130 = vpop.permute.xlu0 %3129
    %v3132 = vsel %vm346, %v3128, 0
    %v3135 = vsel %vm346, %v3130, 0
    %3137 = vmatprep.subr.bf16.mxu0 0
    %3138 = vmatpush1.bf16.xpose.msra.mxu0 %v3135
    %3139 = vmatprep.subr.bf16.mxu0 0
    %3140 = vmatpush1.bf16.xpose.msra.mxu0 0
    %3141 = vmatprep.subr.bf16.mxu0 0
    %3142 = vmatpush1.bf16.xpose.msra.mxu0 0
    %3143 = vmatprep.subr.bf16.mxu0 0
    %3144 = vmatpush1.bf16.xpose.msra.mxu0 0
    %3145 = vmatprep.subr.bf16.mxu0 0
    %3146 = vmatpush1.bf16.xpose.msra.mxu0 0
    %3147 = vmatprep.subr.bf16.mxu0 0
    %3148 = vmatpush1.bf16.xpose.msra.mxu0 0
    %3149 = vmatprep.subr.bf16.mxu0 0
    %3150 = vmatpush1.bf16.xpose.msra.mxu0 0
    %3151 = vmatprep.subr.bf16.mxu0 0
    %3152 = vmatpush1.bf16.xpose.msra.mxu0 0
    %3153 = vmatprep.subr.bf16.mxu0 0
    %3154 = vmatpush1.bf16.xpose.msra.mxu0 0
    %3155 = vmatprep.subr.bf16.mxu0 0
    %3156 = vmatpush1.bf16.xpose.msra.mxu0 0
    %3157 = vmatprep.subr.bf16.mxu0 0
    %3158 = vmatpush1.bf16.xpose.msra.mxu0 0
    %3159 = vmatprep.subr.bf16.mxu0 0
    %3160 = vmatpush1.bf16.xpose.msra.mxu0 0
    %3161 = vmatprep.subr.bf16.mxu0 0
    %3162 = vmatpush1.bf16.xpose.msra.mxu0 0
    %3163 = vmatprep.subr.bf16.mxu0 0
    %3164 = vmatpush1.bf16.xpose.msra.mxu0 0
    %3165 = vmatprep.subr.bf16.mxu0 0
    %3166 = vmatpush1.bf16.xpose.msra.mxu0 0
    %3167 = vmatprep.subr.bf16.mxu0 0
    %3168 = vmatpush1.bf16.xpose.msra.mxu0 0
    %3169 = vmatprep.mubr.bf16.mxu0 0
    %3170 = vmatmul.mubr.bf16.gmra.mrb[0].mxu0 %v3132
    %v3171 = vpop.f32.mrb[0].mxu0
    %v3172 = vadd.f32 0.0, %v3171
    %v3173 = vpop.f32.mrb[0].mxu0
    %v3174 = vpop.f32.mrb[0].mxu0
    %v3175 = vpop.f32.mrb[0].mxu0
    %3176 = vdwg.mxu0
    %3177 = vrot.lane.b32.xlu0 %v339, 104
    %v3178 = vpop.permute.xlu0 %3177
    %3179 = vrot.lane.b32.xlu0 %v339, 72
    %v3180 = vpop.permute.xlu0 %3179
    %v3182 = vsel %vm346, %v3178, 0
    %v3185 = vsel %vm346, %v3180, 0
    %3187 = vmatprep.subr.bf16.mxu0 0
    %3188 = vmatpush1.bf16.xpose.msra.mxu0 %v3185
    %3189 = vmatprep.subr.bf16.mxu0 0
    %3190 = vmatpush1.bf16.xpose.msra.mxu0 0
    %3191 = vmatprep.subr.bf16.mxu0 0
    %3192 = vmatpush1.bf16.xpose.msra.mxu0 0
    %3193 = vmatprep.subr.bf16.mxu0 0
    %3194 = vmatpush1.bf16.xpose.msra.mxu0 0
    %3195 = vmatprep.subr.bf16.mxu0 0
    %3196 = vmatpush1.bf16.xpose.msra.mxu0 0
    %3197 = vmatprep.subr.bf16.mxu0 0
    %3198 = vmatpush1.bf16.xpose.msra.mxu0 0
    %3199 = vmatprep.subr.bf16.mxu0 0
    %3200 = vmatpush1.bf16.xpose.msra.mxu0 0
    %3201 = vmatprep.subr.bf16.mxu0 0
    %3202 = vmatpush1.bf16.xpose.msra.mxu0 0
    %3203 = vmatprep.subr.bf16.mxu0 0
    %3204 = vmatpush1.bf16.xpose.msra.mxu0 0
    %3205 = vmatprep.subr.bf16.mxu0 0
    %3206 = vmatpush1.bf16.xpose.msra.mxu0 0
    %3207 = vmatprep.subr.bf16.mxu0 0
    %3208 = vmatpush1.bf16.xpose.msra.mxu0 0
    %3209 = vmatprep.subr.bf16.mxu0 0
    %3210 = vmatpush1.bf16.xpose.msra.mxu0 0
    %3211 = vmatprep.subr.bf16.mxu0 0
    %3212 = vmatpush1.bf16.xpose.msra.mxu0 0
    %3213 = vmatprep.subr.bf16.mxu0 0
    %3214 = vmatpush1.bf16.xpose.msra.mxu0 0
    %3215 = vmatprep.subr.bf16.mxu0 0
    %3216 = vmatpush1.bf16.xpose.msra.mxu0 0
    %3217 = vmatprep.subr.bf16.mxu0 0
    %3218 = vmatpush1.bf16.xpose.msra.mxu0 0
    %3219 = vmatprep.mubr.bf16.mxu0 0
    %3220 = vmatmul.mubr.bf16.gmra.mrb[0].mxu0 %v3182
    %v3221 = vpop.f32.mrb[0].mxu0
    %v3222 = vadd.f32 0.0, %v3221
    %v3223 = vpop.f32.mrb[0].mxu0
    %v3224 = vpop.f32.mrb[0].mxu0
    %v3225 = vpop.f32.mrb[0].mxu0
    %3226 = vdwg.mxu0
    %3227 = vrot.lane.b32.xlu0 %v340, 104
    %v3228 = vpop.permute.xlu0 %3227
    %3229 = vrot.lane.b32.xlu0 %v340, 72
    %v3230 = vpop.permute.xlu0 %3229
    %v3232 = vsel %vm346, %v3228, 0
    %v3235 = vsel %vm346, %v3230, 0
    %3237 = vmatprep.subr.bf16.mxu0 0
    %3238 = vmatpush1.bf16.xpose.msra.mxu0 %v3235
    %3239 = vmatprep.subr.bf16.mxu0 0
    %3240 = vmatpush1.bf16.xpose.msra.mxu0 0
    %3241 = vmatprep.subr.bf16.mxu0 0
    %3242 = vmatpush1.bf16.xpose.msra.mxu0 0
    %3243 = vmatprep.subr.bf16.mxu0 0
    %3244 = vmatpush1.bf16.xpose.msra.mxu0 0
    %3245 = vmatprep.subr.bf16.mxu0 0
    %3246 = vmatpush1.bf16.xpose.msra.mxu0 0
    %3247 = vmatprep.subr.bf16.mxu0 0
    %3248 = vmatpush1.bf16.xpose.msra.mxu0 0
    %3249 = vmatprep.subr.bf16.mxu0 0
    %3250 = vmatpush1.bf16.xpose.msra.mxu0 0
    %3251 = vmatprep.subr.bf16.mxu0 0
    %3252 = vmatpush1.bf16.xpose.msra.mxu0 0
    %3253 = vmatprep.subr.bf16.mxu0 0
    %3254 = vmatpush1.bf16.xpose.msra.mxu0 0
    %3255 = vmatprep.subr.bf16.mxu0 0
    %3256 = vmatpush1.bf16.xpose.msra.mxu0 0
    %3257 = vmatprep.subr.bf16.mxu0 0
    %3258 = vmatpush1.bf16.xpose.msra.mxu0 0
    %3259 = vmatprep.subr.bf16.mxu0 0
    %3260 = vmatpush1.bf16.xpose.msra.mxu0 0
    %3261 = vmatprep.subr.bf16.mxu0 0
    %3262 = vmatpush1.bf16.xpose.msra.mxu0 0
    %3263 = vmatprep.subr.bf16.mxu0 0
    %3264 = vmatpush1.bf16.xpose.msra.mxu0 0
    %3265 = vmatprep.subr.bf16.mxu0 0
    %3266 = vmatpush1.bf16.xpose.msra.mxu0 0
    %3267 = vmatprep.subr.bf16.mxu0 0
    %3268 = vmatpush1.bf16.xpose.msra.mxu0 0
    %3269 = vmatprep.mubr.bf16.mxu0 0
    %3270 = vmatmul.mubr.bf16.gmra.mrb[0].mxu0 %v3232
    %v3271 = vpop.f32.mrb[0].mxu0
    %v3272 = vadd.f32 0.0, %v3271
    %v3273 = vpop.f32.mrb[0].mxu0
    %v3274 = vpop.f32.mrb[0].mxu0
    %v3275 = vpop.f32.mrb[0].mxu0
    %3276 = vdwg.mxu0
    %3277 = vrot.lane.b32.xlu0 %v341, 104
    %v3278 = vpop.permute.xlu0 %3277
    %3279 = vrot.lane.b32.xlu0 %v341, 72
    %v3280 = vpop.permute.xlu0 %3279
    %v3282 = vsel %vm346, %v3278, 0
    %v3285 = vsel %vm346, %v3280, 0
    %3287 = vmatprep.subr.bf16.mxu0 0
    %3288 = vmatpush1.bf16.xpose.msra.mxu0 %v3285
    %3289 = vmatprep.subr.bf16.mxu0 0
    %3290 = vmatpush1.bf16.xpose.msra.mxu0 0
    %3291 = vmatprep.subr.bf16.mxu0 0
    %3292 = vmatpush1.bf16.xpose.msra.mxu0 0
    %3293 = vmatprep.subr.bf16.mxu0 0
    %3294 = vmatpush1.bf16.xpose.msra.mxu0 0
    %3295 = vmatprep.subr.bf16.mxu0 0
    %3296 = vmatpush1.bf16.xpose.msra.mxu0 0
    %3297 = vmatprep.subr.bf16.mxu0 0
    %3298 = vmatpush1.bf16.xpose.msra.mxu0 0
    %3299 = vmatprep.subr.bf16.mxu0 0
    %3300 = vmatpush1.bf16.xpose.msra.mxu0 0
    %3301 = vmatprep.subr.bf16.mxu0 0
    %3302 = vmatpush1.bf16.xpose.msra.mxu0 0
    %3303 = vmatprep.subr.bf16.mxu0 0
    %3304 = vmatpush1.bf16.xpose.msra.mxu0 0
    %3305 = vmatprep.subr.bf16.mxu0 0
    %3306 = vmatpush1.bf16.xpose.msra.mxu0 0
    %3307 = vmatprep.subr.bf16.mxu0 0
    %3308 = vmatpush1.bf16.xpose.msra.mxu0 0
    %3309 = vmatprep.subr.bf16.mxu0 0
    %3310 = vmatpush1.bf16.xpose.msra.mxu0 0
    %3311 = vmatprep.subr.bf16.mxu0 0
    %3312 = vmatpush1.bf16.xpose.msra.mxu0 0
    %3313 = vmatprep.subr.bf16.mxu0 0
    %3314 = vmatpush1.bf16.xpose.msra.mxu0 0
    %3315 = vmatprep.subr.bf16.mxu0 0
    %3316 = vmatpush1.bf16.xpose.msra.mxu0 0
    %3317 = vmatprep.subr.bf16.mxu0 0
    %3318 = vmatpush1.bf16.xpose.msra.mxu0 0
    %3319 = vmatprep.mubr.bf16.mxu0 0
    %3320 = vmatmul.mubr.bf16.gmra.mrb[0].mxu0 %v3282
    %v3321 = vpop.f32.mrb[0].mxu0
    %v3322 = vadd.f32 0.0, %v3321
    %v3323 = vpop.f32.mrb[0].mxu0
    %v3324 = vpop.f32.mrb[0].mxu0
    %v3325 = vpop.f32.mrb[0].mxu0
    %3326 = vdwg.mxu0
    %3327 = vrot.lane.b32.xlu0 %v342, 104
    %v3328 = vpop.permute.xlu0 %3327
    %3329 = vrot.lane.b32.xlu0 %v342, 72
    %v3330 = vpop.permute.xlu0 %3329
    %v3332 = vsel %vm346, %v3328, 0
    %v3335 = vsel %vm346, %v3330, 0
    %3337 = vmatprep.subr.bf16.mxu0 0
    %3338 = vmatpush1.bf16.xpose.msra.mxu0 %v3335
    %3339 = vmatprep.subr.bf16.mxu0 0
    %3340 = vmatpush1.bf16.xpose.msra.mxu0 0
    %3341 = vmatprep.subr.bf16.mxu0 0
    %3342 = vmatpush1.bf16.xpose.msra.mxu0 0
    %3343 = vmatprep.subr.bf16.mxu0 0
    %3344 = vmatpush1.bf16.xpose.msra.mxu0 0
    %3345 = vmatprep.subr.bf16.mxu0 0
    %3346 = vmatpush1.bf16.xpose.msra.mxu0 0
    %3347 = vmatprep.subr.bf16.mxu0 0
    %3348 = vmatpush1.bf16.xpose.msra.mxu0 0
    %3349 = vmatprep.subr.bf16.mxu0 0
    %3350 = vmatpush1.bf16.xpose.msra.mxu0 0
    %3351 = vmatprep.subr.bf16.mxu0 0
    %3352 = vmatpush1.bf16.xpose.msra.mxu0 0
    %3353 = vmatprep.subr.bf16.mxu0 0
    %3354 = vmatpush1.bf16.xpose.msra.mxu0 0
    %3355 = vmatprep.subr.bf16.mxu0 0
    %3356 = vmatpush1.bf16.xpose.msra.mxu0 0
    %3357 = vmatprep.subr.bf16.mxu0 0
    %3358 = vmatpush1.bf16.xpose.msra.mxu0 0
    %3359 = vmatprep.subr.bf16.mxu0 0
    %3360 = vmatpush1.bf16.xpose.msra.mxu0 0
    %3361 = vmatprep.subr.bf16.mxu0 0
    %3362 = vmatpush1.bf16.xpose.msra.mxu0 0
    %3363 = vmatprep.subr.bf16.mxu0 0
    %3364 = vmatpush1.bf16.xpose.msra.mxu0 0
    %3365 = vmatprep.subr.bf16.mxu0 0
    %3366 = vmatpush1.bf16.xpose.msra.mxu0 0
    %3367 = vmatprep.subr.bf16.mxu0 0
    %3368 = vmatpush1.bf16.xpose.msra.mxu0 0
    %3369 = vmatprep.mubr.bf16.mxu0 0
    %3370 = vmatmul.mubr.bf16.gmra.mrb[0].mxu0 %v3332
    %v3371 = vpop.f32.mrb[0].mxu0
    %v3372 = vadd.f32 0.0, %v3371
    %v3373 = vpop.f32.mrb[0].mxu0
    %v3374 = vpop.f32.mrb[0].mxu0
    %v3375 = vpop.f32.mrb[0].mxu0
    %3376 = vdwg.mxu0
    %v3377 = vsel %vm346, %v3022, -inf
    %3378 = vmax.xlane.f32.xlu0 %v3377
    %v3379 = vpop.xlane.xlu0 %3378
    %v3380 = vsel %vm346, %v3072, -inf
    %3381 = vmax.xlane.f32.xlu0 %v3380
    %v3382 = vpop.xlane.xlu0 %3381
    %v3383 = vsel %vm346, %v3122, -inf
    %3384 = vmax.xlane.f32.xlu0 %v3383
    %v3385 = vpop.xlane.xlu0 %3384
    %v3386 = vsel %vm346, %v3172, -inf
    %3387 = vmax.xlane.f32.xlu0 %v3386
    %v3388 = vpop.xlane.xlu0 %3387
    %v3389 = vsel %vm346, %v3222, -inf
    %3390 = vmax.xlane.f32.xlu0 %v3389
    %v3391 = vpop.xlane.xlu0 %3390
    %v3392 = vsel %vm346, %v3272, -inf
    %3393 = vmax.xlane.f32.xlu0 %v3392
    %v3394 = vpop.xlane.xlu0 %3393
    %v3395 = vsel %vm346, %v3322, -inf
    %3396 = vmax.xlane.f32.xlu0 %v3395
    %v3397 = vpop.xlane.xlu0 %3396
    %v3398 = vsel %vm346, %v3372, -inf
    %3399 = vmax.xlane.f32.xlu0 %v3398
    %v3400 = vpop.xlane.xlu0 %3399
    %v3401 = vsub.f32 %v3022, %v3379
    %v3402 = vsub.f32 %v3072, %v3382
    %v3403 = vsub.f32 %v3122, %v3385
    %v3404 = vsub.f32 %v3172, %v3388
    %v3405 = vsub.f32 %v3222, %v3391
    %v3406 = vsub.f32 %v3272, %v3394
    %v3407 = vsub.f32 %v3322, %v3397
    %v3408 = vsub.f32 %v3372, %v3400
    %v3409 = vmul.f32 %v3401, 1.442695
    %v3410 = vpow.pop %v3409
    %v3411 = vmul.f32 %v3402, 1.442695
    %v3412 = vpow.pop %v3411
    %v3413 = vmul.f32 %v3403, 1.442695
    %v3414 = vpow.pop %v3413
    %v3415 = vmul.f32 %v3404, 1.442695
    %v3416 = vpow.pop %v3415
    %v3417 = vmul.f32 %v3405, 1.442695
    %v3418 = vpow.pop %v3417
    %v3419 = vmul.f32 %v3406, 1.442695
    %v3420 = vpow.pop %v3419
    %v3421 = vmul.f32 %v3407, 1.442695
    %v3422 = vpow.pop %v3421
    %v3423 = vmul.f32 %v3408, 1.442695
    %v3424 = vpow.pop %v3423
    %v3425 = vsel %vm346, %v3410, 0.0
    %3426 = vadd.xlane.f32.xlu0 %v3425
    %v3427 = vpop.xlane.xlu0 %3426
    %v3428 = vsel %vm346, %v3412, 0.0
    %3429 = vadd.xlane.f32.xlu0 %v3428
    %v3430 = vpop.xlane.xlu0 %3429
    %v3431 = vsel %vm346, %v3414, 0.0
    %3432 = vadd.xlane.f32.xlu0 %v3431
    %v3433 = vpop.xlane.xlu0 %3432
    %v3434 = vsel %vm346, %v3416, 0.0
    %3435 = vadd.xlane.f32.xlu0 %v3434
    %v3436 = vpop.xlane.xlu0 %3435
    %v3437 = vsel %vm346, %v3418, 0.0
    %3438 = vadd.xlane.f32.xlu0 %v3437
    %v3439 = vpop.xlane.xlu0 %3438
    %v3440 = vsel %vm346, %v3420, 0.0
    %3441 = vadd.xlane.f32.xlu0 %v3440
    %v3442 = vpop.xlane.xlu0 %3441
    %v3443 = vsel %vm346, %v3422, 0.0
    %3444 = vadd.xlane.f32.xlu0 %v3443
    %v3445 = vpop.xlane.xlu0 %3444
    %v3446 = vsel %vm346, %v3424, 0.0
    %3447 = vadd.xlane.f32.xlu0 %v3446
    %v3448 = vpop.xlane.xlu0 %3447
    %v3449 = vpack.c.bf16 %v3410, %v3410
    %v3450 = vpack.c.bf16 %v3412, %v3412
    %v3451 = vpack.c.bf16 %v3414, %v3414
    %v3452 = vpack.c.bf16 %v3416, %v3416
    %v3453 = vpack.c.bf16 %v3418, %v3418
    %v3454 = vpack.c.bf16 %v3420, %v3420
    %v3455 = vpack.c.bf16 %v3422, %v3422
    %v3456 = vpack.c.bf16 %v3424, %v3424
    %3457 = vrot.lane.b32.xlu0 %v335, 40
    %v3458 = vpop.permute.xlu0 %3457
    %v3460 = vsel %vm346, %v3449, 0
    %v3463 = vsel %vm821, %v3458, 0
    %3465 = vmatprep.subr.bf16.mxu0 0
    %3466 = vmatpush1.bf16.msra.mxu0 %v3463
    %3467 = vmatprep.subr.bf16.mxu0 0
    %3468 = vmatpush1.bf16.msra.mxu0 0
    %3469 = vmatprep.subr.bf16.mxu0 0
    %3470 = vmatpush1.bf16.msra.mxu0 0
    %3471 = vmatprep.subr.bf16.mxu0 0
    %3472 = vmatpush1.bf16.msra.mxu0 0
    %3473 = vmatprep.subr.bf16.mxu0 0
    %3474 = vmatpush1.bf16.msra.mxu0 0
    %3475 = vmatprep.subr.bf16.mxu0 0
    %3476 = vmatpush1.bf16.msra.mxu0 0
    %3477 = vmatprep.subr.bf16.mxu0 0
    %3478 = vmatpush1.bf16.msra.mxu0 0
    %3479 = vmatprep.subr.bf16.mxu0 0
    %3480 = vmatpush1.bf16.msra.mxu0 0
    %3481 = vmatprep.subr.bf16.mxu0 0
    %3482 = vmatpush1.bf16.msra.mxu0 0
    %3483 = vmatprep.subr.bf16.mxu0 0
    %3484 = vmatpush1.bf16.msra.mxu0 0
    %3485 = vmatprep.subr.bf16.mxu0 0
    %3486 = vmatpush1.bf16.msra.mxu0 0
    %3487 = vmatprep.subr.bf16.mxu0 0
    %3488 = vmatpush1.bf16.msra.mxu0 0
    %3489 = vmatprep.subr.bf16.mxu0 0
    %3490 = vmatpush1.bf16.msra.mxu0 0
    %3491 = vmatprep.subr.bf16.mxu0 0
    %3492 = vmatpush1.bf16.msra.mxu0 0
    %3493 = vmatprep.subr.bf16.mxu0 0
    %3494 = vmatpush1.bf16.msra.mxu0 0
    %3495 = vmatprep.subr.bf16.mxu0 0
    %3496 = vmatpush1.bf16.msra.mxu0 0
    %3497 = vmatprep.mubr.bf16.mxu0 0
    %3498 = vmatmul.mubr.bf16.gmra.mrb[0].mxu0 %v3460
    %v3499 = vpop.f32.mrb[0].mxu0
    %v3500 = vadd.f32 0.0, %v3499
    %v3501 = vpop.f32.mrb[0].mxu0
    %v3502 = vpop.f32.mrb[0].mxu0
    %v3503 = vpop.f32.mrb[0].mxu0
    %3504 = vdwg.mxu0
    %3505 = vrot.lane.b32.xlu0 %v336, 40
    %v3506 = vpop.permute.xlu0 %3505
    %v3508 = vsel %vm346, %v3450, 0
    %v3511 = vsel %vm821, %v3506, 0
    %3513 = vmatprep.subr.bf16.mxu0 0
    %3514 = vmatpush1.bf16.msra.mxu0 %v3511
    %3515 = vmatprep.subr.bf16.mxu0 0
    %3516 = vmatpush1.bf16.msra.mxu0 0
    %3517 = vmatprep.subr.bf16.mxu0 0
    %3518 = vmatpush1.bf16.msra.mxu0 0
    %3519 = vmatprep.subr.bf16.mxu0 0
    %3520 = vmatpush1.bf16.msra.mxu0 0
    %3521 = vmatprep.subr.bf16.mxu0 0
    %3522 = vmatpush1.bf16.msra.mxu0 0
    %3523 = vmatprep.subr.bf16.mxu0 0
    %3524 = vmatpush1.bf16.msra.mxu0 0
    %3525 = vmatprep.subr.bf16.mxu0 0
    %3526 = vmatpush1.bf16.msra.mxu0 0
    %3527 = vmatprep.subr.bf16.mxu0 0
    %3528 = vmatpush1.bf16.msra.mxu0 0
    %3529 = vmatprep.subr.bf16.mxu0 0
    %3530 = vmatpush1.bf16.msra.mxu0 0
    %3531 = vmatprep.subr.bf16.mxu0 0
    %3532 = vmatpush1.bf16.msra.mxu0 0
    %3533 = vmatprep.subr.bf16.mxu0 0
    %3534 = vmatpush1.bf16.msra.mxu0 0
    %3535 = vmatprep.subr.bf16.mxu0 0
    %3536 = vmatpush1.bf16.msra.mxu0 0
    %3537 = vmatprep.subr.bf16.mxu0 0
    %3538 = vmatpush1.bf16.msra.mxu0 0
    %3539 = vmatprep.subr.bf16.mxu0 0
    %3540 = vmatpush1.bf16.msra.mxu0 0
    %3541 = vmatprep.subr.bf16.mxu0 0
    %3542 = vmatpush1.bf16.msra.mxu0 0
    %3543 = vmatprep.subr.bf16.mxu0 0
    %3544 = vmatpush1.bf16.msra.mxu0 0
    %3545 = vmatprep.mubr.bf16.mxu0 0
    %3546 = vmatmul.mubr.bf16.gmra.mrb[0].mxu0 %v3508
    %v3547 = vpop.f32.mrb[0].mxu0
    %v3548 = vadd.f32 0.0, %v3547
    %v3549 = vpop.f32.mrb[0].mxu0
    %v3550 = vpop.f32.mrb[0].mxu0
    %v3551 = vpop.f32.mrb[0].mxu0
    %3552 = vdwg.mxu0
    %3553 = vrot.lane.b32.xlu0 %v337, 40
    %v3554 = vpop.permute.xlu0 %3553
    %v3556 = vsel %vm346, %v3451, 0
    %v3559 = vsel %vm821, %v3554, 0
    %3561 = vmatprep.subr.bf16.mxu0 0
    %3562 = vmatpush1.bf16.msra.mxu0 %v3559
    %3563 = vmatprep.subr.bf16.mxu0 0
    %3564 = vmatpush1.bf16.msra.mxu0 0
    %3565 = vmatprep.subr.bf16.mxu0 0
    %3566 = vmatpush1.bf16.msra.mxu0 0
    %3567 = vmatprep.subr.bf16.mxu0 0
    %3568 = vmatpush1.bf16.msra.mxu0 0
    %3569 = vmatprep.subr.bf16.mxu0 0
    %3570 = vmatpush1.bf16.msra.mxu0 0
    %3571 = vmatprep.subr.bf16.mxu0 0
    %3572 = vmatpush1.bf16.msra.mxu0 0
    %3573 = vmatprep.subr.bf16.mxu0 0
    %3574 = vmatpush1.bf16.msra.mxu0 0
    %3575 = vmatprep.subr.bf16.mxu0 0
    %3576 = vmatpush1.bf16.msra.mxu0 0
    %3577 = vmatprep.subr.bf16.mxu0 0
    %3578 = vmatpush1.bf16.msra.mxu0 0
    %3579 = vmatprep.subr.bf16.mxu0 0
    %3580 = vmatpush1.bf16.msra.mxu0 0
    %3581 = vmatprep.subr.bf16.mxu0 0
    %3582 = vmatpush1.bf16.msra.mxu0 0
    %3583 = vmatprep.subr.bf16.mxu0 0
    %3584 = vmatpush1.bf16.msra.mxu0 0
    %3585 = vmatprep.subr.bf16.mxu0 0
    %3586 = vmatpush1.bf16.msra.mxu0 0
    %3587 = vmatprep.subr.bf16.mxu0 0
    %3588 = vmatpush1.bf16.msra.mxu0 0
    %3589 = vmatprep.subr.bf16.mxu0 0
    %3590 = vmatpush1.bf16.msra.mxu0 0
    %3591 = vmatprep.subr.bf16.mxu0 0
    %3592 = vmatpush1.bf16.msra.mxu0 0
    %3593 = vmatprep.mubr.bf16.mxu0 0
    %3594 = vmatmul.mubr.bf16.gmra.mrb[0].mxu0 %v3556
    %v3595 = vpop.f32.mrb[0].mxu0
    %v3596 = vadd.f32 0.0, %v3595
    %v3597 = vpop.f32.mrb[0].mxu0
    %v3598 = vpop.f32.mrb[0].mxu0
    %v3599 = vpop.f32.mrb[0].mxu0
    %3600 = vdwg.mxu0
    %3601 = vrot.lane.b32.xlu0 %v338, 40
    %v3602 = vpop.permute.xlu0 %3601
    %v3604 = vsel %vm346, %v3452, 0
    %v3607 = vsel %vm821, %v3602, 0
    %3609 = vmatprep.subr.bf16.mxu0 0
    %3610 = vmatpush1.bf16.msra.mxu0 %v3607
    %3611 = vmatprep.subr.bf16.mxu0 0
    %3612 = vmatpush1.bf16.msra.mxu0 0
    %3613 = vmatprep.subr.bf16.mxu0 0
    %3614 = vmatpush1.bf16.msra.mxu0 0
    %3615 = vmatprep.subr.bf16.mxu0 0
    %3616 = vmatpush1.bf16.msra.mxu0 0
    %3617 = vmatprep.subr.bf16.mxu0 0
    %3618 = vmatpush1.bf16.msra.mxu0 0
    %3619 = vmatprep.subr.bf16.mxu0 0
    %3620 = vmatpush1.bf16.msra.mxu0 0
    %3621 = vmatprep.subr.bf16.mxu0 0
    %3622 = vmatpush1.bf16.msra.mxu0 0
    %3623 = vmatprep.subr.bf16.mxu0 0
    %3624 = vmatpush1.bf16.msra.mxu0 0
    %3625 = vmatprep.subr.bf16.mxu0 0
    %3626 = vmatpush1.bf16.msra.mxu0 0
    %3627 = vmatprep.subr.bf16.mxu0 0
    %3628 = vmatpush1.bf16.msra.mxu0 0
    %3629 = vmatprep.subr.bf16.mxu0 0
    %3630 = vmatpush1.bf16.msra.mxu0 0
    %3631 = vmatprep.subr.bf16.mxu0 0
    %3632 = vmatpush1.bf16.msra.mxu0 0
    %3633 = vmatprep.subr.bf16.mxu0 0
    %3634 = vmatpush1.bf16.msra.mxu0 0
    %3635 = vmatprep.subr.bf16.mxu0 0
    %3636 = vmatpush1.bf16.msra.mxu0 0
    %3637 = vmatprep.subr.bf16.mxu0 0
    %3638 = vmatpush1.bf16.msra.mxu0 0
    %3639 = vmatprep.subr.bf16.mxu0 0
    %3640 = vmatpush1.bf16.msra.mxu0 0
    %3641 = vmatprep.mubr.bf16.mxu0 0
    %3642 = vmatmul.mubr.bf16.gmra.mrb[0].mxu0 %v3604
    %v3643 = vpop.f32.mrb[0].mxu0
    %v3644 = vadd.f32 0.0, %v3643
    %v3645 = vpop.f32.mrb[0].mxu0
    %v3646 = vpop.f32.mrb[0].mxu0
    %v3647 = vpop.f32.mrb[0].mxu0
    %3648 = vdwg.mxu0
    %3649 = vrot.lane.b32.xlu0 %v339, 40
    %v3650 = vpop.permute.xlu0 %3649
    %v3652 = vsel %vm346, %v3453, 0
    %v3655 = vsel %vm821, %v3650, 0
    %3657 = vmatprep.subr.bf16.mxu0 0
    %3658 = vmatpush1.bf16.msra.mxu0 %v3655
    %3659 = vmatprep.subr.bf16.mxu0 0
    %3660 = vmatpush1.bf16.msra.mxu0 0
    %3661 = vmatprep.subr.bf16.mxu0 0
    %3662 = vmatpush1.bf16.msra.mxu0 0
    %3663 = vmatprep.subr.bf16.mxu0 0
    %3664 = vmatpush1.bf16.msra.mxu0 0
    %3665 = vmatprep.subr.bf16.mxu0 0
    %3666 = vmatpush1.bf16.msra.mxu0 0
    %3667 = vmatprep.subr.bf16.mxu0 0
    %3668 = vmatpush1.bf16.msra.mxu0 0
    %3669 = vmatprep.subr.bf16.mxu0 0
    %3670 = vmatpush1.bf16.msra.mxu0 0
    %3671 = vmatprep.subr.bf16.mxu0 0
    %3672 = vmatpush1.bf16.msra.mxu0 0
    %3673 = vmatprep.subr.bf16.mxu0 0
    %3674 = vmatpush1.bf16.msra.mxu0 0
    %3675 = vmatprep.subr.bf16.mxu0 0
    %3676 = vmatpush1.bf16.msra.mxu0 0
    %3677 = vmatprep.subr.bf16.mxu0 0
    %3678 = vmatpush1.bf16.msra.mxu0 0
    %3679 = vmatprep.subr.bf16.mxu0 0
    %3680 = vmatpush1.bf16.msra.mxu0 0
    %3681 = vmatprep.subr.bf16.mxu0 0
    %3682 = vmatpush1.bf16.msra.mxu0 0
    %3683 = vmatprep.subr.bf16.mxu0 0
    %3684 = vmatpush1.bf16.msra.mxu0 0
    %3685 = vmatprep.subr.bf16.mxu0 0
    %3686 = vmatpush1.bf16.msra.mxu0 0
    %3687 = vmatprep.subr.bf16.mxu0 0
    %3688 = vmatpush1.bf16.msra.mxu0 0
    %3689 = vmatprep.mubr.bf16.mxu0 0
    %3690 = vmatmul.mubr.bf16.gmra.mrb[0].mxu0 %v3652
    %v3691 = vpop.f32.mrb[0].mxu0
    %v3692 = vadd.f32 0.0, %v3691
    %v3693 = vpop.f32.mrb[0].mxu0
    %v3694 = vpop.f32.mrb[0].mxu0
    %v3695 = vpop.f32.mrb[0].mxu0
    %3696 = vdwg.mxu0
    %3697 = vrot.lane.b32.xlu0 %v340, 40
    %v3698 = vpop.permute.xlu0 %3697
    %v3700 = vsel %vm346, %v3454, 0
    %v3703 = vsel %vm821, %v3698, 0
    %3705 = vmatprep.subr.bf16.mxu0 0
    %3706 = vmatpush1.bf16.msra.mxu0 %v3703
    %3707 = vmatprep.subr.bf16.mxu0 0
    %3708 = vmatpush1.bf16.msra.mxu0 0
    %3709 = vmatprep.subr.bf16.mxu0 0
    %3710 = vmatpush1.bf16.msra.mxu0 0
    %3711 = vmatprep.subr.bf16.mxu0 0
    %3712 = vmatpush1.bf16.msra.mxu0 0
    %3713 = vmatprep.subr.bf16.mxu0 0
    %3714 = vmatpush1.bf16.msra.mxu0 0
    %3715 = vmatprep.subr.bf16.mxu0 0
    %3716 = vmatpush1.bf16.msra.mxu0 0
    %3717 = vmatprep.subr.bf16.mxu0 0
    %3718 = vmatpush1.bf16.msra.mxu0 0
    %3719 = vmatprep.subr.bf16.mxu0 0
    %3720 = vmatpush1.bf16.msra.mxu0 0
    %3721 = vmatprep.subr.bf16.mxu0 0
    %3722 = vmatpush1.bf16.msra.mxu0 0
    %3723 = vmatprep.subr.bf16.mxu0 0
    %3724 = vmatpush1.bf16.msra.mxu0 0
    %3725 = vmatprep.subr.bf16.mxu0 0
    %3726 = vmatpush1.bf16.msra.mxu0 0
    %3727 = vmatprep.subr.bf16.mxu0 0
    %3728 = vmatpush1.bf16.msra.mxu0 0
    %3729 = vmatprep.subr.bf16.mxu0 0
    %3730 = vmatpush1.bf16.msra.mxu0 0
    %3731 = vmatprep.subr.bf16.mxu0 0
    %3732 = vmatpush1.bf16.msra.mxu0 0
    %3733 = vmatprep.subr.bf16.mxu0 0
    %3734 = vmatpush1.bf16.msra.mxu0 0
    %3735 = vmatprep.subr.bf16.mxu0 0
    %3736 = vmatpush1.bf16.msra.mxu0 0
    %3737 = vmatprep.mubr.bf16.mxu0 0
    %3738 = vmatmul.mubr.bf16.gmra.mrb[0].mxu0 %v3700
    %v3739 = vpop.f32.mrb[0].mxu0
    %v3740 = vadd.f32 0.0, %v3739
    %v3741 = vpop.f32.mrb[0].mxu0
    %v3742 = vpop.f32.mrb[0].mxu0
    %v3743 = vpop.f32.mrb[0].mxu0
    %3744 = vdwg.mxu0
    %3745 = vrot.lane.b32.xlu0 %v341, 40
    %v3746 = vpop.permute.xlu0 %3745
    %v3748 = vsel %vm346, %v3455, 0
    %v3751 = vsel %vm821, %v3746, 0
    %3753 = vmatprep.subr.bf16.mxu0 0
    %3754 = vmatpush1.bf16.msra.mxu0 %v3751
    %3755 = vmatprep.subr.bf16.mxu0 0
    %3756 = vmatpush1.bf16.msra.mxu0 0
    %3757 = vmatprep.subr.bf16.mxu0 0
    %3758 = vmatpush1.bf16.msra.mxu0 0
    %3759 = vmatprep.subr.bf16.mxu0 0
    %3760 = vmatpush1.bf16.msra.mxu0 0
    %3761 = vmatprep.subr.bf16.mxu0 0
    %3762 = vmatpush1.bf16.msra.mxu0 0
    %3763 = vmatprep.subr.bf16.mxu0 0
    %3764 = vmatpush1.bf16.msra.mxu0 0
    %3765 = vmatprep.subr.bf16.mxu0 0
    %3766 = vmatpush1.bf16.msra.mxu0 0
    %3767 = vmatprep.subr.bf16.mxu0 0
    %3768 = vmatpush1.bf16.msra.mxu0 0
    %3769 = vmatprep.subr.bf16.mxu0 0
    %3770 = vmatpush1.bf16.msra.mxu0 0
    %3771 = vmatprep.subr.bf16.mxu0 0
    %3772 = vmatpush1.bf16.msra.mxu0 0
    %3773 = vmatprep.subr.bf16.mxu0 0
    %3774 = vmatpush1.bf16.msra.mxu0 0
    %3775 = vmatprep.subr.bf16.mxu0 0
    %3776 = vmatpush1.bf16.msra.mxu0 0
    %3777 = vmatprep.subr.bf16.mxu0 0
    %3778 = vmatpush1.bf16.msra.mxu0 0
    %3779 = vmatprep.subr.bf16.mxu0 0
    %3780 = vmatpush1.bf16.msra.mxu0 0
    %3781 = vmatprep.subr.bf16.mxu0 0
    %3782 = vmatpush1.bf16.msra.mxu0 0
    %3783 = vmatprep.subr.bf16.mxu0 0
    %3784 = vmatpush1.bf16.msra.mxu0 0
    %3785 = vmatprep.mubr.bf16.mxu0 0
    %3786 = vmatmul.mubr.bf16.gmra.mrb[0].mxu0 %v3748
    %v3787 = vpop.f32.mrb[0].mxu0
    %v3788 = vadd.f32 0.0, %v3787
    %v3789 = vpop.f32.mrb[0].mxu0
    %v3790 = vpop.f32.mrb[0].mxu0
    %v3791 = vpop.f32.mrb[0].mxu0
    %3792 = vdwg.mxu0
    %3793 = vrot.lane.b32.xlu0 %v342, 40
    %v3794 = vpop.permute.xlu0 %3793
    %v3796 = vsel %vm346, %v3456, 0
    %v3799 = vsel %vm821, %v3794, 0
    %3801 = vmatprep.subr.bf16.mxu0 0
    %3802 = vmatpush1.bf16.msra.mxu0 %v3799
    %3803 = vmatprep.subr.bf16.mxu0 0
    %3804 = vmatpush1.bf16.msra.mxu0 0
    %3805 = vmatprep.subr.bf16.mxu0 0
    %3806 = vmatpush1.bf16.msra.mxu0 0
    %3807 = vmatprep.subr.bf16.mxu0 0
    %3808 = vmatpush1.bf16.msra.mxu0 0
    %3809 = vmatprep.subr.bf16.mxu0 0
    %3810 = vmatpush1.bf16.msra.mxu0 0
    %3811 = vmatprep.subr.bf16.mxu0 0
    %3812 = vmatpush1.bf16.msra.mxu0 0
    %3813 = vmatprep.subr.bf16.mxu0 0
    %3814 = vmatpush1.bf16.msra.mxu0 0
    %3815 = vmatprep.subr.bf16.mxu0 0
    %3816 = vmatpush1.bf16.msra.mxu0 0
    %3817 = vmatprep.subr.bf16.mxu0 0
    %3818 = vmatpush1.bf16.msra.mxu0 0
    %3819 = vmatprep.subr.bf16.mxu0 0
    %3820 = vmatpush1.bf16.msra.mxu0 0
    %3821 = vmatprep.subr.bf16.mxu0 0
    %3822 = vmatpush1.bf16.msra.mxu0 0
    %3823 = vmatprep.subr.bf16.mxu0 0
    %3824 = vmatpush1.bf16.msra.mxu0 0
    %3825 = vmatprep.subr.bf16.mxu0 0
    %3826 = vmatpush1.bf16.msra.mxu0 0
    %3827 = vmatprep.subr.bf16.mxu0 0
    %3828 = vmatpush1.bf16.msra.mxu0 0
    %3829 = vmatprep.subr.bf16.mxu0 0
    %3830 = vmatpush1.bf16.msra.mxu0 0
    %3831 = vmatprep.subr.bf16.mxu0 0
    %3832 = vmatpush1.bf16.msra.mxu0 0
    %3833 = vmatprep.mubr.bf16.mxu0 0
    %3834 = vmatmul.mubr.bf16.gmra.mrb[0].mxu0 %v3796
    %v3835 = vpop.f32.mrb[0].mxu0
    %v3836 = vadd.f32 0.0, %v3835
    %v3837 = vpop.f32.mrb[0].mxu0
    %v3838 = vpop.f32.mrb[0].mxu0
    %v3839 = vpop.f32.mrb[0].mxu0
    %3840 = vdwg.mxu0
    %v3841 = vrcp.pop %v3427
    %v3842 = vrcp.pop %v3430
    %v3843 = vrcp.pop %v3433
    %v3844 = vrcp.pop %v3436
    %v3845 = vrcp.pop %v3439
    %v3846 = vrcp.pop %v3442
    %v3847 = vrcp.pop %v3445
    %v3848 = vrcp.pop %v3448
    %v3849 = vmul.f32 %v3500, %v3841
    %v3850 = vmul.f32 %v3548, %v3842
    %v3851 = vmul.f32 %v3596, %v3843
    %v3852 = vmul.f32 %v3644, %v3844
    %v3853 = vmul.f32 %v3692, %v3845
    %v3854 = vmul.f32 %v3740, %v3846
    %v3855 = vmul.f32 %v3788, %v3847
    %v3856 = vmul.f32 %v3836, %v3848
    %3865 = vrot.lane.b32.xlu0 %v2089, 8
    %v3866 = vpop.permute.xlu0 %3865
    %3867 = vrot.lane.b32.xlu0 %v2090, 8
    %v3868 = vpop.permute.xlu0 %3867
    %3869 = vrot.lane.b32.xlu0 %v2091, 8
    %v3870 = vpop.permute.xlu0 %3869
    %3871 = vrot.lane.b32.xlu0 %v2092, 8
    %v3872 = vpop.permute.xlu0 %3871
    %3873 = vrot.lane.b32.xlu0 %v2093, 8
    %v3874 = vpop.permute.xlu0 %3873
    %3875 = vrot.lane.b32.xlu0 %v2094, 8
    %v3876 = vpop.permute.xlu0 %3875
    %3877 = vrot.lane.b32.xlu0 %v2095, 8
    %v3878 = vpop.permute.xlu0 %3877
    %3879 = vrot.lane.b32.xlu0 %v2096, 8
    %v3880 = vpop.permute.xlu0 %3879
    %3897 = vrot.lane.b32.xlu0 %v2969, 16
    %v3898 = vpop.permute.xlu0 %3897
    %3899 = vrot.lane.b32.xlu0 %v2970, 16
    %v3900 = vpop.permute.xlu0 %3899
    %3901 = vrot.lane.b32.xlu0 %v2971, 16
    %v3902 = vpop.permute.xlu0 %3901
    %3903 = vrot.lane.b32.xlu0 %v2972, 16
    %v3904 = vpop.permute.xlu0 %3903
    %3905 = vrot.lane.b32.xlu0 %v2973, 16
    %v3906 = vpop.permute.xlu0 %3905
    %3907 = vrot.lane.b32.xlu0 %v2974, 16
    %v3908 = vpop.permute.xlu0 %3907
    %3909 = vrot.lane.b32.xlu0 %v2975, 16
    %v3910 = vpop.permute.xlu0 %3909
    %3911 = vrot.lane.b32.xlu0 %v2976, 16
    %v3912 = vpop.permute.xlu0 %3911
    %3929 = vrot.lane.b32.xlu0 %v3849, 24
    %v3930 = vpop.permute.xlu0 %3929
    %3931 = vrot.lane.b32.xlu0 %v3850, 24
    %v3932 = vpop.permute.xlu0 %3931
    %3933 = vrot.lane.b32.xlu0 %v3851, 24
    %v3934 = vpop.permute.xlu0 %3933
    %3935 = vrot.lane.b32.xlu0 %v3852, 24
    %v3936 = vpop.permute.xlu0 %3935
    %3937 = vrot.lane.b32.xlu0 %v3853, 24
    %v3938 = vpop.permute.xlu0 %3937
    %3939 = vrot.lane.b32.xlu0 %v3854, 24
    %v3940 = vpop.permute.xlu0 %3939
    %3941 = vrot.lane.b32.xlu0 %v3855, 24
    %v3942 = vpop.permute.xlu0 %3941
    %3943 = vrot.lane.b32.xlu0 %v3856, 24
    %v3944 = vpop.permute.xlu0 %3943
    %v3953 = vsel %vm346, %v1209, %v3866
    %v3954 = vsel %vm346, %v1210, %v3868
    %v3955 = vsel %vm346, %v1211, %v3870
    %v3956 = vsel %vm346, %v1212, %v3872
    %v3957 = vsel %vm346, %v1213, %v3874
    %v3958 = vsel %vm346, %v1214, %v3876
    %v3959 = vsel %vm346, %v1215, %v3878
    %v3960 = vsel %vm346, %v1216, %v3880
    %v3961 = vsel %vm152, %v3953, %v3898
    %v3962 = vsel %vm152, %v3954, %v3900
    %v3963 = vsel %vm152, %v3955, %v3902
    %v3964 = vsel %vm152, %v3956, %v3904
    %v3965 = vsel %vm152, %v3957, %v3906
    %v3966 = vsel %vm152, %v3958, %v3908
    %v3967 = vsel %vm152, %v3959, %v3910
    %v3968 = vsel %vm152, %v3960, %v3912
    %vm3969 = vcmask 195584
    %v3970 = vsel %vm3969, %v3961, %v3930
    %v3971 = vsel %vm3969, %v3962, %v3932
    %v3972 = vsel %vm3969, %v3963, %v3934
    %v3973 = vsel %vm3969, %v3964, %v3936
    %v3974 = vsel %vm3969, %v3965, %v3938
    %v3975 = vsel %vm3969, %v3966, %v3940
    %v3976 = vsel %vm3969, %v3967, %v3942
    %v3977 = vsel %vm3969, %v3968, %v3944
    %v3978 = vpack.c.bf16 %v3971, %v3970
    %v3979 = vpack.c.bf16 %v3973, %v3972
    %v3980 = vpack.c.bf16 %v3975, %v3974
    %v3981 = vpack.c.bf16 %v3977, %v3976
    %v3982 = vld [vmem:[#allocation10] sm:$0xf]
    %v3983 = vld [vmem:[#allocation10 + $0x4] sm:$0xf]
    %v3984 = vld [vmem:[#allocation10 + $0x8] sm:$0xf]
    %v3985 = vld [vmem:[#allocation10 + $0xc] sm:$0xf]
    %v3986 = vld [vmem:[%s7] sm:$0x1]
    %v3988 = vlaneseq
    %v3989 = vshrl.u32 %v3988, 7
    %v3990 = vsub.s32 0, %v3989
    %v3991 = vrot.slane %v3986, %v3990
    %v3997 = vunpack.c.l.b16 %v3982
    %v3998 = vunpack.c.l.b16 %v3983
    %v3999 = vunpack.c.l.b16 %v3984
    %v4000 = vunpack.c.l.b16 %v3985
    %v4001 = vpack.c.b16 %v3998, %v3997
    %v4002 = vpack.c.b16 %v4000, %v3999
    %v4006 = vsel %vm257, %v3978, 0
    %v4009 = vsel %vm257, %v3979, 0
    %v4012 = vsel %vm257, %v3980, 0
    %v4015 = vsel %vm257, %v3981, 0
    %4017 = vmatprep.subr.bf16.mxu0 0
    %4018 = vmatpush1.bf16.msra.mxu0 %v4001
    %4019 = vmatprep.subr.bf16.mxu0 0
    %4020 = vmatpush1.bf16.msra.mxu0 %v4002
    %4021 = vmatprep.subr.bf16.mxu0 0
    %4022 = vmatpush1.bf16.msra.mxu0 0
    %4023 = vmatprep.subr.bf16.mxu0 0
    %4024 = vmatpush1.bf16.msra.mxu0 0
    %4025 = vmatprep.subr.bf16.mxu0 0
    %4026 = vmatpush1.bf16.msra.mxu0 0
    %4027 = vmatprep.subr.bf16.mxu0 0
    %4028 = vmatpush1.bf16.msra.mxu0 0
    %4029 = vmatprep.subr.bf16.mxu0 0
    %4030 = vmatpush1.bf16.msra.mxu0 0
    %4031 = vmatprep.subr.bf16.mxu0 0
    %4032 = vmatpush1.bf16.msra.mxu0 0
    %4033 = vmatprep.subr.bf16.mxu0 0
    %4034 = vmatpush1.bf16.msra.mxu0 0
    %4035 = vmatprep.subr.bf16.mxu0 0
    %4036 = vmatpush1.bf16.msra.mxu0 0
    %4037 = vmatprep.subr.bf16.mxu0 0
    %4038 = vmatpush1.bf16.msra.mxu0 0
    %4039 = vmatprep.subr.bf16.mxu0 0
    %4040 = vmatpush1.bf16.msra.mxu0 0
    %4041 = vmatprep.subr.bf16.mxu0 0
    %4042 = vmatpush1.bf16.msra.mxu0 0
    %4043 = vmatprep.subr.bf16.mxu0 0
    %4044 = vmatpush1.bf16.msra.mxu0 0
    %4045 = vmatprep.subr.bf16.mxu0 0
    %4046 = vmatpush1.bf16.msra.mxu0 0
    %4047 = vmatprep.subr.bf16.mxu0 0
    %4048 = vmatpush1.bf16.msra.mxu0 0
    %4049 = vmatprep.mubr.bf16.mxu0 0
    %4050 = vmatmul.mubr.bf16.gmra.mrb[0].mxu0 %v4006
    %v4051 = vpop.f32.mrb[0].mxu0
    %v4052 = vadd.f32 %v3991, %v4051
    %v4053 = vpop.f32.mrb[0].mxu0
    %v4054 = vpop.f32.mrb[0].mxu0
    %v4055 = vadd.f32 %v3991, %v4054
    %v4056 = vpop.f32.mrb[0].mxu0
    %4057 = vmatprep.mubr.bf16.mxu0 0
    %4058 = vmatmul.mubr.bf16.gmra.mrb[0].mxu0 %v4009
    %v4059 = vpop.f32.mrb[0].mxu0
    %v4060 = vadd.f32 %v3991, %v4059
    %v4061 = vpop.f32.mrb[0].mxu0
    %v4062 = vpop.f32.mrb[0].mxu0
    %v4063 = vadd.f32 %v3991, %v4062
    %v4064 = vpop.f32.mrb[0].mxu0
    %4065 = vmatprep.mubr.bf16.mxu0 0
    %4066 = vmatmul.mubr.bf16.gmra.mrb[0].mxu0 %v4012
    %v4067 = vpop.f32.mrb[0].mxu0
    %v4068 = vadd.f32 %v3991, %v4067
    %v4069 = vpop.f32.mrb[0].mxu0
    %v4070 = vpop.f32.mrb[0].mxu0
    %v4071 = vadd.f32 %v3991, %v4070
    %v4072 = vpop.f32.mrb[0].mxu0
    %4073 = vmatprep.mubr.bf16.mxu0 0
    %4074 = vmatmul.mubr.bf16.gmra.mrb[0].mxu0 %v4015
    %v4075 = vpop.f32.mrb[0].mxu0
    %v4076 = vadd.f32 %v3991, %v4075
    %v4077 = vpop.f32.mrb[0].mxu0
    %v4078 = vpop.f32.mrb[0].mxu0
    %v4079 = vadd.f32 %v3991, %v4078
    %v4080 = vpop.f32.mrb[0].mxu0
    %4081 = vdwg.mxu0
    %v4082 = vadd.f32 %v200, %v4052
    %v4083 = vadd.f32 %v203, %v4055
    %v4084 = vadd.f32 %v208, %v4060
    %v4085 = vadd.f32 %v211, %v4063
    %v4086 = vadd.f32 %v216, %v4068
    %v4087 = vadd.f32 %v219, %v4071
    %v4088 = vadd.f32 %v224, %v4076
    %v4089 = vadd.f32 %v227, %v4079
    %v4090 = vld [vmem:[%s8] sm:$0x1]
    %v4091 = vld [vmem:[%s9] sm:$0x1]
    %v4092 = vsel %vm257, %v4082, 0.0
    %4093 = vadd.xlane.f32.xlu0 %v4092
    %v4094 = vpop.xlane.xlu0 %4093
    %v4095 = vsel %vm257, %v4083, 0.0
    %4096 = vadd.xlane.f32.xlu0 %v4095
    %v4097 = vpop.xlane.xlu0 %4096
    %v4098 = vsel %vm257, %v4084, 0.0
    %4099 = vadd.xlane.f32.xlu0 %v4098
    %v4100 = vpop.xlane.xlu0 %4099
    %v4101 = vsel %vm257, %v4085, 0.0
    %4102 = vadd.xlane.f32.xlu0 %v4101
    %v4103 = vpop.xlane.xlu0 %4102
    %v4104 = vsel %vm257, %v4086, 0.0
    %4105 = vadd.xlane.f32.xlu0 %v4104
    %v4106 = vpop.xlane.xlu0 %4105
    %v4107 = vsel %vm257, %v4087, 0.0
    %4108 = vadd.xlane.f32.xlu0 %v4107
    %v4109 = vpop.xlane.xlu0 %4108
    %v4110 = vsel %vm257, %v4088, 0.0
    %4111 = vadd.xlane.f32.xlu0 %v4110
    %v4112 = vpop.xlane.xlu0 %4111
    %v4113 = vsel %vm257, %v4089, 0.0
    %4114 = vadd.xlane.f32.xlu0 %v4113
    %v4115 = vpop.xlane.xlu0 %4114
    %v4116 = vrcp.pop 32.0
    %v4117 = vmul.f32 %v4094, %v4116
    %v4118 = vmul.f32 %v4097, %v4116
    %v4119 = vmul.f32 %v4100, %v4116
    %v4120 = vmul.f32 %v4103, %v4116
    %v4121 = vmul.f32 %v4106, %v4116
    %v4122 = vmul.f32 %v4109, %v4116
    %v4123 = vmul.f32 %v4112, %v4116
    %v4124 = vmul.f32 %v4115, %v4116
    %v4125 = vsub.f32 %v4082, %v4117
    %v4126 = vsub.f32 %v4083, %v4118
    %v4127 = vsub.f32 %v4084, %v4119
    %v4128 = vsub.f32 %v4085, %v4120
    %v4129 = vsub.f32 %v4086, %v4121
    %v4130 = vsub.f32 %v4087, %v4122
    %v4131 = vsub.f32 %v4088, %v4123
    %v4132 = vsub.f32 %v4089, %v4124
    %v4133 = vmul.f32 %v4125, %v4125
    %v4134 = vmul.f32 %v4126, %v4126
    %v4135 = vmul.f32 %v4127, %v4127
    %v4136 = vmul.f32 %v4128, %v4128
    %v4137 = vmul.f32 %v4129, %v4129
    %v4138 = vmul.f32 %v4130, %v4130
    %v4139 = vmul.f32 %v4131, %v4131
    %v4140 = vmul.f32 %v4132, %v4132
    %v4141 = vsel %vm257, %v4133, 0.0
    %4142 = vadd.xlane.f32.xlu0 %v4141
    %v4143 = vpop.xlane.xlu0 %4142
    %v4144 = vsel %vm257, %v4134, 0.0
    %4145 = vadd.xlane.f32.xlu0 %v4144
    %v4146 = vpop.xlane.xlu0 %4145
    %v4147 = vsel %vm257, %v4135, 0.0
    %4148 = vadd.xlane.f32.xlu0 %v4147
    %v4149 = vpop.xlane.xlu0 %4148
    %v4150 = vsel %vm257, %v4136, 0.0
    %4151 = vadd.xlane.f32.xlu0 %v4150
    %v4152 = vpop.xlane.xlu0 %4151
    %v4153 = vsel %vm257, %v4137, 0.0
    %4154 = vadd.xlane.f32.xlu0 %v4153
    %v4155 = vpop.xlane.xlu0 %4154
    %v4156 = vsel %vm257, %v4138, 0.0
    %4157 = vadd.xlane.f32.xlu0 %v4156
    %v4158 = vpop.xlane.xlu0 %4157
    %v4159 = vsel %vm257, %v4139, 0.0
    %4160 = vadd.xlane.f32.xlu0 %v4159
    %v4161 = vpop.xlane.xlu0 %4160
    %v4162 = vsel %vm257, %v4140, 0.0
    %4163 = vadd.xlane.f32.xlu0 %v4162
    %v4164 = vpop.xlane.xlu0 %4163
    %v4165 = vmul.f32 %v4143, %v4116
    %v4166 = vmul.f32 %v4146, %v4116
    %v4167 = vmul.f32 %v4149, %v4116
    %v4168 = vmul.f32 %v4152, %v4116
    %v4169 = vmul.f32 %v4155, %v4116
    %v4170 = vmul.f32 %v4158, %v4116
    %v4171 = vmul.f32 %v4161, %v4116
    %v4172 = vmul.f32 %v4164, %v4116
    %v4173 = vadd.f32 %v4165, 1e-05
    %v4174 = vadd.f32 %v4166, 1e-05
    %v4175 = vadd.f32 %v4167, 1e-05
    %v4176 = vadd.f32 %v4168, 1e-05
    %v4177 = vadd.f32 %v4169, 1e-05
    %v4178 = vadd.f32 %v4170, 1e-05
    %v4179 = vadd.f32 %v4171, 1e-05
    %v4180 = vadd.f32 %v4172, 1e-05
    %v4181 = vrsqrt.pop %v4173
    %v4182 = vrsqrt.pop %v4174
    %v4183 = vrsqrt.pop %v4175
    %v4184 = vrsqrt.pop %v4176
    %v4185 = vrsqrt.pop %v4177
    %v4186 = vrsqrt.pop %v4178
    %v4187 = vrsqrt.pop %v4179
    %v4188 = vrsqrt.pop %v4180
    %v4189 = vmul.f32 %v4125, %v4181
    %v4190 = vmul.f32 %v4126, %v4182
    %v4191 = vmul.f32 %v4127, %v4183
    %v4192 = vmul.f32 %v4128, %v4184
    %v4193 = vmul.f32 %v4129, %v4185
    %v4194 = vmul.f32 %v4130, %v4186
    %v4195 = vmul.f32 %v4131, %v4187
    %v4196 = vmul.f32 %v4132, %v4188
    %v4198 = vlaneseq
    %v4199 = vshrl.u32 %v4198, 7
    %v4200 = vsub.s32 0, %v4199
    %v4201 = vrot.slane %v4090, %v4200
    %v4203 = vmul.f32 %v4189, %v4201
    %v4204 = vmul.f32 %v4190, %v4201
    %v4205 = vmul.f32 %v4191, %v4201
    %v4206 = vmul.f32 %v4192, %v4201
    %v4207 = vmul.f32 %v4193, %v4201
    %v4208 = vmul.f32 %v4194, %v4201
    %v4209 = vmul.f32 %v4195, %v4201
    %v4210 = vmul.f32 %v4196, %v4201
    %v4212 = vlaneseq
    %v4213 = vshrl.u32 %v4212, 7
    %v4214 = vsub.s32 0, %v4213
    %v4215 = vrot.slane %v4091, %v4214
    %v4217 = vadd.f32 %v4203, %v4215
    %v4218 = vadd.f32 %v4204, %v4215
    %v4219 = vadd.f32 %v4205, %v4215
    %v4220 = vadd.f32 %v4206, %v4215
    %v4221 = vadd.f32 %v4207, %v4215
    %v4222 = vadd.f32 %v4208, %v4215
    %v4223 = vadd.f32 %v4209, %v4215
    %v4224 = vadd.f32 %v4210, %v4215
    %v4225 = vpack.c.bf16 %v4218, %v4217
    %v4226 = vpack.c.bf16 %v4220, %v4219
    %v4227 = vpack.c.bf16 %v4222, %v4221
    %v4228 = vpack.c.bf16 %v4224, %v4223
    %s4229 = scalar_lea.vmem [#allocation8], 16
    %v4230 = vld [vmem:[%s4229] sm:$0xf]
    %v4231 = vld [vmem:[%s4229 + $0x4] sm:$0xf]
    %v4232 = vld [vmem:[%s4229 + $0x8] sm:$0xf]
    %v4233 = vld [vmem:[%s4229 + $0xc] sm:$0xf]
    %s4234 = scalar_lea.vmem %s5, 1
    %v4235 = vld [vmem:[%s4234] sm:$0x1]
    %v4237 = vlaneseq
    %v4238 = vshrl.u32 %v4237, 7
    %v4239 = vsub.s32 0, %v4238
    %v4240 = vrot.slane %v4235, %v4239
    %v4246 = vunpack.c.l.b16 %v4230
    %v4247 = vunpack.c.l.b16 %v4231
    %v4248 = vunpack.c.l.b16 %v4232
    %v4249 = vunpack.c.l.b16 %v4233
    %v4250 = vpack.c.b16 %v4247, %v4246
    %v4251 = vpack.c.b16 %v4249, %v4248
    %v4255 = vsel %vm257, %v4225, 0
    %v4258 = vsel %vm257, %v4226, 0
    %v4261 = vsel %vm257, %v4227, 0
    %v4264 = vsel %vm257, %v4228, 0
    %4266 = vmatprep.subr.bf16.mxu0 0
    %4267 = vmatpush1.bf16.msra.mxu0 %v4250
    %4268 = vmatprep.subr.bf16.mxu0 0
    %4269 = vmatpush1.bf16.msra.mxu0 %v4251
    %4270 = vmatprep.subr.bf16.mxu0 0
    %4271 = vmatpush1.bf16.msra.mxu0 0
    %4272 = vmatprep.subr.bf16.mxu0 0
    %4273 = vmatpush1.bf16.msra.mxu0 0
    %4274 = vmatprep.subr.bf16.mxu0 0
    %4275 = vmatpush1.bf16.msra.mxu0 0
    %4276 = vmatprep.subr.bf16.mxu0 0
    %4277 = vmatpush1.bf16.msra.mxu0 0
    %4278 = vmatprep.subr.bf16.mxu0 0
    %4279 = vmatpush1.bf16.msra.mxu0 0
    %4280 = vmatprep.subr.bf16.mxu0 0
    %4281 = vmatpush1.bf16.msra.mxu0 0
    %4282 = vmatprep.subr.bf16.mxu0 0
    %4283 = vmatpush1.bf16.msra.mxu0 0
    %4284 = vmatprep.subr.bf16.mxu0 0
    %4285 = vmatpush1.bf16.msra.mxu0 0
    %4286 = vmatprep.subr.bf16.mxu0 0
    %4287 = vmatpush1.bf16.msra.mxu0 0
    %4288 = vmatprep.subr.bf16.mxu0 0
    %4289 = vmatpush1.bf16.msra.mxu0 0
    %4290 = vmatprep.subr.bf16.mxu0 0
    %4291 = vmatpush1.bf16.msra.mxu0 0
    %4292 = vmatprep.subr.bf16.mxu0 0
    %4293 = vmatpush1.bf16.msra.mxu0 0
    %4294 = vmatprep.subr.bf16.mxu0 0
    %4295 = vmatpush1.bf16.msra.mxu0 0
    %4296 = vmatprep.subr.bf16.mxu0 0
    %4297 = vmatpush1.bf16.msra.mxu0 0
    %4298 = vmatprep.mubr.bf16.mxu0 0
    %4299 = vmatmul.mubr.bf16.gmra.mrb[0].mxu0 %v4255
    %v4300 = vpop.f32.mrb[0].mxu0
    %v4301 = vadd.f32 %v4240, %v4300
    %v4302 = vpop.f32.mrb[0].mxu0
    %v4303 = vpop.f32.mrb[0].mxu0
    %v4304 = vadd.f32 %v4240, %v4303
    %v4305 = vpop.f32.mrb[0].mxu0
    %4306 = vmatprep.mubr.bf16.mxu0 0
    %4307 = vmatmul.mubr.bf16.gmra.mrb[0].mxu0 %v4258
    %v4308 = vpop.f32.mrb[0].mxu0
    %v4309 = vadd.f32 %v4240, %v4308
    %v4310 = vpop.f32.mrb[0].mxu0
    %v4311 = vpop.f32.mrb[0].mxu0
    %v4312 = vadd.f32 %v4240, %v4311
    %v4313 = vpop.f32.mrb[0].mxu0
    %4314 = vmatprep.mubr.bf16.mxu0 0
    %4315 = vmatmul.mubr.bf16.gmra.mrb[0].mxu0 %v4261
    %v4316 = vpop.f32.mrb[0].mxu0
    %v4317 = vadd.f32 %v4240, %v4316
    %v4318 = vpop.f32.mrb[0].mxu0
    %v4319 = vpop.f32.mrb[0].mxu0
    %v4320 = vadd.f32 %v4240, %v4319
    %v4321 = vpop.f32.mrb[0].mxu0
    %4322 = vmatprep.mubr.bf16.mxu0 0
    %4323 = vmatmul.mubr.bf16.gmra.mrb[0].mxu0 %v4264
    %v4324 = vpop.f32.mrb[0].mxu0
    %v4325 = vadd.f32 %v4240, %v4324
    %v4326 = vpop.f32.mrb[0].mxu0
    %v4327 = vpop.f32.mrb[0].mxu0
    %v4328 = vadd.f32 %v4240, %v4327
    %v4329 = vpop.f32.mrb[0].mxu0
    %4330 = vdwg.mxu0
    %v4331 = vpack.c.bf16 %v4301, %v4301
    %v4332 = vpack.c.bf16 %v4304, %v4304
    %v4333 = vpack.c.bf16 %v4309, %v4309
    %v4334 = vpack.c.bf16 %v4312, %v4312
    %v4335 = vpack.c.bf16 %v4317, %v4317
    %v4336 = vpack.c.bf16 %v4320, %v4320
    %v4337 = vpack.c.bf16 %v4325, %v4325
    %v4338 = vpack.c.bf16 %v4328, %v4328
    %4340 = vrot.lane.b32.xlu0 %v4331, 96
    %v4341 = vpop.permute.xlu0 %4340
    %v4343 = vsel %vm346, %v4331, 0
    %v4346 = vsel %vm346, %v4341, 0
    %4348 = vmatprep.subr.bf16.mxu0 0
    %4349 = vmatpush1.bf16.xpose.msra.mxu0 %v4346
    %4350 = vmatprep.subr.bf16.mxu0 0
    %4351 = vmatpush1.bf16.xpose.msra.mxu0 0
    %4352 = vmatprep.subr.bf16.mxu0 0
    %4353 = vmatpush1.bf16.xpose.msra.mxu0 0
    %4354 = vmatprep.subr.bf16.mxu0 0
    %4355 = vmatpush1.bf16.xpose.msra.mxu0 0
    %4356 = vmatprep.subr.bf16.mxu0 0
    %4357 = vmatpush1.bf16.xpose.msra.mxu0 0
    %4358 = vmatprep.subr.bf16.mxu0 0
    %4359 = vmatpush1.bf16.xpose.msra.mxu0 0
    %4360 = vmatprep.subr.bf16.mxu0 0
    %4361 = vmatpush1.bf16.xpose.msra.mxu0 0
    %4362 = vmatprep.subr.bf16.mxu0 0
    %4363 = vmatpush1.bf16.xpose.msra.mxu0 0
    %4364 = vmatprep.subr.bf16.mxu0 0
    %4365 = vmatpush1.bf16.xpose.msra.mxu0 0
    %4366 = vmatprep.subr.bf16.mxu0 0
    %4367 = vmatpush1.bf16.xpose.msra.mxu0 0
    %4368 = vmatprep.subr.bf16.mxu0 0
    %4369 = vmatpush1.bf16.xpose.msra.mxu0 0
    %4370 = vmatprep.subr.bf16.mxu0 0
    %4371 = vmatpush1.bf16.xpose.msra.mxu0 0
    %4372 = vmatprep.subr.bf16.mxu0 0
    %4373 = vmatpush1.bf16.xpose.msra.mxu0 0
    %4374 = vmatprep.subr.bf16.mxu0 0
    %4375 = vmatpush1.bf16.xpose.msra.mxu0 0
    %4376 = vmatprep.subr.bf16.mxu0 0
    %4377 = vmatpush1.bf16.xpose.msra.mxu0 0
    %4378 = vmatprep.subr.bf16.mxu0 0
    %4379 = vmatpush1.bf16.xpose.msra.mxu0 0
    %4380 = vmatprep.mubr.bf16.mxu0 0
    %4381 = vmatmul.mubr.bf16.gmra.mrb[0].mxu0 %v4343
    %v4382 = vpop.f32.mrb[0].mxu0
    %v4383 = vadd.f32 0.0, %v4382
    %v4384 = vpop.f32.mrb[0].mxu0
    %v4385 = vpop.f32.mrb[0].mxu0
    %v4386 = vpop.f32.mrb[0].mxu0
    %4387 = vdwg.mxu0
    %4389 = vrot.lane.b32.xlu0 %v4332, 96
    %v4390 = vpop.permute.xlu0 %4389
    %v4392 = vsel %vm346, %v4332, 0
    %v4395 = vsel %vm346, %v4390, 0
    %4397 = vmatprep.subr.bf16.mxu0 0
    %4398 = vmatpush1.bf16.xpose.msra.mxu0 %v4395
    %4399 = vmatprep.subr.bf16.mxu0 0
    %4400 = vmatpush1.bf16.xpose.msra.mxu0 0
    %4401 = vmatprep.subr.bf16.mxu0 0
    %4402 = vmatpush1.bf16.xpose.msra.mxu0 0
    %4403 = vmatprep.subr.bf16.mxu0 0
    %4404 = vmatpush1.bf16.xpose.msra.mxu0 0
    %4405 = vmatprep.subr.bf16.mxu0 0
    %4406 = vmatpush1.bf16.xpose.msra.mxu0 0
    %4407 = vmatprep.subr.bf16.mxu0 0
    %4408 = vmatpush1.bf16.xpose.msra.mxu0 0
    %4409 = vmatprep.subr.bf16.mxu0 0
    %4410 = vmatpush1.bf16.xpose.msra.mxu0 0
    %4411 = vmatprep.subr.bf16.mxu0 0
    %4412 = vmatpush1.bf16.xpose.msra.mxu0 0
    %4413 = vmatprep.subr.bf16.mxu0 0
    %4414 = vmatpush1.bf16.xpose.msra.mxu0 0
    %4415 = vmatprep.subr.bf16.mxu0 0
    %4416 = vmatpush1.bf16.xpose.msra.mxu0 0
    %4417 = vmatprep.subr.bf16.mxu0 0
    %4418 = vmatpush1.bf16.xpose.msra.mxu0 0
    %4419 = vmatprep.subr.bf16.mxu0 0
    %4420 = vmatpush1.bf16.xpose.msra.mxu0 0
    %4421 = vmatprep.subr.bf16.mxu0 0
    %4422 = vmatpush1.bf16.xpose.msra.mxu0 0
    %4423 = vmatprep.subr.bf16.mxu0 0
    %4424 = vmatpush1.bf16.xpose.msra.mxu0 0
    %4425 = vmatprep.subr.bf16.mxu0 0
    %4426 = vmatpush1.bf16.xpose.msra.mxu0 0
    %4427 = vmatprep.subr.bf16.mxu0 0
    %4428 = vmatpush1.bf16.xpose.msra.mxu0 0
    %4429 = vmatprep.mubr.bf16.mxu0 0
    %4430 = vmatmul.mubr.bf16.gmra.mrb[0].mxu0 %v4392
    %v4431 = vpop.f32.mrb[0].mxu0
    %v4432 = vadd.f32 0.0, %v4431
    %v4433 = vpop.f32.mrb[0].mxu0
    %v4434 = vpop.f32.mrb[0].mxu0
    %v4435 = vpop.f32.mrb[0].mxu0
    %4436 = vdwg.mxu0
    %4438 = vrot.lane.b32.xlu0 %v4333, 96
    %v4439 = vpop.permute.xlu0 %4438
    %v4441 = vsel %vm346, %v4333, 0
    %v4444 = vsel %vm346, %v4439, 0
    %4446 = vmatprep.subr.bf16.mxu0 0
    %4447 = vmatpush1.bf16.xpose.msra.mxu0 %v4444
    %4448 = vmatprep.subr.bf16.mxu0 0
    %4449 = vmatpush1.bf16.xpose.msra.mxu0 0
    %4450 = vmatprep.subr.bf16.mxu0 0
    %4451 = vmatpush1.bf16.xpose.msra.mxu0 0
    %4452 = vmatprep.subr.bf16.mxu0 0
    %4453 = vmatpush1.bf16.xpose.msra.mxu0 0
    %4454 = vmatprep.subr.bf16.mxu0 0
    %4455 = vmatpush1.bf16.xpose.msra.mxu0 0
    %4456 = vmatprep.subr.bf16.mxu0 0
    %4457 = vmatpush1.bf16.xpose.msra.mxu0 0
    %4458 = vmatprep.subr.bf16.mxu0 0
    %4459 = vmatpush1.bf16.xpose.msra.mxu0 0
    %4460 = vmatprep.subr.bf16.mxu0 0
    %4461 = vmatpush1.bf16.xpose.msra.mxu0 0
    %4462 = vmatprep.subr.bf16.mxu0 0
    %4463 = vmatpush1.bf16.xpose.msra.mxu0 0
    %4464 = vmatprep.subr.bf16.mxu0 0
    %4465 = vmatpush1.bf16.xpose.msra.mxu0 0
    %4466 = vmatprep.subr.bf16.mxu0 0
    %4467 = vmatpush1.bf16.xpose.msra.mxu0 0
    %4468 = vmatprep.subr.bf16.mxu0 0
    %4469 = vmatpush1.bf16.xpose.msra.mxu0 0
    %4470 = vmatprep.subr.bf16.mxu0 0
    %4471 = vmatpush1.bf16.xpose.msra.mxu0 0
    %4472 = vmatprep.subr.bf16.mxu0 0
    %4473 = vmatpush1.bf16.xpose.msra.mxu0 0
    %4474 = vmatprep.subr.bf16.mxu0 0
    %4475 = vmatpush1.bf16.xpose.msra.mxu0 0
    %4476 = vmatprep.subr.bf16.mxu0 0
    %4477 = vmatpush1.bf16.xpose.msra.mxu0 0
    %4478 = vmatprep.mubr.bf16.mxu0 0
    %4479 = vmatmul.mubr.bf16.gmra.mrb[0].mxu0 %v4441
    %v4480 = vpop.f32.mrb[0].mxu0
    %v4481 = vadd.f32 0.0, %v4480
    %v4482 = vpop.f32.mrb[0].mxu0
    %v4483 = vpop.f32.mrb[0].mxu0
    %v4484 = vpop.f32.mrb[0].mxu0
    %4485 = vdwg.mxu0
    %4487 = vrot.lane.b32.xlu0 %v4334, 96
    %v4488 = vpop.permute.xlu0 %4487
    %v4490 = vsel %vm346, %v4334, 0
    %v4493 = vsel %vm346, %v4488, 0
    %4495 = vmatprep.subr.bf16.mxu0 0
    %4496 = vmatpush1.bf16.xpose.msra.mxu0 %v4493
    %4497 = vmatprep.subr.bf16.mxu0 0
    %4498 = vmatpush1.bf16.xpose.msra.mxu0 0
    %4499 = vmatprep.subr.bf16.mxu0 0
    %4500 = vmatpush1.bf16.xpose.msra.mxu0 0
    %4501 = vmatprep.subr.bf16.mxu0 0
    %4502 = vmatpush1.bf16.xpose.msra.mxu0 0
    %4503 = vmatprep.subr.bf16.mxu0 0
    %4504 = vmatpush1.bf16.xpose.msra.mxu0 0
    %4505 = vmatprep.subr.bf16.mxu0 0
    %4506 = vmatpush1.bf16.xpose.msra.mxu0 0
    %4507 = vmatprep.subr.bf16.mxu0 0
    %4508 = vmatpush1.bf16.xpose.msra.mxu0 0
    %4509 = vmatprep.subr.bf16.mxu0 0
    %4510 = vmatpush1.bf16.xpose.msra.mxu0 0
    %4511 = vmatprep.subr.bf16.mxu0 0
    %4512 = vmatpush1.bf16.xpose.msra.mxu0 0
    %4513 = vmatprep.subr.bf16.mxu0 0
    %4514 = vmatpush1.bf16.xpose.msra.mxu0 0
    %4515 = vmatprep.subr.bf16.mxu0 0
    %4516 = vmatpush1.bf16.xpose.msra.mxu0 0
    %4517 = vmatprep.subr.bf16.mxu0 0
    %4518 = vmatpush1.bf16.xpose.msra.mxu0 0
    %4519 = vmatprep.subr.bf16.mxu0 0
    %4520 = vmatpush1.bf16.xpose.msra.mxu0 0
    %4521 = vmatprep.subr.bf16.mxu0 0
    %4522 = vmatpush1.bf16.xpose.msra.mxu0 0
    %4523 = vmatprep.subr.bf16.mxu0 0
    %4524 = vmatpush1.bf16.xpose.msra.mxu0 0
    %4525 = vmatprep.subr.bf16.mxu0 0
    %4526 = vmatpush1.bf16.xpose.msra.mxu0 0
    %4527 = vmatprep.mubr.bf16.mxu0 0
    %4528 = vmatmul.mubr.bf16.gmra.mrb[0].mxu0 %v4490
    %v4529 = vpop.f32.mrb[0].mxu0
    %v4530 = vadd.f32 0.0, %v4529
    %v4531 = vpop.f32.mrb[0].mxu0
    %v4532 = vpop.f32.mrb[0].mxu0
    %v4533 = vpop.f32.mrb[0].mxu0
    %4534 = vdwg.mxu0
    %4536 = vrot.lane.b32.xlu0 %v4335, 96
    %v4537 = vpop.permute.xlu0 %4536
    %v4539 = vsel %vm346, %v4335, 0
    %v4542 = vsel %vm346, %v4537, 0
    %4544 = vmatprep.subr.bf16.mxu0 0
    %4545 = vmatpush1.bf16.xpose.msra.mxu0 %v4542
    %4546 = vmatprep.subr.bf16.mxu0 0
    %4547 = vmatpush1.bf16.xpose.msra.mxu0 0
    %4548 = vmatprep.subr.bf16.mxu0 0
    %4549 = vmatpush1.bf16.xpose.msra.mxu0 0
    %4550 = vmatprep.subr.bf16.mxu0 0
    %4551 = vmatpush1.bf16.xpose.msra.mxu0 0
    %4552 = vmatprep.subr.bf16.mxu0 0
    %4553 = vmatpush1.bf16.xpose.msra.mxu0 0
    %4554 = vmatprep.subr.bf16.mxu0 0
    %4555 = vmatpush1.bf16.xpose.msra.mxu0 0
    %4556 = vmatprep.subr.bf16.mxu0 0
    %4557 = vmatpush1.bf16.xpose.msra.mxu0 0
    %4558 = vmatprep.subr.bf16.mxu0 0
    %4559 = vmatpush1.bf16.xpose.msra.mxu0 0
    %4560 = vmatprep.subr.bf16.mxu0 0
    %4561 = vmatpush1.bf16.xpose.msra.mxu0 0
    %4562 = vmatprep.subr.bf16.mxu0 0
    %4563 = vmatpush1.bf16.xpose.msra.mxu0 0
    %4564 = vmatprep.subr.bf16.mxu0 0
    %4565 = vmatpush1.bf16.xpose.msra.mxu0 0
    %4566 = vmatprep.subr.bf16.mxu0 0
    %4567 = vmatpush1.bf16.xpose.msra.mxu0 0
    %4568 = vmatprep.subr.bf16.mxu0 0
    %4569 = vmatpush1.bf16.xpose.msra.mxu0 0
    %4570 = vmatprep.subr.bf16.mxu0 0
    %4571 = vmatpush1.bf16.xpose.msra.mxu0 0
    %4572 = vmatprep.subr.bf16.mxu0 0
    %4573 = vmatpush1.bf16.xpose.msra.mxu0 0
    %4574 = vmatprep.subr.bf16.mxu0 0
    %4575 = vmatpush1.bf16.xpose.msra.mxu0 0
    %4576 = vmatprep.mubr.bf16.mxu0 0
    %4577 = vmatmul.mubr.bf16.gmra.mrb[0].mxu0 %v4539
    %v4578 = vpop.f32.mrb[0].mxu0
    %v4579 = vadd.f32 0.0, %v4578
    %v4580 = vpop.f32.mrb[0].mxu0
    %v4581 = vpop.f32.mrb[0].mxu0
    %v4582 = vpop.f32.mrb[0].mxu0
    %4583 = vdwg.mxu0
    %4585 = vrot.lane.b32.xlu0 %v4336, 96
    %v4586 = vpop.permute.xlu0 %4585
    %v4588 = vsel %vm346, %v4336, 0
    %v4591 = vsel %vm346, %v4586, 0
    %4593 = vmatprep.subr.bf16.mxu0 0
    %4594 = vmatpush1.bf16.xpose.msra.mxu0 %v4591
    %4595 = vmatprep.subr.bf16.mxu0 0
    %4596 = vmatpush1.bf16.xpose.msra.mxu0 0
    %4597 = vmatprep.subr.bf16.mxu0 0
    %4598 = vmatpush1.bf16.xpose.msra.mxu0 0
    %4599 = vmatprep.subr.bf16.mxu0 0
    %4600 = vmatpush1.bf16.xpose.msra.mxu0 0
    %4601 = vmatprep.subr.bf16.mxu0 0
    %4602 = vmatpush1.bf16.xpose.msra.mxu0 0
    %4603 = vmatprep.subr.bf16.mxu0 0
    %4604 = vmatpush1.bf16.xpose.msra.mxu0 0
    %4605 = vmatprep.subr.bf16.mxu0 0
    %4606 = vmatpush1.bf16.xpose.msra.mxu0 0
    %4607 = vmatprep.subr.bf16.mxu0 0
    %4608 = vmatpush1.bf16.xpose.msra.mxu0 0
    %4609 = vmatprep.subr.bf16.mxu0 0
    %4610 = vmatpush1.bf16.xpose.msra.mxu0 0
    %4611 = vmatprep.subr.bf16.mxu0 0
    %4612 = vmatpush1.bf16.xpose.msra.mxu0 0
    %4613 = vmatprep.subr.bf16.mxu0 0
    %4614 = vmatpush1.bf16.xpose.msra.mxu0 0
    %4615 = vmatprep.subr.bf16.mxu0 0
    %4616 = vmatpush1.bf16.xpose.msra.mxu0 0
    %4617 = vmatprep.subr.bf16.mxu0 0
    %4618 = vmatpush1.bf16.xpose.msra.mxu0 0
    %4619 = vmatprep.subr.bf16.mxu0 0
    %4620 = vmatpush1.bf16.xpose.msra.mxu0 0
    %4621 = vmatprep.subr.bf16.mxu0 0
    %4622 = vmatpush1.bf16.xpose.msra.mxu0 0
    %4623 = vmatprep.subr.bf16.mxu0 0
    %4624 = vmatpush1.bf16.xpose.msra.mxu0 0
    %4625 = vmatprep.mubr.bf16.mxu0 0
    %4626 = vmatmul.mubr.bf16.gmra.mrb[0].mxu0 %v4588
    %v4627 = vpop.f32.mrb[0].mxu0
    %v4628 = vadd.f32 0.0, %v4627
    %v4629 = vpop.f32.mrb[0].mxu0
    %v4630 = vpop.f32.mrb[0].mxu0
    %v4631 = vpop.f32.mrb[0].mxu0
    %4632 = vdwg.mxu0
    %4634 = vrot.lane.b32.xlu0 %v4337, 96
    %v4635 = vpop.permute.xlu0 %4634
    %v4637 = vsel %vm346, %v4337, 0
    %v4640 = vsel %vm346, %v4635, 0
    %4642 = vmatprep.subr.bf16.mxu0 0
    %4643 = vmatpush1.bf16.xpose.msra.mxu0 %v4640
    %4644 = vmatprep.subr.bf16.mxu0 0
    %4645 = vmatpush1.bf16.xpose.msra.mxu0 0
    %4646 = vmatprep.subr.bf16.mxu0 0
    %4647 = vmatpush1.bf16.xpose.msra.mxu0 0
    %4648 = vmatprep.subr.bf16.mxu0 0
    %4649 = vmatpush1.bf16.xpose.msra.mxu0 0
    %4650 = vmatprep.subr.bf16.mxu0 0
    %4651 = vmatpush1.bf16.xpose.msra.mxu0 0
    %4652 = vmatprep.subr.bf16.mxu0 0
    %4653 = vmatpush1.bf16.xpose.msra.mxu0 0
    %4654 = vmatprep.subr.bf16.mxu0 0
    %4655 = vmatpush1.bf16.xpose.msra.mxu0 0
    %4656 = vmatprep.subr.bf16.mxu0 0
    %4657 = vmatpush1.bf16.xpose.msra.mxu0 0
    %4658 = vmatprep.subr.bf16.mxu0 0
    %4659 = vmatpush1.bf16.xpose.msra.mxu0 0
    %4660 = vmatprep.subr.bf16.mxu0 0
    %4661 = vmatpush1.bf16.xpose.msra.mxu0 0
    %4662 = vmatprep.subr.bf16.mxu0 0
    %4663 = vmatpush1.bf16.xpose.msra.mxu0 0
    %4664 = vmatprep.subr.bf16.mxu0 0
    %4665 = vmatpush1.bf16.xpose.msra.mxu0 0
    %4666 = vmatprep.subr.bf16.mxu0 0
    %4667 = vmatpush1.bf16.xpose.msra.mxu0 0
    %4668 = vmatprep.subr.bf16.mxu0 0
    %4669 = vmatpush1.bf16.xpose.msra.mxu0 0
    %4670 = vmatprep.subr.bf16.mxu0 0
    %4671 = vmatpush1.bf16.xpose.msra.mxu0 0
    %4672 = vmatprep.subr.bf16.mxu0 0
    %4673 = vmatpush1.bf16.xpose.msra.mxu0 0
    %4674 = vmatprep.mubr.bf16.mxu0 0
    %4675 = vmatmul.mubr.bf16.gmra.mrb[0].mxu0 %v4637
    %v4676 = vpop.f32.mrb[0].mxu0
    %v4677 = vadd.f32 0.0, %v4676
    %v4678 = vpop.f32.mrb[0].mxu0
    %v4679 = vpop.f32.mrb[0].mxu0
    %v4680 = vpop.f32.mrb[0].mxu0
    %4681 = vdwg.mxu0
    %4683 = vrot.lane.b32.xlu0 %v4338, 96
    %v4684 = vpop.permute.xlu0 %4683
    %v4686 = vsel %vm346, %v4338, 0
    %v4689 = vsel %vm346, %v4684, 0
    %4691 = vmatprep.subr.bf16.mxu0 0
    %4692 = vmatpush1.bf16.xpose.msra.mxu0 %v4689
    %4693 = vmatprep.subr.bf16.mxu0 0
    %4694 = vmatpush1.bf16.xpose.msra.mxu0 0
    %4695 = vmatprep.subr.bf16.mxu0 0
    %4696 = vmatpush1.bf16.xpose.msra.mxu0 0
    %4697 = vmatprep.subr.bf16.mxu0 0
    %4698 = vmatpush1.bf16.xpose.msra.mxu0 0
    %4699 = vmatprep.subr.bf16.mxu0 0
    %4700 = vmatpush1.bf16.xpose.msra.mxu0 0
    %4701 = vmatprep.subr.bf16.mxu0 0
    %4702 = vmatpush1.bf16.xpose.msra.mxu0 0
    %4703 = vmatprep.subr.bf16.mxu0 0
    %4704 = vmatpush1.bf16.xpose.msra.mxu0 0
    %4705 = vmatprep.subr.bf16.mxu0 0
    %4706 = vmatpush1.bf16.xpose.msra.mxu0 0
    %4707 = vmatprep.subr.bf16.mxu0 0
    %4708 = vmatpush1.bf16.xpose.msra.mxu0 0
    %4709 = vmatprep.subr.bf16.mxu0 0
    %4710 = vmatpush1.bf16.xpose.msra.mxu0 0
    %4711 = vmatprep.subr.bf16.mxu0 0
    %4712 = vmatpush1.bf16.xpose.msra.mxu0 0
    %4713 = vmatprep.subr.bf16.mxu0 0
    %4714 = vmatpush1.bf16.xpose.msra.mxu0 0
    %4715 = vmatprep.subr.bf16.mxu0 0
    %4716 = vmatpush1.bf16.xpose.msra.mxu0 0
    %4717 = vmatprep.subr.bf16.mxu0 0
    %4718 = vmatpush1.bf16.xpose.msra.mxu0 0
    %4719 = vmatprep.subr.bf16.mxu0 0
    %4720 = vmatpush1.bf16.xpose.msra.mxu0 0
    %4721 = vmatprep.subr.bf16.mxu0 0
    %4722 = vmatpush1.bf16.xpose.msra.mxu0 0
    %4723 = vmatprep.mubr.bf16.mxu0 0
    %4724 = vmatmul.mubr.bf16.gmra.mrb[0].mxu0 %v4686
    %v4725 = vpop.f32.mrb[0].mxu0
    %v4726 = vadd.f32 0.0, %v4725
    %v4727 = vpop.f32.mrb[0].mxu0
    %v4728 = vpop.f32.mrb[0].mxu0
    %v4729 = vpop.f32.mrb[0].mxu0
    %4730 = vdwg.mxu0
    %v4731 = vsel %vm346, %v4383, -inf
    %4732 = vmax.xlane.f32.xlu0 %v4731
    %v4733 = vpop.xlane.xlu0 %4732
    %v4734 = vsel %vm346, %v4432, -inf
    %4735 = vmax.xlane.f32.xlu0 %v4734
    %v4736 = vpop.xlane.xlu0 %4735
    %v4737 = vsel %vm346, %v4481, -inf
    %4738 = vmax.xlane.f32.xlu0 %v4737
    %v4739 = vpop.xlane.xlu0 %4738
    %v4740 = vsel %vm346, %v4530, -inf
    %4741 = vmax.xlane.f32.xlu0 %v4740
    %v4742 = vpop.xlane.xlu0 %4741
    %v4743 = vsel %vm346, %v4579, -inf
    %4744 = vmax.xlane.f32.xlu0 %v4743
    %v4745 = vpop.xlane.xlu0 %4744
    %v4746 = vsel %vm346, %v4628, -inf
    %4747 = vmax.xlane.f32.xlu0 %v4746
    %v4748 = vpop.xlane.xlu0 %4747
    %v4749 = vsel %vm346, %v4677, -inf
    %4750 = vmax.xlane.f32.xlu0 %v4749
    %v4751 = vpop.xlane.xlu0 %4750
    %v4752 = vsel %vm346, %v4726, -inf
    %4753 = vmax.xlane.f32.xlu0 %v4752
    %v4754 = vpop.xlane.xlu0 %4753
    %v4755 = vsub.f32 %v4383, %v4733
    %v4756 = vsub.f32 %v4432, %v4736
    %v4757 = vsub.f32 %v4481, %v4739
    %v4758 = vsub.f32 %v4530, %v4742
    %v4759 = vsub.f32 %v4579, %v4745
    %v4760 = vsub.f32 %v4628, %v4748
    %v4761 = vsub.f32 %v4677, %v4751
    %v4762 = vsub.f32 %v4726, %v4754
    %v4763 = vmul.f32 %v4755, 1.442695
    %v4764 = vpow.pop %v4763
    %v4765 = vmul.f32 %v4756, 1.442695
    %v4766 = vpow.pop %v4765
    %v4767 = vmul.f32 %v4757, 1.442695
    %v4768 = vpow.pop %v4767
    %v4769 = vmul.f32 %v4758, 1.442695
    %v4770 = vpow.pop %v4769
    %v4771 = vmul.f32 %v4759, 1.442695
    %v4772 = vpow.pop %v4771
    %v4773 = vmul.f32 %v4760, 1.442695
    %v4774 = vpow.pop %v4773
    %v4775 = vmul.f32 %v4761, 1.442695
    %v4776 = vpow.pop %v4775
    %v4777 = vmul.f32 %v4762, 1.442695
    %v4778 = vpow.pop %v4777
    %v4779 = vsel %vm346, %v4764, 0.0
    %4780 = vadd.xlane.f32.xlu0 %v4779
    %v4781 = vpop.xlane.xlu0 %4780
    %v4782 = vsel %vm346, %v4766, 0.0
    %4783 = vadd.xlane.f32.xlu0 %v4782
    %v4784 = vpop.xlane.xlu0 %4783
    %v4785 = vsel %vm346, %v4768, 0.0
    %4786 = vadd.xlane.f32.xlu0 %v4785
    %v4787 = vpop.xlane.xlu0 %4786
    %v4788 = vsel %vm346, %v4770, 0.0
    %4789 = vadd.xlane.f32.xlu0 %v4788
    %v4790 = vpop.xlane.xlu0 %4789
    %v4791 = vsel %vm346, %v4772, 0.0
    %4792 = vadd.xlane.f32.xlu0 %v4791
    %v4793 = vpop.xlane.xlu0 %4792
    %v4794 = vsel %vm346, %v4774, 0.0
    %4795 = vadd.xlane.f32.xlu0 %v4794
    %v4796 = vpop.xlane.xlu0 %4795
    %v4797 = vsel %vm346, %v4776, 0.0
    %4798 = vadd.xlane.f32.xlu0 %v4797
    %v4799 = vpop.xlane.xlu0 %4798
    %v4800 = vsel %vm346, %v4778, 0.0
    %4801 = vadd.xlane.f32.xlu0 %v4800
    %v4802 = vpop.xlane.xlu0 %4801
    %v4803 = vpack.c.bf16 %v4764, %v4764
    %v4804 = vpack.c.bf16 %v4766, %v4766
    %v4805 = vpack.c.bf16 %v4768, %v4768
    %v4806 = vpack.c.bf16 %v4770, %v4770
    %v4807 = vpack.c.bf16 %v4772, %v4772
    %v4808 = vpack.c.bf16 %v4774, %v4774
    %v4809 = vpack.c.bf16 %v4776, %v4776
    %v4810 = vpack.c.bf16 %v4778, %v4778
    %4811 = vrot.lane.b32.xlu0 %v4331, 64
    %v4812 = vpop.permute.xlu0 %4811
    %v4814 = vsel %vm346, %v4803, 0
    %v4817 = vsel %vm821, %v4812, 0
    %4819 = vmatprep.subr.bf16.mxu0 0
    %4820 = vmatpush1.bf16.msra.mxu0 %v4817
    %4821 = vmatprep.subr.bf16.mxu0 0
    %4822 = vmatpush1.bf16.msra.mxu0 0
    %4823 = vmatprep.subr.bf16.mxu0 0
    %4824 = vmatpush1.bf16.msra.mxu0 0
    %4825 = vmatprep.subr.bf16.mxu0 0
    %4826 = vmatpush1.bf16.msra.mxu0 0
    %4827 = vmatprep.subr.bf16.mxu0 0
    %4828 = vmatpush1.bf16.msra.mxu0 0
    %4829 = vmatprep.subr.bf16.mxu0 0
    %4830 = vmatpush1.bf16.msra.mxu0 0
    %4831 = vmatprep.subr.bf16.mxu0 0
    %4832 = vmatpush1.bf16.msra.mxu0 0
    %4833 = vmatprep.subr.bf16.mxu0 0
    %4834 = vmatpush1.bf16.msra.mxu0 0
    %4835 = vmatprep.subr.bf16.mxu0 0
    %4836 = vmatpush1.bf16.msra.mxu0 0
    %4837 = vmatprep.subr.bf16.mxu0 0
    %4838 = vmatpush1.bf16.msra.mxu0 0
    %4839 = vmatprep.subr.bf16.mxu0 0
    %4840 = vmatpush1.bf16.msra.mxu0 0
    %4841 = vmatprep.subr.bf16.mxu0 0
    %4842 = vmatpush1.bf16.msra.mxu0 0
    %4843 = vmatprep.subr.bf16.mxu0 0
    %4844 = vmatpush1.bf16.msra.mxu0 0
    %4845 = vmatprep.subr.bf16.mxu0 0
    %4846 = vmatpush1.bf16.msra.mxu0 0
    %4847 = vmatprep.subr.bf16.mxu0 0
    %4848 = vmatpush1.bf16.msra.mxu0 0
    %4849 = vmatprep.subr.bf16.mxu0 0
    %4850 = vmatpush1.bf16.msra.mxu0 0
    %4851 = vmatprep.mubr.bf16.mxu0 0
    %4852 = vmatmul.mubr.bf16.gmra.mrb[0].mxu0 %v4814
    %v4853 = vpop.f32.mrb[0].mxu0
    %v4854 = vadd.f32 0.0, %v4853
    %v4855 = vpop.f32.mrb[0].mxu0
    %v4856 = vpop.f32.mrb[0].mxu0
    %v4857 = vpop.f32.mrb[0].mxu0
    %4858 = vdwg.mxu0
    %4859 = vrot.lane.b32.xlu0 %v4332, 64
    %v4860 = vpop.permute.xlu0 %4859
    %v4862 = vsel %vm346, %v4804, 0
    %v4865 = vsel %vm821, %v4860, 0
    %4867 = vmatprep.subr.bf16.mxu0 0
    %4868 = vmatpush1.bf16.msra.mxu0 %v4865
    %4869 = vmatprep.subr.bf16.mxu0 0
    %4870 = vmatpush1.bf16.msra.mxu0 0
    %4871 = vmatprep.subr.bf16.mxu0 0
    %4872 = vmatpush1.bf16.msra.mxu0 0
    %4873 = vmatprep.subr.bf16.mxu0 0
    %4874 = vmatpush1.bf16.msra.mxu0 0
    %4875 = vmatprep.subr.bf16.mxu0 0
    %4876 = vmatpush1.bf16.msra.mxu0 0
    %4877 = vmatprep.subr.bf16.mxu0 0
    %4878 = vmatpush1.bf16.msra.mxu0 0
    %4879 = vmatprep.subr.bf16.mxu0 0
    %4880 = vmatpush1.bf16.msra.mxu0 0
    %4881 = vmatprep.subr.bf16.mxu0 0
    %4882 = vmatpush1.bf16.msra.mxu0 0
    %4883 = vmatprep.subr.bf16.mxu0 0
    %4884 = vmatpush1.bf16.msra.mxu0 0
    %4885 = vmatprep.subr.bf16.mxu0 0
    %4886 = vmatpush1.bf16.msra.mxu0 0
    %4887 = vmatprep.subr.bf16.mxu0 0
    %4888 = vmatpush1.bf16.msra.mxu0 0
    %4889 = vmatprep.subr.bf16.mxu0 0
    %4890 = vmatpush1.bf16.msra.mxu0 0
    %4891 = vmatprep.subr.bf16.mxu0 0
    %4892 = vmatpush1.bf16.msra.mxu0 0
    %4893 = vmatprep.subr.bf16.mxu0 0
    %4894 = vmatpush1.bf16.msra.mxu0 0
    %4895 = vmatprep.subr.bf16.mxu0 0
    %4896 = vmatpush1.bf16.msra.mxu0 0
    %4897 = vmatprep.subr.bf16.mxu0 0
    %4898 = vmatpush1.bf16.msra.mxu0 0
    %4899 = vmatprep.mubr.bf16.mxu0 0
    %4900 = vmatmul.mubr.bf16.gmra.mrb[0].mxu0 %v4862
    %v4901 = vpop.f32.mrb[0].mxu0
    %v4902 = vadd.f32 0.0, %v4901
    %v4903 = vpop.f32.mrb[0].mxu0
    %v4904 = vpop.f32.mrb[0].mxu0
    %v4905 = vpop.f32.mrb[0].mxu0
    %4906 = vdwg.mxu0
    %4907 = vrot.lane.b32.xlu0 %v4333, 64
    %v4908 = vpop.permute.xlu0 %4907
    %v4910 = vsel %vm346, %v4805, 0
    %v4913 = vsel %vm821, %v4908, 0
    %4915 = vmatprep.subr.bf16.mxu0 0
    %4916 = vmatpush1.bf16.msra.mxu0 %v4913
    %4917 = vmatprep.subr.bf16.mxu0 0
    %4918 = vmatpush1.bf16.msra.mxu0 0
    %4919 = vmatprep.subr.bf16.mxu0 0
    %4920 = vmatpush1.bf16.msra.mxu0 0
    %4921 = vmatprep.subr.bf16.mxu0 0
    %4922 = vmatpush1.bf16.msra.mxu0 0
    %4923 = vmatprep.subr.bf16.mxu0 0
    %4924 = vmatpush1.bf16.msra.mxu0 0
    %4925 = vmatprep.subr.bf16.mxu0 0
    %4926 = vmatpush1.bf16.msra.mxu0 0
    %4927 = vmatprep.subr.bf16.mxu0 0
    %4928 = vmatpush1.bf16.msra.mxu0 0
    %4929 = vmatprep.subr.bf16.mxu0 0
    %4930 = vmatpush1.bf16.msra.mxu0 0
    %4931 = vmatprep.subr.bf16.mxu0 0
    %4932 = vmatpush1.bf16.msra.mxu0 0
    %4933 = vmatprep.subr.bf16.mxu0 0
    %4934 = vmatpush1.bf16.msra.mxu0 0
    %4935 = vmatprep.subr.bf16.mxu0 0
    %4936 = vmatpush1.bf16.msra.mxu0 0
    %4937 = vmatprep.subr.bf16.mxu0 0
    %4938 = vmatpush1.bf16.msra.mxu0 0
    %4939 = vmatprep.subr.bf16.mxu0 0
    %4940 = vmatpush1.bf16.msra.mxu0 0
    %4941 = vmatprep.subr.bf16.mxu0 0
    %4942 = vmatpush1.bf16.msra.mxu0 0
    %4943 = vmatprep.subr.bf16.mxu0 0
    %4944 = vmatpush1.bf16.msra.mxu0 0
    %4945 = vmatprep.subr.bf16.mxu0 0
    %4946 = vmatpush1.bf16.msra.mxu0 0
    %4947 = vmatprep.mubr.bf16.mxu0 0
    %4948 = vmatmul.mubr.bf16.gmra.mrb[0].mxu0 %v4910
    %v4949 = vpop.f32.mrb[0].mxu0
    %v4950 = vadd.f32 0.0, %v4949
    %v4951 = vpop.f32.mrb[0].mxu0
    %v4952 = vpop.f32.mrb[0].mxu0
    %v4953 = vpop.f32.mrb[0].mxu0
    %4954 = vdwg.mxu0
    %4955 = vrot.lane.b32.xlu0 %v4334, 64
    %v4956 = vpop.permute.xlu0 %4955
    %v4958 = vsel %vm346, %v4806, 0
    %v4961 = vsel %vm821, %v4956, 0
    %4963 = vmatprep.subr.bf16.mxu0 0
    %4964 = vmatpush1.bf16.msra.mxu0 %v4961
    %4965 = vmatprep.subr.bf16.mxu0 0
    %4966 = vmatpush1.bf16.msra.mxu0 0
    %4967 = vmatprep.subr.bf16.mxu0 0
    %4968 = vmatpush1.bf16.msra.mxu0 0
    %4969 = vmatprep.subr.bf16.mxu0 0
    %4970 = vmatpush1.bf16.msra.mxu0 0
    %4971 = vmatprep.subr.bf16.mxu0 0
    %4972 = vmatpush1.bf16.msra.mxu0 0
    %4973 = vmatprep.subr.bf16.mxu0 0
    %4974 = vmatpush1.bf16.msra.mxu0 0
    %4975 = vmatprep.subr.bf16.mxu0 0
    %4976 = vmatpush1.bf16.msra.mxu0 0
    %4977 = vmatprep.subr.bf16.mxu0 0
    %4978 = vmatpush1.bf16.msra.mxu0 0
    %4979 = vmatprep.subr.bf16.mxu0 0
    %4980 = vmatpush1.bf16.msra.mxu0 0
    %4981 = vmatprep.subr.bf16.mxu0 0
    %4982 = vmatpush1.bf16.msra.mxu0 0
    %4983 = vmatprep.subr.bf16.mxu0 0
    %4984 = vmatpush1.bf16.msra.mxu0 0
    %4985 = vmatprep.subr.bf16.mxu0 0
    %4986 = vmatpush1.bf16.msra.mxu0 0
    %4987 = vmatprep.subr.bf16.mxu0 0
    %4988 = vmatpush1.bf16.msra.mxu0 0
    %4989 = vmatprep.subr.bf16.mxu0 0
    %4990 = vmatpush1.bf16.msra.mxu0 0
    %4991 = vmatprep.subr.bf16.mxu0 0
    %4992 = vmatpush1.bf16.msra.mxu0 0
    %4993 = vmatprep.subr.bf16.mxu0 0
    %4994 = vmatpush1.bf16.msra.mxu0 0
    %4995 = vmatprep.mubr.bf16.mxu0 0
    %4996 = vmatmul.mubr.bf16.gmra.mrb[0].mxu0 %v4958
    %v4997 = vpop.f32.mrb[0].mxu0
    %v4998 = vadd.f32 0.0, %v4997
    %v4999 = vpop.f32.mrb[0].mxu0
    %v5000 = vpop.f32.mrb[0].mxu0
    %v5001 = vpop.f32.mrb[0].mxu0
    %5002 = vdwg.mxu0
    %5003 = vrot.lane.b32.xlu0 %v4335, 64
    %v5004 = vpop.permute.xlu0 %5003
    %v5006 = vsel %vm346, %v4807, 0
    %v5009 = vsel %vm821, %v5004, 0
    %5011 = vmatprep.subr.bf16.mxu0 0
    %5012 = vmatpush1.bf16.msra.mxu0 %v5009
    %5013 = vmatprep.subr.bf16.mxu0 0
    %5014 = vmatpush1.bf16.msra.mxu0 0
    %5015 = vmatprep.subr.bf16.mxu0 0
    %5016 = vmatpush1.bf16.msra.mxu0 0
    %5017 = vmatprep.subr.bf16.mxu0 0
    %5018 = vmatpush1.bf16.msra.mxu0 0
    %5019 = vmatprep.subr.bf16.mxu0 0
    %5020 = vmatpush1.bf16.msra.mxu0 0
    %5021 = vmatprep.subr.bf16.mxu0 0
    %5022 = vmatpush1.bf16.msra.mxu0 0
    %5023 = vmatprep.subr.bf16.mxu0 0
    %5024 = vmatpush1.bf16.msra.mxu0 0
    %5025 = vmatprep.subr.bf16.mxu0 0
    %5026 = vmatpush1.bf16.msra.mxu0 0
    %5027 = vmatprep.subr.bf16.mxu0 0
    %5028 = vmatpush1.bf16.msra.mxu0 0
    %5029 = vmatprep.subr.bf16.mxu0 0
    %5030 = vmatpush1.bf16.msra.mxu0 0
    %5031 = vmatprep.subr.bf16.mxu0 0
    %5032 = vmatpush1.bf16.msra.mxu0 0
    %5033 = vmatprep.subr.bf16.mxu0 0
    %5034 = vmatpush1.bf16.msra.mxu0 0
    %5035 = vmatprep.subr.bf16.mxu0 0
    %5036 = vmatpush1.bf16.msra.mxu0 0
    %5037 = vmatprep.subr.bf16.mxu0 0
    %5038 = vmatpush1.bf16.msra.mxu0 0
    %5039 = vmatprep.subr.bf16.mxu0 0
    %5040 = vmatpush1.bf16.msra.mxu0 0
    %5041 = vmatprep.subr.bf16.mxu0 0
    %5042 = vmatpush1.bf16.msra.mxu0 0
    %5043 = vmatprep.mubr.bf16.mxu0 0
    %5044 = vmatmul.mubr.bf16.gmra.mrb[0].mxu0 %v5006
    %v5045 = vpop.f32.mrb[0].mxu0
    %v5046 = vadd.f32 0.0, %v5045
    %v5047 = vpop.f32.mrb[0].mxu0
    %v5048 = vpop.f32.mrb[0].mxu0
    %v5049 = vpop.f32.mrb[0].mxu0
    %5050 = vdwg.mxu0
    %5051 = vrot.lane.b32.xlu0 %v4336, 64
    %v5052 = vpop.permute.xlu0 %5051
    %v5054 = vsel %vm346, %v4808, 0
    %v5057 = vsel %vm821, %v5052, 0
    %5059 = vmatprep.subr.bf16.mxu0 0
    %5060 = vmatpush1.bf16.msra.mxu0 %v5057
    %5061 = vmatprep.subr.bf16.mxu0 0
    %5062 = vmatpush1.bf16.msra.mxu0 0
    %5063 = vmatprep.subr.bf16.mxu0 0
    %5064 = vmatpush1.bf16.msra.mxu0 0
    %5065 = vmatprep.subr.bf16.mxu0 0
    %5066 = vmatpush1.bf16.msra.mxu0 0
    %5067 = vmatprep.subr.bf16.mxu0 0
    %5068 = vmatpush1.bf16.msra.mxu0 0
    %5069 = vmatprep.subr.bf16.mxu0 0
    %5070 = vmatpush1.bf16.msra.mxu0 0
    %5071 = vmatprep.subr.bf16.mxu0 0
    %5072 = vmatpush1.bf16.msra.mxu0 0
    %5073 = vmatprep.subr.bf16.mxu0 0
    %5074 = vmatpush1.bf16.msra.mxu0 0
    %5075 = vmatprep.subr.bf16.mxu0 0
    %5076 = vmatpush1.bf16.msra.mxu0 0
    %5077 = vmatprep.subr.bf16.mxu0 0
    %5078 = vmatpush1.bf16.msra.mxu0 0
    %5079 = vmatprep.subr.bf16.mxu0 0
    %5080 = vmatpush1.bf16.msra.mxu0 0
    %5081 = vmatprep.subr.bf16.mxu0 0
    %5082 = vmatpush1.bf16.msra.mxu0 0
    %5083 = vmatprep.subr.bf16.mxu0 0
    %5084 = vmatpush1.bf16.msra.mxu0 0
    %5085 = vmatprep.subr.bf16.mxu0 0
    %5086 = vmatpush1.bf16.msra.mxu0 0
    %5087 = vmatprep.subr.bf16.mxu0 0
    %5088 = vmatpush1.bf16.msra.mxu0 0
    %5089 = vmatprep.subr.bf16.mxu0 0
    %5090 = vmatpush1.bf16.msra.mxu0 0
    %5091 = vmatprep.mubr.bf16.mxu0 0
    %5092 = vmatmul.mubr.bf16.gmra.mrb[0].mxu0 %v5054
    %v5093 = vpop.f32.mrb[0].mxu0
    %v5094 = vadd.f32 0.0, %v5093
    %v5095 = vpop.f32.mrb[0].mxu0
    %v5096 = vpop.f32.mrb[0].mxu0
    %v5097 = vpop.f32.mrb[0].mxu0
    %5098 = vdwg.mxu0
    %5099 = vrot.lane.b32.xlu0 %v4337, 64
    %v5100 = vpop.permute.xlu0 %5099
    %v5102 = vsel %vm346, %v4809, 0
    %v5105 = vsel %vm821, %v5100, 0
    %5107 = vmatprep.subr.bf16.mxu0 0
    %5108 = vmatpush1.bf16.msra.mxu0 %v5105
    %5109 = vmatprep.subr.bf16.mxu0 0
    %5110 = vmatpush1.bf16.msra.mxu0 0
    %5111 = vmatprep.subr.bf16.mxu0 0
    %5112 = vmatpush1.bf16.msra.mxu0 0
    %5113 = vmatprep.subr.bf16.mxu0 0
    %5114 = vmatpush1.bf16.msra.mxu0 0
    %5115 = vmatprep.subr.bf16.mxu0 0
    %5116 = vmatpush1.bf16.msra.mxu0 0
    %5117 = vmatprep.subr.bf16.mxu0 0
    %5118 = vmatpush1.bf16.msra.mxu0 0
    %5119 = vmatprep.subr.bf16.mxu0 0
    %5120 = vmatpush1.bf16.msra.mxu0 0
    %5121 = vmatprep.subr.bf16.mxu0 0
    %5122 = vmatpush1.bf16.msra.mxu0 0
    %5123 = vmatprep.subr.bf16.mxu0 0
    %5124 = vmatpush1.bf16.msra.mxu0 0
    %5125 = vmatprep.subr.bf16.mxu0 0
    %5126 = vmatpush1.bf16.msra.mxu0 0
    %5127 = vmatprep.subr.bf16.mxu0 0
    %5128 = vmatpush1.bf16.msra.mxu0 0
    %5129 = vmatprep.subr.bf16.mxu0 0
    %5130 = vmatpush1.bf16.msra.mxu0 0
    %5131 = vmatprep.subr.bf16.mxu0 0
    %5132 = vmatpush1.bf16.msra.mxu0 0
    %5133 = vmatprep.subr.bf16.mxu0 0
    %5134 = vmatpush1.bf16.msra.mxu0 0
    %5135 = vmatprep.subr.bf16.mxu0 0
    %5136 = vmatpush1.bf16.msra.mxu0 0
    %5137 = vmatprep.subr.bf16.mxu0 0
    %5138 = vmatpush1.bf16.msra.mxu0 0
    %5139 = vmatprep.mubr.bf16.mxu0 0
    %5140 = vmatmul.mubr.bf16.gmra.mrb[0].mxu0 %v5102
    %v5141 = vpop.f32.mrb[0].mxu0
    %v5142 = vadd.f32 0.0, %v5141
    %v5143 = vpop.f32.mrb[0].mxu0
    %v5144 = vpop.f32.mrb[0].mxu0
    %v5145 = vpop.f32.mrb[0].mxu0
    %5146 = vdwg.mxu0
    %5147 = vrot.lane.b32.xlu0 %v4338, 64
    %v5148 = vpop.permute.xlu0 %5147
    %v5150 = vsel %vm346, %v4810, 0
    %v5153 = vsel %vm821, %v5148, 0
    %5155 = vmatprep.subr.bf16.mxu0 0
    %5156 = vmatpush1.bf16.msra.mxu0 %v5153
    %5157 = vmatprep.subr.bf16.mxu0 0
    %5158 = vmatpush1.bf16.msra.mxu0 0
    %5159 = vmatprep.subr.bf16.mxu0 0
    %5160 = vmatpush1.bf16.msra.mxu0 0
    %5161 = vmatprep.subr.bf16.mxu0 0
    %5162 = vmatpush1.bf16.msra.mxu0 0
    %5163 = vmatprep.subr.bf16.mxu0 0
    %5164 = vmatpush1.bf16.msra.mxu0 0
    %5165 = vmatprep.subr.bf16.mxu0 0
    %5166 = vmatpush1.bf16.msra.mxu0 0
    %5167 = vmatprep.subr.bf16.mxu0 0
    %5168 = vmatpush1.bf16.msra.mxu0 0
    %5169 = vmatprep.subr.bf16.mxu0 0
    %5170 = vmatpush1.bf16.msra.mxu0 0
    %5171 = vmatprep.subr.bf16.mxu0 0
    %5172 = vmatpush1.bf16.msra.mxu0 0
    %5173 = vmatprep.subr.bf16.mxu0 0
    %5174 = vmatpush1.bf16.msra.mxu0 0
    %5175 = vmatprep.subr.bf16.mxu0 0
    %5176 = vmatpush1.bf16.msra.mxu0 0
    %5177 = vmatprep.subr.bf16.mxu0 0
    %5178 = vmatpush1.bf16.msra.mxu0 0
    %5179 = vmatprep.subr.bf16.mxu0 0
    %5180 = vmatpush1.bf16.msra.mxu0 0
    %5181 = vmatprep.subr.bf16.mxu0 0
    %5182 = vmatpush1.bf16.msra.mxu0 0
    %5183 = vmatprep.subr.bf16.mxu0 0
    %5184 = vmatpush1.bf16.msra.mxu0 0
    %5185 = vmatprep.subr.bf16.mxu0 0
    %5186 = vmatpush1.bf16.msra.mxu0 0
    %5187 = vmatprep.mubr.bf16.mxu0 0
    %5188 = vmatmul.mubr.bf16.gmra.mrb[0].mxu0 %v5150
    %v5189 = vpop.f32.mrb[0].mxu0
    %v5190 = vadd.f32 0.0, %v5189
    %v5191 = vpop.f32.mrb[0].mxu0
    %v5192 = vpop.f32.mrb[0].mxu0
    %v5193 = vpop.f32.mrb[0].mxu0
    %5194 = vdwg.mxu0
    %v5195 = vrcp.pop %v4781
    %v5196 = vrcp.pop %v4784
    %v5197 = vrcp.pop %v4787
    %v5198 = vrcp.pop %v4790
    %v5199 = vrcp.pop %v4793
    %v5200 = vrcp.pop %v4796
    %v5201 = vrcp.pop %v4799
    %v5202 = vrcp.pop %v4802
    %v5203 = vmul.f32 %v4854, %v5195
    %v5204 = vmul.f32 %v4902, %v5196
    %v5205 = vmul.f32 %v4950, %v5197
    %v5206 = vmul.f32 %v4998, %v5198
    %v5207 = vmul.f32 %v5046, %v5199
    %v5208 = vmul.f32 %v5094, %v5200
    %v5209 = vmul.f32 %v5142, %v5201
    %v5210 = vmul.f32 %v5190, %v5202
    %5211 = vrot.lane.b32.xlu0 %v4331, 120
    %v5212 = vpop.permute.xlu0 %5211
    %5213 = vrot.lane.b32.xlu0 %v4331, 88
    %v5214 = vpop.permute.xlu0 %5213
    %v5216 = vsel %vm346, %v5212, 0
    %v5219 = vsel %vm346, %v5214, 0
    %5221 = vmatprep.subr.bf16.mxu0 0
    %5222 = vmatpush1.bf16.xpose.msra.mxu0 %v5219
    %5223 = vmatprep.subr.bf16.mxu0 0
    %5224 = vmatpush1.bf16.xpose.msra.mxu0 0
    %5225 = vmatprep.subr.bf16.mxu0 0
    %5226 = vmatpush1.bf16.xpose.msra.mxu0 0
    %5227 = vmatprep.subr.bf16.mxu0 0
    %5228 = vmatpush1.bf16.xpose.msra.mxu0 0
    %5229 = vmatprep.subr.bf16.mxu0 0
    %5230 = vmatpush1.bf16.xpose.msra.mxu0 0
    %5231 = vmatprep.subr.bf16.mxu0 0
    %5232 = vmatpush1.bf16.xpose.msra.mxu0 0
    %5233 = vmatprep.subr.bf16.mxu0 0
    %5234 = vmatpush1.bf16.xpose.msra.mxu0 0
    %5235 = vmatprep.subr.bf16.mxu0 0
    %5236 = vmatpush1.bf16.xpose.msra.mxu0 0
    %5237 = vmatprep.subr.bf16.mxu0 0
    %5238 = vmatpush1.bf16.xpose.msra.mxu0 0
    %5239 = vmatprep.subr.bf16.mxu0 0
    %5240 = vmatpush1.bf16.xpose.msra.mxu0 0
    %5241 = vmatprep.subr.bf16.mxu0 0
    %5242 = vmatpush1.bf16.xpose.msra.mxu0 0
    %5243 = vmatprep.subr.bf16.mxu0 0
    %5244 = vmatpush1.bf16.xpose.msra.mxu0 0
    %5245 = vmatprep.subr.bf16.mxu0 0
    %5246 = vmatpush1.bf16.xpose.msra.mxu0 0
    %5247 = vmatprep.subr.bf16.mxu0 0
    %5248 = vmatpush1.bf16.xpose.msra.mxu0 0
    %5249 = vmatprep.subr.bf16.mxu0 0
    %5250 = vmatpush1.bf16.xpose.msra.mxu0 0
    %5251 = vmatprep.subr.bf16.mxu0 0
    %5252 = vmatpush1.bf16.xpose.msra.mxu0 0
    %5253 = vmatprep.mubr.bf16.mxu0 0
    %5254 = vmatmul.mubr.bf16.gmra.mrb[0].mxu0 %v5216
    %v5255 = vpop.f32.mrb[0].mxu0
    %v5256 = vadd.f32 0.0, %v5255
    %v5257 = vpop.f32.mrb[0].mxu0
    %v5258 = vpop.f32.mrb[0].mxu0
    %v5259 = vpop.f32.mrb[0].mxu0
    %5260 = vdwg.mxu0
    %5261 = vrot.lane.b32.xlu0 %v4332, 120
    %v5262 = vpop.permute.xlu0 %5261
    %5263 = vrot.lane.b32.xlu0 %v4332, 88
    %v5264 = vpop.permute.xlu0 %5263
    %v5266 = vsel %vm346, %v5262, 0
    %v5269 = vsel %vm346, %v5264, 0
    %5271 = vmatprep.subr.bf16.mxu0 0
    %5272 = vmatpush1.bf16.xpose.msra.mxu0 %v5269
    %5273 = vmatprep.subr.bf16.mxu0 0
    %5274 = vmatpush1.bf16.xpose.msra.mxu0 0
    %5275 = vmatprep.subr.bf16.mxu0 0
    %5276 = vmatpush1.bf16.xpose.msra.mxu0 0
    %5277 = vmatprep.subr.bf16.mxu0 0
    %5278 = vmatpush1.bf16.xpose.msra.mxu0 0
    %5279 = vmatprep.subr.bf16.mxu0 0
    %5280 = vmatpush1.bf16.xpose.msra.mxu0 0
    %5281 = vmatprep.subr.bf16.mxu0 0
    %5282 = vmatpush1.bf16.xpose.msra.mxu0 0
    %5283 = vmatprep.subr.bf16.mxu0 0
    %5284 = vmatpush1.bf16.xpose.msra.mxu0 0
    %5285 = vmatprep.subr.bf16.mxu0 0
    %5286 = vmatpush1.bf16.xpose.msra.mxu0 0
    %5287 = vmatprep.subr.bf16.mxu0 0
    %5288 = vmatpush1.bf16.xpose.msra.mxu0 0
    %5289 = vmatprep.subr.bf16.mxu0 0
    %5290 = vmatpush1.bf16.xpose.msra.mxu0 0
    %5291 = vmatprep.subr.bf16.mxu0 0
    %5292 = vmatpush1.bf16.xpose.msra.mxu0 0
    %5293 = vmatprep.subr.bf16.mxu0 0
    %5294 = vmatpush1.bf16.xpose.msra.mxu0 0
    %5295 = vmatprep.subr.bf16.mxu0 0
    %5296 = vmatpush1.bf16.xpose.msra.mxu0 0
    %5297 = vmatprep.subr.bf16.mxu0 0
    %5298 = vmatpush1.bf16.xpose.msra.mxu0 0
    %5299 = vmatprep.subr.bf16.mxu0 0
    %5300 = vmatpush1.bf16.xpose.msra.mxu0 0
    %5301 = vmatprep.subr.bf16.mxu0 0
    %5302 = vmatpush1.bf16.xpose.msra.mxu0 0
    %5303 = vmatprep.mubr.bf16.mxu0 0
    %5304 = vmatmul.mubr.bf16.gmra.mrb[0].mxu0 %v5266
    %v5305 = vpop.f32.mrb[0].mxu0
    %v5306 = vadd.f32 0.0, %v5305
    %v5307 = vpop.f32.mrb[0].mxu0
    %v5308 = vpop.f32.mrb[0].mxu0
    %v5309 = vpop.f32.mrb[0].mxu0
    %5310 = vdwg.mxu0
    %5311 = vrot.lane.b32.xlu0 %v4333, 120
    %v5312 = vpop.permute.xlu0 %5311
    %5313 = vrot.lane.b32.xlu0 %v4333, 88
    %v5314 = vpop.permute.xlu0 %5313
    %v5316 = vsel %vm346, %v5312, 0
    %v5319 = vsel %vm346, %v5314, 0
    %5321 = vmatprep.subr.bf16.mxu0 0
    %5322 = vmatpush1.bf16.xpose.msra.mxu0 %v5319
    %5323 = vmatprep.subr.bf16.mxu0 0
    %5324 = vmatpush1.bf16.xpose.msra.mxu0 0
    %5325 = vmatprep.subr.bf16.mxu0 0
    %5326 = vmatpush1.bf16.xpose.msra.mxu0 0
    %5327 = vmatprep.subr.bf16.mxu0 0
    %5328 = vmatpush1.bf16.xpose.msra.mxu0 0
    %5329 = vmatprep.subr.bf16.mxu0 0
    %5330 = vmatpush1.bf16.xpose.msra.mxu0 0
    %5331 = vmatprep.subr.bf16.mxu0 0
    %5332 = vmatpush1.bf16.xpose.msra.mxu0 0
    %5333 = vmatprep.subr.bf16.mxu0 0
    %5334 = vmatpush1.bf16.xpose.msra.mxu0 0
    %5335 = vmatprep.subr.bf16.mxu0 0
    %5336 = vmatpush1.bf16.xpose.msra.mxu0 0
    %5337 = vmatprep.subr.bf16.mxu0 0
    %5338 = vmatpush1.bf16.xpose.msra.mxu0 0
    %5339 = vmatprep.subr.bf16.mxu0 0
    %5340 = vmatpush1.bf16.xpose.msra.mxu0 0
    %5341 = vmatprep.subr.bf16.mxu0 0
    %5342 = vmatpush1.bf16.xpose.msra.mxu0 0
    %5343 = vmatprep.subr.bf16.mxu0 0
    %5344 = vmatpush1.bf16.xpose.msra.mxu0 0
    %5345 = vmatprep.subr.bf16.mxu0 0
    %5346 = vmatpush1.bf16.xpose.msra.mxu0 0
    %5347 = vmatprep.subr.bf16.mxu0 0
    %5348 = vmatpush1.bf16.xpose.msra.mxu0 0
    %5349 = vmatprep.subr.bf16.mxu0 0
    %5350 = vmatpush1.bf16.xpose.msra.mxu0 0
    %5351 = vmatprep.subr.bf16.mxu0 0
    %5352 = vmatpush1.bf16.xpose.msra.mxu0 0
    %5353 = vmatprep.mubr.bf16.mxu0 0
    %5354 = vmatmul.mubr.bf16.gmra.mrb[0].mxu0 %v5316
    %v5355 = vpop.f32.mrb[0].mxu0
    %v5356 = vadd.f32 0.0, %v5355
    %v5357 = vpop.f32.mrb[0].mxu0
    %v5358 = vpop.f32.mrb[0].mxu0
    %v5359 = vpop.f32.mrb[0].mxu0
    %5360 = vdwg.mxu0
    %5361 = vrot.lane.b32.xlu0 %v4334, 120
    %v5362 = vpop.permute.xlu0 %5361
    %5363 = vrot.lane.b32.xlu0 %v4334, 88
    %v5364 = vpop.permute.xlu0 %5363
    %v5366 = vsel %vm346, %v5362, 0
    %v5369 = vsel %vm346, %v5364, 0
    %5371 = vmatprep.subr.bf16.mxu0 0
    %5372 = vmatpush1.bf16.xpose.msra.mxu0 %v5369
    %5373 = vmatprep.subr.bf16.mxu0 0
    %5374 = vmatpush1.bf16.xpose.msra.mxu0 0
    %5375 = vmatprep.subr.bf16.mxu0 0
    %5376 = vmatpush1.bf16.xpose.msra.mxu0 0
    %5377 = vmatprep.subr.bf16.mxu0 0
    %5378 = vmatpush1.bf16.xpose.msra.mxu0 0
    %5379 = vmatprep.subr.bf16.mxu0 0
    %5380 = vmatpush1.bf16.xpose.msra.mxu0 0
    %5381 = vmatprep.subr.bf16.mxu0 0
    %5382 = vmatpush1.bf16.xpose.msra.mxu0 0
    %5383 = vmatprep.subr.bf16.mxu0 0
    %5384 = vmatpush1.bf16.xpose.msra.mxu0 0
    %5385 = vmatprep.subr.bf16.mxu0 0
    %5386 = vmatpush1.bf16.xpose.msra.mxu0 0
    %5387 = vmatprep.subr.bf16.mxu0 0
    %5388 = vmatpush1.bf16.xpose.msra.mxu0 0
    %5389 = vmatprep.subr.bf16.mxu0 0
    %5390 = vmatpush1.bf16.xpose.msra.mxu0 0
    %5391 = vmatprep.subr.bf16.mxu0 0
    %5392 = vmatpush1.bf16.xpose.msra.mxu0 0
    %5393 = vmatprep.subr.bf16.mxu0 0
    %5394 = vmatpush1.bf16.xpose.msra.mxu0 0
    %5395 = vmatprep.subr.bf16.mxu0 0
    %5396 = vmatpush1.bf16.xpose.msra.mxu0 0
    %5397 = vmatprep.subr.bf16.mxu0 0
    %5398 = vmatpush1.bf16.xpose.msra.mxu0 0
    %5399 = vmatprep.subr.bf16.mxu0 0
    %5400 = vmatpush1.bf16.xpose.msra.mxu0 0
    %5401 = vmatprep.subr.bf16.mxu0 0
    %5402 = vmatpush1.bf16.xpose.msra.mxu0 0
    %5403 = vmatprep.mubr.bf16.mxu0 0
    %5404 = vmatmul.mubr.bf16.gmra.mrb[0].mxu0 %v5366
    %v5405 = vpop.f32.mrb[0].mxu0
    %v5406 = vadd.f32 0.0, %v5405
    %v5407 = vpop.f32.mrb[0].mxu0
    %v5408 = vpop.f32.mrb[0].mxu0
    %v5409 = vpop.f32.mrb[0].mxu0
    %5410 = vdwg.mxu0
    %5411 = vrot.lane.b32.xlu0 %v4335, 120
    %v5412 = vpop.permute.xlu0 %5411
    %5413 = vrot.lane.b32.xlu0 %v4335, 88
    %v5414 = vpop.permute.xlu0 %5413
    %v5416 = vsel %vm346, %v5412, 0
    %v5419 = vsel %vm346, %v5414, 0
    %5421 = vmatprep.subr.bf16.mxu0 0
    %5422 = vmatpush1.bf16.xpose.msra.mxu0 %v5419
    %5423 = vmatprep.subr.bf16.mxu0 0
    %5424 = vmatpush1.bf16.xpose.msra.mxu0 0
    %5425 = vmatprep.subr.bf16.mxu0 0
    %5426 = vmatpush1.bf16.xpose.msra.mxu0 0
    %5427 = vmatprep.subr.bf16.mxu0 0
    %5428 = vmatpush1.bf16.xpose.msra.mxu0 0
    %5429 = vmatprep.subr.bf16.mxu0 0
    %5430 = vmatpush1.bf16.xpose.msra.mxu0 0
    %5431 = vmatprep.subr.bf16.mxu0 0
    %5432 = vmatpush1.bf16.xpose.msra.mxu0 0
    %5433 = vmatprep.subr.bf16.mxu0 0
    %5434 = vmatpush1.bf16.xpose.msra.mxu0 0
    %5435 = vmatprep.subr.bf16.mxu0 0
    %5436 = vmatpush1.bf16.xpose.msra.mxu0 0
    %5437 = vmatprep.subr.bf16.mxu0 0
    %5438 = vmatpush1.bf16.xpose.msra.mxu0 0
    %5439 = vmatprep.subr.bf16.mxu0 0
    %5440 = vmatpush1.bf16.xpose.msra.mxu0 0
    %5441 = vmatprep.subr.bf16.mxu0 0
    %5442 = vmatpush1.bf16.xpose.msra.mxu0 0
    %5443 = vmatprep.subr.bf16.mxu0 0
    %5444 = vmatpush1.bf16.xpose.msra.mxu0 0
    %5445 = vmatprep.subr.bf16.mxu0 0
    %5446 = vmatpush1.bf16.xpose.msra.mxu0 0
    %5447 = vmatprep.subr.bf16.mxu0 0
    %5448 = vmatpush1.bf16.xpose.msra.mxu0 0
    %5449 = vmatprep.subr.bf16.mxu0 0
    %5450 = vmatpush1.bf16.xpose.msra.mxu0 0
    %5451 = vmatprep.subr.bf16.mxu0 0
    %5452 = vmatpush1.bf16.xpose.msra.mxu0 0
    %5453 = vmatprep.mubr.bf16.mxu0 0
    %5454 = vmatmul.mubr.bf16.gmra.mrb[0].mxu0 %v5416
    %v5455 = vpop.f32.mrb[0].mxu0
    %v5456 = vadd.f32 0.0, %v5455
    %v5457 = vpop.f32.mrb[0].mxu0
    %v5458 = vpop.f32.mrb[0].mxu0
    %v5459 = vpop.f32.mrb[0].mxu0
    %5460 = vdwg.mxu0
    %5461 = vrot.lane.b32.xlu0 %v4336, 120
    %v5462 = vpop.permute.xlu0 %5461
    %5463 = vrot.lane.b32.xlu0 %v4336, 88
    %v5464 = vpop.permute.xlu0 %5463
    %v5466 = vsel %vm346, %v5462, 0
    %v5469 = vsel %vm346, %v5464, 0
    %5471 = vmatprep.subr.bf16.mxu0 0
    %5472 = vmatpush1.bf16.xpose.msra.mxu0 %v5469
    %5473 = vmatprep.subr.bf16.mxu0 0
    %5474 = vmatpush1.bf16.xpose.msra.mxu0 0
    %5475 = vmatprep.subr.bf16.mxu0 0
    %5476 = vmatpush1.bf16.xpose.msra.mxu0 0
    %5477 = vmatprep.subr.bf16.mxu0 0
    %5478 = vmatpush1.bf16.xpose.msra.mxu0 0
    %5479 = vmatprep.subr.bf16.mxu0 0
    %5480 = vmatpush1.bf16.xpose.msra.mxu0 0
    %5481 = vmatprep.subr.bf16.mxu0 0
    %5482 = vmatpush1.bf16.xpose.msra.mxu0 0
    %5483 = vmatprep.subr.bf16.mxu0 0
    %5484 = vmatpush1.bf16.xpose.msra.mxu0 0
    %5485 = vmatprep.subr.bf16.mxu0 0
    %5486 = vmatpush1.bf16.xpose.msra.mxu0 0
    %5487 = vmatprep.subr.bf16.mxu0 0
    %5488 = vmatpush1.bf16.xpose.msra.mxu0 0
    %5489 = vmatprep.subr.bf16.mxu0 0
    %5490 = vmatpush1.bf16.xpose.msra.mxu0 0
    %5491 = vmatprep.subr.bf16.mxu0 0
    %5492 = vmatpush1.bf16.xpose.msra.mxu0 0
    %5493 = vmatprep.subr.bf16.mxu0 0
    %5494 = vmatpush1.bf16.xpose.msra.mxu0 0
    %5495 = vmatprep.subr.bf16.mxu0 0
    %5496 = vmatpush1.bf16.xpose.msra.mxu0 0
    %5497 = vmatprep.subr.bf16.mxu0 0
    %5498 = vmatpush1.bf16.xpose.msra.mxu0 0
    %5499 = vmatprep.subr.bf16.mxu0 0
    %5500 = vmatpush1.bf16.xpose.msra.mxu0 0
    %5501 = vmatprep.subr.bf16.mxu0 0
    %5502 = vmatpush1.bf16.xpose.msra.mxu0 0
    %5503 = vmatprep.mubr.bf16.mxu0 0
    %5504 = vmatmul.mubr.bf16.gmra.mrb[0].mxu0 %v5466
    %v5505 = vpop.f32.mrb[0].mxu0
    %v5506 = vadd.f32 0.0, %v5505
    %v5507 = vpop.f32.mrb[0].mxu0
    %v5508 = vpop.f32.mrb[0].mxu0
    %v5509 = vpop.f32.mrb[0].mxu0
    %5510 = vdwg.mxu0
    %5511 = vrot.lane.b32.xlu0 %v4337, 120
    %v5512 = vpop.permute.xlu0 %5511
    %5513 = vrot.lane.b32.xlu0 %v4337, 88
    %v5514 = vpop.permute.xlu0 %5513
    %v5516 = vsel %vm346, %v5512, 0
    %v5519 = vsel %vm346, %v5514, 0
    %5521 = vmatprep.subr.bf16.mxu0 0
    %5522 = vmatpush1.bf16.xpose.msra.mxu0 %v5519
    %5523 = vmatprep.subr.bf16.mxu0 0
    %5524 = vmatpush1.bf16.xpose.msra.mxu0 0
    %5525 = vmatprep.subr.bf16.mxu0 0
    %5526 = vmatpush1.bf16.xpose.msra.mxu0 0
    %5527 = vmatprep.subr.bf16.mxu0 0
    %5528 = vmatpush1.bf16.xpose.msra.mxu0 0
    %5529 = vmatprep.subr.bf16.mxu0 0
    %5530 = vmatpush1.bf16.xpose.msra.mxu0 0
    %5531 = vmatprep.subr.bf16.mxu0 0
    %5532 = vmatpush1.bf16.xpose.msra.mxu0 0
    %5533 = vmatprep.subr.bf16.mxu0 0
    %5534 = vmatpush1.bf16.xpose.msra.mxu0 0
    %5535 = vmatprep.subr.bf16.mxu0 0
    %5536 = vmatpush1.bf16.xpose.msra.mxu0 0
    %5537 = vmatprep.subr.bf16.mxu0 0
    %5538 = vmatpush1.bf16.xpose.msra.mxu0 0
    %5539 = vmatprep.subr.bf16.mxu0 0
    %5540 = vmatpush1.bf16.xpose.msra.mxu0 0
    %5541 = vmatprep.subr.bf16.mxu0 0
    %5542 = vmatpush1.bf16.xpose.msra.mxu0 0
    %5543 = vmatprep.subr.bf16.mxu0 0
    %5544 = vmatpush1.bf16.xpose.msra.mxu0 0
    %5545 = vmatprep.subr.bf16.mxu0 0
    %5546 = vmatpush1.bf16.xpose.msra.mxu0 0
    %5547 = vmatprep.subr.bf16.mxu0 0
    %5548 = vmatpush1.bf16.xpose.msra.mxu0 0
    %5549 = vmatprep.subr.bf16.mxu0 0
    %5550 = vmatpush1.bf16.xpose.msra.mxu0 0
    %5551 = vmatprep.subr.bf16.mxu0 0
    %5552 = vmatpush1.bf16.xpose.msra.mxu0 0
    %5553 = vmatprep.mubr.bf16.mxu0 0
    %5554 = vmatmul.mubr.bf16.gmra.mrb[0].mxu0 %v5516
    %v5555 = vpop.f32.mrb[0].mxu0
    %v5556 = vadd.f32 0.0, %v5555
    %v5557 = vpop.f32.mrb[0].mxu0
    %v5558 = vpop.f32.mrb[0].mxu0
    %v5559 = vpop.f32.mrb[0].mxu0
    %5560 = vdwg.mxu0
    %5561 = vrot.lane.b32.xlu0 %v4338, 120
    %v5562 = vpop.permute.xlu0 %5561
    %5563 = vrot.lane.b32.xlu0 %v4338, 88
    %v5564 = vpop.permute.xlu0 %5563
    %v5566 = vsel %vm346, %v5562, 0
    %v5569 = vsel %vm346, %v5564, 0
    %5571 = vmatprep.subr.bf16.mxu0 0
    %5572 = vmatpush1.bf16.xpose.msra.mxu0 %v5569
    %5573 = vmatprep.subr.bf16.mxu0 0
    %5574 = vmatpush1.bf16.xpose.msra.mxu0 0
    %5575 = vmatprep.subr.bf16.mxu0 0
    %5576 = vmatpush1.bf16.xpose.msra.mxu0 0
    %5577 = vmatprep.subr.bf16.mxu0 0
    %5578 = vmatpush1.bf16.xpose.msra.mxu0 0
    %5579 = vmatprep.subr.bf16.mxu0 0
    %5580 = vmatpush1.bf16.xpose.msra.mxu0 0
    %5581 = vmatprep.subr.bf16.mxu0 0
    %5582 = vmatpush1.bf16.xpose.msra.mxu0 0
    %5583 = vmatprep.subr.bf16.mxu0 0
    %5584 = vmatpush1.bf16.xpose.msra.mxu0 0
    %5585 = vmatprep.subr.bf16.mxu0 0
    %5586 = vmatpush1.bf16.xpose.msra.mxu0 0
    %5587 = vmatprep.subr.bf16.mxu0 0
    %5588 = vmatpush1.bf16.xpose.msra.mxu0 0
    %5589 = vmatprep.subr.bf16.mxu0 0
    %5590 = vmatpush1.bf16.xpose.msra.mxu0 0
    %5591 = vmatprep.subr.bf16.mxu0 0
    %5592 = vmatpush1.bf16.xpose.msra.mxu0 0
    %5593 = vmatprep.subr.bf16.mxu0 0
    %5594 = vmatpush1.bf16.xpose.msra.mxu0 0
    %5595 = vmatprep.subr.bf16.mxu0 0
    %5596 = vmatpush1.bf16.xpose.msra.mxu0 0
    %5597 = vmatprep.subr.bf16.mxu0 0
    %5598 = vmatpush1.bf16.xpose.msra.mxu0 0
    %5599 = vmatprep.subr.bf16.mxu0 0
    %5600 = vmatpush1.bf16.xpose.msra.mxu0 0
    %5601 = vmatprep.subr.bf16.mxu0 0
    %5602 = vmatpush1.bf16.xpose.msra.mxu0 0
    %5603 = vmatprep.mubr.bf16.mxu0 0
    %5604 = vmatmul.mubr.bf16.gmra.mrb[0].mxu0 %v5566
    %v5605 = vpop.f32.mrb[0].mxu0
    %v5606 = vadd.f32 0.0, %v5605
    %v5607 = vpop.f32.mrb[0].mxu0
    %v5608 = vpop.f32.mrb[0].mxu0
    %v5609 = vpop.f32.mrb[0].mxu0
    %5610 = vdwg.mxu0
    %v5611 = vsel %vm346, %v5256, -inf
    %5612 = vmax.xlane.f32.xlu0 %v5611
    %v5613 = vpop.xlane.xlu0 %5612
    %v5614 = vsel %vm346, %v5306, -inf
    %5615 = vmax.xlane.f32.xlu0 %v5614
    %v5616 = vpop.xlane.xlu0 %5615
    %v5617 = vsel %vm346, %v5356, -inf
    %5618 = vmax.xlane.f32.xlu0 %v5617
    %v5619 = vpop.xlane.xlu0 %5618
    %v5620 = vsel %vm346, %v5406, -inf
    %5621 = vmax.xlane.f32.xlu0 %v5620
    %v5622 = vpop.xlane.xlu0 %5621
    %v5623 = vsel %vm346, %v5456, -inf
    %5624 = vmax.xlane.f32.xlu0 %v5623
    %v5625 = vpop.xlane.xlu0 %5624
    %v5626 = vsel %vm346, %v5506, -inf
    %5627 = vmax.xlane.f32.xlu0 %v5626
    %v5628 = vpop.xlane.xlu0 %5627
    %v5629 = vsel %vm346, %v5556, -inf
    %5630 = vmax.xlane.f32.xlu0 %v5629
    %v5631 = vpop.xlane.xlu0 %5630
    %v5632 = vsel %vm346, %v5606, -inf
    %5633 = vmax.xlane.f32.xlu0 %v5632
    %v5634 = vpop.xlane.xlu0 %5633
    %v5635 = vsub.f32 %v5256, %v5613
    %v5636 = vsub.f32 %v5306, %v5616
    %v5637 = vsub.f32 %v5356, %v5619
    %v5638 = vsub.f32 %v5406, %v5622
    %v5639 = vsub.f32 %v5456, %v5625
    %v5640 = vsub.f32 %v5506, %v5628
    %v5641 = vsub.f32 %v5556, %v5631
    %v5642 = vsub.f32 %v5606, %v5634
    %v5643 = vmul.f32 %v5635, 1.442695
    %v5644 = vpow.pop %v5643
    %v5645 = vmul.f32 %v5636, 1.442695
    %v5646 = vpow.pop %v5645
    %v5647 = vmul.f32 %v5637, 1.442695
    %v5648 = vpow.pop %v5647
    %v5649 = vmul.f32 %v5638, 1.442695
    %v5650 = vpow.pop %v5649
    %v5651 = vmul.f32 %v5639, 1.442695
    %v5652 = vpow.pop %v5651
    %v5653 = vmul.f32 %v5640, 1.442695
    %v5654 = vpow.pop %v5653
    %v5655 = vmul.f32 %v5641, 1.442695
    %v5656 = vpow.pop %v5655
    %v5657 = vmul.f32 %v5642, 1.442695
    %v5658 = vpow.pop %v5657
    %v5659 = vsel %vm346, %v5644, 0.0
    %5660 = vadd.xlane.f32.xlu0 %v5659
    %v5661 = vpop.xlane.xlu0 %5660
    %v5662 = vsel %vm346, %v5646, 0.0
    %5663 = vadd.xlane.f32.xlu0 %v5662
    %v5664 = vpop.xlane.xlu0 %5663
    %v5665 = vsel %vm346, %v5648, 0.0
    %5666 = vadd.xlane.f32.xlu0 %v5665
    %v5667 = vpop.xlane.xlu0 %5666
    %v5668 = vsel %vm346, %v5650, 0.0
    %5669 = vadd.xlane.f32.xlu0 %v5668
    %v5670 = vpop.xlane.xlu0 %5669
    %v5671 = vsel %vm346, %v5652, 0.0
    %5672 = vadd.xlane.f32.xlu0 %v5671
    %v5673 = vpop.xlane.xlu0 %5672
    %v5674 = vsel %vm346, %v5654, 0.0
    %5675 = vadd.xlane.f32.xlu0 %v5674
    %v5676 = vpop.xlane.xlu0 %5675
    %v5677 = vsel %vm346, %v5656, 0.0
    %5678 = vadd.xlane.f32.xlu0 %v5677
    %v5679 = vpop.xlane.xlu0 %5678
    %v5680 = vsel %vm346, %v5658, 0.0
    %5681 = vadd.xlane.f32.xlu0 %v5680
    %v5682 = vpop.xlane.xlu0 %5681
    %v5683 = vpack.c.bf16 %v5644, %v5644
    %v5684 = vpack.c.bf16 %v5646, %v5646
    %v5685 = vpack.c.bf16 %v5648, %v5648
    %v5686 = vpack.c.bf16 %v5650, %v5650
    %v5687 = vpack.c.bf16 %v5652, %v5652
    %v5688 = vpack.c.bf16 %v5654, %v5654
    %v5689 = vpack.c.bf16 %v5656, %v5656
    %v5690 = vpack.c.bf16 %v5658, %v5658
    %5691 = vrot.lane.b32.xlu0 %v4331, 56
    %v5692 = vpop.permute.xlu0 %5691
    %v5694 = vsel %vm346, %v5683, 0
    %v5697 = vsel %vm821, %v5692, 0
    %5699 = vmatprep.subr.bf16.mxu0 0
    %5700 = vmatpush1.bf16.msra.mxu0 %v5697
    %5701 = vmatprep.subr.bf16.mxu0 0
    %5702 = vmatpush1.bf16.msra.mxu0 0
    %5703 = vmatprep.subr.bf16.mxu0 0
    %5704 = vmatpush1.bf16.msra.mxu0 0
    %5705 = vmatprep.subr.bf16.mxu0 0
    %5706 = vmatpush1.bf16.msra.mxu0 0
    %5707 = vmatprep.subr.bf16.mxu0 0
    %5708 = vmatpush1.bf16.msra.mxu0 0
    %5709 = vmatprep.subr.bf16.mxu0 0
    %5710 = vmatpush1.bf16.msra.mxu0 0
    %5711 = vmatprep.subr.bf16.mxu0 0
    %5712 = vmatpush1.bf16.msra.mxu0 0
    %5713 = vmatprep.subr.bf16.mxu0 0
    %5714 = vmatpush1.bf16.msra.mxu0 0
    %5715 = vmatprep.subr.bf16.mxu0 0
    %5716 = vmatpush1.bf16.msra.mxu0 0
    %5717 = vmatprep.subr.bf16.mxu0 0
    %5718 = vmatpush1.bf16.msra.mxu0 0
    %5719 = vmatprep.subr.bf16.mxu0 0
    %5720 = vmatpush1.bf16.msra.mxu0 0
    %5721 = vmatprep.subr.bf16.mxu0 0
    %5722 = vmatpush1.bf16.msra.mxu0 0
    %5723 = vmatprep.subr.bf16.mxu0 0
    %5724 = vmatpush1.bf16.msra.mxu0 0
    %5725 = vmatprep.subr.bf16.mxu0 0
    %5726 = vmatpush1.bf16.msra.mxu0 0
    %5727 = vmatprep.subr.bf16.mxu0 0
    %5728 = vmatpush1.bf16.msra.mxu0 0
    %5729 = vmatprep.subr.bf16.mxu0 0
    %5730 = vmatpush1.bf16.msra.mxu0 0
    %5731 = vmatprep.mubr.bf16.mxu0 0
    %5732 = vmatmul.mubr.bf16.gmra.mrb[0].mxu0 %v5694
    %v5733 = vpop.f32.mrb[0].mxu0
    %v5734 = vadd.f32 0.0, %v5733
    %v5735 = vpop.f32.mrb[0].mxu0
    %v5736 = vpop.f32.mrb[0].mxu0
    %v5737 = vpop.f32.mrb[0].mxu0
    %5738 = vdwg.mxu0
    %5739 = vrot.lane.b32.xlu0 %v4332, 56
    %v5740 = vpop.permute.xlu0 %5739
    %v5742 = vsel %vm346, %v5684, 0
    %v5745 = vsel %vm821, %v5740, 0
    %5747 = vmatprep.subr.bf16.mxu0 0
    %5748 = vmatpush1.bf16.msra.mxu0 %v5745
    %5749 = vmatprep.subr.bf16.mxu0 0
    %5750 = vmatpush1.bf16.msra.mxu0 0
    %5751 = vmatprep.subr.bf16.mxu0 0
    %5752 = vmatpush1.bf16.msra.mxu0 0
    %5753 = vmatprep.subr.bf16.mxu0 0
    %5754 = vmatpush1.bf16.msra.mxu0 0
    %5755 = vmatprep.subr.bf16.mxu0 0
    %5756 = vmatpush1.bf16.msra.mxu0 0
    %5757 = vmatprep.subr.bf16.mxu0 0
    %5758 = vmatpush1.bf16.msra.mxu0 0
    %5759 = vmatprep.subr.bf16.mxu0 0
    %5760 = vmatpush1.bf16.msra.mxu0 0
    %5761 = vmatprep.subr.bf16.mxu0 0
    %5762 = vmatpush1.bf16.msra.mxu0 0
    %5763 = vmatprep.subr.bf16.mxu0 0
    %5764 = vmatpush1.bf16.msra.mxu0 0
    %5765 = vmatprep.subr.bf16.mxu0 0
    %5766 = vmatpush1.bf16.msra.mxu0 0
    %5767 = vmatprep.subr.bf16.mxu0 0
    %5768 = vmatpush1.bf16.msra.mxu0 0
    %5769 = vmatprep.subr.bf16.mxu0 0
    %5770 = vmatpush1.bf16.msra.mxu0 0
    %5771 = vmatprep.subr.bf16.mxu0 0
    %5772 = vmatpush1.bf16.msra.mxu0 0
    %5773 = vmatprep.subr.bf16.mxu0 0
    %5774 = vmatpush1.bf16.msra.mxu0 0
    %5775 = vmatprep.subr.bf16.mxu0 0
    %5776 = vmatpush1.bf16.msra.mxu0 0
    %5777 = vmatprep.subr.bf16.mxu0 0
    %5778 = vmatpush1.bf16.msra.mxu0 0
    %5779 = vmatprep.mubr.bf16.mxu0 0
    %5780 = vmatmul.mubr.bf16.gmra.mrb[0].mxu0 %v5742
    %v5781 = vpop.f32.mrb[0].mxu0
    %v5782 = vadd.f32 0.0, %v5781
    %v5783 = vpop.f32.mrb[0].mxu0
    %v5784 = vpop.f32.mrb[0].mxu0
    %v5785 = vpop.f32.mrb[0].mxu0
    %5786 = vdwg.mxu0
    %5787 = vrot.lane.b32.xlu0 %v4333, 56
    %v5788 = vpop.permute.xlu0 %5787
    %v5790 = vsel %vm346, %v5685, 0
    %v5793 = vsel %vm821, %v5788, 0
    %5795 = vmatprep.subr.bf16.mxu0 0
    %5796 = vmatpush1.bf16.msra.mxu0 %v5793
    %5797 = vmatprep.subr.bf16.mxu0 0
    %5798 = vmatpush1.bf16.msra.mxu0 0
    %5799 = vmatprep.subr.bf16.mxu0 0
    %5800 = vmatpush1.bf16.msra.mxu0 0
    %5801 = vmatprep.subr.bf16.mxu0 0
    %5802 = vmatpush1.bf16.msra.mxu0 0
    %5803 = vmatprep.subr.bf16.mxu0 0
    %5804 = vmatpush1.bf16.msra.mxu0 0
    %5805 = vmatprep.subr.bf16.mxu0 0
    %5806 = vmatpush1.bf16.msra.mxu0 0
    %5807 = vmatprep.subr.bf16.mxu0 0
    %5808 = vmatpush1.bf16.msra.mxu0 0
    %5809 = vmatprep.subr.bf16.mxu0 0
    %5810 = vmatpush1.bf16.msra.mxu0 0
    %5811 = vmatprep.subr.bf16.mxu0 0
    %5812 = vmatpush1.bf16.msra.mxu0 0
    %5813 = vmatprep.subr.bf16.mxu0 0
    %5814 = vmatpush1.bf16.msra.mxu0 0
    %5815 = vmatprep.subr.bf16.mxu0 0
    %5816 = vmatpush1.bf16.msra.mxu0 0
    %5817 = vmatprep.subr.bf16.mxu0 0
    %5818 = vmatpush1.bf16.msra.mxu0 0
    %5819 = vmatprep.subr.bf16.mxu0 0
    %5820 = vmatpush1.bf16.msra.mxu0 0
    %5821 = vmatprep.subr.bf16.mxu0 0
    %5822 = vmatpush1.bf16.msra.mxu0 0
    %5823 = vmatprep.subr.bf16.mxu0 0
    %5824 = vmatpush1.bf16.msra.mxu0 0
    %5825 = vmatprep.subr.bf16.mxu0 0
    %5826 = vmatpush1.bf16.msra.mxu0 0
    %5827 = vmatprep.mubr.bf16.mxu0 0
    %5828 = vmatmul.mubr.bf16.gmra.mrb[0].mxu0 %v5790
    %v5829 = vpop.f32.mrb[0].mxu0
    %v5830 = vadd.f32 0.0, %v5829
    %v5831 = vpop.f32.mrb[0].mxu0
    %v5832 = vpop.f32.mrb[0].mxu0
    %v5833 = vpop.f32.mrb[0].mxu0
    %5834 = vdwg.mxu0
    %5835 = vrot.lane.b32.xlu0 %v4334, 56
    %v5836 = vpop.permute.xlu0 %5835
    %v5838 = vsel %vm346, %v5686, 0
    %v5841 = vsel %vm821, %v5836, 0
    %5843 = vmatprep.subr.bf16.mxu0 0
    %5844 = vmatpush1.bf16.msra.mxu0 %v5841
    %5845 = vmatprep.subr.bf16.mxu0 0
    %5846 = vmatpush1.bf16.msra.mxu0 0
    %5847 = vmatprep.subr.bf16.mxu0 0
    %5848 = vmatpush1.bf16.msra.mxu0 0
    %5849 = vmatprep.subr.bf16.mxu0 0
    %5850 = vmatpush1.bf16.msra.mxu0 0
    %5851 = vmatprep.subr.bf16.mxu0 0
    %5852 = vmatpush1.bf16.msra.mxu0 0
    %5853 = vmatprep.subr.bf16.mxu0 0
    %5854 = vmatpush1.bf16.msra.mxu0 0
    %5855 = vmatprep.subr.bf16.mxu0 0
    %5856 = vmatpush1.bf16.msra.mxu0 0
    %5857 = vmatprep.subr.bf16.mxu0 0
    %5858 = vmatpush1.bf16.msra.mxu0 0
    %5859 = vmatprep.subr.bf16.mxu0 0
    %5860 = vmatpush1.bf16.msra.mxu0 0
    %5861 = vmatprep.subr.bf16.mxu0 0
    %5862 = vmatpush1.bf16.msra.mxu0 0
    %5863 = vmatprep.subr.bf16.mxu0 0
    %5864 = vmatpush1.bf16.msra.mxu0 0
    %5865 = vmatprep.subr.bf16.mxu0 0
    %5866 = vmatpush1.bf16.msra.mxu0 0
    %5867 = vmatprep.subr.bf16.mxu0 0
    %5868 = vmatpush1.bf16.msra.mxu0 0
    %5869 = vmatprep.subr.bf16.mxu0 0
    %5870 = vmatpush1.bf16.msra.mxu0 0
    %5871 = vmatprep.subr.bf16.mxu0 0
    %5872 = vmatpush1.bf16.msra.mxu0 0
    %5873 = vmatprep.subr.bf16.mxu0 0
    %5874 = vmatpush1.bf16.msra.mxu0 0
    %5875 = vmatprep.mubr.bf16.mxu0 0
    %5876 = vmatmul.mubr.bf16.gmra.mrb[0].mxu0 %v5838
    %v5877 = vpop.f32.mrb[0].mxu0
    %v5878 = vadd.f32 0.0, %v5877
    %v5879 = vpop.f32.mrb[0].mxu0
    %v5880 = vpop.f32.mrb[0].mxu0
    %v5881 = vpop.f32.mrb[0].mxu0
    %5882 = vdwg.mxu0
    %5883 = vrot.lane.b32.xlu0 %v4335, 56
    %v5884 = vpop.permute.xlu0 %5883
    %v5886 = vsel %vm346, %v5687, 0
    %v5889 = vsel %vm821, %v5884, 0
    %5891 = vmatprep.subr.bf16.mxu0 0
    %5892 = vmatpush1.bf16.msra.mxu0 %v5889
    %5893 = vmatprep.subr.bf16.mxu0 0
    %5894 = vmatpush1.bf16.msra.mxu0 0
    %5895 = vmatprep.subr.bf16.mxu0 0
    %5896 = vmatpush1.bf16.msra.mxu0 0
    %5897 = vmatprep.subr.bf16.mxu0 0
    %5898 = vmatpush1.bf16.msra.mxu0 0
    %5899 = vmatprep.subr.bf16.mxu0 0
    %5900 = vmatpush1.bf16.msra.mxu0 0
    %5901 = vmatprep.subr.bf16.mxu0 0
    %5902 = vmatpush1.bf16.msra.mxu0 0
    %5903 = vmatprep.subr.bf16.mxu0 0
    %5904 = vmatpush1.bf16.msra.mxu0 0
    %5905 = vmatprep.subr.bf16.mxu0 0
    %5906 = vmatpush1.bf16.msra.mxu0 0
    %5907 = vmatprep.subr.bf16.mxu0 0
    %5908 = vmatpush1.bf16.msra.mxu0 0
    %5909 = vmatprep.subr.bf16.mxu0 0
    %5910 = vmatpush1.bf16.msra.mxu0 0
    %5911 = vmatprep.subr.bf16.mxu0 0
    %5912 = vmatpush1.bf16.msra.mxu0 0
    %5913 = vmatprep.subr.bf16.mxu0 0
    %5914 = vmatpush1.bf16.msra.mxu0 0
    %5915 = vmatprep.subr.bf16.mxu0 0
    %5916 = vmatpush1.bf16.msra.mxu0 0
    %5917 = vmatprep.subr.bf16.mxu0 0
    %5918 = vmatpush1.bf16.msra.mxu0 0
    %5919 = vmatprep.subr.bf16.mxu0 0
    %5920 = vmatpush1.bf16.msra.mxu0 0
    %5921 = vmatprep.subr.bf16.mxu0 0
    %5922 = vmatpush1.bf16.msra.mxu0 0
    %5923 = vmatprep.mubr.bf16.mxu0 0
    %5924 = vmatmul.mubr.bf16.gmra.mrb[0].mxu0 %v5886
    %v5925 = vpop.f32.mrb[0].mxu0
    %v5926 = vadd.f32 0.0, %v5925
    %v5927 = vpop.f32.mrb[0].mxu0
    %v5928 = vpop.f32.mrb[0].mxu0
    %v5929 = vpop.f32.mrb[0].mxu0
    %5930 = vdwg.mxu0
    %5931 = vrot.lane.b32.xlu0 %v4336, 56
    %v5932 = vpop.permute.xlu0 %5931
    %v5934 = vsel %vm346, %v5688, 0
    %v5937 = vsel %vm821, %v5932, 0
    %5939 = vmatprep.subr.bf16.mxu0 0
    %5940 = vmatpush1.bf16.msra.mxu0 %v5937
    %5941 = vmatprep.subr.bf16.mxu0 0
    %5942 = vmatpush1.bf16.msra.mxu0 0
    %5943 = vmatprep.subr.bf16.mxu0 0
    %5944 = vmatpush1.bf16.msra.mxu0 0
    %5945 = vmatprep.subr.bf16.mxu0 0
    %5946 = vmatpush1.bf16.msra.mxu0 0
    %5947 = vmatprep.subr.bf16.mxu0 0
    %5948 = vmatpush1.bf16.msra.mxu0 0
    %5949 = vmatprep.subr.bf16.mxu0 0
    %5950 = vmatpush1.bf16.msra.mxu0 0
    %5951 = vmatprep.subr.bf16.mxu0 0
    %5952 = vmatpush1.bf16.msra.mxu0 0
    %5953 = vmatprep.subr.bf16.mxu0 0
    %5954 = vmatpush1.bf16.msra.mxu0 0
    %5955 = vmatprep.subr.bf16.mxu0 0
    %5956 = vmatpush1.bf16.msra.mxu0 0
    %5957 = vmatprep.subr.bf16.mxu0 0
    %5958 = vmatpush1.bf16.msra.mxu0 0
    %5959 = vmatprep.subr.bf16.mxu0 0
    %5960 = vmatpush1.bf16.msra.mxu0 0
    %5961 = vmatprep.subr.bf16.mxu0 0
    %5962 = vmatpush1.bf16.msra.mxu0 0
    %5963 = vmatprep.subr.bf16.mxu0 0
    %5964 = vmatpush1.bf16.msra.mxu0 0
    %5965 = vmatprep.subr.bf16.mxu0 0
    %5966 = vmatpush1.bf16.msra.mxu0 0
    %5967 = vmatprep.subr.bf16.mxu0 0
    %5968 = vmatpush1.bf16.msra.mxu0 0
    %5969 = vmatprep.subr.bf16.mxu0 0
    %5970 = vmatpush1.bf16.msra.mxu0 0
    %5971 = vmatprep.mubr.bf16.mxu0 0
    %5972 = vmatmul.mubr.bf16.gmra.mrb[0].mxu0 %v5934
    %v5973 = vpop.f32.mrb[0].mxu0
    %v5974 = vadd.f32 0.0, %v5973
    %v5975 = vpop.f32.mrb[0].mxu0
    %v5976 = vpop.f32.mrb[0].mxu0
    %v5977 = vpop.f32.mrb[0].mxu0
    %5978 = vdwg.mxu0
    %5979 = vrot.lane.b32.xlu0 %v4337, 56
    %v5980 = vpop.permute.xlu0 %5979
    %v5982 = vsel %vm346, %v5689, 0
    %v5985 = vsel %vm821, %v5980, 0
    %5987 = vmatprep.subr.bf16.mxu0 0
    %5988 = vmatpush1.bf16.msra.mxu0 %v5985
    %5989 = vmatprep.subr.bf16.mxu0 0
    %5990 = vmatpush1.bf16.msra.mxu0 0
    %5991 = vmatprep.subr.bf16.mxu0 0
    %5992 = vmatpush1.bf16.msra.mxu0 0
    %5993 = vmatprep.subr.bf16.mxu0 0
    %5994 = vmatpush1.bf16.msra.mxu0 0
    %5995 = vmatprep.subr.bf16.mxu0 0
    %5996 = vmatpush1.bf16.msra.mxu0 0
    %5997 = vmatprep.subr.bf16.mxu0 0
    %5998 = vmatpush1.bf16.msra.mxu0 0
    %5999 = vmatprep.subr.bf16.mxu0 0
    %6000 = vmatpush1.bf16.msra.mxu0 0
    %6001 = vmatprep.subr.bf16.mxu0 0
    %6002 = vmatpush1.bf16.msra.mxu0 0
    %6003 = vmatprep.subr.bf16.mxu0 0
    %6004 = vmatpush1.bf16.msra.mxu0 0
    %6005 = vmatprep.subr.bf16.mxu0 0
    %6006 = vmatpush1.bf16.msra.mxu0 0
    %6007 = vmatprep.subr.bf16.mxu0 0
    %6008 = vmatpush1.bf16.msra.mxu0 0
    %6009 = vmatprep.subr.bf16.mxu0 0
    %6010 = vmatpush1.bf16.msra.mxu0 0
    %6011 = vmatprep.subr.bf16.mxu0 0
    %6012 = vmatpush1.bf16.msra.mxu0 0
    %6013 = vmatprep.subr.bf16.mxu0 0
    %6014 = vmatpush1.bf16.msra.mxu0 0
    %6015 = vmatprep.subr.bf16.mxu0 0
    %6016 = vmatpush1.bf16.msra.mxu0 0
    %6017 = vmatprep.subr.bf16.mxu0 0
    %6018 = vmatpush1.bf16.msra.mxu0 0
    %6019 = vmatprep.mubr.bf16.mxu0 0
    %6020 = vmatmul.mubr.bf16.gmra.mrb[0].mxu0 %v5982
    %v6021 = vpop.f32.mrb[0].mxu0
    %v6022 = vadd.f32 0.0, %v6021
    %v6023 = vpop.f32.mrb[0].mxu0
    %v6024 = vpop.f32.mrb[0].mxu0
    %v6025 = vpop.f32.mrb[0].mxu0
    %6026 = vdwg.mxu0
    %6027 = vrot.lane.b32.xlu0 %v4338, 56
    %v6028 = vpop.permute.xlu0 %6027
    %v6030 = vsel %vm346, %v5690, 0
    %v6033 = vsel %vm821, %v6028, 0
    %6035 = vmatprep.subr.bf16.mxu0 0
    %6036 = vmatpush1.bf16.msra.mxu0 %v6033
    %6037 = vmatprep.subr.bf16.mxu0 0
    %6038 = vmatpush1.bf16.msra.mxu0 0
    %6039 = vmatprep.subr.bf16.mxu0 0
    %6040 = vmatpush1.bf16.msra.mxu0 0
    %6041 = vmatprep.subr.bf16.mxu0 0
    %6042 = vmatpush1.bf16.msra.mxu0 0
    %6043 = vmatprep.subr.bf16.mxu0 0
    %6044 = vmatpush1.bf16.msra.mxu0 0
    %6045 = vmatprep.subr.bf16.mxu0 0
    %6046 = vmatpush1.bf16.msra.mxu0 0
    %6047 = vmatprep.subr.bf16.mxu0 0
    %6048 = vmatpush1.bf16.msra.mxu0 0
    %6049 = vmatprep.subr.bf16.mxu0 0
    %6050 = vmatpush1.bf16.msra.mxu0 0
    %6051 = vmatprep.subr.bf16.mxu0 0
    %6052 = vmatpush1.bf16.msra.mxu0 0
    %6053 = vmatprep.subr.bf16.mxu0 0
    %6054 = vmatpush1.bf16.msra.mxu0 0
    %6055 = vmatprep.subr.bf16.mxu0 0
    %6056 = vmatpush1.bf16.msra.mxu0 0
    %6057 = vmatprep.subr.bf16.mxu0 0
    %6058 = vmatpush1.bf16.msra.mxu0 0
    %6059 = vmatprep.subr.bf16.mxu0 0
    %6060 = vmatpush1.bf16.msra.mxu0 0
    %6061 = vmatprep.subr.bf16.mxu0 0
    %6062 = vmatpush1.bf16.msra.mxu0 0
    %6063 = vmatprep.subr.bf16.mxu0 0
    %6064 = vmatpush1.bf16.msra.mxu0 0
    %6065 = vmatprep.subr.bf16.mxu0 0
    %6066 = vmatpush1.bf16.msra.mxu0 0
    %6067 = vmatprep.mubr.bf16.mxu0 0
    %6068 = vmatmul.mubr.bf16.gmra.mrb[0].mxu0 %v6030
    %v6069 = vpop.f32.mrb[0].mxu0
    %v6070 = vadd.f32 0.0, %v6069
    %v6071 = vpop.f32.mrb[0].mxu0
    %v6072 = vpop.f32.mrb[0].mxu0
    %v6073 = vpop.f32.mrb[0].mxu0
    %6074 = vdwg.mxu0
    %v6075 = vrcp.pop %v5661
    %v6076 = vrcp.pop %v5664
    %v6077 = vrcp.pop %v5667
    %v6078 = vrcp.pop %v5670
    %v6079 = vrcp.pop %v5673
    %v6080 = vrcp.pop %v5676
    %v6081 = vrcp.pop %v5679
    %v6082 = vrcp.pop %v5682
    %v6083 = vmul.f32 %v5734, %v6075
    %v6084 = vmul.f32 %v5782, %v6076
    %v6085 = vmul.f32 %v5830, %v6077
    %v6086 = vmul.f32 %v5878, %v6078
    %v6087 = vmul.f32 %v5926, %v6079
    %v6088 = vmul.f32 %v5974, %v6080
    %v6089 = vmul.f32 %v6022, %v6081
    %v6090 = vmul.f32 %v6070, %v6082
    %6091 = vrot.lane.b32.xlu0 %v4331, 112
    %v6092 = vpop.permute.xlu0 %6091
    %6093 = vrot.lane.b32.xlu0 %v4331, 80
    %v6094 = vpop.permute.xlu0 %6093
    %v6096 = vsel %vm346, %v6092, 0
    %v6099 = vsel %vm346, %v6094, 0
    %6101 = vmatprep.subr.bf16.mxu0 0
    %6102 = vmatpush1.bf16.xpose.msra.mxu0 %v6099
    %6103 = vmatprep.subr.bf16.mxu0 0
    %6104 = vmatpush1.bf16.xpose.msra.mxu0 0
    %6105 = vmatprep.subr.bf16.mxu0 0
    %6106 = vmatpush1.bf16.xpose.msra.mxu0 0
    %6107 = vmatprep.subr.bf16.mxu0 0
    %6108 = vmatpush1.bf16.xpose.msra.mxu0 0
    %6109 = vmatprep.subr.bf16.mxu0 0
    %6110 = vmatpush1.bf16.xpose.msra.mxu0 0
    %6111 = vmatprep.subr.bf16.mxu0 0
    %6112 = vmatpush1.bf16.xpose.msra.mxu0 0
    %6113 = vmatprep.subr.bf16.mxu0 0
    %6114 = vmatpush1.bf16.xpose.msra.mxu0 0
    %6115 = vmatprep.subr.bf16.mxu0 0
    %6116 = vmatpush1.bf16.xpose.msra.mxu0 0
    %6117 = vmatprep.subr.bf16.mxu0 0
    %6118 = vmatpush1.bf16.xpose.msra.mxu0 0
    %6119 = vmatprep.subr.bf16.mxu0 0
    %6120 = vmatpush1.bf16.xpose.msra.mxu0 0
    %6121 = vmatprep.subr.bf16.mxu0 0
    %6122 = vmatpush1.bf16.xpose.msra.mxu0 0
    %6123 = vmatprep.subr.bf16.mxu0 0
    %6124 = vmatpush1.bf16.xpose.msra.mxu0 0
    %6125 = vmatprep.subr.bf16.mxu0 0
    %6126 = vmatpush1.bf16.xpose.msra.mxu0 0
    %6127 = vmatprep.subr.bf16.mxu0 0
    %6128 = vmatpush1.bf16.xpose.msra.mxu0 0
    %6129 = vmatprep.subr.bf16.mxu0 0
    %6130 = vmatpush1.bf16.xpose.msra.mxu0 0
    %6131 = vmatprep.subr.bf16.mxu0 0
    %6132 = vmatpush1.bf16.xpose.msra.mxu0 0
    %6133 = vmatprep.mubr.bf16.mxu0 0
    %6134 = vmatmul.mubr.bf16.gmra.mrb[0].mxu0 %v6096
    %v6135 = vpop.f32.mrb[0].mxu0
    %v6136 = vadd.f32 0.0, %v6135
    %v6137 = vpop.f32.mrb[0].mxu0
    %v6138 = vpop.f32.mrb[0].mxu0
    %v6139 = vpop.f32.mrb[0].mxu0
    %6140 = vdwg.mxu0
    %6141 = vrot.lane.b32.xlu0 %v4332, 112
    %v6142 = vpop.permute.xlu0 %6141
    %6143 = vrot.lane.b32.xlu0 %v4332, 80
    %v6144 = vpop.permute.xlu0 %6143
    %v6146 = vsel %vm346, %v6142, 0
    %v6149 = vsel %vm346, %v6144, 0
    %6151 = vmatprep.subr.bf16.mxu0 0
    %6152 = vmatpush1.bf16.xpose.msra.mxu0 %v6149
    %6153 = vmatprep.subr.bf16.mxu0 0
    %6154 = vmatpush1.bf16.xpose.msra.mxu0 0
    %6155 = vmatprep.subr.bf16.mxu0 0
    %6156 = vmatpush1.bf16.xpose.msra.mxu0 0
    %6157 = vmatprep.subr.bf16.mxu0 0
    %6158 = vmatpush1.bf16.xpose.msra.mxu0 0
    %6159 = vmatprep.subr.bf16.mxu0 0
    %6160 = vmatpush1.bf16.xpose.msra.mxu0 0
    %6161 = vmatprep.subr.bf16.mxu0 0
    %6162 = vmatpush1.bf16.xpose.msra.mxu0 0
    %6163 = vmatprep.subr.bf16.mxu0 0
    %6164 = vmatpush1.bf16.xpose.msra.mxu0 0
    %6165 = vmatprep.subr.bf16.mxu0 0
    %6166 = vmatpush1.bf16.xpose.msra.mxu0 0
    %6167 = vmatprep.subr.bf16.mxu0 0
    %6168 = vmatpush1.bf16.xpose.msra.mxu0 0
    %6169 = vmatprep.subr.bf16.mxu0 0
    %6170 = vmatpush1.bf16.xpose.msra.mxu0 0
    %6171 = vmatprep.subr.bf16.mxu0 0
    %6172 = vmatpush1.bf16.xpose.msra.mxu0 0
    %6173 = vmatprep.subr.bf16.mxu0 0
    %6174 = vmatpush1.bf16.xpose.msra.mxu0 0
    %6175 = vmatprep.subr.bf16.mxu0 0
    %6176 = vmatpush1.bf16.xpose.msra.mxu0 0
    %6177 = vmatprep.subr.bf16.mxu0 0
    %6178 = vmatpush1.bf16.xpose.msra.mxu0 0
    %6179 = vmatprep.subr.bf16.mxu0 0
    %6180 = vmatpush1.bf16.xpose.msra.mxu0 0
    %6181 = vmatprep.subr.bf16.mxu0 0
    %6182 = vmatpush1.bf16.xpose.msra.mxu0 0
    %6183 = vmatprep.mubr.bf16.mxu0 0
    %6184 = vmatmul.mubr.bf16.gmra.mrb[0].mxu0 %v6146
    %v6185 = vpop.f32.mrb[0].mxu0
    %v6186 = vadd.f32 0.0, %v6185
    %v6187 = vpop.f32.mrb[0].mxu0
    %v6188 = vpop.f32.mrb[0].mxu0
    %v6189 = vpop.f32.mrb[0].mxu0
    %6190 = vdwg.mxu0
    %6191 = vrot.lane.b32.xlu0 %v4333, 112
    %v6192 = vpop.permute.xlu0 %6191
    %6193 = vrot.lane.b32.xlu0 %v4333, 80
    %v6194 = vpop.permute.xlu0 %6193
    %v6196 = vsel %vm346, %v6192, 0
    %v6199 = vsel %vm346, %v6194, 0
    %6201 = vmatprep.subr.bf16.mxu0 0
    %6202 = vmatpush1.bf16.xpose.msra.mxu0 %v6199
    %6203 = vmatprep.subr.bf16.mxu0 0
    %6204 = vmatpush1.bf16.xpose.msra.mxu0 0
    %6205 = vmatprep.subr.bf16.mxu0 0
    %6206 = vmatpush1.bf16.xpose.msra.mxu0 0
    %6207 = vmatprep.subr.bf16.mxu0 0
    %6208 = vmatpush1.bf16.xpose.msra.mxu0 0
    %6209 = vmatprep.subr.bf16.mxu0 0
    %6210 = vmatpush1.bf16.xpose.msra.mxu0 0
    %6211 = vmatprep.subr.bf16.mxu0 0
    %6212 = vmatpush1.bf16.xpose.msra.mxu0 0
    %6213 = vmatprep.subr.bf16.mxu0 0
    %6214 = vmatpush1.bf16.xpose.msra.mxu0 0
    %6215 = vmatprep.subr.bf16.mxu0 0
    %6216 = vmatpush1.bf16.xpose.msra.mxu0 0
    %6217 = vmatprep.subr.bf16.mxu0 0
    %6218 = vmatpush1.bf16.xpose.msra.mxu0 0
    %6219 = vmatprep.subr.bf16.mxu0 0
    %6220 = vmatpush1.bf16.xpose.msra.mxu0 0
    %6221 = vmatprep.subr.bf16.mxu0 0
    %6222 = vmatpush1.bf16.xpose.msra.mxu0 0
    %6223 = vmatprep.subr.bf16.mxu0 0
    %6224 = vmatpush1.bf16.xpose.msra.mxu0 0
    %6225 = vmatprep.subr.bf16.mxu0 0
    %6226 = vmatpush1.bf16.xpose.msra.mxu0 0
    %6227 = vmatprep.subr.bf16.mxu0 0
    %6228 = vmatpush1.bf16.xpose.msra.mxu0 0
    %6229 = vmatprep.subr.bf16.mxu0 0
    %6230 = vmatpush1.bf16.xpose.msra.mxu0 0
    %6231 = vmatprep.subr.bf16.mxu0 0
    %6232 = vmatpush1.bf16.xpose.msra.mxu0 0
    %6233 = vmatprep.mubr.bf16.mxu0 0
    %6234 = vmatmul.mubr.bf16.gmra.mrb[0].mxu0 %v6196
    %v6235 = vpop.f32.mrb[0].mxu0
    %v6236 = vadd.f32 0.0, %v6235
    %v6237 = vpop.f32.mrb[0].mxu0
    %v6238 = vpop.f32.mrb[0].mxu0
    %v6239 = vpop.f32.mrb[0].mxu0
    %6240 = vdwg.mxu0
    %6241 = vrot.lane.b32.xlu0 %v4334, 112
    %v6242 = vpop.permute.xlu0 %6241
    %6243 = vrot.lane.b32.xlu0 %v4334, 80
    %v6244 = vpop.permute.xlu0 %6243
    %v6246 = vsel %vm346, %v6242, 0
    %v6249 = vsel %vm346, %v6244, 0
    %6251 = vmatprep.subr.bf16.mxu0 0
    %6252 = vmatpush1.bf16.xpose.msra.mxu0 %v6249
    %6253 = vmatprep.subr.bf16.mxu0 0
    %6254 = vmatpush1.bf16.xpose.msra.mxu0 0
    %6255 = vmatprep.subr.bf16.mxu0 0
    %6256 = vmatpush1.bf16.xpose.msra.mxu0 0
    %6257 = vmatprep.subr.bf16.mxu0 0
    %6258 = vmatpush1.bf16.xpose.msra.mxu0 0
    %6259 = vmatprep.subr.bf16.mxu0 0
    %6260 = vmatpush1.bf16.xpose.msra.mxu0 0
    %6261 = vmatprep.subr.bf16.mxu0 0
    %6262 = vmatpush1.bf16.xpose.msra.mxu0 0
    %6263 = vmatprep.subr.bf16.mxu0 0
    %6264 = vmatpush1.bf16.xpose.msra.mxu0 0
    %6265 = vmatprep.subr.bf16.mxu0 0
    %6266 = vmatpush1.bf16.xpose.msra.mxu0 0
    %6267 = vmatprep.subr.bf16.mxu0 0
    %6268 = vmatpush1.bf16.xpose.msra.mxu0 0
    %6269 = vmatprep.subr.bf16.mxu0 0
    %6270 = vmatpush1.bf16.xpose.msra.mxu0 0
    %6271 = vmatprep.subr.bf16.mxu0 0
    %6272 = vmatpush1.bf16.xpose.msra.mxu0 0
    %6273 = vmatprep.subr.bf16.mxu0 0
    %6274 = vmatpush1.bf16.xpose.msra.mxu0 0
    %6275 = vmatprep.subr.bf16.mxu0 0
    %6276 = vmatpush1.bf16.xpose.msra.mxu0 0
    %6277 = vmatprep.subr.bf16.mxu0 0
    %6278 = vmatpush1.bf16.xpose.msra.mxu0 0
    %6279 = vmatprep.subr.bf16.mxu0 0
    %6280 = vmatpush1.bf16.xpose.msra.mxu0 0
    %6281 = vmatprep.subr.bf16.mxu0 0
    %6282 = vmatpush1.bf16.xpose.msra.mxu0 0
    %6283 = vmatprep.mubr.bf16.mxu0 0
    %6284 = vmatmul.mubr.bf16.gmra.mrb[0].mxu0 %v6246
    %v6285 = vpop.f32.mrb[0].mxu0
    %v6286 = vadd.f32 0.0, %v6285
    %v6287 = vpop.f32.mrb[0].mxu0
    %v6288 = vpop.f32.mrb[0].mxu0
    %v6289 = vpop.f32.mrb[0].mxu0
    %6290 = vdwg.mxu0
    %6291 = vrot.lane.b32.xlu0 %v4335, 112
    %v6292 = vpop.permute.xlu0 %6291
    %6293 = vrot.lane.b32.xlu0 %v4335, 80
    %v6294 = vpop.permute.xlu0 %6293
    %v6296 = vsel %vm346, %v6292, 0
    %v6299 = vsel %vm346, %v6294, 0
    %6301 = vmatprep.subr.bf16.mxu0 0
    %6302 = vmatpush1.bf16.xpose.msra.mxu0 %v6299
    %6303 = vmatprep.subr.bf16.mxu0 0
    %6304 = vmatpush1.bf16.xpose.msra.mxu0 0
    %6305 = vmatprep.subr.bf16.mxu0 0
    %6306 = vmatpush1.bf16.xpose.msra.mxu0 0
    %6307 = vmatprep.subr.bf16.mxu0 0
    %6308 = vmatpush1.bf16.xpose.msra.mxu0 0
    %6309 = vmatprep.subr.bf16.mxu0 0
    %6310 = vmatpush1.bf16.xpose.msra.mxu0 0
    %6311 = vmatprep.subr.bf16.mxu0 0
    %6312 = vmatpush1.bf16.xpose.msra.mxu0 0
    %6313 = vmatprep.subr.bf16.mxu0 0
    %6314 = vmatpush1.bf16.xpose.msra.mxu0 0
    %6315 = vmatprep.subr.bf16.mxu0 0
    %6316 = vmatpush1.bf16.xpose.msra.mxu0 0
    %6317 = vmatprep.subr.bf16.mxu0 0
    %6318 = vmatpush1.bf16.xpose.msra.mxu0 0
    %6319 = vmatprep.subr.bf16.mxu0 0
    %6320 = vmatpush1.bf16.xpose.msra.mxu0 0
    %6321 = vmatprep.subr.bf16.mxu0 0
    %6322 = vmatpush1.bf16.xpose.msra.mxu0 0
    %6323 = vmatprep.subr.bf16.mxu0 0
    %6324 = vmatpush1.bf16.xpose.msra.mxu0 0
    %6325 = vmatprep.subr.bf16.mxu0 0
    %6326 = vmatpush1.bf16.xpose.msra.mxu0 0
    %6327 = vmatprep.subr.bf16.mxu0 0
    %6328 = vmatpush1.bf16.xpose.msra.mxu0 0
    %6329 = vmatprep.subr.bf16.mxu0 0
    %6330 = vmatpush1.bf16.xpose.msra.mxu0 0
    %6331 = vmatprep.subr.bf16.mxu0 0
    %6332 = vmatpush1.bf16.xpose.msra.mxu0 0
    %6333 = vmatprep.mubr.bf16.mxu0 0
    %6334 = vmatmul.mubr.bf16.gmra.mrb[0].mxu0 %v6296
    %v6335 = vpop.f32.mrb[0].mxu0
    %v6336 = vadd.f32 0.0, %v6335
    %v6337 = vpop.f32.mrb[0].mxu0
    %v6338 = vpop.f32.mrb[0].mxu0
    %v6339 = vpop.f32.mrb[0].mxu0
    %6340 = vdwg.mxu0
    %6341 = vrot.lane.b32.xlu0 %v4336, 112
    %v6342 = vpop.permute.xlu0 %6341
    %6343 = vrot.lane.b32.xlu0 %v4336, 80
    %v6344 = vpop.permute.xlu0 %6343
    %v6346 = vsel %vm346, %v6342, 0
    %v6349 = vsel %vm346, %v6344, 0
    %6351 = vmatprep.subr.bf16.mxu0 0
    %6352 = vmatpush1.bf16.xpose.msra.mxu0 %v6349
    %6353 = vmatprep.subr.bf16.mxu0 0
    %6354 = vmatpush1.bf16.xpose.msra.mxu0 0
    %6355 = vmatprep.subr.bf16.mxu0 0
    %6356 = vmatpush1.bf16.xpose.msra.mxu0 0
    %6357 = vmatprep.subr.bf16.mxu0 0
    %6358 = vmatpush1.bf16.xpose.msra.mxu0 0
    %6359 = vmatprep.subr.bf16.mxu0 0
    %6360 = vmatpush1.bf16.xpose.msra.mxu0 0
    %6361 = vmatprep.subr.bf16.mxu0 0
    %6362 = vmatpush1.bf16.xpose.msra.mxu0 0
    %6363 = vmatprep.subr.bf16.mxu0 0
    %6364 = vmatpush1.bf16.xpose.msra.mxu0 0
    %6365 = vmatprep.subr.bf16.mxu0 0
    %6366 = vmatpush1.bf16.xpose.msra.mxu0 0
    %6367 = vmatprep.subr.bf16.mxu0 0
    %6368 = vmatpush1.bf16.xpose.msra.mxu0 0
    %6369 = vmatprep.subr.bf16.mxu0 0
    %6370 = vmatpush1.bf16.xpose.msra.mxu0 0
    %6371 = vmatprep.subr.bf16.mxu0 0
    %6372 = vmatpush1.bf16.xpose.msra.mxu0 0
    %6373 = vmatprep.subr.bf16.mxu0 0
    %6374 = vmatpush1.bf16.xpose.msra.mxu0 0
    %6375 = vmatprep.subr.bf16.mxu0 0
    %6376 = vmatpush1.bf16.xpose.msra.mxu0 0
    %6377 = vmatprep.subr.bf16.mxu0 0
    %6378 = vmatpush1.bf16.xpose.msra.mxu0 0
    %6379 = vmatprep.subr.bf16.mxu0 0
    %6380 = vmatpush1.bf16.xpose.msra.mxu0 0
    %6381 = vmatprep.subr.bf16.mxu0 0
    %6382 = vmatpush1.bf16.xpose.msra.mxu0 0
    %6383 = vmatprep.mubr.bf16.mxu0 0
    %6384 = vmatmul.mubr.bf16.gmra.mrb[0].mxu0 %v6346
    %v6385 = vpop.f32.mrb[0].mxu0
    %v6386 = vadd.f32 0.0, %v6385
    %v6387 = vpop.f32.mrb[0].mxu0
    %v6388 = vpop.f32.mrb[0].mxu0
    %v6389 = vpop.f32.mrb[0].mxu0
    %6390 = vdwg.mxu0
    %6391 = vrot.lane.b32.xlu0 %v4337, 112
    %v6392 = vpop.permute.xlu0 %6391
    %6393 = vrot.lane.b32.xlu0 %v4337, 80
    %v6394 = vpop.permute.xlu0 %6393
    %v6396 = vsel %vm346, %v6392, 0
    %v6399 = vsel %vm346, %v6394, 0
    %6401 = vmatprep.subr.bf16.mxu0 0
    %6402 = vmatpush1.bf16.xpose.msra.mxu0 %v6399
    %6403 = vmatprep.subr.bf16.mxu0 0
    %6404 = vmatpush1.bf16.xpose.msra.mxu0 0
    %6405 = vmatprep.subr.bf16.mxu0 0
    %6406 = vmatpush1.bf16.xpose.msra.mxu0 0
    %6407 = vmatprep.subr.bf16.mxu0 0
    %6408 = vmatpush1.bf16.xpose.msra.mxu0 0
    %6409 = vmatprep.subr.bf16.mxu0 0
    %6410 = vmatpush1.bf16.xpose.msra.mxu0 0
    %6411 = vmatprep.subr.bf16.mxu0 0
    %6412 = vmatpush1.bf16.xpose.msra.mxu0 0
    %6413 = vmatprep.subr.bf16.mxu0 0
    %6414 = vmatpush1.bf16.xpose.msra.mxu0 0
    %6415 = vmatprep.subr.bf16.mxu0 0
    %6416 = vmatpush1.bf16.xpose.msra.mxu0 0
    %6417 = vmatprep.subr.bf16.mxu0 0
    %6418 = vmatpush1.bf16.xpose.msra.mxu0 0
    %6419 = vmatprep.subr.bf16.mxu0 0
    %6420 = vmatpush1.bf16.xpose.msra.mxu0 0
    %6421 = vmatprep.subr.bf16.mxu0 0
    %6422 = vmatpush1.bf16.xpose.msra.mxu0 0
    %6423 = vmatprep.subr.bf16.mxu0 0
    %6424 = vmatpush1.bf16.xpose.msra.mxu0 0
    %6425 = vmatprep.subr.bf16.mxu0 0
    %6426 = vmatpush1.bf16.xpose.msra.mxu0 0
    %6427 = vmatprep.subr.bf16.mxu0 0
    %6428 = vmatpush1.bf16.xpose.msra.mxu0 0
    %6429 = vmatprep.subr.bf16.mxu0 0
    %6430 = vmatpush1.bf16.xpose.msra.mxu0 0
    %6431 = vmatprep.subr.bf16.mxu0 0
    %6432 = vmatpush1.bf16.xpose.msra.mxu0 0
    %6433 = vmatprep.mubr.bf16.mxu0 0
    %6434 = vmatmul.mubr.bf16.gmra.mrb[0].mxu0 %v6396
    %v6435 = vpop.f32.mrb[0].mxu0
    %v6436 = vadd.f32 0.0, %v6435
    %v6437 = vpop.f32.mrb[0].mxu0
    %v6438 = vpop.f32.mrb[0].mxu0
    %v6439 = vpop.f32.mrb[0].mxu0
    %6440 = vdwg.mxu0
    %6441 = vrot.lane.b32.xlu0 %v4338, 112
    %v6442 = vpop.permute.xlu0 %6441
    %6443 = vrot.lane.b32.xlu0 %v4338, 80
    %v6444 = vpop.permute.xlu0 %6443
    %v6446 = vsel %vm346, %v6442, 0
    %v6449 = vsel %vm346, %v6444, 0
    %6451 = vmatprep.subr.bf16.mxu0 0
    %6452 = vmatpush1.bf16.xpose.msra.mxu0 %v6449
    %6453 = vmatprep.subr.bf16.mxu0 0
    %6454 = vmatpush1.bf16.xpose.msra.mxu0 0
    %6455 = vmatprep.subr.bf16.mxu0 0
    %6456 = vmatpush1.bf16.xpose.msra.mxu0 0
    %6457 = vmatprep.subr.bf16.mxu0 0
    %6458 = vmatpush1.bf16.xpose.msra.mxu0 0
    %6459 = vmatprep.subr.bf16.mxu0 0
    %6460 = vmatpush1.bf16.xpose.msra.mxu0 0
    %6461 = vmatprep.subr.bf16.mxu0 0
    %6462 = vmatpush1.bf16.xpose.msra.mxu0 0
    %6463 = vmatprep.subr.bf16.mxu0 0
    %6464 = vmatpush1.bf16.xpose.msra.mxu0 0
    %6465 = vmatprep.subr.bf16.mxu0 0
    %6466 = vmatpush1.bf16.xpose.msra.mxu0 0
    %6467 = vmatprep.subr.bf16.mxu0 0
    %6468 = vmatpush1.bf16.xpose.msra.mxu0 0
    %6469 = vmatprep.subr.bf16.mxu0 0
    %6470 = vmatpush1.bf16.xpose.msra.mxu0 0
    %6471 = vmatprep.subr.bf16.mxu0 0
    %6472 = vmatpush1.bf16.xpose.msra.mxu0 0
    %6473 = vmatprep.subr.bf16.mxu0 0
    %6474 = vmatpush1.bf16.xpose.msra.mxu0 0
    %6475 = vmatprep.subr.bf16.mxu0 0
    %6476 = vmatpush1.bf16.xpose.msra.mxu0 0
    %6477 = vmatprep.subr.bf16.mxu0 0
    %6478 = vmatpush1.bf16.xpose.msra.mxu0 0
    %6479 = vmatprep.subr.bf16.mxu0 0
    %6480 = vmatpush1.bf16.xpose.msra.mxu0 0
    %6481 = vmatprep.subr.bf16.mxu0 0
    %6482 = vmatpush1.bf16.xpose.msra.mxu0 0
    %6483 = vmatprep.mubr.bf16.mxu0 0
    %6484 = vmatmul.mubr.bf16.gmra.mrb[0].mxu0 %v6446
    %v6485 = vpop.f32.mrb[0].mxu0
    %v6486 = vadd.f32 0.0, %v6485
    %v6487 = vpop.f32.mrb[0].mxu0
    %v6488 = vpop.f32.mrb[0].mxu0
    %v6489 = vpop.f32.mrb[0].mxu0
    %6490 = vdwg.mxu0
    %v6491 = vsel %vm346, %v6136, -inf
    %6492 = vmax.xlane.f32.xlu0 %v6491
    %v6493 = vpop.xlane.xlu0 %6492
    %v6494 = vsel %vm346, %v6186, -inf
    %6495 = vmax.xlane.f32.xlu0 %v6494
    %v6496 = vpop.xlane.xlu0 %6495
    %v6497 = vsel %vm346, %v6236, -inf
    %6498 = vmax.xlane.f32.xlu0 %v6497
    %v6499 = vpop.xlane.xlu0 %6498
    %v6500 = vsel %vm346, %v6286, -inf
    %6501 = vmax.xlane.f32.xlu0 %v6500
    %v6502 = vpop.xlane.xlu0 %6501
    %v6503 = vsel %vm346, %v6336, -inf
    %6504 = vmax.xlane.f32.xlu0 %v6503
    %v6505 = vpop.xlane.xlu0 %6504
    %v6506 = vsel %vm346, %v6386, -inf
    %6507 = vmax.xlane.f32.xlu0 %v6506
    %v6508 = vpop.xlane.xlu0 %6507
    %v6509 = vsel %vm346, %v6436, -inf
    %6510 = vmax.xlane.f32.xlu0 %v6509
    %v6511 = vpop.xlane.xlu0 %6510
    %v6512 = vsel %vm346, %v6486, -inf
    %6513 = vmax.xlane.f32.xlu0 %v6512
    %v6514 = vpop.xlane.xlu0 %6513
    %v6515 = vsub.f32 %v6136, %v6493
    %v6516 = vsub.f32 %v6186, %v6496
    %v6517 = vsub.f32 %v6236, %v6499
    %v6518 = vsub.f32 %v6286, %v6502
    %v6519 = vsub.f32 %v6336, %v6505
    %v6520 = vsub.f32 %v6386, %v6508
    %v6521 = vsub.f32 %v6436, %v6511
    %v6522 = vsub.f32 %v6486, %v6514
    %v6523 = vmul.f32 %v6515, 1.442695
    %v6524 = vpow.pop %v6523
    %v6525 = vmul.f32 %v6516, 1.442695
    %v6526 = vpow.pop %v6525
    %v6527 = vmul.f32 %v6517, 1.442695
    %v6528 = vpow.pop %v6527
    %v6529 = vmul.f32 %v6518, 1.442695
    %v6530 = vpow.pop %v6529
    %v6531 = vmul.f32 %v6519, 1.442695
    %v6532 = vpow.pop %v6531
    %v6533 = vmul.f32 %v6520, 1.442695
    %v6534 = vpow.pop %v6533
    %v6535 = vmul.f32 %v6521, 1.442695
    %v6536 = vpow.pop %v6535
    %v6537 = vmul.f32 %v6522, 1.442695
    %v6538 = vpow.pop %v6537
    %v6539 = vsel %vm346, %v6524, 0.0
    %6540 = vadd.xlane.f32.xlu0 %v6539
    %v6541 = vpop.xlane.xlu0 %6540
    %v6542 = vsel %vm346, %v6526, 0.0
    %6543 = vadd.xlane.f32.xlu0 %v6542
    %v6544 = vpop.xlane.xlu0 %6543
    %v6545 = vsel %vm346, %v6528, 0.0
    %6546 = vadd.xlane.f32.xlu0 %v6545
    %v6547 = vpop.xlane.xlu0 %6546
    %v6548 = vsel %vm346, %v6530, 0.0
    %6549 = vadd.xlane.f32.xlu0 %v6548
    %v6550 = vpop.xlane.xlu0 %6549
    %v6551 = vsel %vm346, %v6532, 0.0
    %6552 = vadd.xlane.f32.xlu0 %v6551
    %v6553 = vpop.xlane.xlu0 %6552
    %v6554 = vsel %vm346, %v6534, 0.0
    %6555 = vadd.xlane.f32.xlu0 %v6554
    %v6556 = vpop.xlane.xlu0 %6555
    %v6557 = vsel %vm346, %v6536, 0.0
    %6558 = vadd.xlane.f32.xlu0 %v6557
    %v6559 = vpop.xlane.xlu0 %6558
    %v6560 = vsel %vm346, %v6538, 0.0
    %6561 = vadd.xlane.f32.xlu0 %v6560
    %v6562 = vpop.xlane.xlu0 %6561
    %v6563 = vpack.c.bf16 %v6524, %v6524
    %v6564 = vpack.c.bf16 %v6526, %v6526
    %v6565 = vpack.c.bf16 %v6528, %v6528
    %v6566 = vpack.c.bf16 %v6530, %v6530
    %v6567 = vpack.c.bf16 %v6532, %v6532
    %v6568 = vpack.c.bf16 %v6534, %v6534
    %v6569 = vpack.c.bf16 %v6536, %v6536
    %v6570 = vpack.c.bf16 %v6538, %v6538
    %6571 = vrot.lane.b32.xlu0 %v4331, 48
    %v6572 = vpop.permute.xlu0 %6571
    %v6574 = vsel %vm346, %v6563, 0
    %v6577 = vsel %vm821, %v6572, 0
    %6579 = vmatprep.subr.bf16.mxu0 0
    %6580 = vmatpush1.bf16.msra.mxu0 %v6577
    %6581 = vmatprep.subr.bf16.mxu0 0
    %6582 = vmatpush1.bf16.msra.mxu0 0
    %6583 = vmatprep.subr.bf16.mxu0 0
    %6584 = vmatpush1.bf16.msra.mxu0 0
    %6585 = vmatprep.subr.bf16.mxu0 0
    %6586 = vmatpush1.bf16.msra.mxu0 0
    %6587 = vmatprep.subr.bf16.mxu0 0
    %6588 = vmatpush1.bf16.msra.mxu0 0
    %6589 = vmatprep.subr.bf16.mxu0 0
    %6590 = vmatpush1.bf16.msra.mxu0 0
    %6591 = vmatprep.subr.bf16.mxu0 0
    %6592 = vmatpush1.bf16.msra.mxu0 0
    %6593 = vmatprep.subr.bf16.mxu0 0
    %6594 = vmatpush1.bf16.msra.mxu0 0
    %6595 = vmatprep.subr.bf16.mxu0 0
    %6596 = vmatpush1.bf16.msra.mxu0 0
    %6597 = vmatprep.subr.bf16.mxu0 0
    %6598 = vmatpush1.bf16.msra.mxu0 0
    %6599 = vmatprep.subr.bf16.mxu0 0
    %6600 = vmatpush1.bf16.msra.mxu0 0
    %6601 = vmatprep.subr.bf16.mxu0 0
    %6602 = vmatpush1.bf16.msra.mxu0 0
    %6603 = vmatprep.subr.bf16.mxu0 0
    %6604 = vmatpush1.bf16.msra.mxu0 0
    %6605 = vmatprep.subr.bf16.mxu0 0
    %6606 = vmatpush1.bf16.msra.mxu0 0
    %6607 = vmatprep.subr.bf16.mxu0 0
    %6608 = vmatpush1.bf16.msra.mxu0 0
    %6609 = vmatprep.subr.bf16.mxu0 0
    %6610 = vmatpush1.bf16.msra.mxu0 0
    %6611 = vmatprep.mubr.bf16.mxu0 0
    %6612 = vmatmul.mubr.bf16.gmra.mrb[0].mxu0 %v6574
    %v6613 = vpop.f32.mrb[0].mxu0
    %v6614 = vadd.f32 0.0, %v6613
    %v6615 = vpop.f32.mrb[0].mxu0
    %v6616 = vpop.f32.mrb[0].mxu0
    %v6617 = vpop.f32.mrb[0].mxu0
    %6618 = vdwg.mxu0
    %6619 = vrot.lane.b32.xlu0 %v4332, 48
    %v6620 = vpop.permute.xlu0 %6619
    %v6622 = vsel %vm346, %v6564, 0
    %v6625 = vsel %vm821, %v6620, 0
    %6627 = vmatprep.subr.bf16.mxu0 0
    %6628 = vmatpush1.bf16.msra.mxu0 %v6625
    %6629 = vmatprep.subr.bf16.mxu0 0
    %6630 = vmatpush1.bf16.msra.mxu0 0
    %6631 = vmatprep.subr.bf16.mxu0 0
    %6632 = vmatpush1.bf16.msra.mxu0 0
    %6633 = vmatprep.subr.bf16.mxu0 0
    %6634 = vmatpush1.bf16.msra.mxu0 0
    %6635 = vmatprep.subr.bf16.mxu0 0
    %6636 = vmatpush1.bf16.msra.mxu0 0
    %6637 = vmatprep.subr.bf16.mxu0 0
    %6638 = vmatpush1.bf16.msra.mxu0 0
    %6639 = vmatprep.subr.bf16.mxu0 0
    %6640 = vmatpush1.bf16.msra.mxu0 0
    %6641 = vmatprep.subr.bf16.mxu0 0
    %6642 = vmatpush1.bf16.msra.mxu0 0
    %6643 = vmatprep.subr.bf16.mxu0 0
    %6644 = vmatpush1.bf16.msra.mxu0 0
    %6645 = vmatprep.subr.bf16.mxu0 0
    %6646 = vmatpush1.bf16.msra.mxu0 0
    %6647 = vmatprep.subr.bf16.mxu0 0
    %6648 = vmatpush1.bf16.msra.mxu0 0
    %6649 = vmatprep.subr.bf16.mxu0 0
    %6650 = vmatpush1.bf16.msra.mxu0 0
    %6651 = vmatprep.subr.bf16.mxu0 0
    %6652 = vmatpush1.bf16.msra.mxu0 0
    %6653 = vmatprep.subr.bf16.mxu0 0
    %6654 = vmatpush1.bf16.msra.mxu0 0
    %6655 = vmatprep.subr.bf16.mxu0 0
    %6656 = vmatpush1.bf16.msra.mxu0 0
    %6657 = vmatprep.subr.bf16.mxu0 0
    %6658 = vmatpush1.bf16.msra.mxu0 0
    %6659 = vmatprep.mubr.bf16.mxu0 0
    %6660 = vmatmul.mubr.bf16.gmra.mrb[0].mxu0 %v6622
    %v6661 = vpop.f32.mrb[0].mxu0
    %v6662 = vadd.f32 0.0, %v6661
    %v6663 = vpop.f32.mrb[0].mxu0
    %v6664 = vpop.f32.mrb[0].mxu0
    %v6665 = vpop.f32.mrb[0].mxu0
    %6666 = vdwg.mxu0
    %6667 = vrot.lane.b32.xlu0 %v4333, 48
    %v6668 = vpop.permute.xlu0 %6667
    %v6670 = vsel %vm346, %v6565, 0
    %v6673 = vsel %vm821, %v6668, 0
    %6675 = vmatprep.subr.bf16.mxu0 0
    %6676 = vmatpush1.bf16.msra.mxu0 %v6673
    %6677 = vmatprep.subr.bf16.mxu0 0
    %6678 = vmatpush1.bf16.msra.mxu0 0
    %6679 = vmatprep.subr.bf16.mxu0 0
    %6680 = vmatpush1.bf16.msra.mxu0 0
    %6681 = vmatprep.subr.bf16.mxu0 0
    %6682 = vmatpush1.bf16.msra.mxu0 0
    %6683 = vmatprep.subr.bf16.mxu0 0
    %6684 = vmatpush1.bf16.msra.mxu0 0
    %6685 = vmatprep.subr.bf16.mxu0 0
    %6686 = vmatpush1.bf16.msra.mxu0 0
    %6687 = vmatprep.subr.bf16.mxu0 0
    %6688 = vmatpush1.bf16.msra.mxu0 0
    %6689 = vmatprep.subr.bf16.mxu0 0
    %6690 = vmatpush1.bf16.msra.mxu0 0
    %6691 = vmatprep.subr.bf16.mxu0 0
    %6692 = vmatpush1.bf16.msra.mxu0 0
    %6693 = vmatprep.subr.bf16.mxu0 0
    %6694 = vmatpush1.bf16.msra.mxu0 0
    %6695 = vmatprep.subr.bf16.mxu0 0
    %6696 = vmatpush1.bf16.msra.mxu0 0
    %6697 = vmatprep.subr.bf16.mxu0 0
    %6698 = vmatpush1.bf16.msra.mxu0 0
    %6699 = vmatprep.subr.bf16.mxu0 0
    %6700 = vmatpush1.bf16.msra.mxu0 0
    %6701 = vmatprep.subr.bf16.mxu0 0
    %6702 = vmatpush1.bf16.msra.mxu0 0
    %6703 = vmatprep.subr.bf16.mxu0 0
    %6704 = vmatpush1.bf16.msra.mxu0 0
    %6705 = vmatprep.subr.bf16.mxu0 0
    %6706 = vmatpush1.bf16.msra.mxu0 0
    %6707 = vmatprep.mubr.bf16.mxu0 0
    %6708 = vmatmul.mubr.bf16.gmra.mrb[0].mxu0 %v6670
    %v6709 = vpop.f32.mrb[0].mxu0
    %v6710 = vadd.f32 0.0, %v6709
    %v6711 = vpop.f32.mrb[0].mxu0
    %v6712 = vpop.f32.mrb[0].mxu0
    %v6713 = vpop.f32.mrb[0].mxu0
    %6714 = vdwg.mxu0
    %6715 = vrot.lane.b32.xlu0 %v4334, 48
    %v6716 = vpop.permute.xlu0 %6715
    %v6718 = vsel %vm346, %v6566, 0
    %v6721 = vsel %vm821, %v6716, 0
    %6723 = vmatprep.subr.bf16.mxu0 0
    %6724 = vmatpush1.bf16.msra.mxu0 %v6721
    %6725 = vmatprep.subr.bf16.mxu0 0
    %6726 = vmatpush1.bf16.msra.mxu0 0
    %6727 = vmatprep.subr.bf16.mxu0 0
    %6728 = vmatpush1.bf16.msra.mxu0 0
    %6729 = vmatprep.subr.bf16.mxu0 0
    %6730 = vmatpush1.bf16.msra.mxu0 0
    %6731 = vmatprep.subr.bf16.mxu0 0
    %6732 = vmatpush1.bf16.msra.mxu0 0
    %6733 = vmatprep.subr.bf16.mxu0 0
    %6734 = vmatpush1.bf16.msra.mxu0 0
    %6735 = vmatprep.subr.bf16.mxu0 0
    %6736 = vmatpush1.bf16.msra.mxu0 0
    %6737 = vmatprep.subr.bf16.mxu0 0
    %6738 = vmatpush1.bf16.msra.mxu0 0
    %6739 = vmatprep.subr.bf16.mxu0 0
    %6740 = vmatpush1.bf16.msra.mxu0 0
    %6741 = vmatprep.subr.bf16.mxu0 0
    %6742 = vmatpush1.bf16.msra.mxu0 0
    %6743 = vmatprep.subr.bf16.mxu0 0
    %6744 = vmatpush1.bf16.msra.mxu0 0
    %6745 = vmatprep.subr.bf16.mxu0 0
    %6746 = vmatpush1.bf16.msra.mxu0 0
    %6747 = vmatprep.subr.bf16.mxu0 0
    %6748 = vmatpush1.bf16.msra.mxu0 0
    %6749 = vmatprep.subr.bf16.mxu0 0
    %6750 = vmatpush1.bf16.msra.mxu0 0
    %6751 = vmatprep.subr.bf16.mxu0 0
    %6752 = vmatpush1.bf16.msra.mxu0 0
    %6753 = vmatprep.subr.bf16.mxu0 0
    %6754 = vmatpush1.bf16.msra.mxu0 0
    %6755 = vmatprep.mubr.bf16.mxu0 0
    %6756 = vmatmul.mubr.bf16.gmra.mrb[0].mxu0 %v6718
    %v6757 = vpop.f32.mrb[0].mxu0
    %v6758 = vadd.f32 0.0, %v6757
    %v6759 = vpop.f32.mrb[0].mxu0
    %v6760 = vpop.f32.mrb[0].mxu0
    %v6761 = vpop.f32.mrb[0].mxu0
    %6762 = vdwg.mxu0
    %6763 = vrot.lane.b32.xlu0 %v4335, 48
    %v6764 = vpop.permute.xlu0 %6763
    %v6766 = vsel %vm346, %v6567, 0
    %v6769 = vsel %vm821, %v6764, 0
    %6771 = vmatprep.subr.bf16.mxu0 0
    %6772 = vmatpush1.bf16.msra.mxu0 %v6769
    %6773 = vmatprep.subr.bf16.mxu0 0
    %6774 = vmatpush1.bf16.msra.mxu0 0
    %6775 = vmatprep.subr.bf16.mxu0 0
    %6776 = vmatpush1.bf16.msra.mxu0 0
    %6777 = vmatprep.subr.bf16.mxu0 0
    %6778 = vmatpush1.bf16.msra.mxu0 0
    %6779 = vmatprep.subr.bf16.mxu0 0
    %6780 = vmatpush1.bf16.msra.mxu0 0
    %6781 = vmatprep.subr.bf16.mxu0 0
    %6782 = vmatpush1.bf16.msra.mxu0 0
    %6783 = vmatprep.subr.bf16.mxu0 0
    %6784 = vmatpush1.bf16.msra.mxu0 0
    %6785 = vmatprep.subr.bf16.mxu0 0
    %6786 = vmatpush1.bf16.msra.mxu0 0
    %6787 = vmatprep.subr.bf16.mxu0 0
    %6788 = vmatpush1.bf16.msra.mxu0 0
    %6789 = vmatprep.subr.bf16.mxu0 0
    %6790 = vmatpush1.bf16.msra.mxu0 0
    %6791 = vmatprep.subr.bf16.mxu0 0
    %6792 = vmatpush1.bf16.msra.mxu0 0
    %6793 = vmatprep.subr.bf16.mxu0 0
    %6794 = vmatpush1.bf16.msra.mxu0 0
    %6795 = vmatprep.subr.bf16.mxu0 0
    %6796 = vmatpush1.bf16.msra.mxu0 0
    %6797 = vmatprep.subr.bf16.mxu0 0
    %6798 = vmatpush1.bf16.msra.mxu0 0
    %6799 = vmatprep.subr.bf16.mxu0 0
    %6800 = vmatpush1.bf16.msra.mxu0 0
    %6801 = vmatprep.subr.bf16.mxu0 0
    %6802 = vmatpush1.bf16.msra.mxu0 0
    %6803 = vmatprep.mubr.bf16.mxu0 0
    %6804 = vmatmul.mubr.bf16.gmra.mrb[0].mxu0 %v6766
    %v6805 = vpop.f32.mrb[0].mxu0
    %v6806 = vadd.f32 0.0, %v6805
    %v6807 = vpop.f32.mrb[0].mxu0
    %v6808 = vpop.f32.mrb[0].mxu0
    %v6809 = vpop.f32.mrb[0].mxu0
    %6810 = vdwg.mxu0
    %6811 = vrot.lane.b32.xlu0 %v4336, 48
    %v6812 = vpop.permute.xlu0 %6811
    %v6814 = vsel %vm346, %v6568, 0
    %v6817 = vsel %vm821, %v6812, 0
    %6819 = vmatprep.subr.bf16.mxu0 0
    %6820 = vmatpush1.bf16.msra.mxu0 %v6817
    %6821 = vmatprep.subr.bf16.mxu0 0
    %6822 = vmatpush1.bf16.msra.mxu0 0
    %6823 = vmatprep.subr.bf16.mxu0 0
    %6824 = vmatpush1.bf16.msra.mxu0 0
    %6825 = vmatprep.subr.bf16.mxu0 0
    %6826 = vmatpush1.bf16.msra.mxu0 0
    %6827 = vmatprep.subr.bf16.mxu0 0
    %6828 = vmatpush1.bf16.msra.mxu0 0
    %6829 = vmatprep.subr.bf16.mxu0 0
    %6830 = vmatpush1.bf16.msra.mxu0 0
    %6831 = vmatprep.subr.bf16.mxu0 0
    %6832 = vmatpush1.bf16.msra.mxu0 0
    %6833 = vmatprep.subr.bf16.mxu0 0
    %6834 = vmatpush1.bf16.msra.mxu0 0
    %6835 = vmatprep.subr.bf16.mxu0 0
    %6836 = vmatpush1.bf16.msra.mxu0 0
    %6837 = vmatprep.subr.bf16.mxu0 0
    %6838 = vmatpush1.bf16.msra.mxu0 0
    %6839 = vmatprep.subr.bf16.mxu0 0
    %6840 = vmatpush1.bf16.msra.mxu0 0
    %6841 = vmatprep.subr.bf16.mxu0 0
    %6842 = vmatpush1.bf16.msra.mxu0 0
    %6843 = vmatprep.subr.bf16.mxu0 0
    %6844 = vmatpush1.bf16.msra.mxu0 0
    %6845 = vmatprep.subr.bf16.mxu0 0
    %6846 = vmatpush1.bf16.msra.mxu0 0
    %6847 = vmatprep.subr.bf16.mxu0 0
    %6848 = vmatpush1.bf16.msra.mxu0 0
    %6849 = vmatprep.subr.bf16.mxu0 0
    %6850 = vmatpush1.bf16.msra.mxu0 0
    %6851 = vmatprep.mubr.bf16.mxu0 0
    %6852 = vmatmul.mubr.bf16.gmra.mrb[0].mxu0 %v6814
    %v6853 = vpop.f32.mrb[0].mxu0
    %v6854 = vadd.f32 0.0, %v6853
    %v6855 = vpop.f32.mrb[0].mxu0
    %v6856 = vpop.f32.mrb[0].mxu0
    %v6857 = vpop.f32.mrb[0].mxu0
    %6858 = vdwg.mxu0
    %6859 = vrot.lane.b32.xlu0 %v4337, 48
    %v6860 = vpop.permute.xlu0 %6859
    %v6862 = vsel %vm346, %v6569, 0
    %v6865 = vsel %vm821, %v6860, 0
    %6867 = vmatprep.subr.bf16.mxu0 0
    %6868 = vmatpush1.bf16.msra.mxu0 %v6865
    %6869 = vmatprep.subr.bf16.mxu0 0
    %6870 = vmatpush1.bf16.msra.mxu0 0
    %6871 = vmatprep.subr.bf16.mxu0 0
    %6872 = vmatpush1.bf16.msra.mxu0 0
    %6873 = vmatprep.subr.bf16.mxu0 0
    %6874 = vmatpush1.bf16.msra.mxu0 0
    %6875 = vmatprep.subr.bf16.mxu0 0
    %6876 = vmatpush1.bf16.msra.mxu0 0
    %6877 = vmatprep.subr.bf16.mxu0 0
    %6878 = vmatpush1.bf16.msra.mxu0 0
    %6879 = vmatprep.subr.bf16.mxu0 0
    %6880 = vmatpush1.bf16.msra.mxu0 0
    %6881 = vmatprep.subr.bf16.mxu0 0
    %6882 = vmatpush1.bf16.msra.mxu0 0
    %6883 = vmatprep.subr.bf16.mxu0 0
    %6884 = vmatpush1.bf16.msra.mxu0 0
    %6885 = vmatprep.subr.bf16.mxu0 0
    %6886 = vmatpush1.bf16.msra.mxu0 0
    %6887 = vmatprep.subr.bf16.mxu0 0
    %6888 = vmatpush1.bf16.msra.mxu0 0
    %6889 = vmatprep.subr.bf16.mxu0 0
    %6890 = vmatpush1.bf16.msra.mxu0 0
    %6891 = vmatprep.subr.bf16.mxu0 0
    %6892 = vmatpush1.bf16.msra.mxu0 0
    %6893 = vmatprep.subr.bf16.mxu0 0
    %6894 = vmatpush1.bf16.msra.mxu0 0
    %6895 = vmatprep.subr.bf16.mxu0 0
    %6896 = vmatpush1.bf16.msra.mxu0 0
    %6897 = vmatprep.subr.bf16.mxu0 0
    %6898 = vmatpush1.bf16.msra.mxu0 0
    %6899 = vmatprep.mubr.bf16.mxu0 0
    %6900 = vmatmul.mubr.bf16.gmra.mrb[0].mxu0 %v6862
    %v6901 = vpop.f32.mrb[0].mxu0
    %v6902 = vadd.f32 0.0, %v6901
    %v6903 = vpop.f32.mrb[0].mxu0
    %v6904 = vpop.f32.mrb[0].mxu0
    %v6905 = vpop.f32.mrb[0].mxu0
    %6906 = vdwg.mxu0
    %6907 = vrot.lane.b32.xlu0 %v4338, 48
    %v6908 = vpop.permute.xlu0 %6907
    %v6910 = vsel %vm346, %v6570, 0
    %v6913 = vsel %vm821, %v6908, 0
    %6915 = vmatprep.subr.bf16.mxu0 0
    %6916 = vmatpush1.bf16.msra.mxu0 %v6913
    %6917 = vmatprep.subr.bf16.mxu0 0
    %6918 = vmatpush1.bf16.msra.mxu0 0
    %6919 = vmatprep.subr.bf16.mxu0 0
    %6920 = vmatpush1.bf16.msra.mxu0 0
    %6921 = vmatprep.subr.bf16.mxu0 0
    %6922 = vmatpush1.bf16.msra.mxu0 0
    %6923 = vmatprep.subr.bf16.mxu0 0
    %6924 = vmatpush1.bf16.msra.mxu0 0
    %6925 = vmatprep.subr.bf16.mxu0 0
    %6926 = vmatpush1.bf16.msra.mxu0 0
    %6927 = vmatprep.subr.bf16.mxu0 0
    %6928 = vmatpush1.bf16.msra.mxu0 0
    %6929 = vmatprep.subr.bf16.mxu0 0
    %6930 = vmatpush1.bf16.msra.mxu0 0
    %6931 = vmatprep.subr.bf16.mxu0 0
    %6932 = vmatpush1.bf16.msra.mxu0 0
    %6933 = vmatprep.subr.bf16.mxu0 0
    %6934 = vmatpush1.bf16.msra.mxu0 0
    %6935 = vmatprep.subr.bf16.mxu0 0
    %6936 = vmatpush1.bf16.msra.mxu0 0
    %6937 = vmatprep.subr.bf16.mxu0 0
    %6938 = vmatpush1.bf16.msra.mxu0 0
    %6939 = vmatprep.subr.bf16.mxu0 0
    %6940 = vmatpush1.bf16.msra.mxu0 0
    %6941 = vmatprep.subr.bf16.mxu0 0
    %6942 = vmatpush1.bf16.msra.mxu0 0
    %6943 = vmatprep.subr.bf16.mxu0 0
    %6944 = vmatpush1.bf16.msra.mxu0 0
    %6945 = vmatprep.subr.bf16.mxu0 0
    %6946 = vmatpush1.bf16.msra.mxu0 0
    %6947 = vmatprep.mubr.bf16.mxu0 0
    %6948 = vmatmul.mubr.bf16.gmra.mrb[0].mxu0 %v6910
    %v6949 = vpop.f32.mrb[0].mxu0
    %v6950 = vadd.f32 0.0, %v6949
    %v6951 = vpop.f32.mrb[0].mxu0
    %v6952 = vpop.f32.mrb[0].mxu0
    %v6953 = vpop.f32.mrb[0].mxu0
    %6954 = vdwg.mxu0
    %v6955 = vrcp.pop %v6541
    %v6956 = vrcp.pop %v6544
    %v6957 = vrcp.pop %v6547
    %v6958 = vrcp.pop %v6550
    %v6959 = vrcp.pop %v6553
    %v6960 = vrcp.pop %v6556
    %v6961 = vrcp.pop %v6559
    %v6962 = vrcp.pop %v6562
    %v6963 = vmul.f32 %v6614, %v6955
    %v6964 = vmul.f32 %v6662, %v6956
    %v6965 = vmul.f32 %v6710, %v6957
    %v6966 = vmul.f32 %v6758, %v6958
    %v6967 = vmul.f32 %v6806, %v6959
    %v6968 = vmul.f32 %v6854, %v6960
    %v6969 = vmul.f32 %v6902, %v6961
    %v6970 = vmul.f32 %v6950, %v6962
    %6971 = vrot.lane.b32.xlu0 %v4331, 104
    %v6972 = vpop.permute.xlu0 %6971
    %6973 = vrot.lane.b32.xlu0 %v4331, 72
    %v6974 = vpop.permute.xlu0 %6973
    %v6976 = vsel %vm346, %v6972, 0
    %v6979 = vsel %vm346, %v6974, 0
    %6981 = vmatprep.subr.bf16.mxu0 0
    %6982 = vmatpush1.bf16.xpose.msra.mxu0 %v6979
    %6983 = vmatprep.subr.bf16.mxu0 0
    %6984 = vmatpush1.bf16.xpose.msra.mxu0 0
    %6985 = vmatprep.subr.bf16.mxu0 0
    %6986 = vmatpush1.bf16.xpose.msra.mxu0 0
    %6987 = vmatprep.subr.bf16.mxu0 0
    %6988 = vmatpush1.bf16.xpose.msra.mxu0 0
    %6989 = vmatprep.subr.bf16.mxu0 0
    %6990 = vmatpush1.bf16.xpose.msra.mxu0 0
    %6991 = vmatprep.subr.bf16.mxu0 0
    %6992 = vmatpush1.bf16.xpose.msra.mxu0 0
    %6993 = vmatprep.subr.bf16.mxu0 0
    %6994 = vmatpush1.bf16.xpose.msra.mxu0 0
    %6995 = vmatprep.subr.bf16.mxu0 0
    %6996 = vmatpush1.bf16.xpose.msra.mxu0 0
    %6997 = vmatprep.subr.bf16.mxu0 0
    %6998 = vmatpush1.bf16.xpose.msra.mxu0 0
    %6999 = vmatprep.subr.bf16.mxu0 0
    %7000 = vmatpush1.bf16.xpose.msra.mxu0 0
    %7001 = vmatprep.subr.bf16.mxu0 0
    %7002 = vmatpush1.bf16.xpose.msra.mxu0 0
    %7003 = vmatprep.subr.bf16.mxu0 0
    %7004 = vmatpush1.bf16.xpose.msra.mxu0 0
    %7005 = vmatprep.subr.bf16.mxu0 0
    %7006 = vmatpush1.bf16.xpose.msra.mxu0 0
    %7007 = vmatprep.subr.bf16.mxu0 0
    %7008 = vmatpush1.bf16.xpose.msra.mxu0 0
    %7009 = vmatprep.subr.bf16.mxu0 0
    %7010 = vmatpush1.bf16.xpose.msra.mxu0 0
    %7011 = vmatprep.subr.bf16.mxu0 0
    %7012 = vmatpush1.bf16.xpose.msra.mxu0 0
    %7013 = vmatprep.mubr.bf16.mxu0 0
    %7014 = vmatmul.mubr.bf16.gmra.mrb[0].mxu0 %v6976
    %v7015 = vpop.f32.mrb[0].mxu0
    %v7016 = vadd.f32 0.0, %v7015
    %v7017 = vpop.f32.mrb[0].mxu0
    %v7018 = vpop.f32.mrb[0].mxu0
    %v7019 = vpop.f32.mrb[0].mxu0
    %7020 = vdwg.mxu0
    %7021 = vrot.lane.b32.xlu0 %v4332, 104
    %v7022 = vpop.permute.xlu0 %7021
    %7023 = vrot.lane.b32.xlu0 %v4332, 72
    %v7024 = vpop.permute.xlu0 %7023
    %v7026 = vsel %vm346, %v7022, 0
    %v7029 = vsel %vm346, %v7024, 0
    %7031 = vmatprep.subr.bf16.mxu0 0
    %7032 = vmatpush1.bf16.xpose.msra.mxu0 %v7029
    %7033 = vmatprep.subr.bf16.mxu0 0
    %7034 = vmatpush1.bf16.xpose.msra.mxu0 0
    %7035 = vmatprep.subr.bf16.mxu0 0
    %7036 = vmatpush1.bf16.xpose.msra.mxu0 0
    %7037 = vmatprep.subr.bf16.mxu0 0
    %7038 = vmatpush1.bf16.xpose.msra.mxu0 0
    %7039 = vmatprep.subr.bf16.mxu0 0
    %7040 = vmatpush1.bf16.xpose.msra.mxu0 0
    %7041 = vmatprep.subr.bf16.mxu0 0
    %7042 = vmatpush1.bf16.xpose.msra.mxu0 0
    %7043 = vmatprep.subr.bf16.mxu0 0
    %7044 = vmatpush1.bf16.xpose.msra.mxu0 0
    %7045 = vmatprep.subr.bf16.mxu0 0
    %7046 = vmatpush1.bf16.xpose.msra.mxu0 0
    %7047 = vmatprep.subr.bf16.mxu0 0
    %7048 = vmatpush1.bf16.xpose.msra.mxu0 0
    %7049 = vmatprep.subr.bf16.mxu0 0
    %7050 = vmatpush1.bf16.xpose.msra.mxu0 0
    %7051 = vmatprep.subr.bf16.mxu0 0
    %7052 = vmatpush1.bf16.xpose.msra.mxu0 0
    %7053 = vmatprep.subr.bf16.mxu0 0
    %7054 = vmatpush1.bf16.xpose.msra.mxu0 0
    %7055 = vmatprep.subr.bf16.mxu0 0
    %7056 = vmatpush1.bf16.xpose.msra.mxu0 0
    %7057 = vmatprep.subr.bf16.mxu0 0
    %7058 = vmatpush1.bf16.xpose.msra.mxu0 0
    %7059 = vmatprep.subr.bf16.mxu0 0
    %7060 = vmatpush1.bf16.xpose.msra.mxu0 0
    %7061 = vmatprep.subr.bf16.mxu0 0
    %7062 = vmatpush1.bf16.xpose.msra.mxu0 0
    %7063 = vmatprep.mubr.bf16.mxu0 0
    %7064 = vmatmul.mubr.bf16.gmra.mrb[0].mxu0 %v7026
    %v7065 = vpop.f32.mrb[0].mxu0
    %v7066 = vadd.f32 0.0, %v7065
    %v7067 = vpop.f32.mrb[0].mxu0
    %v7068 = vpop.f32.mrb[0].mxu0
    %v7069 = vpop.f32.mrb[0].mxu0
    %7070 = vdwg.mxu0
    %7071 = vrot.lane.b32.xlu0 %v4333, 104
    %v7072 = vpop.permute.xlu0 %7071
    %7073 = vrot.lane.b32.xlu0 %v4333, 72
    %v7074 = vpop.permute.xlu0 %7073
    %v7076 = vsel %vm346, %v7072, 0
    %v7079 = vsel %vm346, %v7074, 0
    %7081 = vmatprep.subr.bf16.mxu0 0
    %7082 = vmatpush1.bf16.xpose.msra.mxu0 %v7079
    %7083 = vmatprep.subr.bf16.mxu0 0
    %7084 = vmatpush1.bf16.xpose.msra.mxu0 0
    %7085 = vmatprep.subr.bf16.mxu0 0
    %7086 = vmatpush1.bf16.xpose.msra.mxu0 0
    %7087 = vmatprep.subr.bf16.mxu0 0
    %7088 = vmatpush1.bf16.xpose.msra.mxu0 0
    %7089 = vmatprep.subr.bf16.mxu0 0
    %7090 = vmatpush1.bf16.xpose.msra.mxu0 0
    %7091 = vmatprep.subr.bf16.mxu0 0
    %7092 = vmatpush1.bf16.xpose.msra.mxu0 0
    %7093 = vmatprep.subr.bf16.mxu0 0
    %7094 = vmatpush1.bf16.xpose.msra.mxu0 0
    %7095 = vmatprep.subr.bf16.mxu0 0
    %7096 = vmatpush1.bf16.xpose.msra.mxu0 0
    %7097 = vmatprep.subr.bf16.mxu0 0
    %7098 = vmatpush1.bf16.xpose.msra.mxu0 0
    %7099 = vmatprep.subr.bf16.mxu0 0
    %7100 = vmatpush1.bf16.xpose.msra.mxu0 0
    %7101 = vmatprep.subr.bf16.mxu0 0
    %7102 = vmatpush1.bf16.xpose.msra.mxu0 0
    %7103 = vmatprep.subr.bf16.mxu0 0
    %7104 = vmatpush1.bf16.xpose.msra.mxu0 0
    %7105 = vmatprep.subr.bf16.mxu0 0
    %7106 = vmatpush1.bf16.xpose.msra.mxu0 0
    %7107 = vmatprep.subr.bf16.mxu0 0
    %7108 = vmatpush1.bf16.xpose.msra.mxu0 0
    %7109 = vmatprep.subr.bf16.mxu0 0
    %7110 = vmatpush1.bf16.xpose.msra.mxu0 0
    %7111 = vmatprep.subr.bf16.mxu0 0
    %7112 = vmatpush1.bf16.xpose.msra.mxu0 0
    %7113 = vmatprep.mubr.bf16.mxu0 0
    %7114 = vmatmul.mubr.bf16.gmra.mrb[0].mxu0 %v7076
    %v7115 = vpop.f32.mrb[0].mxu0
    %v7116 = vadd.f32 0.0, %v7115
    %v7117 = vpop.f32.mrb[0].mxu0
    %v7118 = vpop.f32.mrb[0].mxu0
    %v7119 = vpop.f32.mrb[0].mxu0
    %7120 = vdwg.mxu0
    %7121 = vrot.lane.b32.xlu0 %v4334, 104
    %v7122 = vpop.permute.xlu0 %7121
    %7123 = vrot.lane.b32.xlu0 %v4334, 72
    %v7124 = vpop.permute.xlu0 %7123
    %v7126 = vsel %vm346, %v7122, 0
    %v7129 = vsel %vm346, %v7124, 0
    %7131 = vmatprep.subr.bf16.mxu0 0
    %7132 = vmatpush1.bf16.xpose.msra.mxu0 %v7129
    %7133 = vmatprep.subr.bf16.mxu0 0
    %7134 = vmatpush1.bf16.xpose.msra.mxu0 0
    %7135 = vmatprep.subr.bf16.mxu0 0
    %7136 = vmatpush1.bf16.xpose.msra.mxu0 0
    %7137 = vmatprep.subr.bf16.mxu0 0
    %7138 = vmatpush1.bf16.xpose.msra.mxu0 0
    %7139 = vmatprep.subr.bf16.mxu0 0
    %7140 = vmatpush1.bf16.xpose.msra.mxu0 0
    %7141 = vmatprep.subr.bf16.mxu0 0
    %7142 = vmatpush1.bf16.xpose.msra.mxu0 0
    %7143 = vmatprep.subr.bf16.mxu0 0
    %7144 = vmatpush1.bf16.xpose.msra.mxu0 0
    %7145 = vmatprep.subr.bf16.mxu0 0
    %7146 = vmatpush1.bf16.xpose.msra.mxu0 0
    %7147 = vmatprep.subr.bf16.mxu0 0
    %7148 = vmatpush1.bf16.xpose.msra.mxu0 0
    %7149 = vmatprep.subr.bf16.mxu0 0
    %7150 = vmatpush1.bf16.xpose.msra.mxu0 0
    %7151 = vmatprep.subr.bf16.mxu0 0
    %7152 = vmatpush1.bf16.xpose.msra.mxu0 0
    %7153 = vmatprep.subr.bf16.mxu0 0
    %7154 = vmatpush1.bf16.xpose.msra.mxu0 0
    %7155 = vmatprep.subr.bf16.mxu0 0
    %7156 = vmatpush1.bf16.xpose.msra.mxu0 0
    %7157 = vmatprep.subr.bf16.mxu0 0
    %7158 = vmatpush1.bf16.xpose.msra.mxu0 0
    %7159 = vmatprep.subr.bf16.mxu0 0
    %7160 = vmatpush1.bf16.xpose.msra.mxu0 0
    %7161 = vmatprep.subr.bf16.mxu0 0
    %7162 = vmatpush1.bf16.xpose.msra.mxu0 0
    %7163 = vmatprep.mubr.bf16.mxu0 0
    %7164 = vmatmul.mubr.bf16.gmra.mrb[0].mxu0 %v7126
    %v7165 = vpop.f32.mrb[0].mxu0
    %v7166 = vadd.f32 0.0, %v7165
    %v7167 = vpop.f32.mrb[0].mxu0
    %v7168 = vpop.f32.mrb[0].mxu0
    %v7169 = vpop.f32.mrb[0].mxu0
    %7170 = vdwg.mxu0
    %7171 = vrot.lane.b32.xlu0 %v4335, 104
    %v7172 = vpop.permute.xlu0 %7171
    %7173 = vrot.lane.b32.xlu0 %v4335, 72
    %v7174 = vpop.permute.xlu0 %7173
    %v7176 = vsel %vm346, %v7172, 0
    %v7179 = vsel %vm346, %v7174, 0
    %7181 = vmatprep.subr.bf16.mxu0 0
    %7182 = vmatpush1.bf16.xpose.msra.mxu0 %v7179
    %7183 = vmatprep.subr.bf16.mxu0 0
    %7184 = vmatpush1.bf16.xpose.msra.mxu0 0
    %7185 = vmatprep.subr.bf16.mxu0 0
    %7186 = vmatpush1.bf16.xpose.msra.mxu0 0
    %7187 = vmatprep.subr.bf16.mxu0 0
    %7188 = vmatpush1.bf16.xpose.msra.mxu0 0
    %7189 = vmatprep.subr.bf16.mxu0 0
    %7190 = vmatpush1.bf16.xpose.msra.mxu0 0
    %7191 = vmatprep.subr.bf16.mxu0 0
    %7192 = vmatpush1.bf16.xpose.msra.mxu0 0
    %7193 = vmatprep.subr.bf16.mxu0 0
    %7194 = vmatpush1.bf16.xpose.msra.mxu0 0
    %7195 = vmatprep.subr.bf16.mxu0 0
    %7196 = vmatpush1.bf16.xpose.msra.mxu0 0
    %7197 = vmatprep.subr.bf16.mxu0 0
    %7198 = vmatpush1.bf16.xpose.msra.mxu0 0
    %7199 = vmatprep.subr.bf16.mxu0 0
    %7200 = vmatpush1.bf16.xpose.msra.mxu0 0
    %7201 = vmatprep.subr.bf16.mxu0 0
    %7202 = vmatpush1.bf16.xpose.msra.mxu0 0
    %7203 = vmatprep.subr.bf16.mxu0 0
    %7204 = vmatpush1.bf16.xpose.msra.mxu0 0
    %7205 = vmatprep.subr.bf16.mxu0 0
    %7206 = vmatpush1.bf16.xpose.msra.mxu0 0
    %7207 = vmatprep.subr.bf16.mxu0 0
    %7208 = vmatpush1.bf16.xpose.msra.mxu0 0
    %7209 = vmatprep.subr.bf16.mxu0 0
    %7210 = vmatpush1.bf16.xpose.msra.mxu0 0
    %7211 = vmatprep.subr.bf16.mxu0 0
    %7212 = vmatpush1.bf16.xpose.msra.mxu0 0
    %7213 = vmatprep.mubr.bf16.mxu0 0
    %7214 = vmatmul.mubr.bf16.gmra.mrb[0].mxu0 %v7176
    %v7215 = vpop.f32.mrb[0].mxu0
    %v7216 = vadd.f32 0.0, %v7215
    %v7217 = vpop.f32.mrb[0].mxu0
    %v7218 = vpop.f32.mrb[0].mxu0
    %v7219 = vpop.f32.mrb[0].mxu0
    %7220 = vdwg.mxu0
    %7221 = vrot.lane.b32.xlu0 %v4336, 104
    %v7222 = vpop.permute.xlu0 %7221
    %7223 = vrot.lane.b32.xlu0 %v4336, 72
    %v7224 = vpop.permute.xlu0 %7223
    %v7226 = vsel %vm346, %v7222, 0
    %v7229 = vsel %vm346, %v7224, 0
    %7231 = vmatprep.subr.bf16.mxu0 0
    %7232 = vmatpush1.bf16.xpose.msra.mxu0 %v7229
    %7233 = vmatprep.subr.bf16.mxu0 0
    %7234 = vmatpush1.bf16.xpose.msra.mxu0 0
    %7235 = vmatprep.subr.bf16.mxu0 0
    %7236 = vmatpush1.bf16.xpose.msra.mxu0 0
    %7237 = vmatprep.subr.bf16.mxu0 0
    %7238 = vmatpush1.bf16.xpose.msra.mxu0 0
    %7239 = vmatprep.subr.bf16.mxu0 0
    %7240 = vmatpush1.bf16.xpose.msra.mxu0 0
    %7241 = vmatprep.subr.bf16.mxu0 0
    %7242 = vmatpush1.bf16.xpose.msra.mxu0 0
    %7243 = vmatprep.subr.bf16.mxu0 0
    %7244 = vmatpush1.bf16.xpose.msra.mxu0 0
    %7245 = vmatprep.subr.bf16.mxu0 0
    %7246 = vmatpush1.bf16.xpose.msra.mxu0 0
    %7247 = vmatprep.subr.bf16.mxu0 0
    %7248 = vmatpush1.bf16.xpose.msra.mxu0 0
    %7249 = vmatprep.subr.bf16.mxu0 0
    %7250 = vmatpush1.bf16.xpose.msra.mxu0 0
    %7251 = vmatprep.subr.bf16.mxu0 0
    %7252 = vmatpush1.bf16.xpose.msra.mxu0 0
    %7253 = vmatprep.subr.bf16.mxu0 0
    %7254 = vmatpush1.bf16.xpose.msra.mxu0 0
    %7255 = vmatprep.subr.bf16.mxu0 0
    %7256 = vmatpush1.bf16.xpose.msra.mxu0 0
    %7257 = vmatprep.subr.bf16.mxu0 0
    %7258 = vmatpush1.bf16.xpose.msra.mxu0 0
    %7259 = vmatprep.subr.bf16.mxu0 0
    %7260 = vmatpush1.bf16.xpose.msra.mxu0 0
    %7261 = vmatprep.subr.bf16.mxu0 0
    %7262 = vmatpush1.bf16.xpose.msra.mxu0 0
    %7263 = vmatprep.mubr.bf16.mxu0 0
    %7264 = vmatmul.mubr.bf16.gmra.mrb[0].mxu0 %v7226
    %v7265 = vpop.f32.mrb[0].mxu0
    %v7266 = vadd.f32 0.0, %v7265
    %v7267 = vpop.f32.mrb[0].mxu0
    %v7268 = vpop.f32.mrb[0].mxu0
    %v7269 = vpop.f32.mrb[0].mxu0
    %7270 = vdwg.mxu0
    %7271 = vrot.lane.b32.xlu0 %v4337, 104
    %v7272 = vpop.permute.xlu0 %7271
    %7273 = vrot.lane.b32.xlu0 %v4337, 72
    %v7274 = vpop.permute.xlu0 %7273
    %v7276 = vsel %vm346, %v7272, 0
    %v7279 = vsel %vm346, %v7274, 0
    %7281 = vmatprep.subr.bf16.mxu0 0
    %7282 = vmatpush1.bf16.xpose.msra.mxu0 %v7279
    %7283 = vmatprep.subr.bf16.mxu0 0
    %7284 = vmatpush1.bf16.xpose.msra.mxu0 0
    %7285 = vmatprep.subr.bf16.mxu0 0
    %7286 = vmatpush1.bf16.xpose.msra.mxu0 0
    %7287 = vmatprep.subr.bf16.mxu0 0
    %7288 = vmatpush1.bf16.xpose.msra.mxu0 0
    %7289 = vmatprep.subr.bf16.mxu0 0
    %7290 = vmatpush1.bf16.xpose.msra.mxu0 0
    %7291 = vmatprep.subr.bf16.mxu0 0
    %7292 = vmatpush1.bf16.xpose.msra.mxu0 0
    %7293 = vmatprep.subr.bf16.mxu0 0
    %7294 = vmatpush1.bf16.xpose.msra.mxu0 0
    %7295 = vmatprep.subr.bf16.mxu0 0
    %7296 = vmatpush1.bf16.xpose.msra.mxu0 0
    %7297 = vmatprep.subr.bf16.mxu0 0
    %7298 = vmatpush1.bf16.xpose.msra.mxu0 0
    %7299 = vmatprep.subr.bf16.mxu0 0
    %7300 = vmatpush1.bf16.xpose.msra.mxu0 0
    %7301 = vmatprep.subr.bf16.mxu0 0
    %7302 = vmatpush1.bf16.xpose.msra.mxu0 0
    %7303 = vmatprep.subr.bf16.mxu0 0
    %7304 = vmatpush1.bf16.xpose.msra.mxu0 0
    %7305 = vmatprep.subr.bf16.mxu0 0
    %7306 = vmatpush1.bf16.xpose.msra.mxu0 0
    %7307 = vmatprep.subr.bf16.mxu0 0
    %7308 = vmatpush1.bf16.xpose.msra.mxu0 0
    %7309 = vmatprep.subr.bf16.mxu0 0
    %7310 = vmatpush1.bf16.xpose.msra.mxu0 0
    %7311 = vmatprep.subr.bf16.mxu0 0
    %7312 = vmatpush1.bf16.xpose.msra.mxu0 0
    %7313 = vmatprep.mubr.bf16.mxu0 0
    %7314 = vmatmul.mubr.bf16.gmra.mrb[0].mxu0 %v7276
    %v7315 = vpop.f32.mrb[0].mxu0
    %v7316 = vadd.f32 0.0, %v7315
    %v7317 = vpop.f32.mrb[0].mxu0
    %v7318 = vpop.f32.mrb[0].mxu0
    %v7319 = vpop.f32.mrb[0].mxu0
    %7320 = vdwg.mxu0
    %7321 = vrot.lane.b32.xlu0 %v4338, 104
    %v7322 = vpop.permute.xlu0 %7321
    %7323 = vrot.lane.b32.xlu0 %v4338, 72
    %v7324 = vpop.permute.xlu0 %7323
    %v7326 = vsel %vm346, %v7322, 0
    %v7329 = vsel %vm346, %v7324, 0
    %7331 = vmatprep.subr.bf16.mxu0 0
    %7332 = vmatpush1.bf16.xpose.msra.mxu0 %v7329
    %7333 = vmatprep.subr.bf16.mxu0 0
    %7334 = vmatpush1.bf16.xpose.msra.mxu0 0
    %7335 = vmatprep.subr.bf16.mxu0 0
    %7336 = vmatpush1.bf16.xpose.msra.mxu0 0
    %7337 = vmatprep.subr.bf16.mxu0 0
    %7338 = vmatpush1.bf16.xpose.msra.mxu0 0
    %7339 = vmatprep.subr.bf16.mxu0 0
    %7340 = vmatpush1.bf16.xpose.msra.mxu0 0
    %7341 = vmatprep.subr.bf16.mxu0 0
    %7342 = vmatpush1.bf16.xpose.msra.mxu0 0
    %7343 = vmatprep.subr.bf16.mxu0 0
    %7344 = vmatpush1.bf16.xpose.msra.mxu0 0
    %7345 = vmatprep.subr.bf16.mxu0 0
    %7346 = vmatpush1.bf16.xpose.msra.mxu0 0
    %7347 = vmatprep.subr.bf16.mxu0 0
    %7348 = vmatpush1.bf16.xpose.msra.mxu0 0
    %7349 = vmatprep.subr.bf16.mxu0 0
    %7350 = vmatpush1.bf16.xpose.msra.mxu0 0
    %7351 = vmatprep.subr.bf16.mxu0 0
    %7352 = vmatpush1.bf16.xpose.msra.mxu0 0
    %7353 = vmatprep.subr.bf16.mxu0 0
    %7354 = vmatpush1.bf16.xpose.msra.mxu0 0
    %7355 = vmatprep.subr.bf16.mxu0 0
    %7356 = vmatpush1.bf16.xpose.msra.mxu0 0
    %7357 = vmatprep.subr.bf16.mxu0 0
    %7358 = vmatpush1.bf16.xpose.msra.mxu0 0
    %7359 = vmatprep.subr.bf16.mxu0 0
    %7360 = vmatpush1.bf16.xpose.msra.mxu0 0
    %7361 = vmatprep.subr.bf16.mxu0 0
    %7362 = vmatpush1.bf16.xpose.msra.mxu0 0
    %7363 = vmatprep.mubr.bf16.mxu0 0
    %7364 = vmatmul.mubr.bf16.gmra.mrb[0].mxu0 %v7326
    %v7365 = vpop.f32.mrb[0].mxu0
    %v7366 = vadd.f32 0.0, %v7365
    %v7367 = vpop.f32.mrb[0].mxu0
    %v7368 = vpop.f32.mrb[0].mxu0
    %v7369 = vpop.f32.mrb[0].mxu0
    %7370 = vdwg.mxu0
    %v7371 = vsel %vm346, %v7016, -inf
    %7372 = vmax.xlane.f32.xlu0 %v7371
    %v7373 = vpop.xlane.xlu0 %7372
    %v7374 = vsel %vm346, %v7066, -inf
    %7375 = vmax.xlane.f32.xlu0 %v7374
    %v7376 = vpop.xlane.xlu0 %7375
    %v7377 = vsel %vm346, %v7116, -inf
    %7378 = vmax.xlane.f32.xlu0 %v7377
    %v7379 = vpop.xlane.xlu0 %7378
    %v7380 = vsel %vm346, %v7166, -inf
    %7381 = vmax.xlane.f32.xlu0 %v7380
    %v7382 = vpop.xlane.xlu0 %7381
    %v7383 = vsel %vm346, %v7216, -inf
    %7384 = vmax.xlane.f32.xlu0 %v7383
    %v7385 = vpop.xlane.xlu0 %7384
    %v7386 = vsel %vm346, %v7266, -inf
    %7387 = vmax.xlane.f32.xlu0 %v7386
    %v7388 = vpop.xlane.xlu0 %7387
    %v7389 = vsel %vm346, %v7316, -inf
    %7390 = vmax.xlane.f32.xlu0 %v7389
    %v7391 = vpop.xlane.xlu0 %7390
    %v7392 = vsel %vm346, %v7366, -inf
    %7393 = vmax.xlane.f32.xlu0 %v7392
    %v7394 = vpop.xlane.xlu0 %7393
    %v7395 = vsub.f32 %v7016, %v7373
    %v7396 = vsub.f32 %v7066, %v7376
    %v7397 = vsub.f32 %v7116, %v7379
    %v7398 = vsub.f32 %v7166, %v7382
    %v7399 = vsub.f32 %v7216, %v7385
    %v7400 = vsub.f32 %v7266, %v7388
    %v7401 = vsub.f32 %v7316, %v7391
    %v7402 = vsub.f32 %v7366, %v7394
    %v7403 = vmul.f32 %v7395, 1.442695
    %v7404 = vpow.pop %v7403
    %v7405 = vmul.f32 %v7396, 1.442695
    %v7406 = vpow.pop %v7405
    %v7407 = vmul.f32 %v7397, 1.442695
    %v7408 = vpow.pop %v7407
    %v7409 = vmul.f32 %v7398, 1.442695
    %v7410 = vpow.pop %v7409
    %v7411 = vmul.f32 %v7399, 1.442695
    %v7412 = vpow.pop %v7411
    %v7413 = vmul.f32 %v7400, 1.442695
    %v7414 = vpow.pop %v7413
    %v7415 = vmul.f32 %v7401, 1.442695
    %v7416 = vpow.pop %v7415
    %v7417 = vmul.f32 %v7402, 1.442695
    %v7418 = vpow.pop %v7417
    %v7419 = vsel %vm346, %v7404, 0.0
    %7420 = vadd.xlane.f32.xlu0 %v7419
    %v7421 = vpop.xlane.xlu0 %7420
    %v7422 = vsel %vm346, %v7406, 0.0
    %7423 = vadd.xlane.f32.xlu0 %v7422
    %v7424 = vpop.xlane.xlu0 %7423
    %v7425 = vsel %vm346, %v7408, 0.0
    %7426 = vadd.xlane.f32.xlu0 %v7425
    %v7427 = vpop.xlane.xlu0 %7426
    %v7428 = vsel %vm346, %v7410, 0.0
    %7429 = vadd.xlane.f32.xlu0 %v7428
    %v7430 = vpop.xlane.xlu0 %7429
    %v7431 = vsel %vm346, %v7412, 0.0
    %7432 = vadd.xlane.f32.xlu0 %v7431
    %v7433 = vpop.xlane.xlu0 %7432
    %v7434 = vsel %vm346, %v7414, 0.0
    %7435 = vadd.xlane.f32.xlu0 %v7434
    %v7436 = vpop.xlane.xlu0 %7435
    %v7437 = vsel %vm346, %v7416, 0.0
    %7438 = vadd.xlane.f32.xlu0 %v7437
    %v7439 = vpop.xlane.xlu0 %7438
    %v7440 = vsel %vm346, %v7418, 0.0
    %7441 = vadd.xlane.f32.xlu0 %v7440
    %v7442 = vpop.xlane.xlu0 %7441
    %v7443 = vpack.c.bf16 %v7404, %v7404
    %v7444 = vpack.c.bf16 %v7406, %v7406
    %v7445 = vpack.c.bf16 %v7408, %v7408
    %v7446 = vpack.c.bf16 %v7410, %v7410
    %v7447 = vpack.c.bf16 %v7412, %v7412
    %v7448 = vpack.c.bf16 %v7414, %v7414
    %v7449 = vpack.c.bf16 %v7416, %v7416
    %v7450 = vpack.c.bf16 %v7418, %v7418
    %7451 = vrot.lane.b32.xlu0 %v4331, 40
    %v7452 = vpop.permute.xlu0 %7451
    %v7454 = vsel %vm346, %v7443, 0
    %v7457 = vsel %vm821, %v7452, 0
    %7459 = vmatprep.subr.bf16.mxu0 0
    %7460 = vmatpush1.bf16.msra.mxu0 %v7457
    %7461 = vmatprep.subr.bf16.mxu0 0
    %7462 = vmatpush1.bf16.msra.mxu0 0
    %7463 = vmatprep.subr.bf16.mxu0 0
    %7464 = vmatpush1.bf16.msra.mxu0 0
    %7465 = vmatprep.subr.bf16.mxu0 0
    %7466 = vmatpush1.bf16.msra.mxu0 0
    %7467 = vmatprep.subr.bf16.mxu0 0
    %7468 = vmatpush1.bf16.msra.mxu0 0
    %7469 = vmatprep.subr.bf16.mxu0 0
    %7470 = vmatpush1.bf16.msra.mxu0 0
    %7471 = vmatprep.subr.bf16.mxu0 0
    %7472 = vmatpush1.bf16.msra.mxu0 0
    %7473 = vmatprep.subr.bf16.mxu0 0
    %7474 = vmatpush1.bf16.msra.mxu0 0
    %7475 = vmatprep.subr.bf16.mxu0 0
    %7476 = vmatpush1.bf16.msra.mxu0 0
    %7477 = vmatprep.subr.bf16.mxu0 0
    %7478 = vmatpush1.bf16.msra.mxu0 0
    %7479 = vmatprep.subr.bf16.mxu0 0
    %7480 = vmatpush1.bf16.msra.mxu0 0
    %7481 = vmatprep.subr.bf16.mxu0 0
    %7482 = vmatpush1.bf16.msra.mxu0 0
    %7483 = vmatprep.subr.bf16.mxu0 0
    %7484 = vmatpush1.bf16.msra.mxu0 0
    %7485 = vmatprep.subr.bf16.mxu0 0
    %7486 = vmatpush1.bf16.msra.mxu0 0
    %7487 = vmatprep.subr.bf16.mxu0 0
    %7488 = vmatpush1.bf16.msra.mxu0 0
    %7489 = vmatprep.subr.bf16.mxu0 0
    %7490 = vmatpush1.bf16.msra.mxu0 0
    %7491 = vmatprep.mubr.bf16.mxu0 0
    %7492 = vmatmul.mubr.bf16.gmra.mrb[0].mxu0 %v7454
    %v7493 = vpop.f32.mrb[0].mxu0
    %v7494 = vadd.f32 0.0, %v7493
    %v7495 = vpop.f32.mrb[0].mxu0
    %v7496 = vpop.f32.mrb[0].mxu0
    %v7497 = vpop.f32.mrb[0].mxu0
    %7498 = vdwg.mxu0
    %7499 = vrot.lane.b32.xlu0 %v4332, 40
    %v7500 = vpop.permute.xlu0 %7499
    %v7502 = vsel %vm346, %v7444, 0
    %v7505 = vsel %vm821, %v7500, 0
    %7507 = vmatprep.subr.bf16.mxu0 0
    %7508 = vmatpush1.bf16.msra.mxu0 %v7505
    %7509 = vmatprep.subr.bf16.mxu0 0
    %7510 = vmatpush1.bf16.msra.mxu0 0
    %7511 = vmatprep.subr.bf16.mxu0 0
    %7512 = vmatpush1.bf16.msra.mxu0 0
    %7513 = vmatprep.subr.bf16.mxu0 0
    %7514 = vmatpush1.bf16.msra.mxu0 0
    %7515 = vmatprep.subr.bf16.mxu0 0
    %7516 = vmatpush1.bf16.msra.mxu0 0
    %7517 = vmatprep.subr.bf16.mxu0 0
    %7518 = vmatpush1.bf16.msra.mxu0 0
    %7519 = vmatprep.subr.bf16.mxu0 0
    %7520 = vmatpush1.bf16.msra.mxu0 0
    %7521 = vmatprep.subr.bf16.mxu0 0
    %7522 = vmatpush1.bf16.msra.mxu0 0
    %7523 = vmatprep.subr.bf16.mxu0 0
    %7524 = vmatpush1.bf16.msra.mxu0 0
    %7525 = vmatprep.subr.bf16.mxu0 0
    %7526 = vmatpush1.bf16.msra.mxu0 0
    %7527 = vmatprep.subr.bf16.mxu0 0
    %7528 = vmatpush1.bf16.msra.mxu0 0
    %7529 = vmatprep.subr.bf16.mxu0 0
    %7530 = vmatpush1.bf16.msra.mxu0 0
    %7531 = vmatprep.subr.bf16.mxu0 0
    %7532 = vmatpush1.bf16.msra.mxu0 0
    %7533 = vmatprep.subr.bf16.mxu0 0
    %7534 = vmatpush1.bf16.msra.mxu0 0
    %7535 = vmatprep.subr.bf16.mxu0 0
    %7536 = vmatpush1.bf16.msra.mxu0 0
    %7537 = vmatprep.subr.bf16.mxu0 0
    %7538 = vmatpush1.bf16.msra.mxu0 0
    %7539 = vmatprep.mubr.bf16.mxu0 0
    %7540 = vmatmul.mubr.bf16.gmra.mrb[0].mxu0 %v7502
    %v7541 = vpop.f32.mrb[0].mxu0
    %v7542 = vadd.f32 0.0, %v7541
    %v7543 = vpop.f32.mrb[0].mxu0
    %v7544 = vpop.f32.mrb[0].mxu0
    %v7545 = vpop.f32.mrb[0].mxu0
    %7546 = vdwg.mxu0
    %7547 = vrot.lane.b32.xlu0 %v4333, 40
    %v7548 = vpop.permute.xlu0 %7547
    %v7550 = vsel %vm346, %v7445, 0
    %v7553 = vsel %vm821, %v7548, 0
    %7555 = vmatprep.subr.bf16.mxu0 0
    %7556 = vmatpush1.bf16.msra.mxu0 %v7553
    %7557 = vmatprep.subr.bf16.mxu0 0
    %7558 = vmatpush1.bf16.msra.mxu0 0
    %7559 = vmatprep.subr.bf16.mxu0 0
    %7560 = vmatpush1.bf16.msra.mxu0 0
    %7561 = vmatprep.subr.bf16.mxu0 0
    %7562 = vmatpush1.bf16.msra.mxu0 0
    %7563 = vmatprep.subr.bf16.mxu0 0
    %7564 = vmatpush1.bf16.msra.mxu0 0
    %7565 = vmatprep.subr.bf16.mxu0 0
    %7566 = vmatpush1.bf16.msra.mxu0 0
    %7567 = vmatprep.subr.bf16.mxu0 0
    %7568 = vmatpush1.bf16.msra.mxu0 0
    %7569 = vmatprep.subr.bf16.mxu0 0
    %7570 = vmatpush1.bf16.msra.mxu0 0
    %7571 = vmatprep.subr.bf16.mxu0 0
    %7572 = vmatpush1.bf16.msra.mxu0 0
    %7573 = vmatprep.subr.bf16.mxu0 0
    %7574 = vmatpush1.bf16.msra.mxu0 0
    %7575 = vmatprep.subr.bf16.mxu0 0
    %7576 = vmatpush1.bf16.msra.mxu0 0
    %7577 = vmatprep.subr.bf16.mxu0 0
    %7578 = vmatpush1.bf16.msra.mxu0 0
    %7579 = vmatprep.subr.bf16.mxu0 0
    %7580 = vmatpush1.bf16.msra.mxu0 0
    %7581 = vmatprep.subr.bf16.mxu0 0
    %7582 = vmatpush1.bf16.msra.mxu0 0
    %7583 = vmatprep.subr.bf16.mxu0 0
    %7584 = vmatpush1.bf16.msra.mxu0 0
    %7585 = vmatprep.subr.bf16.mxu0 0
    %7586 = vmatpush1.bf16.msra.mxu0 0
    %7587 = vmatprep.mubr.bf16.mxu0 0
    %7588 = vmatmul.mubr.bf16.gmra.mrb[0].mxu0 %v7550
    %v7589 = vpop.f32.mrb[0].mxu0
    %v7590 = vadd.f32 0.0, %v7589
    %v7591 = vpop.f32.mrb[0].mxu0
    %v7592 = vpop.f32.mrb[0].mxu0
    %v7593 = vpop.f32.mrb[0].mxu0
    %7594 = vdwg.mxu0
    %7595 = vrot.lane.b32.xlu0 %v4334, 40
    %v7596 = vpop.permute.xlu0 %7595
    %v7598 = vsel %vm346, %v7446, 0
    %v7601 = vsel %vm821, %v7596, 0
    %7603 = vmatprep.subr.bf16.mxu0 0
    %7604 = vmatpush1.bf16.msra.mxu0 %v7601
    %7605 = vmatprep.subr.bf16.mxu0 0
    %7606 = vmatpush1.bf16.msra.mxu0 0
    %7607 = vmatprep.subr.bf16.mxu0 0
    %7608 = vmatpush1.bf16.msra.mxu0 0
    %7609 = vmatprep.subr.bf16.mxu0 0
    %7610 = vmatpush1.bf16.msra.mxu0 0
    %7611 = vmatprep.subr.bf16.mxu0 0
    %7612 = vmatpush1.bf16.msra.mxu0 0
    %7613 = vmatprep.subr.bf16.mxu0 0
    %7614 = vmatpush1.bf16.msra.mxu0 0
    %7615 = vmatprep.subr.bf16.mxu0 0
    %7616 = vmatpush1.bf16.msra.mxu0 0
    %7617 = vmatprep.subr.bf16.mxu0 0
    %7618 = vmatpush1.bf16.msra.mxu0 0
    %7619 = vmatprep.subr.bf16.mxu0 0
    %7620 = vmatpush1.bf16.msra.mxu0 0
    %7621 = vmatprep.subr.bf16.mxu0 0
    %7622 = vmatpush1.bf16.msra.mxu0 0
    %7623 = vmatprep.subr.bf16.mxu0 0
    %7624 = vmatpush1.bf16.msra.mxu0 0
    %7625 = vmatprep.subr.bf16.mxu0 0
    %7626 = vmatpush1.bf16.msra.mxu0 0
    %7627 = vmatprep.subr.bf16.mxu0 0
    %7628 = vmatpush1.bf16.msra.mxu0 0
    %7629 = vmatprep.subr.bf16.mxu0 0
    %7630 = vmatpush1.bf16.msra.mxu0 0
    %7631 = vmatprep.subr.bf16.mxu0 0
    %7632 = vmatpush1.bf16.msra.mxu0 0
    %7633 = vmatprep.subr.bf16.mxu0 0
    %7634 = vmatpush1.bf16.msra.mxu0 0
    %7635 = vmatprep.mubr.bf16.mxu0 0
    %7636 = vmatmul.mubr.bf16.gmra.mrb[0].mxu0 %v7598
    %v7637 = vpop.f32.mrb[0].mxu0
    %v7638 = vadd.f32 0.0, %v7637
    %v7639 = vpop.f32.mrb[0].mxu0
    %v7640 = vpop.f32.mrb[0].mxu0
    %v7641 = vpop.f32.mrb[0].mxu0
    %7642 = vdwg.mxu0
    %7643 = vrot.lane.b32.xlu0 %v4335, 40
    %v7644 = vpop.permute.xlu0 %7643
    %v7646 = vsel %vm346, %v7447, 0
    %v7649 = vsel %vm821, %v7644, 0
    %7651 = vmatprep.subr.bf16.mxu0 0
    %7652 = vmatpush1.bf16.msra.mxu0 %v7649
    %7653 = vmatprep.subr.bf16.mxu0 0
    %7654 = vmatpush1.bf16.msra.mxu0 0
    %7655 = vmatprep.subr.bf16.mxu0 0
    %7656 = vmatpush1.bf16.msra.mxu0 0
    %7657 = vmatprep.subr.bf16.mxu0 0
    %7658 = vmatpush1.bf16.msra.mxu0 0
    %7659 = vmatprep.subr.bf16.mxu0 0
    %7660 = vmatpush1.bf16.msra.mxu0 0
    %7661 = vmatprep.subr.bf16.mxu0 0
    %7662 = vmatpush1.bf16.msra.mxu0 0
    %7663 = vmatprep.subr.bf16.mxu0 0
    %7664 = vmatpush1.bf16.msra.mxu0 0
    %7665 = vmatprep.subr.bf16.mxu0 0
    %7666 = vmatpush1.bf16.msra.mxu0 0
    %7667 = vmatprep.subr.bf16.mxu0 0
    %7668 = vmatpush1.bf16.msra.mxu0 0
    %7669 = vmatprep.subr.bf16.mxu0 0
    %7670 = vmatpush1.bf16.msra.mxu0 0
    %7671 = vmatprep.subr.bf16.mxu0 0
    %7672 = vmatpush1.bf16.msra.mxu0 0
    %7673 = vmatprep.subr.bf16.mxu0 0
    %7674 = vmatpush1.bf16.msra.mxu0 0
    %7675 = vmatprep.subr.bf16.mxu0 0
    %7676 = vmatpush1.bf16.msra.mxu0 0
    %7677 = vmatprep.subr.bf16.mxu0 0
    %7678 = vmatpush1.bf16.msra.mxu0 0
    %7679 = vmatprep.subr.bf16.mxu0 0
    %7680 = vmatpush1.bf16.msra.mxu0 0
    %7681 = vmatprep.subr.bf16.mxu0 0
    %7682 = vmatpush1.bf16.msra.mxu0 0
    %7683 = vmatprep.mubr.bf16.mxu0 0
    %7684 = vmatmul.mubr.bf16.gmra.mrb[0].mxu0 %v7646
    %v7685 = vpop.f32.mrb[0].mxu0
    %v7686 = vadd.f32 0.0, %v7685
    %v7687 = vpop.f32.mrb[0].mxu0
    %v7688 = vpop.f32.mrb[0].mxu0
    %v7689 = vpop.f32.mrb[0].mxu0
    %7690 = vdwg.mxu0
    %7691 = vrot.lane.b32.xlu0 %v4336, 40
    %v7692 = vpop.permute.xlu0 %7691
    %v7694 = vsel %vm346, %v7448, 0
    %v7697 = vsel %vm821, %v7692, 0
    %7699 = vmatprep.subr.bf16.mxu0 0
    %7700 = vmatpush1.bf16.msra.mxu0 %v7697
    %7701 = vmatprep.subr.bf16.mxu0 0
    %7702 = vmatpush1.bf16.msra.mxu0 0
    %7703 = vmatprep.subr.bf16.mxu0 0
    %7704 = vmatpush1.bf16.msra.mxu0 0
    %7705 = vmatprep.subr.bf16.mxu0 0
    %7706 = vmatpush1.bf16.msra.mxu0 0
    %7707 = vmatprep.subr.bf16.mxu0 0
    %7708 = vmatpush1.bf16.msra.mxu0 0
    %7709 = vmatprep.subr.bf16.mxu0 0
    %7710 = vmatpush1.bf16.msra.mxu0 0
    %7711 = vmatprep.subr.bf16.mxu0 0
    %7712 = vmatpush1.bf16.msra.mxu0 0
    %7713 = vmatprep.subr.bf16.mxu0 0
    %7714 = vmatpush1.bf16.msra.mxu0 0
    %7715 = vmatprep.subr.bf16.mxu0 0
    %7716 = vmatpush1.bf16.msra.mxu0 0
    %7717 = vmatprep.subr.bf16.mxu0 0
    %7718 = vmatpush1.bf16.msra.mxu0 0
    %7719 = vmatprep.subr.bf16.mxu0 0
    %7720 = vmatpush1.bf16.msra.mxu0 0
    %7721 = vmatprep.subr.bf16.mxu0 0
    %7722 = vmatpush1.bf16.msra.mxu0 0
    %7723 = vmatprep.subr.bf16.mxu0 0
    %7724 = vmatpush1.bf16.msra.mxu0 0
    %7725 = vmatprep.subr.bf16.mxu0 0
    %7726 = vmatpush1.bf16.msra.mxu0 0
    %7727 = vmatprep.subr.bf16.mxu0 0
    %7728 = vmatpush1.bf16.msra.mxu0 0
    %7729 = vmatprep.subr.bf16.mxu0 0
    %7730 = vmatpush1.bf16.msra.mxu0 0
    %7731 = vmatprep.mubr.bf16.mxu0 0
    %7732 = vmatmul.mubr.bf16.gmra.mrb[0].mxu0 %v7694
    %v7733 = vpop.f32.mrb[0].mxu0
    %v7734 = vadd.f32 0.0, %v7733
    %v7735 = vpop.f32.mrb[0].mxu0
    %v7736 = vpop.f32.mrb[0].mxu0
    %v7737 = vpop.f32.mrb[0].mxu0
    %7738 = vdwg.mxu0
    %7739 = vrot.lane.b32.xlu0 %v4337, 40
    %v7740 = vpop.permute.xlu0 %7739
    %v7742 = vsel %vm346, %v7449, 0
    %v7745 = vsel %vm821, %v7740, 0
    %7747 = vmatprep.subr.bf16.mxu0 0
    %7748 = vmatpush1.bf16.msra.mxu0 %v7745
    %7749 = vmatprep.subr.bf16.mxu0 0
    %7750 = vmatpush1.bf16.msra.mxu0 0
    %7751 = vmatprep.subr.bf16.mxu0 0
    %7752 = vmatpush1.bf16.msra.mxu0 0
    %7753 = vmatprep.subr.bf16.mxu0 0
    %7754 = vmatpush1.bf16.msra.mxu0 0
    %7755 = vmatprep.subr.bf16.mxu0 0
    %7756 = vmatpush1.bf16.msra.mxu0 0
    %7757 = vmatprep.subr.bf16.mxu0 0
    %7758 = vmatpush1.bf16.msra.mxu0 0
    %7759 = vmatprep.subr.bf16.mxu0 0
    %7760 = vmatpush1.bf16.msra.mxu0 0
    %7761 = vmatprep.subr.bf16.mxu0 0
    %7762 = vmatpush1.bf16.msra.mxu0 0
    %7763 = vmatprep.subr.bf16.mxu0 0
    %7764 = vmatpush1.bf16.msra.mxu0 0
    %7765 = vmatprep.subr.bf16.mxu0 0
    %7766 = vmatpush1.bf16.msra.mxu0 0
    %7767 = vmatprep.subr.bf16.mxu0 0
    %7768 = vmatpush1.bf16.msra.mxu0 0
    %7769 = vmatprep.subr.bf16.mxu0 0
    %7770 = vmatpush1.bf16.msra.mxu0 0
    %7771 = vmatprep.subr.bf16.mxu0 0
    %7772 = vmatpush1.bf16.msra.mxu0 0
    %7773 = vmatprep.subr.bf16.mxu0 0
    %7774 = vmatpush1.bf16.msra.mxu0 0
    %7775 = vmatprep.subr.bf16.mxu0 0
    %7776 = vmatpush1.bf16.msra.mxu0 0
    %7777 = vmatprep.subr.bf16.mxu0 0
    %7778 = vmatpush1.bf16.msra.mxu0 0
    %7779 = vmatprep.mubr.bf16.mxu0 0
    %7780 = vmatmul.mubr.bf16.gmra.mrb[0].mxu0 %v7742
    %v7781 = vpop.f32.mrb[0].mxu0
    %v7782 = vadd.f32 0.0, %v7781
    %v7783 = vpop.f32.mrb[0].mxu0
    %v7784 = vpop.f32.mrb[0].mxu0
    %v7785 = vpop.f32.mrb[0].mxu0
    %7786 = vdwg.mxu0
    %7787 = vrot.lane.b32.xlu0 %v4338, 40
    %v7788 = vpop.permute.xlu0 %7787
    %v7790 = vsel %vm346, %v7450, 0
    %v7793 = vsel %vm821, %v7788, 0
    %7795 = vmatprep.subr.bf16.mxu0 0
    %7796 = vmatpush1.bf16.msra.mxu0 %v7793
    %7797 = vmatprep.subr.bf16.mxu0 0
    %7798 = vmatpush1.bf16.msra.mxu0 0
    %7799 = vmatprep.subr.bf16.mxu0 0
    %7800 = vmatpush1.bf16.msra.mxu0 0
    %7801 = vmatprep.subr.bf16.mxu0 0
    %7802 = vmatpush1.bf16.msra.mxu0 0
    %7803 = vmatprep.subr.bf16.mxu0 0
    %7804 = vmatpush1.bf16.msra.mxu0 0
    %7805 = vmatprep.subr.bf16.mxu0 0
    %7806 = vmatpush1.bf16.msra.mxu0 0
    %7807 = vmatprep.subr.bf16.mxu0 0
    %7808 = vmatpush1.bf16.msra.mxu0 0
    %7809 = vmatprep.subr.bf16.mxu0 0
    %7810 = vmatpush1.bf16.msra.mxu0 0
    %7811 = vmatprep.subr.bf16.mxu0 0
    %7812 = vmatpush1.bf16.msra.mxu0 0
    %7813 = vmatprep.subr.bf16.mxu0 0
    %7814 = vmatpush1.bf16.msra.mxu0 0
    %7815 = vmatprep.subr.bf16.mxu0 0
    %7816 = vmatpush1.bf16.msra.mxu0 0
    %7817 = vmatprep.subr.bf16.mxu0 0
    %7818 = vmatpush1.bf16.msra.mxu0 0
    %7819 = vmatprep.subr.bf16.mxu0 0
    %7820 = vmatpush1.bf16.msra.mxu0 0
    %7821 = vmatprep.subr.bf16.mxu0 0
    %7822 = vmatpush1.bf16.msra.mxu0 0
    %7823 = vmatprep.subr.bf16.mxu0 0
    %7824 = vmatpush1.bf16.msra.mxu0 0
    %7825 = vmatprep.subr.bf16.mxu0 0
    %7826 = vmatpush1.bf16.msra.mxu0 0
    %7827 = vmatprep.mubr.bf16.mxu0 0
    %7828 = vmatmul.mubr.bf16.gmra.mrb[0].mxu0 %v7790
    %v7829 = vpop.f32.mrb[0].mxu0
    %v7830 = vadd.f32 0.0, %v7829
    %v7831 = vpop.f32.mrb[0].mxu0
    %v7832 = vpop.f32.mrb[0].mxu0
    %v7833 = vpop.f32.mrb[0].mxu0
    %7834 = vdwg.mxu0
    %v7835 = vrcp.pop %v7421
    %v7836 = vrcp.pop %v7424
    %v7837 = vrcp.pop %v7427
    %v7838 = vrcp.pop %v7430
    %v7839 = vrcp.pop %v7433
    %v7840 = vrcp.pop %v7436
    %v7841 = vrcp.pop %v7439
    %v7842 = vrcp.pop %v7442
    %v7843 = vmul.f32 %v7494, %v7835
    %v7844 = vmul.f32 %v7542, %v7836
    %v7845 = vmul.f32 %v7590, %v7837
    %v7846 = vmul.f32 %v7638, %v7838
    %v7847 = vmul.f32 %v7686, %v7839
    %v7848 = vmul.f32 %v7734, %v7840
    %v7849 = vmul.f32 %v7782, %v7841
    %v7850 = vmul.f32 %v7830, %v7842
    %7859 = vrot.lane.b32.xlu0 %v6083, 8
    %v7860 = vpop.permute.xlu0 %7859
    %7861 = vrot.lane.b32.xlu0 %v6084, 8
    %v7862 = vpop.permute.xlu0 %7861
    %7863 = vrot.lane.b32.xlu0 %v6085, 8
    %v7864 = vpop.permute.xlu0 %7863
    %7865 = vrot.lane.b32.xlu0 %v6086, 8
    %v7866 = vpop.permute.xlu0 %7865
    %7867 = vrot.lane.b32.xlu0 %v6087, 8
    %v7868 = vpop.permute.xlu0 %7867
    %7869 = vrot.lane.b32.xlu0 %v6088, 8
    %v7870 = vpop.permute.xlu0 %7869
    %7871 = vrot.lane.b32.xlu0 %v6089, 8
    %v7872 = vpop.permute.xlu0 %7871
    %7873 = vrot.lane.b32.xlu0 %v6090, 8
    %v7874 = vpop.permute.xlu0 %7873
    %7891 = vrot.lane.b32.xlu0 %v6963, 16
    %v7892 = vpop.permute.xlu0 %7891
    %7893 = vrot.lane.b32.xlu0 %v6964, 16
    %v7894 = vpop.permute.xlu0 %7893
    %7895 = vrot.lane.b32.xlu0 %v6965, 16
    %v7896 = vpop.permute.xlu0 %7895
    %7897 = vrot.lane.b32.xlu0 %v6966, 16
    %v7898 = vpop.permute.xlu0 %7897
    %7899 = vrot.lane.b32.xlu0 %v6967, 16
    %v7900 = vpop.permute.xlu0 %7899
    %7901 = vrot.lane.b32.xlu0 %v6968, 16
    %v7902 = vpop.permute.xlu0 %7901
    %7903 = vrot.lane.b32.xlu0 %v6969, 16
    %v7904 = vpop.permute.xlu0 %7903
    %7905 = vrot.lane.b32.xlu0 %v6970, 16
    %v7906 = vpop.permute.xlu0 %7905
    %7923 = vrot.lane.b32.xlu0 %v7843, 24
    %v7924 = vpop.permute.xlu0 %7923
    %7925 = vrot.lane.b32.xlu0 %v7844, 24
    %v7926 = vpop.permute.xlu0 %7925
    %7927 = vrot.lane.b32.xlu0 %v7845, 24
    %v7928 = vpop.permute.xlu0 %7927
    %7929 = vrot.lane.b32.xlu0 %v7846, 24
    %v7930 = vpop.permute.xlu0 %7929
    %7931 = vrot.lane.b32.xlu0 %v7847, 24
    %v7932 = vpop.permute.xlu0 %7931
    %7933 = vrot.lane.b32.xlu0 %v7848, 24
    %v7934 = vpop.permute.xlu0 %7933
    %7935 = vrot.lane.b32.xlu0 %v7849, 24
    %v7936 = vpop.permute.xlu0 %7935
    %7937 = vrot.lane.b32.xlu0 %v7850, 24
    %v7938 = vpop.permute.xlu0 %7937
    %v7947 = vsel %vm346, %v5203, %v7860
    %v7948 = vsel %vm346, %v5204, %v7862
    %v7949 = vsel %vm346, %v5205, %v7864
    %v7950 = vsel %vm346, %v5206, %v7866
    %v7951 = vsel %vm346, %v5207, %v7868
    %v7952 = vsel %vm346, %v5208, %v7870
    %v7953 = vsel %vm346, %v5209, %v7872
    %v7954 = vsel %vm346, %v5210, %v7874
    %v7955 = vsel %vm152, %v7947, %v7892
    %v7956 = vsel %vm152, %v7948, %v7894
    %v7957 = vsel %vm152, %v7949, %v7896
    %v7958 = vsel %vm152, %v7950, %v7898
    %v7959 = vsel %vm152, %v7951, %v7900
    %v7960 = vsel %vm152, %v7952, %v7902
    %v7961 = vsel %vm152, %v7953, %v7904
    %v7962 = vsel %vm152, %v7954, %v7906
    %v7963 = vsel %vm3969, %v7955, %v7924
    %v7964 = vsel %vm3969, %v7956, %v7926
    %v7965 = vsel %vm3969, %v7957, %v7928
    %v7966 = vsel %vm3969, %v7958, %v7930
    %v7967 = vsel %vm3969, %v7959, %v7932
    %v7968 = vsel %vm3969, %v7960, %v7934
    %v7969 = vsel %vm3969, %v7961, %v7936
    %v7970 = vsel %vm3969, %v7962, %v7938
    %v7971 = vpack.c.bf16 %v7964, %v7963
    %v7972 = vpack.c.bf16 %v7966, %v7965
    %v7973 = vpack.c.bf16 %v7968, %v7967
    %v7974 = vpack.c.bf16 %v7970, %v7969
    %s7975 = scalar_lea.vmem [#allocation10], 16
    %v7976 = vld [vmem:[%s7975] sm:$0xf]
    %v7977 = vld [vmem:[%s7975 + $0x4] sm:$0xf]
    %v7978 = vld [vmem:[%s7975 + $0x8] sm:$0xf]
    %v7979 = vld [vmem:[%s7975 + $0xc] sm:$0xf]
    %s7980 = scalar_lea.vmem %s7, 1
    %v7981 = vld [vmem:[%s7980] sm:$0x1]
    %v7983 = vlaneseq
    %v7984 = vshrl.u32 %v7983, 7
    %v7985 = vsub.s32 0, %v7984
    %v7986 = vrot.slane %v7981, %v7985
    %v7992 = vunpack.c.l.b16 %v7976
    %v7993 = vunpack.c.l.b16 %v7977
    %v7994 = vunpack.c.l.b16 %v7978
    %v7995 = vunpack.c.l.b16 %v7979
    %v7996 = vpack.c.b16 %v7993, %v7992
    %v7997 = vpack.c.b16 %v7995, %v7994
    %v8001 = vsel %vm257, %v7971, 0
    %v8004 = vsel %vm257, %v7972, 0
    %v8007 = vsel %vm257, %v7973, 0
    %v8010 = vsel %vm257, %v7974, 0
    %8012 = vmatprep.subr.bf16.mxu0 0
    %8013 = vmatpush1.bf16.msra.mxu0 %v7996
    %8014 = vmatprep.subr.bf16.mxu0 0
    %8015 = vmatpush1.bf16.msra.mxu0 %v7997
    %8016 = vmatprep.subr.bf16.mxu0 0
    %8017 = vmatpush1.bf16.msra.mxu0 0
    %8018 = vmatprep.subr.bf16.mxu0 0
    %8019 = vmatpush1.bf16.msra.mxu0 0
    %8020 = vmatprep.subr.bf16.mxu0 0
    %8021 = vmatpush1.bf16.msra.mxu0 0
    %8022 = vmatprep.subr.bf16.mxu0 0
    %8023 = vmatpush1.bf16.msra.mxu0 0
    %8024 = vmatprep.subr.bf16.mxu0 0
    %8025 = vmatpush1.bf16.msra.mxu0 0
    %8026 = vmatprep.subr.bf16.mxu0 0
    %8027 = vmatpush1.bf16.msra.mxu0 0
    %8028 = vmatprep.subr.bf16.mxu0 0
    %8029 = vmatpush1.bf16.msra.mxu0 0
    %8030 = vmatprep.subr.bf16.mxu0 0
    %8031 = vmatpush1.bf16.msra.mxu0 0
    %8032 = vmatprep.subr.bf16.mxu0 0
    %8033 = vmatpush1.bf16.msra.mxu0 0
    %8034 = vmatprep.subr.bf16.mxu0 0
    %8035 = vmatpush1.bf16.msra.mxu0 0
    %8036 = vmatprep.subr.bf16.mxu0 0
    %8037 = vmatpush1.bf16.msra.mxu0 0
    %8038 = vmatprep.subr.bf16.mxu0 0
    %8039 = vmatpush1.bf16.msra.mxu0 0
    %8040 = vmatprep.subr.bf16.mxu0 0
    %8041 = vmatpush1.bf16.msra.mxu0 0
    %8042 = vmatprep.subr.bf16.mxu0 0
    %8043 = vmatpush1.bf16.msra.mxu0 0
    %8044 = vmatprep.mubr.bf16.mxu0 0
    %8045 = vmatmul.mubr.bf16.gmra.mrb[0].mxu0 %v8001
    %v8046 = vpop.f32.mrb[0].mxu0
    %v8047 = vadd.f32 %v7986, %v8046
    %v8048 = vpop.f32.mrb[0].mxu0
    %v8049 = vpop.f32.mrb[0].mxu0
    %v8050 = vadd.f32 %v7986, %v8049
    %v8051 = vpop.f32.mrb[0].mxu0
    %8052 = vmatprep.mubr.bf16.mxu0 0
    %8053 = vmatmul.mubr.bf16.gmra.mrb[0].mxu0 %v8004
    %v8054 = vpop.f32.mrb[0].mxu0
    %v8055 = vadd.f32 %v7986, %v8054
    %v8056 = vpop.f32.mrb[0].mxu0
    %v8057 = vpop.f32.mrb[0].mxu0
    %v8058 = vadd.f32 %v7986, %v8057
    %v8059 = vpop.f32.mrb[0].mxu0
    %8060 = vmatprep.mubr.bf16.mxu0 0
    %8061 = vmatmul.mubr.bf16.gmra.mrb[0].mxu0 %v8007
    %v8062 = vpop.f32.mrb[0].mxu0
    %v8063 = vadd.f32 %v7986, %v8062
    %v8064 = vpop.f32.mrb[0].mxu0
    %v8065 = vpop.f32.mrb[0].mxu0
    %v8066 = vadd.f32 %v7986, %v8065
    %v8067 = vpop.f32.mrb[0].mxu0
    %8068 = vmatprep.mubr.bf16.mxu0 0
    %8069 = vmatmul.mubr.bf16.gmra.mrb[0].mxu0 %v8010
    %v8070 = vpop.f32.mrb[0].mxu0
    %v8071 = vadd.f32 %v7986, %v8070
    %v8072 = vpop.f32.mrb[0].mxu0
    %v8073 = vpop.f32.mrb[0].mxu0
    %v8074 = vadd.f32 %v7986, %v8073
    %v8075 = vpop.f32.mrb[0].mxu0
    %8076 = vdwg.mxu0
    %v8077 = vadd.f32 %v4217, %v8047
    %v8078 = vadd.f32 %v4218, %v8050
    %v8079 = vadd.f32 %v4219, %v8055
    %v8080 = vadd.f32 %v4220, %v8058
    %v8081 = vadd.f32 %v4221, %v8063
    %v8082 = vadd.f32 %v4222, %v8066
    %v8083 = vadd.f32 %v4223, %v8071
    %v8084 = vadd.f32 %v4224, %v8074
    %s8085 = scalar_lea.vmem %s8, 1
    %v8086 = vld [vmem:[%s8085] sm:$0x1]
    %s8087 = scalar_lea.vmem %s9, 1
    %v8088 = vld [vmem:[%s8087] sm:$0x1]
    %v8089 = vsel %vm257, %v8077, 0.0
    %8090 = vadd.xlane.f32.xlu0 %v8089
    %v8091 = vpop.xlane.xlu0 %8090
    %v8092 = vsel %vm257, %v8078, 0.0
    %8093 = vadd.xlane.f32.xlu0 %v8092
    %v8094 = vpop.xlane.xlu0 %8093
    %v8095 = vsel %vm257, %v8079, 0.0
    %8096 = vadd.xlane.f32.xlu0 %v8095
    %v8097 = vpop.xlane.xlu0 %8096
    %v8098 = vsel %vm257, %v8080, 0.0
    %8099 = vadd.xlane.f32.xlu0 %v8098
    %v8100 = vpop.xlane.xlu0 %8099
    %v8101 = vsel %vm257, %v8081, 0.0
    %8102 = vadd.xlane.f32.xlu0 %v8101
    %v8103 = vpop.xlane.xlu0 %8102
    %v8104 = vsel %vm257, %v8082, 0.0
    %8105 = vadd.xlane.f32.xlu0 %v8104
    %v8106 = vpop.xlane.xlu0 %8105
    %v8107 = vsel %vm257, %v8083, 0.0
    %8108 = vadd.xlane.f32.xlu0 %v8107
    %v8109 = vpop.xlane.xlu0 %8108
    %v8110 = vsel %vm257, %v8084, 0.0
    %8111 = vadd.xlane.f32.xlu0 %v8110
    %v8112 = vpop.xlane.xlu0 %8111
    %v8113 = vmul.f32 %v8091, %v4116
    %v8114 = vmul.f32 %v8094, %v4116
    %v8115 = vmul.f32 %v8097, %v4116
    %v8116 = vmul.f32 %v8100, %v4116
    %v8117 = vmul.f32 %v8103, %v4116
    %v8118 = vmul.f32 %v8106, %v4116
    %v8119 = vmul.f32 %v8109, %v4116
    %v8120 = vmul.f32 %v8112, %v4116
    %v8121 = vsub.f32 %v8077, %v8113
    %v8122 = vsub.f32 %v8078, %v8114
    %v8123 = vsub.f32 %v8079, %v8115
    %v8124 = vsub.f32 %v8080, %v8116
    %v8125 = vsub.f32 %v8081, %v8117
    %v8126 = vsub.f32 %v8082, %v8118
    %v8127 = vsub.f32 %v8083, %v8119
    %v8128 = vsub.f32 %v8084, %v8120
    %v8129 = vmul.f32 %v8121, %v8121
    %v8130 = vmul.f32 %v8122, %v8122
    %v8131 = vmul.f32 %v8123, %v8123
    %v8132 = vmul.f32 %v8124, %v8124
    %v8133 = vmul.f32 %v8125, %v8125
    %v8134 = vmul.f32 %v8126, %v8126
    %v8135 = vmul.f32 %v8127, %v8127
    %v8136 = vmul.f32 %v8128, %v8128
    %v8137 = vsel %vm257, %v8129, 0.0
    %8138 = vadd.xlane.f32.xlu0 %v8137
    %v8139 = vpop.xlane.xlu0 %8138
    %v8140 = vsel %vm257, %v8130, 0.0
    %8141 = vadd.xlane.f32.xlu0 %v8140
    %v8142 = vpop.xlane.xlu0 %8141
    %v8143 = vsel %vm257, %v8131, 0.0
    %8144 = vadd.xlane.f32.xlu0 %v8143
    %v8145 = vpop.xlane.xlu0 %8144
    %v8146 = vsel %vm257, %v8132, 0.0
    %8147 = vadd.xlane.f32.xlu0 %v8146
    %v8148 = vpop.xlane.xlu0 %8147
    %v8149 = vsel %vm257, %v8133, 0.0
    %8150 = vadd.xlane.f32.xlu0 %v8149
    %v8151 = vpop.xlane.xlu0 %8150
    %v8152 = vsel %vm257, %v8134, 0.0
    %8153 = vadd.xlane.f32.xlu0 %v8152
    %v8154 = vpop.xlane.xlu0 %8153
    %v8155 = vsel %vm257, %v8135, 0.0
    %8156 = vadd.xlane.f32.xlu0 %v8155
    %v8157 = vpop.xlane.xlu0 %8156
    %v8158 = vsel %vm257, %v8136, 0.0
    %8159 = vadd.xlane.f32.xlu0 %v8158
    %v8160 = vpop.xlane.xlu0 %8159
    %v8161 = vmul.f32 %v8139, %v4116
    %v8162 = vmul.f32 %v8142, %v4116
    %v8163 = vmul.f32 %v8145, %v4116
    %v8164 = vmul.f32 %v8148, %v4116
    %v8165 = vmul.f32 %v8151, %v4116
    %v8166 = vmul.f32 %v8154, %v4116
    %v8167 = vmul.f32 %v8157, %v4116
    %v8168 = vmul.f32 %v8160, %v4116
    %v8169 = vadd.f32 %v8161, 1e-05
    %v8170 = vadd.f32 %v8162, 1e-05
    %v8171 = vadd.f32 %v8163, 1e-05
    %v8172 = vadd.f32 %v8164, 1e-05
    %v8173 = vadd.f32 %v8165, 1e-05
    %v8174 = vadd.f32 %v8166, 1e-05
    %v8175 = vadd.f32 %v8167, 1e-05
    %v8176 = vadd.f32 %v8168, 1e-05
    %v8177 = vrsqrt.pop %v8169
    %v8178 = vrsqrt.pop %v8170
    %v8179 = vrsqrt.pop %v8171
    %v8180 = vrsqrt.pop %v8172
    %v8181 = vrsqrt.pop %v8173
    %v8182 = vrsqrt.pop %v8174
    %v8183 = vrsqrt.pop %v8175
    %v8184 = vrsqrt.pop %v8176
    %v8185 = vmul.f32 %v8121, %v8177
    %v8186 = vmul.f32 %v8122, %v8178
    %v8187 = vmul.f32 %v8123, %v8179
    %v8188 = vmul.f32 %v8124, %v8180
    %v8189 = vmul.f32 %v8125, %v8181
    %v8190 = vmul.f32 %v8126, %v8182
    %v8191 = vmul.f32 %v8127, %v8183
    %v8192 = vmul.f32 %v8128, %v8184
    %v8194 = vlaneseq
    %v8195 = vshrl.u32 %v8194, 7
    %v8196 = vsub.s32 0, %v8195
    %v8197 = vrot.slane %v8086, %v8196
    %v8199 = vmul.f32 %v8185, %v8197
    %v8200 = vmul.f32 %v8186, %v8197
    %v8201 = vmul.f32 %v8187, %v8197
    %v8202 = vmul.f32 %v8188, %v8197
    %v8203 = vmul.f32 %v8189, %v8197
    %v8204 = vmul.f32 %v8190, %v8197
    %v8205 = vmul.f32 %v8191, %v8197
    %v8206 = vmul.f32 %v8192, %v8197
    %v8208 = vlaneseq
    %v8209 = vshrl.u32 %v8208, 7
    %v8210 = vsub.s32 0, %v8209
    %v8211 = vrot.slane %v8088, %v8210
    %v8213 = vadd.f32 %v8199, %v8211
    %v8214 = vadd.f32 %v8200, %v8211
    %v8215 = vadd.f32 %v8201, %v8211
    %v8216 = vadd.f32 %v8202, %v8211
    %v8217 = vadd.f32 %v8203, %v8211
    %v8218 = vadd.f32 %v8204, %v8211
    %v8219 = vadd.f32 %v8205, %v8211
    %v8220 = vadd.f32 %v8206, %v8211
    %v8221 = vld [vmem:[%s10] sm:$0x1]
    %v8222 = vld [vmem:[%s11] sm:$0x1]
    %v8223 = vsel %vm257, %v8213, 0.0
    %8224 = vadd.xlane.f32.xlu0 %v8223
    %v8225 = vpop.xlane.xlu0 %8224
    %v8226 = vsel %vm257, %v8214, 0.0
    %8227 = vadd.xlane.f32.xlu0 %v8226
    %v8228 = vpop.xlane.xlu0 %8227
    %v8229 = vsel %vm257, %v8215, 0.0
    %8230 = vadd.xlane.f32.xlu0 %v8229
    %v8231 = vpop.xlane.xlu0 %8230
    %v8232 = vsel %vm257, %v8216, 0.0
    %8233 = vadd.xlane.f32.xlu0 %v8232
    %v8234 = vpop.xlane.xlu0 %8233
    %v8235 = vsel %vm257, %v8217, 0.0
    %8236 = vadd.xlane.f32.xlu0 %v8235
    %v8237 = vpop.xlane.xlu0 %8236
    %v8238 = vsel %vm257, %v8218, 0.0
    %8239 = vadd.xlane.f32.xlu0 %v8238
    %v8240 = vpop.xlane.xlu0 %8239
    %v8241 = vsel %vm257, %v8219, 0.0
    %8242 = vadd.xlane.f32.xlu0 %v8241
    %v8243 = vpop.xlane.xlu0 %8242
    %v8244 = vsel %vm257, %v8220, 0.0
    %8245 = vadd.xlane.f32.xlu0 %v8244
    %v8246 = vpop.xlane.xlu0 %8245
    %v8247 = vmul.f32 %v8225, %v4116
    %v8248 = vmul.f32 %v8228, %v4116
    %v8249 = vmul.f32 %v8231, %v4116
    %v8250 = vmul.f32 %v8234, %v4116
    %v8251 = vmul.f32 %v8237, %v4116
    %v8252 = vmul.f32 %v8240, %v4116
    %v8253 = vmul.f32 %v8243, %v4116
    %v8254 = vmul.f32 %v8246, %v4116
    %v8255 = vsub.f32 %v8213, %v8247
    %v8256 = vsub.f32 %v8214, %v8248
    %v8257 = vsub.f32 %v8215, %v8249
    %v8258 = vsub.f32 %v8216, %v8250
    %v8259 = vsub.f32 %v8217, %v8251
    %v8260 = vsub.f32 %v8218, %v8252
    %v8261 = vsub.f32 %v8219, %v8253
    %v8262 = vsub.f32 %v8220, %v8254
    %v8263 = vmul.f32 %v8255, %v8255
    %v8264 = vmul.f32 %v8256, %v8256
    %v8265 = vmul.f32 %v8257, %v8257
    %v8266 = vmul.f32 %v8258, %v8258
    %v8267 = vmul.f32 %v8259, %v8259
    %v8268 = vmul.f32 %v8260, %v8260
    %v8269 = vmul.f32 %v8261, %v8261
    %v8270 = vmul.f32 %v8262, %v8262
    %v8271 = vsel %vm257, %v8263, 0.0
    %8272 = vadd.xlane.f32.xlu0 %v8271
    %v8273 = vpop.xlane.xlu0 %8272
    %v8274 = vsel %vm257, %v8264, 0.0
    %8275 = vadd.xlane.f32.xlu0 %v8274
    %v8276 = vpop.xlane.xlu0 %8275
    %v8277 = vsel %vm257, %v8265, 0.0
    %8278 = vadd.xlane.f32.xlu0 %v8277
    %v8279 = vpop.xlane.xlu0 %8278
    %v8280 = vsel %vm257, %v8266, 0.0
    %8281 = vadd.xlane.f32.xlu0 %v8280
    %v8282 = vpop.xlane.xlu0 %8281
    %v8283 = vsel %vm257, %v8267, 0.0
    %8284 = vadd.xlane.f32.xlu0 %v8283
    %v8285 = vpop.xlane.xlu0 %8284
    %v8286 = vsel %vm257, %v8268, 0.0
    %8287 = vadd.xlane.f32.xlu0 %v8286
    %v8288 = vpop.xlane.xlu0 %8287
    %v8289 = vsel %vm257, %v8269, 0.0
    %8290 = vadd.xlane.f32.xlu0 %v8289
    %v8291 = vpop.xlane.xlu0 %8290
    %v8292 = vsel %vm257, %v8270, 0.0
    %8293 = vadd.xlane.f32.xlu0 %v8292
    %v8294 = vpop.xlane.xlu0 %8293
    %v8295 = vmul.f32 %v8273, %v4116
    %v8296 = vmul.f32 %v8276, %v4116
    %v8297 = vmul.f32 %v8279, %v4116
    %v8298 = vmul.f32 %v8282, %v4116
    %v8299 = vmul.f32 %v8285, %v4116
    %v8300 = vmul.f32 %v8288, %v4116
    %v8301 = vmul.f32 %v8291, %v4116
    %v8302 = vmul.f32 %v8294, %v4116
    %v8303 = vadd.f32 %v8295, 1e-05
    %v8304 = vadd.f32 %v8296, 1e-05
    %v8305 = vadd.f32 %v8297, 1e-05
    %v8306 = vadd.f32 %v8298, 1e-05
    %v8307 = vadd.f32 %v8299, 1e-05
    %v8308 = vadd.f32 %v8300, 1e-05
    %v8309 = vadd.f32 %v8301, 1e-05
    %v8310 = vadd.f32 %v8302, 1e-05
    %v8311 = vrsqrt.pop %v8303
    %v8312 = vrsqrt.pop %v8304
    %v8313 = vrsqrt.pop %v8305
    %v8314 = vrsqrt.pop %v8306
    %v8315 = vrsqrt.pop %v8307
    %v8316 = vrsqrt.pop %v8308
    %v8317 = vrsqrt.pop %v8309
    %v8318 = vrsqrt.pop %v8310
    %v8319 = vmul.f32 %v8255, %v8311
    %v8320 = vmul.f32 %v8256, %v8312
    %v8321 = vmul.f32 %v8257, %v8313
    %v8322 = vmul.f32 %v8258, %v8314
    %v8323 = vmul.f32 %v8259, %v8315
    %v8324 = vmul.f32 %v8260, %v8316
    %v8325 = vmul.f32 %v8261, %v8317
    %v8326 = vmul.f32 %v8262, %v8318
    %v8328 = vlaneseq
    %v8329 = vshrl.u32 %v8328, 7
    %v8330 = vsub.s32 0, %v8329
    %v8331 = vrot.slane %v8221, %v8330
    %v8333 = vmul.f32 %v8319, %v8331
    %v8334 = vmul.f32 %v8320, %v8331
    %v8335 = vmul.f32 %v8321, %v8331
    %v8336 = vmul.f32 %v8322, %v8331
    %v8337 = vmul.f32 %v8323, %v8331
    %v8338 = vmul.f32 %v8324, %v8331
    %v8339 = vmul.f32 %v8325, %v8331
    %v8340 = vmul.f32 %v8326, %v8331
    %v8342 = vlaneseq
    %v8343 = vshrl.u32 %v8342, 7
    %v8344 = vsub.s32 0, %v8343
    %v8345 = vrot.slane %v8222, %v8344
    %v8347 = vadd.f32 %v8333, %v8345
    %v8348 = vadd.f32 %v8334, %v8345
    %v8349 = vadd.f32 %v8335, %v8345
    %v8350 = vadd.f32 %v8336, %v8345
    %v8351 = vadd.f32 %v8337, %v8345
    %v8352 = vadd.f32 %v8338, %v8345
    %v8353 = vadd.f32 %v8339, %v8345
    %v8354 = vadd.f32 %v8340, %v8345
    %v8355 = vld [vmem:[#allocation5] sm:$0xff]
    %v8356 = vsel %vm346, %v8355, 0.0
    %8357 = vadd.xlane.f32.xlu0 %v8356
    %v8358 = vpop.xlane.xlu0 %8357
    %v8359 = vmax.f32 %v8358, 1.0
    %v8360 = vlaneseq
    %v8361 = vshrl.u32 %v8360, 7
    %v8362 = vsub.s32 0, %v8361
    %v8363 = vrot.slane %v8355, %v8362
    %8365 = vbcast.lane.b32.xlu0 %v8363, 256
    %v8366 = vpop.permute.xlu0 %8365
    %v8367 = vlaneseq
    %v8368 = vshrl.u32 %v8367, 7
    %v8369 = vsub.s32 1, %v8368
    %v8370 = vrot.slane %v8355, %v8369
    %8372 = vbcast.lane.b32.xlu0 %v8370, 256
    %v8373 = vpop.permute.xlu0 %8372
    %v8374 = vlaneseq
    %v8375 = vshrl.u32 %v8374, 7
    %v8376 = vsub.s32 2, %v8375
    %v8377 = vrot.slane %v8355, %v8376
    %8379 = vbcast.lane.b32.xlu0 %v8377, 256
    %v8380 = vpop.permute.xlu0 %8379
    %v8381 = vlaneseq
    %v8382 = vshrl.u32 %v8381, 7
    %v8383 = vsub.s32 3, %v8382
    %v8384 = vrot.slane %v8355, %v8383
    %8386 = vbcast.lane.b32.xlu0 %v8384, 256
    %v8387 = vpop.permute.xlu0 %8386
    %v8388 = vlaneseq
    %v8389 = vshrl.u32 %v8388, 7
    %v8390 = vsub.s32 4, %v8389
    %v8391 = vrot.slane %v8355, %v8390
    %8393 = vbcast.lane.b32.xlu0 %v8391, 256
    %v8394 = vpop.permute.xlu0 %8393
    %v8395 = vlaneseq
    %v8396 = vshrl.u32 %v8395, 7
    %v8397 = vsub.s32 5, %v8396
    %v8398 = vrot.slane %v8355, %v8397
    %8400 = vbcast.lane.b32.xlu0 %v8398, 256
    %v8401 = vpop.permute.xlu0 %8400
    %v8402 = vlaneseq
    %v8403 = vshrl.u32 %v8402, 7
    %v8404 = vsub.s32 6, %v8403
    %v8405 = vrot.slane %v8355, %v8404
    %8407 = vbcast.lane.b32.xlu0 %v8405, 256
    %v8408 = vpop.permute.xlu0 %8407
    %v8409 = vlaneseq
    %v8410 = vshrl.u32 %v8409, 7
    %v8411 = vsub.s32 7, %v8410
    %v8412 = vrot.slane %v8355, %v8411
    %8414 = vbcast.lane.b32.xlu0 %v8412, 256
    %v8415 = vpop.permute.xlu0 %8414
    %v8416 = vmul.f32 %v8347, %v8366
    %v8417 = vmul.f32 %v8348, %v8373
    %v8418 = vmul.f32 %v8349, %v8380
    %v8419 = vmul.f32 %v8350, %v8387
    %v8420 = vmul.f32 %v8351, %v8394
    %v8421 = vmul.f32 %v8352, %v8401
    %v8422 = vmul.f32 %v8353, %v8408
    %v8423 = vmul.f32 %v8354, %v8415
    %v8424 = vsel %vm257, %v8416, 0.0
    %v8425 = vrot.slane %v8424, 4
    %v8426 = vadd.f32 %v8424, %v8425
    %v8427 = vrot.slane %v8426, 2
    %v8428 = vadd.f32 %v8426, %v8427
    %v8429 = vrot.slane %v8428, 1
    %v8430 = vadd.f32 %v8428, %v8429
    %v8431 = vsel %vm257, %v8417, 0.0
    %v8432 = vrot.slane %v8431, 4
    %v8433 = vadd.f32 %v8431, %v8432
    %v8434 = vrot.slane %v8433, 2
    %v8435 = vadd.f32 %v8433, %v8434
    %v8436 = vrot.slane %v8435, 1
    %v8437 = vadd.f32 %v8435, %v8436
    %v8438 = vsel %vm257, %v8418, 0.0
    %v8439 = vrot.slane %v8438, 4
    %v8440 = vadd.f32 %v8438, %v8439
    %v8441 = vrot.slane %v8440, 2
    %v8442 = vadd.f32 %v8440, %v8441
    %v8443 = vrot.slane %v8442, 1
    %v8444 = vadd.f32 %v8442, %v8443
    %v8445 = vsel %vm257, %v8419, 0.0
    %v8446 = vrot.slane %v8445, 4
    %v8447 = vadd.f32 %v8445, %v8446
    %v8448 = vrot.slane %v8447, 2
    %v8449 = vadd.f32 %v8447, %v8448
    %v8450 = vrot.slane %v8449, 1
    %v8451 = vadd.f32 %v8449, %v8450
    %v8452 = vsel %vm257, %v8420, 0.0
    %v8453 = vrot.slane %v8452, 4
    %v8454 = vadd.f32 %v8452, %v8453
    %v8455 = vrot.slane %v8454, 2
    %v8456 = vadd.f32 %v8454, %v8455
    %v8457 = vrot.slane %v8456, 1
    %v8458 = vadd.f32 %v8456, %v8457
    %v8459 = vsel %vm257, %v8421, 0.0
    %v8460 = vrot.slane %v8459, 4
    %v8461 = vadd.f32 %v8459, %v8460
    %v8462 = vrot.slane %v8461, 2
    %v8463 = vadd.f32 %v8461, %v8462
    %v8464 = vrot.slane %v8463, 1
    %v8465 = vadd.f32 %v8463, %v8464
    %v8466 = vsel %vm257, %v8422, 0.0
    %v8467 = vrot.slane %v8466, 4
    %v8468 = vadd.f32 %v8466, %v8467
    %v8469 = vrot.slane %v8468, 2
    %v8470 = vadd.f32 %v8468, %v8469
    %v8471 = vrot.slane %v8470, 1
    %v8472 = vadd.f32 %v8470, %v8471
    %v8473 = vsel %vm257, %v8423, 0.0
    %v8474 = vrot.slane %v8473, 4
    %v8475 = vadd.f32 %v8473, %v8474
    %v8476 = vrot.slane %v8475, 2
    %v8477 = vadd.f32 %v8475, %v8476
    %v8478 = vrot.slane %v8477, 1
    %v8479 = vadd.f32 %v8477, %v8478
    %v8480 = vrcp.pop %v8359
    %v8482 = vrot.slane %v8480, 1
    %v8483 = vrot.slane %v8480, 2
    %v8484 = vrot.slane %v8480, 3
    %v8485 = vrot.slane %v8480, 4
    %v8486 = vrot.slane %v8480, 5
    %v8487 = vrot.slane %v8480, 6
    %v8488 = vrot.slane %v8480, 7
    %v8497 = vmul.f32 %v8430, %v8480
    %v8498 = vmul.f32 %v8437, %v8482
    %v8499 = vmul.f32 %v8444, %v8483
    %v8500 = vmul.f32 %v8451, %v8484
    %v8501 = vmul.f32 %v8458, %v8485
    %v8502 = vmul.f32 %v8465, %v8486
    %v8503 = vmul.f32 %v8472, %v8487
    %v8504 = vmul.f32 %v8479, %v8488
    %v8513 = vrot.slane %v8498, 7
    %vm8514 = vcmask 1041409
    %v8515 = vsel %vm8514, %v8513, %v8497
    %v8516 = vrot.slane %v8499, 6
    %vm8517 = vcmask 1042434
    %v8518 = vsel %vm8517, %v8516, %v8515
    %v8519 = vrot.slane %v8500, 5
    %vm8520 = vcmask 1043459
    %v8521 = vsel %vm8520, %v8519, %v8518
    %v8522 = vrot.slane %v8501, 4
    %vm8523 = vcmask 1044484
    %v8524 = vsel %vm8523, %v8522, %v8521
    %v8525 = vrot.slane %v8502, 3
    %vm8526 = vcmask 1045509
    %v8527 = vsel %vm8526, %v8525, %v8524
    %v8528 = vrot.slane %v8503, 2
    %vm8529 = vcmask 1046534
    %v8530 = vsel %vm8529, %v8528, %v8527
    %v8531 = vrot.slane %v8504, 1
    %vm8532 = vcmask 1047559
    %v8533 = vsel %vm8532, %v8531, %v8530
    %8535 = vst.msk [vmem:[#allocation11] sm:$0xff] %vm257, %v8533
    // Predicated region
    $region70: #{tpu_custom_call.1} parent=1 // pred_check
      _
    $region71: #{tpu_custom_call.1} parent=1 // pred_check_branch
      %8537 = sbr.rel (0) target = $region73
    $region72: #{tpu_custom_call.1} parent=1 // pred_region
      %s8539 = ssub.s32 128, 128
      %8540 = vsyncadd [#allocation4], %s8539
      %s8542 = sshll.u32 [#allocation11], 4
      %s8543 = int_to_ptr.vmem [resolvable:$true] %s8542
      %8545 = dma.vmem_to_hbm [thread:$0]  %s8543, 128, %s12, [#allocation4]
    $region73: #{tpu_custom_call.1} parent=1 // pred_fallthru
      _
    // Predicated region
    $region74: #{tpu_custom_call.1} parent=1 // pred_check
      _
    $region75: #{tpu_custom_call.1} parent=1 // pred_check_branch
      %8547 = sbr.rel (0) target = $region77
    $region76: #{tpu_custom_call.1} parent=1 // pred_region
      %8548 = dma.done [#allocation4], 128
    $region77: #{tpu_custom_call.1} parent=1 // pred_fallthru
      _
    %8549 = vsyncpa [#allocation3], 1
    %8550 = vsyncpa [#allocation6], 1
    %8551 = vsyncpa [#allocation9], 1
    %8552 = vsyncpa [#allocation4], 1

</llo_original>
